<compile_context>
chip_gen: v5e
topology: v5e:2x2
jax: 0.10.0
libtpu: 0.0.40
codegen_flags: <defaults>
</compile_context>

<pallas_src>
import functools
import math

import jax
import jax.numpy as jnp
from jax.experimental import pallas as pl
from jax.experimental.pallas import tpu as pltpu

# Conservative scoped-VMEM budget valid on every generation (<= 64 MiB on v7x,
# <= 128 MiB on v5e/v6e).  Tile caps below are derived against this budget.
_VMEM_LIMIT = 32 * 1024 * 1024


def _round_up(x, m):
    return ((x + m - 1) // m) * m


def _pick_seq_tile(n, cap):
    """Largest multiple of 8 that divides n and is <= cap."""
    assert n % 8 == 0, "sequence length must be a multiple of 8"
    t = min(cap, n)
    t -= t % 8
    while n % t:
        t -= 8
    return t


# ----------------------------------------------------------------------------
# Fused [LayerNorm ->] matmul [-> activation] [+ residual] kernel
# ----------------------------------------------------------------------------
def _fused_linear_kernel(*refs, act, has_ln, has_res, out_splits, eps):
    it = iter(refs)
    x_ref = next(it)
    if has_ln:
        g_ref = next(it)
        b_ref = next(it)
    w_ref = next(it)
    bias_ref = next(it)
    res_ref = next(it) if has_res else None
    o_ref = next(it)

    x = x_ref[...]
    if has_ln:
        xf = x.astype(jnp.float32)
        mu = jnp.mean(xf, axis=-1, keepdims=True)
        var = jnp.mean(jnp.square(xf - mu), axis=-1, keepdims=True)
        xf = (xf - mu) * jax.lax.rsqrt(var + eps)
        xf = xf * g_ref[...].astype(jnp.float32) + b_ref[...].astype(jnp.float32)
        xm = xf.astype(jnp.bfloat16)
    else:
        xm = x.astype(jnp.bfloat16)

    # bf16 MXU matmul, f32 accumulation.
    acc = jnp.dot(xm, w_ref[...].astype(jnp.bfloat16),
                  preferred_element_type=jnp.float32)
    acc = acc + bias_ref[...].astype(jnp.float32)
    if act == "relu":
        acc = jnp.maximum(acc, 0.0)
    elif act == "gelu":
        # TODO(synk): PyTorch nn.GELU defaults to the exact erf form; the tanh
        # approximation is used here for safe Mosaic lowering (tiny delta).
        acc = jax.nn.gelu(acc, approximate=True)
    if has_res:
        acc = acc + res_ref[...].astype(jnp.float32)

    if out_splits == 1:
        o_ref[...] = acc.astype(o_ref.dtype)
    else:
        s = acc.shape[1] // out_splits
        for j in range(out_splits):
            o_ref[j] = acc[:, j * s:(j + 1) * s].astype(o_ref.dtype)


def pallas_fused_linear(x, w, b, *, gamma=None, beta=None, residual=None,
                        act="none", out_splits=1, out_dtype=None,
                        eps=1e-5, tm_cap=256):
    """[LN ->] x @ w + b [-> act] [+ residual], row-tiled.

    LN / bias / activation / residual-add are fused into the matmul epilogue so
    the activation matrix round-trips HBM only once.  With out_splits=3 the
    result is emitted pre-split as (3, M, N/3) so Q/K/V need no host transpose.
    """
    M, K = x.shape
    Kw, N = w.shape
    assert K == Kw and N % out_splits == 0
    out_dtype = out_dtype or x.dtype

    # Row tile: big enough to amortize per-step overhead & fill the MXU, small
    # enough to keep >=2 grid steps so v7x's two TensorCores both get work.
    tm = min(tm_cap, max(8, _round_up((M + 1) // 2, 8)))
    Mp = _round_up(M, tm)
    if Mp != M:
        x = jnp.pad(x, ((0, Mp - M), (0, 0)))
        if residual is not None:
            residual = jnp.pad(residual, ((0, Mp - M), (0, 0)))

    args = [x]
    in_specs = [pl.BlockSpec((tm, K), lambda i: (i, 0))]
    if gamma is not None:
        args += [gamma.reshape(1, K), beta.reshape(1, K)]
        in_specs += [pl.BlockSpec((1, K), lambda i: (0, 0)),
                     pl.BlockSpec((1, K), lambda i: (0, 0))]
    # Weight/bias use a constant index map (re-used every step).
    # NOTE: pipeline_mode=pl.Buffered(1) would single-buffer them and free
    # VMEM; left at the default for lowering portability.
    args += [w, b.reshape(1, N)]
    in_specs += [pl.BlockSpec((K, N), lambda i: (0, 0)),
                 pl.BlockSpec((1, N), lambda i: (0, 0))]
    if residual is not None:
        args.append(residual)
        in_specs.append(pl.BlockSpec((tm, N), lambda i: (i, 0)))

    if out_splits == 1:
        out_shape = jax.ShapeDtypeStruct((Mp, N), out_dtype)
        out_spec = pl.BlockSpec((tm, N), lambda i: (i, 0))
    else:
        Ns = N // out_splits
        out_shape = jax.ShapeDtypeStruct((out_splits, Mp, Ns), out_dtype)
        out_spec = pl.BlockSpec((out_splits, tm, Ns), lambda i: (0, i, 0))

    out = pl.pallas_call(
        functools.partial(_fused_linear_kernel, act=act,
                          has_ln=gamma is not None,
                          has_res=residual is not None,
                          out_splits=out_splits, eps=eps),
        out_shape=out_shape,
        grid=(Mp // tm,),
        in_specs=in_specs,
        out_specs=out_spec,
        compiler_params=pltpu.CompilerParams(
            dimension_semantics=("parallel",),
            vmem_limit_bytes=_VMEM_LIMIT),
    )(*args)

    if Mp != M:
        out = out[:, :M] if out_splits > 1 else out[:M]
    return out


# ----------------------------------------------------------------------------
# Flash-style multi-head self-attention (heads packed lane-dense, online softmax)
# ----------------------------------------------------------------------------
def _flash_attn_kernel(q_ref, k_ref, v_ref, o_ref, acc_ref, m_ref, l_ref,
                       *, heads, dh, scale):
    ki = pl.program_id(2)

    @pl.when(ki == 0)
    def _():
        acc_ref[...] = jnp.zeros_like(acc_ref)
        m_ref[...] = jnp.full_like(m_ref, -jnp.inf)
        l_ref[...] = jnp.zeros_like(l_ref)

    q = q_ref[0, 0]                     # (tq, D) bf16, heads packed on lanes
    k = k_ref[0, 0]                     # (tk, D)
    v = v_ref[0, 0]                     # (tk, D)

    for h in range(heads):              # static unroll over heads
        sl = slice(h * dh, (h + 1) * dh)
        # Contract the head dim of q and k directly (no k.T / XLU transpose).
        s = jax.lax.dot_general(
            q[:, sl], k[:, sl], (((1,), (1,)), ((), ())),
            preferred_element_type=jnp.float32) * scale            # (tq, tk)
        m_prev = m_ref[h]                                          # (tq, 1)
        m_new = jnp.maximum(m_prev, jnp.max(s, axis=-1, keepdims=True))
        alpha = jnp.exp(m_prev - m_new)
        p = jnp.exp(s - m_new)
        l_ref[h] = alpha * l_ref[h] + jnp.sum(p, axis=-1, keepdims=True)
        pv = jnp.dot(p.astype(jnp.bfloat16), v[:, sl],
                     preferred_element_type=jnp.float32)           # (tq, dh)
        acc_ref[:, sl] = alpha * acc_ref[:, sl] + pv
        m_ref[h] = m_new

    @pl.when(ki == pl.num_programs(2) - 1)
    def _():
        tq = acc_ref.shape[0]
        inv = jnp.concatenate(
            [jnp.broadcast_to(pl.reciprocal(l_ref[h], approx=True), (tq, dh))
             for h in range(heads)], axis=-1)                      # (tq, D)
        o_ref[0] = (acc_ref[...] * inv).astype(o_ref.dtype)        # lane-dense store


def pallas_flash_attention(qkv, heads, *, tq_cap=256, tk_cap=256):
    """Self-attention over packed qkv of shape (3, B, N, D).

    Flash tiling: grid (B, q_tiles, kv_tiles) with online softmax, so VMEM only
    ever holds (tq x D) + (tk x D) tiles plus a (tq x tk) per-head score tile —
    the full N x N score matrix is never materialized.  All heads stay packed
    on the 128-lane axis for loads, stores and the output.
    """
    _, B, N, D = qkv.shape
    assert D % heads == 0
    dh = D // heads
    tq = _pick_seq_tile(N, tq_cap)
    tk = _pick_seq_tile(N, tk_cap)
    scale = 1.0 / math.sqrt(dh)

    return pl.pallas_call(
        functools.partial(_flash_attn_kernel, heads=heads, dh=dh, scale=scale),
        out_shape=jax.ShapeDtypeStruct((B, N, D), jnp.bfloat16),
        grid=(B, N // tq, N // tk),
        in_specs=[
            pl.BlockSpec((1, 1, tq, D), lambda b, qi, ki: (0, b, qi, 0)),
            pl.BlockSpec((1, 1, tk, D), lambda b, qi, ki: (1, b, ki, 0)),
            pl.BlockSpec((1, 1, tk, D), lambda b, qi, ki: (2, b, ki, 0)),
        ],
        out_specs=pl.BlockSpec((1, tq, D), lambda b, qi, ki: (b, qi, 0)),
        scratch_shapes=[
            pltpu.VMEM((tq, D), jnp.float32),        # output accumulator
            pltpu.VMEM((heads, tq, 1), jnp.float32), # running max per head
            pltpu.VMEM((heads, tq, 1), jnp.float32), # running sum per head
        ],
        compiler_params=pltpu.CompilerParams(
            dimension_semantics=("parallel", "parallel", "arbitrary"),
            vmem_limit_bytes=_VMEM_LIMIT),
    )(qkv, qkv, qkv)


# ----------------------------------------------------------------------------
# Glue (patchify stem, parameter init, forward assembly)
# ----------------------------------------------------------------------------
def patchify(points, ksize):
    """Non-overlapping ksize x ksize / stride=ksize patches from NCHW input.

    stride == kernel size, so im2col degenerates to one reshape + transpose
    (no 9 strided slices + concat).
    # TODO(synk): for the real 1152x1152 input, fold this gather into the
    # projection kernel's BlockSpec index_map instead of materializing cols.
    """
    B, C, H, W = points.shape
    Ho, Wo = H // ksize, W // ksize
    x = points[:, :, :Ho * ksize, :Wo * ksize]
    x = x.reshape(B, C, Ho, ksize, Wo, ksize)
    x = x.transpose(0, 2, 4, 3, 5, 1)                 # B, Ho, Wo, kh, kw, C
    return x.reshape(B * Ho * Wo, ksize * ksize * C), (B, Ho, Wo)


def init_params(key, cfg):
    D, Dm = cfg["hidden"], cfg["mlp_hidden"]
    kvol = cfg["in_ch"] * cfg["ksize"] ** 2
    kpad = _round_up(kvol, 32)                        # lane-friendlier contraction dim

    def w(k, shape, scale=0.02):
        return (scale * jax.random.normal(k, shape, jnp.float32)).astype(jnp.bfloat16)

    keys = jax.random.split(key, 4 + 8 * cfg["depth"])
    proj_w = jnp.zeros((kpad, D), jnp.bfloat16).at[:kvol].set(w(keys[0], (kvol, D)))
    params = {
        "proj_w": proj_w,
        "proj_b": jnp.zeros((D,), jnp.float32),
        "lnf_g": jnp.ones((D,), jnp.float32),
        "lnf_b": jnp.zeros((D,), jnp.float32),
        "head_w": w(keys[1], (D, D)),
        "head_b": jnp.zeros((D,), jnp.float32),
        "blocks": [],
    }
    for l in range(cfg["depth"]):
        kk = keys[4 + 8 * l: 4 + 8 * (l + 1)]
        params["blocks"].append({
            "ln1_g": jnp.ones((D,), jnp.float32), "ln1_b": jnp.zeros((D,), jnp.float32),
            "qkv_w": w(kk[0], (D, 3 * D)), "qkv_b": jnp.zeros((3 * D,), jnp.float32),
            "proj_w": w(kk[1], (D, D)), "proj_b": jnp.zeros((D,), jnp.float32),
            "ln2_g": jnp.ones((D,), jnp.float32), "ln2_b": jnp.zeros((D,), jnp.float32),
            "fc1_w": w(kk[2], (D, Dm)), "fc1_b": jnp.zeros((Dm,), jnp.float32),
            "fc2_w": w(kk[3], (Dm, D)), "fc2_b": jnp.zeros((D,), jnp.float32),
        })
    return params


def detector_forward(params, points, cfg):
    """points: [B, 3, H, W] NCHW (like the PyTorch module). Returns (mlp, fea_backbone)."""
    D, heads = cfg["hidden"], cfg["heads"]

    # ----- pcencoder (Projector, simplified): stride-3 3x3 conv + ReLU -----
    cols, (B, Ho, Wo) = patchify(points, cfg["ksize"])
    kpad = params["proj_w"].shape[0]
    cols = jnp.pad(cols, ((0, 0), (0, kpad - cols.shape[1])))        # K: 27 -> 32
    tok = pallas_fused_linear(cols, params["proj_w"], params["proj_b"],
                              act="relu", out_dtype=jnp.float32)     # [B*N, D] f32
    N = Ho * Wo
    M = B * N

    # ----- backbone (VitSegNet, depth=3 pre-LN transformer blocks) -----
    for blk in params["blocks"]:
        # LN1 fused into QKV projection; Q/K/V emitted pre-split as (3, M, D)
        # (bf16) so no host-side head reshape/transpose is needed.
        qkv = pallas_fused_linear(tok, blk["qkv_w"], blk["qkv_b"],
                                  gamma=blk["ln1_g"], beta=blk["ln1_b"],
                                  out_splits=3, out_dtype=jnp.bfloat16)
        attn = pallas_flash_attention(qkv.reshape(3, B, N, D), heads)  # (B,N,D) bf16
        # Output projection with the residual add fused into its epilogue.
        tok = pallas_fused_linear(attn.reshape(M, D), blk["proj_w"], blk["proj_b"],
                                  residual=tok, out_dtype=jnp.float32)
        # LN2 + MLP: fc1+GELU fused, fc2+residual fused.
        h = pallas_fused_linear(tok, blk["fc1_w"], blk["fc1_b"],
                                gamma=blk["ln2_g"], beta=blk["ln2_b"],
                                act="gelu", out_dtype=jnp.bfloat16)
        tok = pallas_fused_linear(h, blk["fc2_w"], blk["fc2_b"],
                                  residual=tok, out_dtype=jnp.float32)

    # ----- backbone outputs: (mlp, fea_backbone) -----
    mlp = pallas_fused_linear(tok, params["head_w"], params["head_b"],
                              gamma=params["lnf_g"], beta=params["lnf_b"],
                              out_dtype=jnp.float32).reshape(B, N, D)
    fea_backbone = tok.reshape(B, Ho, Wo, D).transpose(0, 3, 1, 2)   # NCHW
    return mlp, fea_backbone


# ----------------------------------------------------------------------------
if __name__ == "__main__":
    cfg = dict(in_ch=3, ksize=3, hidden=128, heads=4, head_dim=32,
               mlp_hidden=256, depth=3)
    key = jax.random.PRNGKey(0)
    # Original network takes [1, 3, 1152, 1152]; use a small consistent shape.
    B, Cin, H, W = 2, 3, 24, 24
    points = jax.random.normal(jax.random.fold_in(key, 999), (B, Cin, H, W), jnp.float32)
    params = init_params(jax.random.fold_in(key, 1), cfg)

    fwd = jax.jit(functools.partial(detector_forward, cfg=cfg))
    mlp, fea_backbone = fwd(params, points)
    jax.block_until_ready((mlp, fea_backbone))
    assert mlp.shape == (B, (H // 3) * (W // 3), cfg["hidden"])
    assert fea_backbone.shape == (B, cfg["hidden"], H // 3, W // 3)
    assert bool(jnp.all(jnp.isfinite(mlp))) and bool(jnp.all(jnp.isfinite(fea_backbone)))
    print("KERNEL_OK")
</pallas_src>

<mosaic_0001>
module attributes {stable_mosaic.version = 11 : i64} {
  func.func @_fused_linear_kernel(%arg0: i32, %arg1: memref<64x32xf32, #tpu.memory_space<vmem>>, %arg2: memref<32x128xbf16, #tpu.memory_space<vmem>>, %arg3: memref<1x128xf32, #tpu.memory_space<vmem>>, %arg4: memref<64x128xf32, #tpu.memory_space<vmem>>) attributes {dimension_semantics = [#tpu.dimension_semantics<parallel>], iteration_bounds = array<i64: 2>, scalar_prefetch = 0 : i64, scratch_operands = 0 : i64, tpu.core_type = #tpu.core_type<tc>, window_params = [{transform_indices = @transform_0, window_bounds = array<i64: 64, 32>}, {pipeline_mode = #tpu.pipeline_mode<synchronous>, transform_indices = @transform_1, window_bounds = array<i64: 32, 128>}, {pipeline_mode = #tpu.pipeline_mode<synchronous>, transform_indices = @transform_2, window_bounds = array<i64: 1, 128>}, {transform_indices = @transform_3, window_bounds = array<i64: 64, 128>}]} {
    %c0 = arith.constant 0 : index
    %c0_0 = arith.constant 0 : index
    %0 = vector.load %arg1[%c0, %c0_0] : memref<64x32xf32, #tpu.memory_space<vmem>>, vector<64x32xf32>
    %1 = arith.truncf %0 : vector<64x32xf32> to vector<64x32xbf16>
    %c0_1 = arith.constant 0 : index
    %c0_2 = arith.constant 0 : index
    %2 = vector.load %arg2[%c0_1, %c0_2] : memref<32x128xbf16, #tpu.memory_space<vmem>>, vector<32x128xbf16>
    %cst = arith.constant dense<0.000000e+00> : vector<64x128xf32>
    %3 = tpu.matmul %1, %2, %cst {dimension_numbers = #tpu.dot_dimension_numbers<[1], [0], [0], [1], [0, 0, 1, 1], [], []>} : vector<64x32xbf16>, vector<32x128xbf16>, vector<64x128xf32> -> vector<64x128xf32>
    %c0_3 = arith.constant 0 : index
    %c0_4 = arith.constant 0 : index
    %4 = vector.load %arg3[%c0_3, %c0_4] : memref<1x128xf32, #tpu.memory_space<vmem>>, vector<1x128xf32>
    %5 = vector.broadcast %4 : vector<1x128xf32> to vector<64x128xf32>
    %6 = arith.addf %3, %5 : vector<64x128xf32>
    %cst_5 = arith.constant 0.000000e+00 : f32
    %7 = vector.broadcast %cst_5 : f32 to vector<64x128xf32>
    %8 = arith.maximumf %6, %7 : vector<64x128xf32>
    %c0_6 = arith.constant 0 : index
    %c0_7 = arith.constant 0 : index
    %9 = vector.load %arg4[%c0_6, %c0_7] : memref<64x128xf32, #tpu.memory_space<vmem>>, vector<64x128xf32>
    tpu.vector_store %arg4[%c0_6, %c0_7], %8 {strides = array<i32>} : memref<64x128xf32, #tpu.memory_space<vmem>>, vector<64x128xf32>,
    return
  }
  func.func @transform_0(%arg0: i32) -> (i32, i32) {
    %c0_i32 = arith.constant 0 : i32
    %c0_i32_0 = arith.constant 0 : i32
    return %arg0, %c0_i32 : i32, i32
  }
  func.func @transform_1(%arg0: i32) -> (i32, i32) {
    %c0_i32 = arith.constant 0 : i32
    %c0_i32_0 = arith.constant 0 : i32
    %c0_i32_1 = arith.constant 0 : i32
    return %c0_i32, %c0_i32_0 : i32, i32
  }
  func.func @transform_2(%arg0: i32) -> (i32, i32) {
    %c0_i32 = arith.constant 0 : i32
    %c0_i32_0 = arith.constant 0 : i32
    %c0_i32_1 = arith.constant 0 : i32
    return %c0_i32, %c0_i32_0 : i32, i32
  }
  func.func @transform_3(%arg0: i32) -> (i32, i32) {
    %c0_i32 = arith.constant 0 : i32
    %c0_i32_0 = arith.constant 0 : i32
    return %arg0, %c0_i32 : i32, i32
  }
}

module attributes {stable_mosaic.version = 11 : i64} {
  func.func @_fused_linear_kernel(%arg0: i32, %arg1: memref<64x128xf32, #tpu.memory_space<vmem>>, %arg2: memref<1x128xf32, #tpu.memory_space<vmem>>, %arg3: memref<1x128xf32, #tpu.memory_space<vmem>>, %arg4: memref<128x384xbf16, #tpu.memory_space<vmem>>, %arg5: memref<1x384xf32, #tpu.memory_space<vmem>>, %arg6: memref<3x64x128xbf16, #tpu.memory_space<vmem>>) attributes {dimension_semantics = [#tpu.dimension_semantics<parallel>], iteration_bounds = array<i64: 2>, scalar_prefetch = 0 : i64, scratch_operands = 0 : i64, tpu.core_type = #tpu.core_type<tc>, window_params = [{transform_indices = @transform_0, window_bounds = array<i64: 64, 128>}, {pipeline_mode = #tpu.pipeline_mode<synchronous>, transform_indices = @transform_1, window_bounds = array<i64: 1, 128>}, {pipeline_mode = #tpu.pipeline_mode<synchronous>, transform_indices = @transform_2, window_bounds = array<i64: 1, 128>}, {pipeline_mode = #tpu.pipeline_mode<synchronous>, transform_indices = @transform_3, window_bounds = array<i64: 128, 384>}, {pipeline_mode = #tpu.pipeline_mode<synchronous>, transform_indices = @transform_4, window_bounds = array<i64: 1, 384>}, {transform_indices = @transform_5, window_bounds = array<i64: 3, 64, 128>}]} {
    %c0 = arith.constant 0 : index
    %c0_0 = arith.constant 0 : index
    %0 = vector.load %arg1[%c0, %c0_0] : memref<64x128xf32, #tpu.memory_space<vmem>>, vector<64x128xf32>
    %cst = arith.constant dense<0.000000e+00> : vector<64xf32>
    %1 = vector.multi_reduction <add>, %0, %cst [1] : vector<64x128xf32> to vector<64xf32>
    %2 = vector.shape_cast %1 : vector<64xf32> to vector<64x1xf32>
    %cst_1 = arith.constant 1.280000e+02 : f32
    %3 = vector.broadcast %cst_1 : f32 to vector<64x1xf32>
    %4 = arith.divf %2, %3 : vector<64x1xf32>
    %5 = vector.broadcast %4 : vector<64x1xf32> to vector<64x128xf32>
    %6 = arith.subf %0, %5 : vector<64x128xf32>
    %7 = arith.mulf %6, %6 : vector<64x128xf32>
    %cst_2 = arith.constant dense<0.000000e+00> : vector<64xf32>
    %8 = vector.multi_reduction <add>, %7, %cst_2 [1] : vector<64x128xf32> to vector<64xf32>
    %9 = vector.shape_cast %8 : vector<64xf32> to vector<64x1xf32>
    %cst_3 = arith.constant 1.280000e+02 : f32
    %10 = vector.broadcast %cst_3 : f32 to vector<64x1xf32>
    %11 = arith.divf %9, %10 : vector<64x1xf32>
    %12 = vector.broadcast %4 : vector<64x1xf32> to vector<64x128xf32>
    %13 = arith.subf %0, %12 : vector<64x128xf32>
    %cst_4 = arith.constant 9.99999974E-6 : f32
    %14 = vector.broadcast %cst_4 : f32 to vector<64x1xf32>
    %15 = arith.addf %11, %14 : vector<64x1xf32>
    %16 = math.rsqrt %15 : vector<64x1xf32>
    %17 = vector.broadcast %16 : vector<64x1xf32> to vector<64x128xf32>
    %18 = arith.mulf %13, %17 : vector<64x128xf32>
    %c0_5 = arith.constant 0 : index
    %c0_6 = arith.constant 0 : index
    %19 = vector.load %arg2[%c0_5, %c0_6] : memref<1x128xf32, #tpu.memory_space<vmem>>, vector<1x128xf32>
    %20 = vector.broadcast %19 : vector<1x128xf32> to vector<64x128xf32>
    %21 = arith.mulf %18, %20 : vector<64x128xf32>
    %c0_7 = arith.constant 0 : index
    %c0_8 = arith.constant 0 : index
    %22 = vector.load %arg3[%c0_7, %c0_8] : memref<1x128xf32, #tpu.memory_space<vmem>>, vector<1x128xf32>
    %23 = vector.broadcast %22 : vector<1x128xf32> to vector<64x128xf32>
    %24 = arith.addf %21, %23 : vector<64x128xf32>
    %25 = arith.truncf %24 : vector<64x128xf32> to vector<64x128xbf16>
    %c0_9 = arith.constant 0 : index
    %c0_10 = arith.constant 0 : index
    %26 = vector.load %arg4[%c0_9, %c0_10] : memref<128x384xbf16, #tpu.memory_space<vmem>>, vector<128x384xbf16>
    %cst_11 = arith.constant dense<0.000000e+00> : vector<64x384xf32>
    %27 = tpu.matmul %25, %26, %cst_11 {dimension_numbers = #tpu.dot_dimension_numbers<[1], [0], [0], [1], [0, 0, 1, 1], [], []>} : vector<64x128xbf16>, vector<128x384xbf16>, vector<64x384xf32> -> vector<64x384xf32>
    %c0_12 = arith.constant 0 : index
    %c0_13 = arith.constant 0 : index
    %28 = vector.load %arg5[%c0_12, %c0_13] : memref<1x384xf32, #tpu.memory_space<vmem>>, vector<1x384xf32>
    %29 = vector.broadcast %28 : vector<1x384xf32> to vector<64x384xf32>
    %30 = arith.addf %27, %29 : vector<64x384xf32>
    %31 = vector.extract_strided_slice %30 {offsets = [0, 0], sizes = [64, 128], strides = [1, 1]} : vector<64x384xf32> to vector<64x128xf32>
    %32 = arith.truncf %31 : vector<64x128xf32> to vector<64x128xbf16>
    %c0_14 = arith.constant 0 : index
    %c0_15 = arith.constant 0 : index
    %c0_16 = arith.constant 0 : index
    %33 = vector.load %arg6[%c0_14, %c0_15, %c0_16] : memref<3x64x128xbf16, #tpu.memory_space<vmem>>, vector<1x64x128xbf16>
    %34 = vector.shape_cast %33 : vector<1x64x128xbf16> to vector<64x128xbf16>
    %35 = vector.shape_cast %32 : vector<64x128xbf16> to vector<1x64x128xbf16>
    tpu.vector_store %arg6[%c0_14, %c0_15, %c0_16], %35 {strides = array<i32>} : memref<3x64x128xbf16, #tpu.memory_space<vmem>>, vector<1x64x128xbf16>,
    %36 = vector.extract_strided_slice %30 {offsets = [0, 128], sizes = [64, 128], strides = [1, 1]} : vector<64x384xf32> to vector<64x128xf32>
    %37 = arith.truncf %36 : vector<64x128xf32> to vector<64x128xbf16>
    %c1 = arith.constant 1 : index
    %c0_17 = arith.constant 0 : index
    %c0_18 = arith.constant 0 : index
    %38 = vector.load %arg6[%c1, %c0_17, %c0_18] : memref<3x64x128xbf16, #tpu.memory_space<vmem>>, vector<1x64x128xbf16>
    %39 = vector.shape_cast %38 : vector<1x64x128xbf16> to vector<64x128xbf16>
    %40 = vector.shape_cast %37 : vector<64x128xbf16> to vector<1x64x128xbf16>
    tpu.vector_store %arg6[%c1, %c0_17, %c0_18], %40 {strides = array<i32>} : memref<3x64x128xbf16, #tpu.memory_space<vmem>>, vector<1x64x128xbf16>,
    %41 = vector.extract_strided_slice %30 {offsets = [0, 256], sizes = [64, 128], strides = [1, 1]} : vector<64x384xf32> to vector<64x128xf32>
    %42 = arith.truncf %41 : vector<64x128xf32> to vector<64x128xbf16>
    %c2 = arith.constant 2 : index
    %c0_19 = arith.constant 0 : index
    %c0_20 = arith.constant 0 : index
    %43 = vector.load %arg6[%c2, %c0_19, %c0_20] : memref<3x64x128xbf16, #tpu.memory_space<vmem>>, vector<1x64x128xbf16>
    %44 = vector.shape_cast %43 : vector<1x64x128xbf16> to vector<64x128xbf16>
    %45 = vector.shape_cast %42 : vector<64x128xbf16> to vector<1x64x128xbf16>
    tpu.vector_store %arg6[%c2, %c0_19, %c0_20], %45 {strides = array<i32>} : memref<3x64x128xbf16, #tpu.memory_space<vmem>>, vector<1x64x128xbf16>,
    return
  }
  func.func @transform_0(%arg0: i32) -> (i32, i32) {
    %c0_i32 = arith.constant 0 : i32
    %c0_i32_0 = arith.constant 0 : i32
    return %arg0, %c0_i32 : i32, i32
  }
  func.func @transform_1(%arg0: i32) -> (i32, i32) {
    %c0_i32 = arith.constant 0 : i32
    %c0_i32_0 = arith.constant 0 : i32
    %c0_i32_1 = arith.constant 0 : i32
    return %c0_i32, %c0_i32_0 : i32, i32
  }
  func.func @transform_2(%arg0: i32) -> (i32, i32) {
    %c0_i32 = arith.constant 0 : i32
    %c0_i32_0 = arith.constant 0 : i32
    %c0_i32_1 = arith.constant 0 : i32
    return %c0_i32, %c0_i32_0 : i32, i32
  }
  func.func @transform_3(%arg0: i32) -> (i32, i32) {
    %c0_i32 = arith.constant 0 : i32
    %c0_i32_0 = arith.constant 0 : i32
    %c0_i32_1 = arith.constant 0 : i32
    return %c0_i32, %c0_i32_0 : i32, i32
  }
  func.func @transform_4(%arg0: i32) -> (i32, i32) {
    %c0_i32 = arith.constant 0 : i32
    %c0_i32_0 = arith.constant 0 : i32
    %c0_i32_1 = arith.constant 0 : i32
    return %c0_i32, %c0_i32_0 : i32, i32
  }
  func.func @transform_5(%arg0: i32) -> (i32, i32, i32) {
    %c0_i32 = arith.constant 0 : i32
    %c0_i32_0 = arith.constant 0 : i32
    %c0_i32_1 = arith.constant 0 : i32
    return %c0_i32, %arg0, %c0_i32_0 : i32, i32, i32
  }
}

module attributes {stable_mosaic.version = 11 : i64} {
  func.func @_flash_attn_kernel(%arg0: i32, %arg1: i32, %arg2: i32, %arg3: memref<1x1x64x128xbf16, #tpu.memory_space<vmem>>, %arg4: memref<1x1x64x128xbf16, #tpu.memory_space<vmem>>, %arg5: memref<1x1x64x128xbf16, #tpu.memory_space<vmem>>, %arg6: memref<1x64x128xbf16, #tpu.memory_space<vmem>>, %arg7: memref<64x128xf32, #tpu.memory_space<vmem>>, %arg8: memref<4x64x1xf32, #tpu.memory_space<vmem>>, %arg9: memref<4x64x1xf32, #tpu.memory_space<vmem>>) attributes {dimension_semantics = [#tpu.dimension_semantics<parallel>, #tpu.dimension_semantics<parallel>, #tpu.dimension_semantics<arbitrary>], iteration_bounds = array<i64: 2, 1, 1>, scalar_prefetch = 0 : i64, scratch_operands = 3 : i64, tpu.core_type = #tpu.core_type<tc>, window_params = [{transform_indices = @transform_0, window_bounds = array<i64: 1, 1, 64, 128>}, {transform_indices = @transform_1, window_bounds = array<i64: 1, 1, 64, 128>}, {transform_indices = @transform_2, window_bounds = array<i64: 1, 1, 64, 128>}, {transform_indices = @transform_3, window_bounds = array<i64: 1, 64, 128>}]} {
    %c0_i32 = arith.constant 0 : i32
    %0 = arith.cmpi eq, %arg2, %c0_i32 : i32
    %1 = arith.extui %0 : i1 to i32
    %c0_i32_0 = arith.constant 0 : i32
    %2 = arith.cmpi ne, %1, %c0_i32_0 : i32
    scf.if %2 {
      %cst_91 = arith.constant 0.000000e+00 : f32
      %152 = vector.broadcast %cst_91 : f32 to vector<64x128xf32>
      %c0_92 = arith.constant 0 : index
      %c0_93 = arith.constant 0 : index
      %153 = vector.load %arg7[%c0_92, %c0_93] : memref<64x128xf32, #tpu.memory_space<vmem>>, vector<64x128xf32>
      tpu.vector_store %arg7[%c0_92, %c0_93], %152 {strides = array<i32>} : memref<64x128xf32, #tpu.memory_space<vmem>>, vector<64x128xf32>,
      %cst_94 = arith.constant 0xFF800000 : f32
      %154 = vector.broadcast %cst_94 : f32 to vector<4x64x1xf32>
      %c0_95 = arith.constant 0 : index
      %c0_96 = arith.constant 0 : index
      %c0_97 = arith.constant 0 : index
      %155 = vector.load %arg8[%c0_95, %c0_96, %c0_97] : memref<4x64x1xf32, #tpu.memory_space<vmem>>, vector<4x64x1xf32>
      tpu.vector_store %arg8[%c0_95, %c0_96, %c0_97], %154 {strides = array<i32>} : memref<4x64x1xf32, #tpu.memory_space<vmem>>, vector<4x64x1xf32>,
      %cst_98 = arith.constant 0.000000e+00 : f32
      %156 = vector.broadcast %cst_98 : f32 to vector<4x64x1xf32>
      %c0_99 = arith.constant 0 : index
      %c0_100 = arith.constant 0 : index
      %c0_101 = arith.constant 0 : index
      %157 = vector.load %arg9[%c0_99, %c0_100, %c0_101] : memref<4x64x1xf32, #tpu.memory_space<vmem>>, vector<4x64x1xf32>
      tpu.vector_store %arg9[%c0_99, %c0_100, %c0_101], %156 {strides = array<i32>} : memref<4x64x1xf32, #tpu.memory_space<vmem>>, vector<4x64x1xf32>,
    } else {
    }
    %c0 = arith.constant 0 : index
    %c0_1 = arith.constant 0 : index
    %c0_2 = arith.constant 0 : index
    %c0_3 = arith.constant 0 : index
    %3 = vector.load %arg3[%c0, %c0_1, %c0_2, %c0_3] : memref<1x1x64x128xbf16, #tpu.memory_space<vmem>>, vector<1x1x64x128xbf16>
    %4 = vector.shape_cast %3 : vector<1x1x64x128xbf16> to vector<64x128xbf16>
    %c0_4 = arith.constant 0 : index
    %c0_5 = arith.constant 0 : index
    %c0_6 = arith.constant 0 : index
    %c0_7 = arith.constant 0 : index
    %5 = vector.load %arg4[%c0_4, %c0_5, %c0_6, %c0_7] : memref<1x1x64x128xbf16, #tpu.memory_space<vmem>>, vector<1x1x64x128xbf16>
    %6 = vector.shape_cast %5 : vector<1x1x64x128xbf16> to vector<64x128xbf16>
    %c0_8 = arith.constant 0 : index
    %c0_9 = arith.constant 0 : index
    %c0_10 = arith.constant 0 : index
    %c0_11 = arith.constant 0 : index
    %7 = vector.load %arg5[%c0_8, %c0_9, %c0_10, %c0_11] : memref<1x1x64x128xbf16, #tpu.memory_space<vmem>>, vector<1x1x64x128xbf16>
    %8 = vector.shape_cast %7 : vector<1x1x64x128xbf16> to vector<64x128xbf16>
    %9 = vector.extract_strided_slice %4 {offsets = [0, 0], sizes = [64, 32], strides = [1, 1]} : vector<64x128xbf16> to vector<64x32xbf16>
    %10 = vector.extract_strided_slice %6 {offsets = [0, 0], sizes = [64, 32], strides = [1, 1]} : vector<64x128xbf16> to vector<64x32xbf16>
    %cst = arith.constant dense<0.000000e+00> : vector<64x64xf32>
    %11 = tpu.matmul %9, %10, %cst {dimension_numbers = #tpu.dot_dimension_numbers<[1], [1], [0], [0], [0, 0, 1, 0], [], []>} : vector<64x32xbf16>, vector<64x32xbf16>, vector<64x64xf32> -> vector<64x64xf32>
    %cst_12 = arith.constant 0.176776692 : f32
    %12 = vector.broadcast %cst_12 : f32 to vector<64x64xf32>
    %13 = arith.mulf %11, %12 : vector<64x64xf32>
    %c0_13 = arith.constant 0 : index
    %c0_14 = arith.constant 0 : index
    %c0_15 = arith.constant 0 : index
    %14 = vector.load %arg8[%c0_13, %c0_14, %c0_15] : memref<4x64x1xf32, #tpu.memory_space<vmem>>, vector<1x64x1xf32>
    %15 = vector.shape_cast %14 : vector<1x64x1xf32> to vector<64x1xf32>
    %cst_16 = arith.constant dense<0xFF800000> : vector<64xf32>
    %16 = vector.multi_reduction <maximumf>, %13, %cst_16 [1] : vector<64x64xf32> to vector<64xf32>
    %17 = vector.shape_cast %16 : vector<64xf32> to vector<64x1xf32>
    %18 = arith.maximumf %15, %17 : vector<64x1xf32>
    %19 = arith.subf %15, %18 : vector<64x1xf32>
    %20 = math.exp %19 : vector<64x1xf32>
    %21 = vector.broadcast %18 : vector<64x1xf32> to vector<64x64xf32>
    %22 = arith.subf %13, %21 : vector<64x64xf32>
    %23 = math.exp %22 : vector<64x64xf32>
    %c0_17 = arith.constant 0 : index
    %c0_18 = arith.constant 0 : index
    %c0_19 = arith.constant 0 : index
    %24 = vector.load %arg9[%c0_17, %c0_18, %c0_19] : memref<4x64x1xf32, #tpu.memory_space<vmem>>, vector<1x64x1xf32>
    %25 = vector.shape_cast %24 : vector<1x64x1xf32> to vector<64x1xf32>
    %26 = arith.mulf %20, %25 : vector<64x1xf32>
    %cst_20 = arith.constant dense<0.000000e+00> : vector<64xf32>
    %27 = vector.multi_reduction <add>, %23, %cst_20 [1] : vector<64x64xf32> to vector<64xf32>
    %28 = vector.shape_cast %27 : vector<64xf32> to vector<64x1xf32>
    %29 = arith.addf %26, %28 : vector<64x1xf32>
    %c0_21 = arith.constant 0 : index
    %c0_22 = arith.constant 0 : index
    %c0_23 = arith.constant 0 : index
    %30 = vector.load %arg9[%c0_21, %c0_22, %c0_23] : memref<4x64x1xf32, #tpu.memory_space<vmem>>, vector<1x64x1xf32>
    %31 = vector.shape_cast %30 : vector<1x64x1xf32> to vector<64x1xf32>
    %32 = vector.shape_cast %29 : vector<64x1xf32> to vector<1x64x1xf32>
    tpu.vector_store %arg9[%c0_21, %c0_22, %c0_23], %32 {strides = array<i32>} : memref<4x64x1xf32, #tpu.memory_space<vmem>>, vector<1x64x1xf32>,
    %33 = arith.truncf %23 : vector<64x64xf32> to vector<64x64xbf16>
    %34 = vector.extract_strided_slice %8 {offsets = [0, 0], sizes = [64, 32], strides = [1, 1]} : vector<64x128xbf16> to vector<64x32xbf16>
    %cst_24 = arith.constant dense<0.000000e+00> : vector<64x32xf32>
    %35 = tpu.matmul %33, %34, %cst_24 {dimension_numbers = #tpu.dot_dimension_numbers<[1], [0], [0], [1], [0, 0, 1, 1], [], []>} : vector<64x64xbf16>, vector<64x32xbf16>, vector<64x32xf32> -> vector<64x32xf32>
    %c0_25 = arith.constant 0 : index
    %c0_26 = arith.constant 0 : index
    %36 = vector.load %arg7[%c0_25, %c0_26] : memref<64x128xf32, #tpu.memory_space<vmem>>, vector<64x32xf32>
    %37 = vector.broadcast %20 : vector<64x1xf32> to vector<64x32xf32>
    %38 = arith.mulf %37, %36 : vector<64x32xf32>
    %39 = arith.addf %38, %35 : vector<64x32xf32>
    %c0_27 = arith.constant 0 : index
    %c0_28 = arith.constant 0 : index
    %40 = vector.load %arg7[%c0_27, %c0_28] : memref<64x128xf32, #tpu.memory_space<vmem>>, vector<64x32xf32>
    tpu.vector_store %arg7[%c0_27, %c0_28], %39 {strides = array<i32>} : memref<64x128xf32, #tpu.memory_space<vmem>>, vector<64x32xf32>,
    %c0_29 = arith.constant 0 : index
    %c0_30 = arith.constant 0 : index
    %c0_31 = arith.constant 0 : index
    %41 = vector.load %arg8[%c0_29, %c0_30, %c0_31] : memref<4x64x1xf32, #tpu.memory_space<vmem>>, vector<1x64x1xf32>
    %42 = vector.shape_cast %41 : vector<1x64x1xf32> to vector<64x1xf32>
    %43 = vector.shape_cast %18 : vector<64x1xf32> to vector<1x64x1xf32>
    tpu.vector_store %arg8[%c0_29, %c0_30, %c0_31], %43 {strides = array<i32>} : memref<4x64x1xf32, #tpu.memory_space<vmem>>, vector<1x64x1xf32>,
    %44 = vector.extract_strided_slice %4 {offsets = [0, 32], sizes = [64, 32], strides = [1, 1]} : vector<64x128xbf16> to vector<64x32xbf16>
    %45 = vector.extract_strided_slice %6 {offsets = [0, 32], sizes = [64, 32], strides = [1, 1]} : vector<64x128xbf16> to vector<64x32xbf16>
    %cst_32 = arith.constant dense<0.000000e+00> : vector<64x64xf32>
    %46 = tpu.matmul %44, %45, %cst_32 {dimension_numbers = #tpu.dot_dimension_numbers<[1], [1], [0], [0], [0, 0, 1, 0], [], []>} : vector<64x32xbf16>, vector<64x32xbf16>, vector<64x64xf32> -> vector<64x64xf32>
    %cst_33 = arith.constant 0.176776692 : f32
    %47 = vector.broadcast %cst_33 : f32 to vector<64x64xf32>
    %48 = arith.mulf %46, %47 : vector<64x64xf32>
    %c1 = arith.constant 1 : index
    %c0_34 = arith.constant 0 : index
    %c0_35 = arith.constant 0 : index
    %49 = vector.load %arg8[%c1, %c0_34, %c0_35] : memref<4x64x1xf32, #tpu.memory_space<vmem>>, vector<1x64x1xf32>
    %50 = vector.shape_cast %49 : vector<1x64x1xf32> to vector<64x1xf32>
    %cst_36 = arith.constant dense<0xFF800000> : vector<64xf32>
    %51 = vector.multi_reduction <maximumf>, %48, %cst_36 [1] : vector<64x64xf32> to vector<64xf32>
    %52 = vector.shape_cast %51 : vector<64xf32> to vector<64x1xf32>
    %53 = arith.maximumf %50, %52 : vector<64x1xf32>
    %54 = arith.subf %50, %53 : vector<64x1xf32>
    %55 = math.exp %54 : vector<64x1xf32>
    %56 = vector.broadcast %53 : vector<64x1xf32> to vector<64x64xf32>
    %57 = arith.subf %48, %56 : vector<64x64xf32>
    %58 = math.exp %57 : vector<64x64xf32>
    %c1_37 = arith.constant 1 : index
    %c0_38 = arith.constant 0 : index
    %c0_39 = arith.constant 0 : index
    %59 = vector.load %arg9[%c1_37, %c0_38, %c0_39] : memref<4x64x1xf32, #tpu.memory_space<vmem>>, vector<1x64x1xf32>
    %60 = vector.shape_cast %59 : vector<1x64x1xf32> to vector<64x1xf32>
    %61 = arith.mulf %55, %60 : vector<64x1xf32>
    %cst_40 = arith.constant dense<0.000000e+00> : vector<64xf32>
    %62 = vector.multi_reduction <add>, %58, %cst_40 [1] : vector<64x64xf32> to vector<64xf32>
    %63 = vector.shape_cast %62 : vector<64xf32> to vector<64x1xf32>
    %64 = arith.addf %61, %63 : vector<64x1xf32>
    %c1_41 = arith.constant 1 : index
    %c0_42 = arith.constant 0 : index
    %c0_43 = arith.constant 0 : index
    %65 = vector.load %arg9[%c1_41, %c0_42, %c0_43] : memref<4x64x1xf32, #tpu.memory_space<vmem>>, vector<1x64x1xf32>
    %66 = vector.shape_cast %65 : vector<1x64x1xf32> to vector<64x1xf32>
    %67 = vector.shape_cast %64 : vector<64x1xf32> to vector<1x64x1xf32>
    tpu.vector_store %arg9[%c1_41, %c0_42, %c0_43], %67 {strides = array<i32>} : memref<4x64x1xf32, #tpu.memory_space<vmem>>, vector<1x64x1xf32>,
    %68 = arith.truncf %58 : vector<64x64xf32> to vector<64x64xbf16>
    %69 = vector.extract_strided_slice %8 {offsets = [0, 32], sizes = [64, 32], strides = [1, 1]} : vector<64x128xbf16> to vector<64x32xbf16>
    %cst_44 = arith.constant dense<0.000000e+00> : vector<64x32xf32>
    %70 = tpu.matmul %68, %69, %cst_44 {dimension_numbers = #tpu.dot_dimension_numbers<[1], [0], [0], [1], [0, 0, 1, 1], [], []>} : vector<64x64xbf16>, vector<64x32xbf16>, vector<64x32xf32> -> vector<64x32xf32>
    %c0_45 = arith.constant 0 : index
    %c32 = arith.constant 32 : index
    %71 = vector.load %arg7[%c0_45, %c32] : memref<64x128xf32, #tpu.memory_space<vmem>>, vector<64x32xf32>
    %72 = vector.broadcast %55 : vector<64x1xf32> to vector<64x32xf32>
    %73 = arith.mulf %72, %71 : vector<64x32xf32>
    %74 = arith.addf %73, %70 : vector<64x32xf32>
    %c0_46 = arith.constant 0 : index
    %c32_47 = arith.constant 32 : index
    %75 = vector.load %arg7[%c0_46, %c32_47] : memref<64x128xf32, #tpu.memory_space<vmem>>, vector<64x32xf32>
    tpu.vector_store %arg7[%c0_46, %c32_47], %74 {strides = array<i32>} : memref<64x128xf32, #tpu.memory_space<vmem>>, vector<64x32xf32>,
    %c1_48 = arith.constant 1 : index
    %c0_49 = arith.constant 0 : index
    %c0_50 = arith.constant 0 : index
    %76 = vector.load %arg8[%c1_48, %c0_49, %c0_50] : memref<4x64x1xf32, #tpu.memory_space<vmem>>, vector<1x64x1xf32>
    %77 = vector.shape_cast %76 : vector<1x64x1xf32> to vector<64x1xf32>
    %78 = vector.shape_cast %53 : vector<64x1xf32> to vector<1x64x1xf32>
    tpu.vector_store %arg8[%c1_48, %c0_49, %c0_50], %78 {strides = array<i32>} : memref<4x64x1xf32, #tpu.memory_space<vmem>>, vector<1x64x1xf32>,
    %79 = vector.extract_strided_slice %4 {offsets = [0, 64], sizes = [64, 32], strides = [1, 1]} : vector<64x128xbf16> to vector<64x32xbf16>
    %80 = vector.extract_strided_slice %6 {offsets = [0, 64], sizes = [64, 32], strides = [1, 1]} : vector<64x128xbf16> to vector<64x32xbf16>
    %cst_51 = arith.constant dense<0.000000e+00> : vector<64x64xf32>
    %81 = tpu.matmul %79, %80, %cst_51 {dimension_numbers = #tpu.dot_dimension_numbers<[1], [1], [0], [0], [0, 0, 1, 0], [], []>} : vector<64x32xbf16>, vector<64x32xbf16>, vector<64x64xf32> -> vector<64x64xf32>
    %cst_52 = arith.constant 0.176776692 : f32
    %82 = vector.broadcast %cst_52 : f32 to vector<64x64xf32>
    %83 = arith.mulf %81, %82 : vector<64x64xf32>
    %c2 = arith.constant 2 : index
    %c0_53 = arith.constant 0 : index
    %c0_54 = arith.constant 0 : index
    %84 = vector.load %arg8[%c2, %c0_53, %c0_54] : memref<4x64x1xf32, #tpu.memory_space<vmem>>, vector<1x64x1xf32>
    %85 = vector.shape_cast %84 : vector<1x64x1xf32> to vector<64x1xf32>
    %cst_55 = arith.constant dense<0xFF800000> : vector<64xf32>
    %86 = vector.multi_reduction <maximumf>, %83, %cst_55 [1] : vector<64x64xf32> to vector<64xf32>
    %87 = vector.shape_cast %86 : vector<64xf32> to vector<64x1xf32>
    %88 = arith.maximumf %85, %87 : vector<64x1xf32>
    %89 = arith.subf %85, %88 : vector<64x1xf32>
    %90 = math.exp %89 : vector<64x1xf32>
    %91 = vector.broadcast %88 : vector<64x1xf32> to vector<64x64xf32>
    %92 = arith.subf %83, %91 : vector<64x64xf32>
    %93 = math.exp %92 : vector<64x64xf32>
    %c2_56 = arith.constant 2 : index
    %c0_57 = arith.constant 0 : index
    %c0_58 = arith.constant 0 : index
    %94 = vector.load %arg9[%c2_56, %c0_57, %c0_58] : memref<4x64x1xf32, #tpu.memory_space<vmem>>, vector<1x64x1xf32>
    %95 = vector.shape_cast %94 : vector<1x64x1xf32> to vector<64x1xf32>
    %96 = arith.mulf %90, %95 : vector<64x1xf32>
    %cst_59 = arith.constant dense<0.000000e+00> : vector<64xf32>
    %97 = vector.multi_reduction <add>, %93, %cst_59 [1] : vector<64x64xf32> to vector<64xf32>
    %98 = vector.shape_cast %97 : vector<64xf32> to vector<64x1xf32>
    %99 = arith.addf %96, %98 : vector<64x1xf32>
    %c2_60 = arith.constant 2 : index
    %c0_61 = arith.constant 0 : index
    %c0_62 = arith.constant 0 : index
    %100 = vector.load %arg9[%c2_60, %c0_61, %c0_62] : memref<4x64x1xf32, #tpu.memory_space<vmem>>, vector<1x64x1xf32>
    %101 = vector.shape_cast %100 : vector<1x64x1xf32> to vector<64x1xf32>
    %102 = vector.shape_cast %99 : vector<64x1xf32> to vector<1x64x1xf32>
    tpu.vector_store %arg9[%c2_60, %c0_61, %c0_62], %102 {strides = array<i32>} : memref<4x64x1xf32, #tpu.memory_space<vmem>>, vector<1x64x1xf32>,
    %103 = arith.truncf %93 : vector<64x64xf32> to vector<64x64xbf16>
    %104 = vector.extract_strided_slice %8 {offsets = [0, 64], sizes = [64, 32], strides = [1, 1]} : vector<64x128xbf16> to vector<64x32xbf16>
    %cst_63 = arith.constant dense<0.000000e+00> : vector<64x32xf32>
    %105 = tpu.matmul %103, %104, %cst_63 {dimension_numbers = #tpu.dot_dimension_numbers<[1], [0], [0], [1], [0, 0, 1, 1], [], []>} : vector<64x64xbf16>, vector<64x32xbf16>, vector<64x32xf32> -> vector<64x32xf32>
    %c0_64 = arith.constant 0 : index
    %c64 = arith.constant 64 : index
    %106 = vector.load %arg7[%c0_64, %c64] : memref<64x128xf32, #tpu.memory_space<vmem>>, vector<64x32xf32>
    %107 = vector.broadcast %90 : vector<64x1xf32> to vector<64x32xf32>
    %108 = arith.mulf %107, %106 : vector<64x32xf32>
    %109 = arith.addf %108, %105 : vector<64x32xf32>
    %c0_65 = arith.constant 0 : index
    %c64_66 = arith.constant 64 : index
    %110 = vector.load %arg7[%c0_65, %c64_66] : memref<64x128xf32, #tpu.memory_space<vmem>>, vector<64x32xf32>
    tpu.vector_store %arg7[%c0_65, %c64_66], %109 {strides = array<i32>} : memref<64x128xf32, #tpu.memory_space<vmem>>, vector<64x32xf32>,
    %c2_67 = arith.constant 2 : index
    %c0_68 = arith.constant 0 : index
    %c0_69 = arith.constant 0 : index
    %111 = vector.load %arg8[%c2_67, %c0_68, %c0_69] : memref<4x64x1xf32, #tpu.memory_space<vmem>>, vector<1x64x1xf32>
    %112 = vector.shape_cast %111 : vector<1x64x1xf32> to vector<64x1xf32>
    %113 = vector.shape_cast %88 : vector<64x1xf32> to vector<1x64x1xf32>
    tpu.vector_store %arg8[%c2_67, %c0_68, %c0_69], %113 {strides = array<i32>} : memref<4x64x1xf32, #tpu.memory_space<vmem>>, vector<1x64x1xf32>,
    %114 = vector.extract_strided_slice %4 {offsets = [0, 96], sizes = [64, 32], strides = [1, 1]} : vector<64x128xbf16> to vector<64x32xbf16>
    %115 = vector.extract_strided_slice %6 {offsets = [0, 96], sizes = [64, 32], strides = [1, 1]} : vector<64x128xbf16> to vector<64x32xbf16>
    %cst_70 = arith.constant dense<0.000000e+00> : vector<64x64xf32>
    %116 = tpu.matmul %114, %115, %cst_70 {dimension_numbers = #tpu.dot_dimension_numbers<[1], [1], [0], [0], [0, 0, 1, 0], [], []>} : vector<64x32xbf16>, vector<64x32xbf16>, vector<64x64xf32> -> vector<64x64xf32>
    %cst_71 = arith.constant 0.176776692 : f32
    %117 = vector.broadcast %cst_71 : f32 to vector<64x64xf32>
    %118 = arith.mulf %116, %117 : vector<64x64xf32>
    %c3 = arith.constant 3 : index
    %c0_72 = arith.constant 0 : index
    %c0_73 = arith.constant 0 : index
    %119 = vector.load %arg8[%c3, %c0_72, %c0_73] : memref<4x64x1xf32, #tpu.memory_space<vmem>>, vector<1x64x1xf32>
    %120 = vector.shape_cast %119 : vector<1x64x1xf32> to vector<64x1xf32>
    %cst_74 = arith.constant dense<0xFF800000> : vector<64xf32>
    %121 = vector.multi_reduction <maximumf>, %118, %cst_74 [1] : vector<64x64xf32> to vector<64xf32>
    %122 = vector.shape_cast %121 : vector<64xf32> to vector<64x1xf32>
    %123 = arith.maximumf %120, %122 : vector<64x1xf32>
    %124 = arith.subf %120, %123 : vector<64x1xf32>
    %125 = math.exp %124 : vector<64x1xf32>
    %126 = vector.broadcast %123 : vector<64x1xf32> to vector<64x64xf32>
    %127 = arith.subf %118, %126 : vector<64x64xf32>
    %128 = math.exp %127 : vector<64x64xf32>
    %c3_75 = arith.constant 3 : index
    %c0_76 = arith.constant 0 : index
    %c0_77 = arith.constant 0 : index
    %129 = vector.load %arg9[%c3_75, %c0_76, %c0_77] : memref<4x64x1xf32, #tpu.memory_space<vmem>>, vector<1x64x1xf32>
    %130 = vector.shape_cast %129 : vector<1x64x1xf32> to vector<64x1xf32>
    %131 = arith.mulf %125, %130 : vector<64x1xf32>
    %cst_78 = arith.constant dense<0.000000e+00> : vector<64xf32>
    %132 = vector.multi_reduction <add>, %128, %cst_78 [1] : vector<64x64xf32> to vector<64xf32>
    %133 = vector.shape_cast %132 : vector<64xf32> to vector<64x1xf32>
    %134 = arith.addf %131, %133 : vector<64x1xf32>
    %c3_79 = arith.constant 3 : index
    %c0_80 = arith.constant 0 : index
    %c0_81 = arith.constant 0 : index
    %135 = vector.load %arg9[%c3_79, %c0_80, %c0_81] : memref<4x64x1xf32, #tpu.memory_space<vmem>>, vector<1x64x1xf32>
    %136 = vector.shape_cast %135 : vector<1x64x1xf32> to vector<64x1xf32>
    %137 = vector.shape_cast %134 : vector<64x1xf32> to vector<1x64x1xf32>
    tpu.vector_store %arg9[%c3_79, %c0_80, %c0_81], %137 {strides = array<i32>} : memref<4x64x1xf32, #tpu.memory_space<vmem>>, vector<1x64x1xf32>,
    %138 = arith.truncf %128 : vector<64x64xf32> to vector<64x64xbf16>
    %139 = vector.extract_strided_slice %8 {offsets = [0, 96], sizes = [64, 32], strides = [1, 1]} : vector<64x128xbf16> to vector<64x32xbf16>
    %cst_82 = arith.constant dense<0.000000e+00> : vector<64x32xf32>
    %140 = tpu.matmul %138, %139, %cst_82 {dimension_numbers = #tpu.dot_dimension_numbers<[1], [0], [0], [1], [0, 0, 1, 1], [], []>} : vector<64x64xbf16>, vector<64x32xbf16>, vector<64x32xf32> -> vector<64x32xf32>
    %c0_83 = arith.constant 0 : index
    %c96 = arith.constant 96 : index
    %141 = vector.load %arg7[%c0_83, %c96] : memref<64x128xf32, #tpu.memory_space<vmem>>, vector<64x32xf32>
    %142 = vector.broadcast %125 : vector<64x1xf32> to vector<64x32xf32>
    %143 = arith.mulf %142, %141 : vector<64x32xf32>
    %144 = arith.addf %143, %140 : vector<64x32xf32>
    %c0_84 = arith.constant 0 : index
    %c96_85 = arith.constant 96 : index
    %145 = vector.load %arg7[%c0_84, %c96_85] : memref<64x128xf32, #tpu.memory_space<vmem>>, vector<64x32xf32>
    tpu.vector_store %arg7[%c0_84, %c96_85], %144 {strides = array<i32>} : memref<64x128xf32, #tpu.memory_space<vmem>>, vector<64x32xf32>,
    %c3_86 = arith.constant 3 : index
    %c0_87 = arith.constant 0 : index
    %c0_88 = arith.constant 0 : index
    %146 = vector.load %arg8[%c3_86, %c0_87, %c0_88] : memref<4x64x1xf32, #tpu.memory_space<vmem>>, vector<1x64x1xf32>
    %147 = vector.shape_cast %146 : vector<1x64x1xf32> to vector<64x1xf32>
    %148 = vector.shape_cast %123 : vector<64x1xf32> to vector<1x64x1xf32>
    tpu.vector_store %arg8[%c3_86, %c0_87, %c0_88], %148 {strides = array<i32>} : memref<4x64x1xf32, #tpu.memory_space<vmem>>, vector<1x64x1xf32>,
    %c0_i32_89 = arith.constant 0 : i32
    %149 = arith.cmpi eq, %arg2, %c0_i32_89 : i32
    %150 = arith.extui %149 : i1 to i32
    %c0_i32_90 = arith.constant 0 : i32
    %151 = arith.cmpi ne, %150, %c0_i32_90 : i32
    scf.if %151 {
      %c0_91 = arith.constant 0 : index
      %c0_92 = arith.constant 0 : index
      %c0_93 = arith.constant 0 : index
      %152 = vector.load %arg9[%c0_91, %c0_92, %c0_93] : memref<4x64x1xf32, #tpu.memory_space<vmem>>, vector<1x64x1xf32>
      %153 = vector.shape_cast %152 : vector<1x64x1xf32> to vector<64x1xf32>
      %154 = tpu.reciprocal %153 {approx = true} : vector<64x1xf32> -> vector<64x1xf32>
      %155 = vector.shape_cast %154 : vector<64x1xf32> to vector<64x1xf32>
      %156 = vector.broadcast %155 : vector<64x1xf32> to vector<64x32xf32>
      %c1_94 = arith.constant 1 : index
      %c0_95 = arith.constant 0 : index
      %c0_96 = arith.constant 0 : index
      %157 = vector.load %arg9[%c1_94, %c0_95, %c0_96] : memref<4x64x1xf32, #tpu.memory_space<vmem>>, vector<1x64x1xf32>
      %158 = vector.shape_cast %157 : vector<1x64x1xf32> to vector<64x1xf32>
      %159 = tpu.reciprocal %158 {approx = true} : vector<64x1xf32> -> vector<64x1xf32>
      %160 = vector.shape_cast %159 : vector<64x1xf32> to vector<64x1xf32>
      %161 = vector.broadcast %160 : vector<64x1xf32> to vector<64x32xf32>
      %c2_97 = arith.constant 2 : index
      %c0_98 = arith.constant 0 : index
      %c0_99 = arith.constant 0 : index
      %162 = vector.load %arg9[%c2_97, %c0_98, %c0_99] : memref<4x64x1xf32, #tpu.memory_space<vmem>>, vector<1x64x1xf32>
      %163 = vector.shape_cast %162 : vector<1x64x1xf32> to vector<64x1xf32>
      %164 = tpu.reciprocal %163 {approx = true} : vector<64x1xf32> -> vector<64x1xf32>
      %165 = vector.shape_cast %164 : vector<64x1xf32> to vector<64x1xf32>
      %166 = vector.broadcast %165 : vector<64x1xf32> to vector<64x32xf32>
      %c3_100 = arith.constant 3 : index
      %c0_101 = arith.constant 0 : index
      %c0_102 = arith.constant 0 : index
      %167 = vector.load %arg9[%c3_100, %c0_101, %c0_102] : memref<4x64x1xf32, #tpu.memory_space<vmem>>, vector<1x64x1xf32>
      %168 = vector.shape_cast %167 : vector<1x64x1xf32> to vector<64x1xf32>
      %169 = tpu.reciprocal %168 {approx = true} : vector<64x1xf32> -> vector<64x1xf32>
      %170 = vector.shape_cast %169 : vector<64x1xf32> to vector<64x1xf32>
      %171 = vector.broadcast %170 : vector<64x1xf32> to vector<64x32xf32>
      %172 = tpu.concatenate %156, %161, %166, %171 in 1 : vector<64x32xf32>, vector<64x32xf32>, vector<64x32xf32>, vector<64x32xf32> -> vector<64x128xf32>
      %c0_103 = arith.constant 0 : index
      %c0_104 = arith.constant 0 : index
      %173 = vector.load %arg7[%c0_103, %c0_104] : memref<64x128xf32, #tpu.memory_space<vmem>>, vector<64x128xf32>
      %174 = arith.mulf %173, %172 : vector<64x128xf32>
      %175 = arith.truncf %174 : vector<64x128xf32> to vector<64x128xbf16>
      %c0_105 = arith.constant 0 : index
      %c0_106 = arith.constant 0 : index
      %c0_107 = arith.constant 0 : index
      %176 = vector.load %arg6[%c0_105, %c0_106, %c0_107] : memref<1x64x128xbf16, #tpu.memory_space<vmem>>, vector<1x64x128xbf16>
      %177 = vector.shape_cast %176 : vector<1x64x128xbf16> to vector<64x128xbf16>
      %178 = vector.shape_cast %175 : vector<64x128xbf16> to vector<1x64x128xbf16>
      tpu.vector_store %arg6[%c0_105, %c0_106, %c0_107], %178 {strides = array<i32>} : memref<1x64x128xbf16, #tpu.memory_space<vmem>>, vector<1x64x128xbf16>,
    } else {
    }
    return
  }
  func.func @transform_0(%arg0: i32, %arg1: i32, %arg2: i32) -> (i32, i32, i32, i32) {
    %c0_i32 = arith.constant 0 : i32
    %c0_i32_0 = arith.constant 0 : i32
    %c0_i32_1 = arith.constant 0 : i32
    return %c0_i32, %arg0, %arg1, %c0_i32_0 : i32, i32, i32, i32
  }
  func.func @transform_1(%arg0: i32, %arg1: i32, %arg2: i32) -> (i32, i32, i32, i32) {
    %c1_i32 = arith.constant 1 : i32
    %c0_i32 = arith.constant 0 : i32
    %c0_i32_0 = arith.constant 0 : i32
    return %c1_i32, %arg0, %arg2, %c0_i32 : i32, i32, i32, i32
  }
  func.func @transform_2(%arg0: i32, %arg1: i32, %arg2: i32) -> (i32, i32, i32, i32) {
    %c2_i32 = arith.constant 2 : i32
    %c0_i32 = arith.constant 0 : i32
    %c0_i32_0 = arith.constant 0 : i32
    return %c2_i32, %arg0, %arg2, %c0_i32 : i32, i32, i32, i32
  }
  func.func @transform_3(%arg0: i32, %arg1: i32, %arg2: i32) -> (i32, i32, i32) {
    %c0_i32 = arith.constant 0 : i32
    %c0_i32_0 = arith.constant 0 : i32
    return %arg0, %arg1, %c0_i32 : i32, i32, i32
  }
}

module attributes {stable_mosaic.version = 11 : i64} {
  func.func @_fused_linear_kernel(%arg0: i32, %arg1: memref<64x128xbf16, #tpu.memory_space<vmem>>, %arg2: memref<128x128xbf16, #tpu.memory_space<vmem>>, %arg3: memref<1x128xf32, #tpu.memory_space<vmem>>, %arg4: memref<64x128xf32, #tpu.memory_space<vmem>>, %arg5: memref<64x128xf32, #tpu.memory_space<vmem>>) attributes {dimension_semantics = [#tpu.dimension_semantics<parallel>], iteration_bounds = array<i64: 2>, scalar_prefetch = 0 : i64, scratch_operands = 0 : i64, tpu.core_type = #tpu.core_type<tc>, window_params = [{transform_indices = @transform_0, window_bounds = array<i64: 64, 128>}, {pipeline_mode = #tpu.pipeline_mode<synchronous>, transform_indices = @transform_1, window_bounds = array<i64: 128, 128>}, {pipeline_mode = #tpu.pipeline_mode<synchronous>, transform_indices = @transform_2, window_bounds = array<i64: 1, 128>}, {transform_indices = @transform_3, window_bounds = array<i64: 64, 128>}, {transform_indices = @transform_4, window_bounds = array<i64: 64, 128>}]} {
    %c0 = arith.constant 0 : index
    %c0_0 = arith.constant 0 : index
    %0 = vector.load %arg1[%c0, %c0_0] : memref<64x128xbf16, #tpu.memory_space<vmem>>, vector<64x128xbf16>
    %c0_1 = arith.constant 0 : index
    %c0_2 = arith.constant 0 : index
    %1 = vector.load %arg2[%c0_1, %c0_2] : memref<128x128xbf16, #tpu.memory_space<vmem>>, vector<128x128xbf16>
    %cst = arith.constant dense<0.000000e+00> : vector<64x128xf32>
    %2 = tpu.matmul %0, %1, %cst {dimension_numbers = #tpu.dot_dimension_numbers<[1], [0], [0], [1], [0, 0, 1, 1], [], []>} : vector<64x128xbf16>, vector<128x128xbf16>, vector<64x128xf32> -> vector<64x128xf32>
    %c0_3 = arith.constant 0 : index
    %c0_4 = arith.constant 0 : index
    %3 = vector.load %arg3[%c0_3, %c0_4] : memref<1x128xf32, #tpu.memory_space<vmem>>, vector<1x128xf32>
    %4 = vector.broadcast %3 : vector<1x128xf32> to vector<64x128xf32>
    %5 = arith.addf %2, %4 : vector<64x128xf32>
    %c0_5 = arith.constant 0 : index
    %c0_6 = arith.constant 0 : index
    %6 = vector.load %arg4[%c0_5, %c0_6] : memref<64x128xf32, #tpu.memory_space<vmem>>, vector<64x128xf32>
    %7 = arith.addf %5, %6 : vector<64x128xf32>
    %c0_7 = arith.constant 0 : index
    %c0_8 = arith.constant 0 : index
    %8 = vector.load %arg5[%c0_7, %c0_8] : memref<64x128xf32, #tpu.memory_space<vmem>>, vector<64x128xf32>
    tpu.vector_store %arg5[%c0_7, %c0_8], %7 {strides = array<i32>} : memref<64x128xf32, #tpu.memory_space<vmem>>, vector<64x128xf32>,
    return
  }
  func.func @transform_0(%arg0: i32) -> (i32, i32) {
    %c0_i32 = arith.constant 0 : i32
    %c0_i32_0 = arith.constant 0 : i32
    return %arg0, %c0_i32 : i32, i32
  }
  func.func @transform_1(%arg0: i32) -> (i32, i32) {
    %c0_i32 = arith.constant 0 : i32
    %c0_i32_0 = arith.constant 0 : i32
    %c0_i32_1 = arith.constant 0 : i32
    return %c0_i32, %c0_i32_0 : i32, i32
  }
  func.func @transform_2(%arg0: i32) -> (i32, i32) {
    %c0_i32 = arith.constant 0 : i32
    %c0_i32_0 = arith.constant 0 : i32
    %c0_i32_1 = arith.constant 0 : i32
    return %c0_i32, %c0_i32_0 : i32, i32
  }
  func.func @transform_3(%arg0: i32) -> (i32, i32) {
    %c0_i32 = arith.constant 0 : i32
    %c0_i32_0 = arith.constant 0 : i32
    return %arg0, %c0_i32 : i32, i32
  }
  func.func @transform_4(%arg0: i32) -> (i32, i32) {
    %c0_i32 = arith.constant 0 : i32
    %c0_i32_0 = arith.constant 0 : i32
    return %arg0, %c0_i32 : i32, i32
  }
}

module attributes {stable_mosaic.version = 11 : i64} {
  func.func @_fused_linear_kernel(%arg0: i32, %arg1: memref<64x128xf32, #tpu.memory_space<vmem>>, %arg2: memref<1x128xf32, #tpu.memory_space<vmem>>, %arg3: memref<1x128xf32, #tpu.memory_space<vmem>>, %arg4: memref<128x256xbf16, #tpu.memory_space<vmem>>, %arg5: memref<1x256xf32, #tpu.memory_space<vmem>>, %arg6: memref<64x256xbf16, #tpu.memory_space<vmem>>) attributes {dimension_semantics = [#tpu.dimension_semantics<parallel>], iteration_bounds = array<i64: 2>, scalar_prefetch = 0 : i64, scratch_operands = 0 : i64, tpu.core_type = #tpu.core_type<tc>, window_params = [{transform_indices = @transform_0, window_bounds = array<i64: 64, 128>}, {pipeline_mode = #tpu.pipeline_mode<synchronous>, transform_indices = @transform_1, window_bounds = array<i64: 1, 128>}, {pipeline_mode = #tpu.pipeline_mode<synchronous>, transform_indices = @transform_2, window_bounds = array<i64: 1, 128>}, {pipeline_mode = #tpu.pipeline_mode<synchronous>, transform_indices = @transform_3, window_bounds = array<i64: 128, 256>}, {pipeline_mode = #tpu.pipeline_mode<synchronous>, transform_indices = @transform_4, window_bounds = array<i64: 1, 256>}, {transform_indices = @transform_5, window_bounds = array<i64: 64, 256>}]} {
    %c0 = arith.constant 0 : index
    %c0_0 = arith.constant 0 : index
    %0 = vector.load %arg1[%c0, %c0_0] : memref<64x128xf32, #tpu.memory_space<vmem>>, vector<64x128xf32>
    %cst = arith.constant dense<0.000000e+00> : vector<64xf32>
    %1 = vector.multi_reduction <add>, %0, %cst [1] : vector<64x128xf32> to vector<64xf32>
    %2 = vector.shape_cast %1 : vector<64xf32> to vector<64x1xf32>
    %cst_1 = arith.constant 1.280000e+02 : f32
    %3 = vector.broadcast %cst_1 : f32 to vector<64x1xf32>
    %4 = arith.divf %2, %3 : vector<64x1xf32>
    %5 = vector.broadcast %4 : vector<64x1xf32> to vector<64x128xf32>
    %6 = arith.subf %0, %5 : vector<64x128xf32>
    %7 = arith.mulf %6, %6 : vector<64x128xf32>
    %cst_2 = arith.constant dense<0.000000e+00> : vector<64xf32>
    %8 = vector.multi_reduction <add>, %7, %cst_2 [1] : vector<64x128xf32> to vector<64xf32>
    %9 = vector.shape_cast %8 : vector<64xf32> to vector<64x1xf32>
    %cst_3 = arith.constant 1.280000e+02 : f32
    %10 = vector.broadcast %cst_3 : f32 to vector<64x1xf32>
    %11 = arith.divf %9, %10 : vector<64x1xf32>
    %12 = vector.broadcast %4 : vector<64x1xf32> to vector<64x128xf32>
    %13 = arith.subf %0, %12 : vector<64x128xf32>
    %cst_4 = arith.constant 9.99999974E-6 : f32
    %14 = vector.broadcast %cst_4 : f32 to vector<64x1xf32>
    %15 = arith.addf %11, %14 : vector<64x1xf32>
    %16 = math.rsqrt %15 : vector<64x1xf32>
    %17 = vector.broadcast %16 : vector<64x1xf32> to vector<64x128xf32>
    %18 = arith.mulf %13, %17 : vector<64x128xf32>
    %c0_5 = arith.constant 0 : index
    %c0_6 = arith.constant 0 : index
    %19 = vector.load %arg2[%c0_5, %c0_6] : memref<1x128xf32, #tpu.memory_space<vmem>>, vector<1x128xf32>
    %20 = vector.broadcast %19 : vector<1x128xf32> to vector<64x128xf32>
    %21 = arith.mulf %18, %20 : vector<64x128xf32>
    %c0_7 = arith.constant 0 : index
    %c0_8 = arith.constant 0 : index
    %22 = vector.load %arg3[%c0_7, %c0_8] : memref<1x128xf32, #tpu.memory_space<vmem>>, vector<1x128xf32>
    %23 = vector.broadcast %22 : vector<1x128xf32> to vector<64x128xf32>
    %24 = arith.addf %21, %23 : vector<64x128xf32>
    %25 = arith.truncf %24 : vector<64x128xf32> to vector<64x128xbf16>
    %c0_9 = arith.constant 0 : index
    %c0_10 = arith.constant 0 : index
    %26 = vector.load %arg4[%c0_9, %c0_10] : memref<128x256xbf16, #tpu.memory_space<vmem>>, vector<128x256xbf16>
    %cst_11 = arith.constant dense<0.000000e+00> : vector<64x256xf32>
    %27 = tpu.matmul %25, %26, %cst_11 {dimension_numbers = #tpu.dot_dimension_numbers<[1], [0], [0], [1], [0, 0, 1, 1], [], []>} : vector<64x128xbf16>, vector<128x256xbf16>, vector<64x256xf32> -> vector<64x256xf32>
    %c0_12 = arith.constant 0 : index
    %c0_13 = arith.constant 0 : index
    %28 = vector.load %arg5[%c0_12, %c0_13] : memref<1x256xf32, #tpu.memory_space<vmem>>, vector<1x256xf32>
    %29 = vector.broadcast %28 : vector<1x256xf32> to vector<64x256xf32>
    %30 = arith.addf %27, %29 : vector<64x256xf32>
    %31 = arith.mulf %30, %30 : vector<64x256xf32>
    %32 = arith.mulf %30, %31 : vector<64x256xf32>
    %cst_14 = arith.constant 4.471500e-02 : f32
    %33 = vector.broadcast %cst_14 : f32 to vector<64x256xf32>
    %34 = arith.mulf %33, %32 : vector<64x256xf32>
    %35 = arith.addf %30, %34 : vector<64x256xf32>
    %cst_15 = arith.constant 0.797884583 : f32
    %36 = vector.broadcast %cst_15 : f32 to vector<64x256xf32>
    %37 = arith.mulf %36, %35 : vector<64x256xf32>
    %38 = math.tanh %37 : vector<64x256xf32>
    %cst_16 = arith.constant 1.000000e+00 : f32
    %39 = vector.broadcast %cst_16 : f32 to vector<64x256xf32>
    %40 = arith.addf %39, %38 : vector<64x256xf32>
    %cst_17 = arith.constant 5.000000e-01 : f32
    %41 = vector.broadcast %cst_17 : f32 to vector<64x256xf32>
    %42 = arith.mulf %41, %40 : vector<64x256xf32>
    %43 = arith.mulf %30, %42 : vector<64x256xf32>
    %44 = arith.truncf %43 : vector<64x256xf32> to vector<64x256xbf16>
    %c0_18 = arith.constant 0 : index
    %c0_19 = arith.constant 0 : index
    %45 = vector.load %arg6[%c0_18, %c0_19] : memref<64x256xbf16, #tpu.memory_space<vmem>>, vector<64x256xbf16>
    tpu.vector_store %arg6[%c0_18, %c0_19], %44 {strides = array<i32>} : memref<64x256xbf16, #tpu.memory_space<vmem>>, vector<64x256xbf16>,
    return
  }
  func.func @transform_0(%arg0: i32) -> (i32, i32) {
    %c0_i32 = arith.constant 0 : i32
    %c0_i32_0 = arith.constant 0 : i32
    return %arg0, %c0_i32 : i32, i32
  }
  func.func @transform_1(%arg0: i32) -> (i32, i32) {
    %c0_i32 = arith.constant 0 : i32
    %c0_i32_0 = arith.constant 0 : i32
    %c0_i32_1 = arith.constant 0 : i32
    return %c0_i32, %c0_i32_0 : i32, i32
  }
  func.func @transform_2(%arg0: i32) -> (i32, i32) {
    %c0_i32 = arith.constant 0 : i32
    %c0_i32_0 = arith.constant 0 : i32
    %c0_i32_1 = arith.constant 0 : i32
    return %c0_i32, %c0_i32_0 : i32, i32
  }
  func.func @transform_3(%arg0: i32) -> (i32, i32) {
    %c0_i32 = arith.constant 0 : i32
    %c0_i32_0 = arith.constant 0 : i32
    %c0_i32_1 = arith.constant 0 : i32
    return %c0_i32, %c0_i32_0 : i32, i32
  }
  func.func @transform_4(%arg0: i32) -> (i32, i32) {
    %c0_i32 = arith.constant 0 : i32
    %c0_i32_0 = arith.constant 0 : i32
    %c0_i32_1 = arith.constant 0 : i32
    return %c0_i32, %c0_i32_0 : i32, i32
  }
  func.func @transform_5(%arg0: i32) -> (i32, i32) {
    %c0_i32 = arith.constant 0 : i32
    %c0_i32_0 = arith.constant 0 : i32
    return %arg0, %c0_i32 : i32, i32
  }
}

module attributes {stable_mosaic.version = 11 : i64} {
  func.func @_fused_linear_kernel(%arg0: i32, %arg1: memref<64x256xbf16, #tpu.memory_space<vmem>>, %arg2: memref<256x128xbf16, #tpu.memory_space<vmem>>, %arg3: memref<1x128xf32, #tpu.memory_space<vmem>>, %arg4: memref<64x128xf32, #tpu.memory_space<vmem>>, %arg5: memref<64x128xf32, #tpu.memory_space<vmem>>) attributes {dimension_semantics = [#tpu.dimension_semantics<parallel>], iteration_bounds = array<i64: 2>, scalar_prefetch = 0 : i64, scratch_operands = 0 : i64, tpu.core_type = #tpu.core_type<tc>, window_params = [{transform_indices = @transform_0, window_bounds = array<i64: 64, 256>}, {pipeline_mode = #tpu.pipeline_mode<synchronous>, transform_indices = @transform_1, window_bounds = array<i64: 256, 128>}, {pipeline_mode = #tpu.pipeline_mode<synchronous>, transform_indices = @transform_2, window_bounds = array<i64: 1, 128>}, {transform_indices = @transform_3, window_bounds = array<i64: 64, 128>}, {transform_indices = @transform_4, window_bounds = array<i64: 64, 128>}]} {
    %c0 = arith.constant 0 : index
    %c0_0 = arith.constant 0 : index
    %0 = vector.load %arg1[%c0, %c0_0] : memref<64x256xbf16, #tpu.memory_space<vmem>>, vector<64x256xbf16>
    %c0_1 = arith.constant 0 : index
    %c0_2 = arith.constant 0 : index
    %1 = vector.load %arg2[%c0_1, %c0_2] : memref<256x128xbf16, #tpu.memory_space<vmem>>, vector<256x128xbf16>
    %cst = arith.constant dense<0.000000e+00> : vector<64x128xf32>
    %2 = tpu.matmul %0, %1, %cst {dimension_numbers = #tpu.dot_dimension_numbers<[1], [0], [0], [1], [0, 0, 1, 1], [], []>} : vector<64x256xbf16>, vector<256x128xbf16>, vector<64x128xf32> -> vector<64x128xf32>
    %c0_3 = arith.constant 0 : index
    %c0_4 = arith.constant 0 : index
    %3 = vector.load %arg3[%c0_3, %c0_4] : memref<1x128xf32, #tpu.memory_space<vmem>>, vector<1x128xf32>
    %4 = vector.broadcast %3 : vector<1x128xf32> to vector<64x128xf32>
    %5 = arith.addf %2, %4 : vector<64x128xf32>
    %c0_5 = arith.constant 0 : index
    %c0_6 = arith.constant 0 : index
    %6 = vector.load %arg4[%c0_5, %c0_6] : memref<64x128xf32, #tpu.memory_space<vmem>>, vector<64x128xf32>
    %7 = arith.addf %5, %6 : vector<64x128xf32>
    %c0_7 = arith.constant 0 : index
    %c0_8 = arith.constant 0 : index
    %8 = vector.load %arg5[%c0_7, %c0_8] : memref<64x128xf32, #tpu.memory_space<vmem>>, vector<64x128xf32>
    tpu.vector_store %arg5[%c0_7, %c0_8], %7 {strides = array<i32>} : memref<64x128xf32, #tpu.memory_space<vmem>>, vector<64x128xf32>,
    return
  }
  func.func @transform_0(%arg0: i32) -> (i32, i32) {
    %c0_i32 = arith.constant 0 : i32
    %c0_i32_0 = arith.constant 0 : i32
    return %arg0, %c0_i32 : i32, i32
  }
  func.func @transform_1(%arg0: i32) -> (i32, i32) {
    %c0_i32 = arith.constant 0 : i32
    %c0_i32_0 = arith.constant 0 : i32
    %c0_i32_1 = arith.constant 0 : i32
    return %c0_i32, %c0_i32_0 : i32, i32
  }
  func.func @transform_2(%arg0: i32) -> (i32, i32) {
    %c0_i32 = arith.constant 0 : i32
    %c0_i32_0 = arith.constant 0 : i32
    %c0_i32_1 = arith.constant 0 : i32
    return %c0_i32, %c0_i32_0 : i32, i32
  }
  func.func @transform_3(%arg0: i32) -> (i32, i32) {
    %c0_i32 = arith.constant 0 : i32
    %c0_i32_0 = arith.constant 0 : i32
    return %arg0, %c0_i32 : i32, i32
  }
  func.func @transform_4(%arg0: i32) -> (i32, i32) {
    %c0_i32 = arith.constant 0 : i32
    %c0_i32_0 = arith.constant 0 : i32
    return %arg0, %c0_i32 : i32, i32
  }
}

module attributes {stable_mosaic.version = 11 : i64} {
  func.func @_fused_linear_kernel(%arg0: i32, %arg1: memref<64x128xf32, #tpu.memory_space<vmem>>, %arg2: memref<1x128xf32, #tpu.memory_space<vmem>>, %arg3: memref<1x128xf32, #tpu.memory_space<vmem>>, %arg4: memref<128x128xbf16, #tpu.memory_space<vmem>>, %arg5: memref<1x128xf32, #tpu.memory_space<vmem>>, %arg6: memref<64x128xf32, #tpu.memory_space<vmem>>) attributes {dimension_semantics = [#tpu.dimension_semantics<parallel>], iteration_bounds = array<i64: 2>, scalar_prefetch = 0 : i64, scratch_operands = 0 : i64, tpu.core_type = #tpu.core_type<tc>, window_params = [{transform_indices = @transform_0, window_bounds = array<i64: 64, 128>}, {pipeline_mode = #tpu.pipeline_mode<synchronous>, transform_indices = @transform_1, window_bounds = array<i64: 1, 128>}, {pipeline_mode = #tpu.pipeline_mode<synchronous>, transform_indices = @transform_2, window_bounds = array<i64: 1, 128>}, {pipeline_mode = #tpu.pipeline_mode<synchronous>, transform_indices = @transform_3, window_bounds = array<i64: 128, 128>}, {pipeline_mode = #tpu.pipeline_mode<synchronous>, transform_indices = @transform_4, window_bounds = array<i64: 1, 128>}, {transform_indices = @transform_5, window_bounds = array<i64: 64, 128>}]} {
    %c0 = arith.constant 0 : index
    %c0_0 = arith.constant 0 : index
    %0 = vector.load %arg1[%c0, %c0_0] : memref<64x128xf32, #tpu.memory_space<vmem>>, vector<64x128xf32>
    %cst = arith.constant dense<0.000000e+00> : vector<64xf32>
    %1 = vector.multi_reduction <add>, %0, %cst [1] : vector<64x128xf32> to vector<64xf32>
    %2 = vector.shape_cast %1 : vector<64xf32> to vector<64x1xf32>
    %cst_1 = arith.constant 1.280000e+02 : f32
    %3 = vector.broadcast %cst_1 : f32 to vector<64x1xf32>
    %4 = arith.divf %2, %3 : vector<64x1xf32>
    %5 = vector.broadcast %4 : vector<64x1xf32> to vector<64x128xf32>
    %6 = arith.subf %0, %5 : vector<64x128xf32>
    %7 = arith.mulf %6, %6 : vector<64x128xf32>
    %cst_2 = arith.constant dense<0.000000e+00> : vector<64xf32>
    %8 = vector.multi_reduction <add>, %7, %cst_2 [1] : vector<64x128xf32> to vector<64xf32>
    %9 = vector.shape_cast %8 : vector<64xf32> to vector<64x1xf32>
    %cst_3 = arith.constant 1.280000e+02 : f32
    %10 = vector.broadcast %cst_3 : f32 to vector<64x1xf32>
    %11 = arith.divf %9, %10 : vector<64x1xf32>
    %12 = vector.broadcast %4 : vector<64x1xf32> to vector<64x128xf32>
    %13 = arith.subf %0, %12 : vector<64x128xf32>
    %cst_4 = arith.constant 9.99999974E-6 : f32
    %14 = vector.broadcast %cst_4 : f32 to vector<64x1xf32>
    %15 = arith.addf %11, %14 : vector<64x1xf32>
    %16 = math.rsqrt %15 : vector<64x1xf32>
    %17 = vector.broadcast %16 : vector<64x1xf32> to vector<64x128xf32>
    %18 = arith.mulf %13, %17 : vector<64x128xf32>
    %c0_5 = arith.constant 0 : index
    %c0_6 = arith.constant 0 : index
    %19 = vector.load %arg2[%c0_5, %c0_6] : memref<1x128xf32, #tpu.memory_space<vmem>>, vector<1x128xf32>
    %20 = vector.broadcast %19 : vector<1x128xf32> to vector<64x128xf32>
    %21 = arith.mulf %18, %20 : vector<64x128xf32>
    %c0_7 = arith.constant 0 : index
    %c0_8 = arith.constant 0 : index
    %22 = vector.load %arg3[%c0_7, %c0_8] : memref<1x128xf32, #tpu.memory_space<vmem>>, vector<1x128xf32>
    %23 = vector.broadcast %22 : vector<1x128xf32> to vector<64x128xf32>
    %24 = arith.addf %21, %23 : vector<64x128xf32>
    %25 = arith.truncf %24 : vector<64x128xf32> to vector<64x128xbf16>
    %c0_9 = arith.constant 0 : index
    %c0_10 = arith.constant 0 : index
    %26 = vector.load %arg4[%c0_9, %c0_10] : memref<128x128xbf16, #tpu.memory_space<vmem>>, vector<128x128xbf16>
    %cst_11 = arith.constant dense<0.000000e+00> : vector<64x128xf32>
    %27 = tpu.matmul %25, %26, %cst_11 {dimension_numbers = #tpu.dot_dimension_numbers<[1], [0], [0], [1], [0, 0, 1, 1], [], []>} : vector<64x128xbf16>, vector<128x128xbf16>, vector<64x128xf32> -> vector<64x128xf32>
    %c0_12 = arith.constant 0 : index
    %c0_13 = arith.constant 0 : index
    %28 = vector.load %arg5[%c0_12, %c0_13] : memref<1x128xf32, #tpu.memory_space<vmem>>, vector<1x128xf32>
    %29 = vector.broadcast %28 : vector<1x128xf32> to vector<64x128xf32>
    %30 = arith.addf %27, %29 : vector<64x128xf32>
    %c0_14 = arith.constant 0 : index
    %c0_15 = arith.constant 0 : index
    %31 = vector.load %arg6[%c0_14, %c0_15] : memref<64x128xf32, #tpu.memory_space<vmem>>, vector<64x128xf32>
    tpu.vector_store %arg6[%c0_14, %c0_15], %30 {strides = array<i32>} : memref<64x128xf32, #tpu.memory_space<vmem>>, vector<64x128xf32>,
    return
  }
  func.func @transform_0(%arg0: i32) -> (i32, i32) {
    %c0_i32 = arith.constant 0 : i32
    %c0_i32_0 = arith.constant 0 : i32
    return %arg0, %c0_i32 : i32, i32
  }
  func.func @transform_1(%arg0: i32) -> (i32, i32) {
    %c0_i32 = arith.constant 0 : i32
    %c0_i32_0 = arith.constant 0 : i32
    %c0_i32_1 = arith.constant 0 : i32
    return %c0_i32, %c0_i32_0 : i32, i32
  }
  func.func @transform_2(%arg0: i32) -> (i32, i32) {
    %c0_i32 = arith.constant 0 : i32
    %c0_i32_0 = arith.constant 0 : i32
    %c0_i32_1 = arith.constant 0 : i32
    return %c0_i32, %c0_i32_0 : i32, i32
  }
  func.func @transform_3(%arg0: i32) -> (i32, i32) {
    %c0_i32 = arith.constant 0 : i32
    %c0_i32_0 = arith.constant 0 : i32
    %c0_i32_1 = arith.constant 0 : i32
    return %c0_i32, %c0_i32_0 : i32, i32
  }
  func.func @transform_4(%arg0: i32) -> (i32, i32) {
    %c0_i32 = arith.constant 0 : i32
    %c0_i32_0 = arith.constant 0 : i32
    %c0_i32_1 = arith.constant 0 : i32
    return %c0_i32, %c0_i32_0 : i32, i32
  }
  func.func @transform_5(%arg0: i32) -> (i32, i32) {
    %c0_i32 = arith.constant 0 : i32
    %c0_i32_0 = arith.constant 0 : i32
    return %arg0, %c0_i32 : i32, i32
  }
}

</mosaic_0001>

<llo_original>
// kernel: detector_forward.17
$region0: #{detector_forward.17}
  #allocation0 [shape = 'u32[]', space=smem, size = 0x4, offset = 0x4, fixed_abs, tag = 'smem constant byte address 0x4 - core index']
  #allocation1 [shape = 'u32[72,128]{1,0:T(1,128)}', space=vmem, size = 0x9000, scoped, tag = 'internal scratch']
  %s0 = inlined_call_operand.vmem [shape: f32[128,32], index: 0, kind: input, shape index: {}]
  %s1 = inlined_call_operand.vmem [shape: bf16[32,128], index: 1, kind: input, shape index: {}]
  %s2 = inlined_call_operand.vmem [shape: f32[1,128], index: 2, kind: input, shape index: {}]
  %s3 = inlined_call_operand.vmem [shape: f32[128,128], index: 3, kind: output, shape index: {}]
  %s4 = sld [smem:[#allocation0]]
  $region45: #{detector_forward.17} parent=0
    _
  %s6 = ssub.s32 1, %s4
  %s7 = scalar_select 0, %s6, %s4
  loop: start=0, step=1, limit=4
  $region2: #{detector_forward.17} parent=0 // loop_pre_header
    _
  $region3: #{detector_forward.17} parent=0 // loop_header
    %s9 = sphi 0, %s13
    %p10 = scmp.ge.s32.totalorder %s9, 4
    %s19 = sphi 0, %s21
    %s22 = sphi 0, %s19
    %s23 = sphi 0, %s22
    %s39 = sphi 0, %s23
    %s43 = sphi 0, %s43
    %s45 = sphi 0, %s43
    %s46 = sphi 0, %s45
    %s60 = sphi 0, %s46
    %s64 = sphi 0, %s64
    %s66 = sphi 0, %s64
    %s67 = sphi 0, %s66
    %s81 = sphi 0, %s67
    %s87 = sphi 0, %s89
    %s90 = sphi 0, %s87
    %s91 = sphi 0, %s90
    %s107 = sphi 0, %s91
  $region4: #{detector_forward.17} parent=0 // loop_header_branch
    %12 = sbr.rel (%p10) target = $region8
  $region5: #{detector_forward.17} parent=0 // loop_body
    %s14 = ssub.s32 %s9, 1
    %s15 = ssub.s32 %s9, 2
    %s16 = sadd.s32 %s9, 1
    %s17 = ssub.s32 %s9, %s16
    %p18 = scmp.eq.s32.totalorder %s17, 0
    %s20 = sadd.s32 %s19, 1
    %s21 = scalar_select %p18, %s19, %s20
    %p24 = pneg %p18
    %p25 = scmp.eq.s32.totalorder %s9, 1
    %p26 = por %p24, %p25
    %p27 = scmp.ne.s32.totalorder %s19, %s22
    %p28 = scmp.eq.s32.totalorder %s9, 0
    %p29 = por %p27, %p28
    %p30 = scmp.ne.s32.totalorder %s19, %s22
    %p31 = scmp.eq.s32.totalorder %s14, 1
    %p32 = por %p30, %p31
    %p33 = scmp.ne.s32.totalorder %s22, %s23
    %p34 = scmp.eq.s32.totalorder %s14, 0
    %p35 = por %p33, %p34
    %p36 = scmp.ne.s32.totalorder %s22, %s23
    %p37 = scmp.eq.s32.totalorder %s15, 1
    %p38 = por %p36, %p37
    %p40 = scmp.ne.s32.totalorder %s23, %s39
    %p41 = scmp.eq.s32.totalorder %s15, 0
    %p42 = por %p40, %p41
    %s44 = sadd.s32 %s43, 1
    %p47 = scmp.eq.s32.totalorder %s9, 1
    %p48 = scmp.ne.s32.totalorder %s43, %s45
    %p49 = scmp.eq.s32.totalorder %s9, 0
    %p50 = por %p48, %p49
    %p51 = scmp.ne.s32.totalorder %s43, %s45
    %p52 = scmp.eq.s32.totalorder %s14, 1
    %p53 = por %p51, %p52
    %p54 = scmp.ne.s32.totalorder %s45, %s46
    %p55 = scmp.eq.s32.totalorder %s14, 0
    %p56 = por %p54, %p55
    %p57 = scmp.ne.s32.totalorder %s45, %s46
    %p58 = scmp.eq.s32.totalorder %s15, 1
    %p59 = por %p57, %p58
    %p61 = scmp.ne.s32.totalorder %s46, %s60
    %p62 = scmp.eq.s32.totalorder %s15, 0
    %p63 = por %p61, %p62
    %s65 = sadd.s32 %s64, 1
    %p68 = scmp.eq.s32.totalorder %s9, 1
    %p69 = scmp.ne.s32.totalorder %s64, %s66
    %p70 = scmp.eq.s32.totalorder %s9, 0
    %p71 = por %p69, %p70
    %p72 = scmp.ne.s32.totalorder %s64, %s66
    %p73 = scmp.eq.s32.totalorder %s14, 1
    %p74 = por %p72, %p73
    %p75 = scmp.ne.s32.totalorder %s66, %s67
    %p76 = scmp.eq.s32.totalorder %s14, 0
    %p77 = por %p75, %p76
    %p78 = scmp.ne.s32.totalorder %s66, %s67
    %p79 = scmp.eq.s32.totalorder %s15, 1
    %p80 = por %p78, %p79
    %p82 = scmp.ne.s32.totalorder %s67, %s81
    %p83 = scmp.eq.s32.totalorder %s15, 0
    %p84 = por %p82, %p83
    %s85 = ssub.s32 %s9, %s16
    %p86 = scmp.eq.s32.totalorder %s85, 0
    %s88 = sadd.s32 %s87, 1
    %s89 = scalar_select %p86, %s87, %s88
    %p92 = pneg %p86
    %p93 = scmp.eq.s32.totalorder %s9, 1
    %p94 = por %p92, %p93
    %p95 = scmp.ne.s32.totalorder %s87, %s90
    %p96 = scmp.eq.s32.totalorder %s9, 0
    %p97 = por %p95, %p96
    %p98 = scmp.ne.s32.totalorder %s87, %s90
    %p99 = scmp.eq.s32.totalorder %s14, 1
    %p100 = por %p98, %p99
    %p101 = scmp.ne.s32.totalorder %s90, %s91
    %p102 = scmp.eq.s32.totalorder %s14, 0
    %p103 = por %p101, %p102
    %p104 = scmp.ne.s32.totalorder %s90, %s91
    %p105 = scmp.eq.s32.totalorder %s15, 1
    %p106 = por %p104, %p105
    %p108 = scmp.ne.s32.totalorder %s91, %s107
    %p109 = scmp.eq.s32.totalorder %s15, 0
    %p110 = por %p108, %p109
    %p111 = scmp.le.s32.totalorder 1, %s9
    %p112 = scmp.lt.s32.totalorder %s9, 3
    %p113 = pnand %p111, %p112
    %p114 = pneg %p113
    // Predicated region
    $region9: #{detector_forward.17} parent=5 // pred_check
      _
    $region10: #{detector_forward.17} parent=5 // pred_check_branch
      %116 = sbr.rel (%p113) target = $region12
    $region11: #{detector_forward.17} parent=5 // pred_region
      %s117 = ssub.s32 %s9, 1
      // Predicated region
      $region13: #{detector_forward.17} parent=11 // pred_check
        %p118 = pneg %p56
      $region14: #{detector_forward.17} parent=11 // pred_check_branch
        %120 = sbr.rel (%p118) target = $region16
      $region15: #{detector_forward.17} parent=11 // pred_region
        _
      $region16: #{detector_forward.17} parent=11 // pred_fallthru
        _
      // Predicated region
      $region17: #{detector_forward.17} parent=11 // pred_check
        %p121 = pneg %p77
      $region18: #{detector_forward.17} parent=11 // pred_check_branch
        %123 = sbr.rel (%p121) target = $region20
      $region19: #{detector_forward.17} parent=11 // pred_region
        _
      $region20: #{detector_forward.17} parent=11 // pred_fallthru
        _
    $region12: #{detector_forward.17} parent=5 // pred_fallthru
      _
    %p124 = scmp.lt.s32.totalorder %s9, 2
    // Predicated region
    $region21: #{detector_forward.17} parent=5 // pred_check
      %p125 = pneg %p124
    $region22: #{detector_forward.17} parent=5 // pred_check_branch
      %127 = sbr.rel (%p125) target = $region24
    $region23: #{detector_forward.17} parent=5 // pred_region
      // Predicated region
      $region25: #{detector_forward.17} parent=23 // pred_check
        %p128 = pneg %p29
      $region26: #{detector_forward.17} parent=23 // pred_check_branch
        %130 = sbr.rel (%p128) target = $region28
      $region27: #{detector_forward.17} parent=23 // pred_region
        %s131 = smul.u32 8, %s9
        %p132 = scmp.lt.s32.totalorder %s131, 15
        %s133 = scalar_select %p132, %s131, 15
        %s134 = smul.addr %s133, 8
        %s135 = scalar_lea.vmem %s0, %s134
        %s136 = smul.u32 8, %s9
      $region28: #{detector_forward.17} parent=23 // pred_fallthru
        _
    $region24: #{detector_forward.17} parent=5 // pred_fallthru
      _
    %p137 = scmp.le.s32.totalorder 1, %s9
    %p138 = scmp.lt.s32.totalorder %s9, 3
    %p139 = pnand %p137, %p138
    %p140 = pneg %p139
    // Predicated region
    $region29: #{detector_forward.17} parent=5 // pred_check
      _
    $region30: #{detector_forward.17} parent=5 // pred_check_branch
      %142 = sbr.rel (%p139) target = $region32
    $region31: #{detector_forward.17} parent=5 // pred_region
      %s143 = ssub.s32 %s9, 1
      %s144 = smul.u32 8, %s14
      %p145 = scmp.lt.s32.totalorder %s144, 15
      %s146 = scalar_select %p145, %s144, 15
      %s147 = smul.addr %s146, 8
      %s148 = scalar_lea.vmem %s0, %s147
      %p149 = pneg %p35
      %p150 = pneg %p32
      %p151 = pneg %p56
      %p152 = pneg %p53
      %p153 = pneg %p77
      %p154 = pneg %p74
      %p155 = pneg %p103
      %p156 = pneg %p100
      %s157 = smul.u32 8, %s14
      %p158 = scmp.lt.s32.totalorder %s157, 15
      %s159 = scalar_select %p158, %s157, 15
      %s160 = smul.addr %s159, 8
      %s161 = scalar_lea.vmem %s3, %s160
      %s162 = smul.u32 8, %s14
      %p163 = scmp.lt.s32.totalorder %s162, 15
      %s164 = scalar_select %p163, %s162, 15
      %s165 = smul.addr %s164, 8
      %s166 = scalar_lea.vmem %s0, %s165
      %s167 = smul.u32 8, %s14
      %s168 = smul.u32 8, %s14
      %p169 = scmp.lt.s32.totalorder %s168, 15
      %s170 = scalar_select %p169, %s168, 15
      %s171 = smul.addr %s170, 8
      %s172 = scalar_lea.vmem %s3, %s171
      %s173 = smul.u32 8, %s14
      %v175 = vld [vmem:[%s166] sm:$0xff]
      %v176 = vld [vmem:[%s166 + $0x8] sm:$0xff]
      %v177 = vld [vmem:[%s166 + $0x10] sm:$0xff]
      %v178 = vld [vmem:[%s166 + $0x18] sm:$0xff]
      %v179 = vld [vmem:[%s166 + $0x20] sm:$0xff]
      %v180 = vld [vmem:[%s166 + $0x28] sm:$0xff]
      %v181 = vld [vmem:[%s166 + $0x30] sm:$0xff]
      %v182 = vld [vmem:[%s166 + $0x38] sm:$0xff]
      %v183 = vpack.c.bf16 %v176, %v175
      %v184 = vpack.c.bf16 %v178, %v177
      %v185 = vpack.c.bf16 %v180, %v179
      %v186 = vpack.c.bf16 %v182, %v181
      %v187 = vld [vmem:[%s1] sm:$0xf]
      %v188 = vld [vmem:[%s1 + $0x4] sm:$0xf]
      %v189 = vld [vmem:[%s1 + $0x8] sm:$0xf]
      %v190 = vld [vmem:[%s1 + $0xc] sm:$0xf]
      %v191 = vld [vmem:[%s2] sm:$0x1]
      %v193 = vperm.slane %v191, 0
      %v199 = vunpack.c.l.b16 %v187
      %v200 = vunpack.c.l.b16 %v188
      %v201 = vunpack.c.l.b16 %v189
      %v202 = vunpack.c.l.b16 %v190
      %v203 = vpack.c.b16 %v200, %v199
      %v204 = vpack.c.b16 %v202, %v201
      %vm207 = vcmask 261120
      %v209 = vsel %vm207, %v183, 0
      %v212 = vsel %vm207, %v184, 0
      %v215 = vsel %vm207, %v185, 0
      %v218 = vsel %vm207, %v186, 0
      %220 = vmatpush.bf16.msra.mxu0 0
      %221 = vmatpush.bf16.msra.mxu0 0
      %222 = vmatpush.bf16.msra.mxu0 0
      %223 = vmatpush.bf16.msra.mxu0 0
      %224 = vmatpush.bf16.msra.mxu0 0
      %225 = vmatpush.bf16.msra.mxu0 0
      %226 = vmatpush.bf16.msra.mxu0 %v204
      %227 = vmatpush.bf16.msra.mxu0 %v203
      %228 = vmatmul.bf16.gmra.mxu0 %v209
      %v229 = vpop.f32.mrf.mxu0
      %v230 = vadd.f32 %v193, %v229
      %v231 = vpop.f32.mrf.mxu0
      %v232 = vadd.f32 %v193, %v231
      %233 = vmatmul.bf16.gmra.mxu0 %v212
      %v234 = vpop.f32.mrf.mxu0
      %v235 = vadd.f32 %v193, %v234
      %v236 = vpop.f32.mrf.mxu0
      %v237 = vadd.f32 %v193, %v236
      %238 = vmatmul.bf16.gmra.mxu0 %v215
      %v239 = vpop.f32.mrf.mxu0
      %v240 = vadd.f32 %v193, %v239
      %v241 = vpop.f32.mrf.mxu0
      %v242 = vadd.f32 %v193, %v241
      %243 = vmatmul.bf16.gmra.mxu0 %v218
      %v244 = vpop.f32.mrf.mxu0
      %v245 = vadd.f32 %v193, %v244
      %v246 = vpop.f32.mrf.mxu0
      %v247 = vadd.f32 %v193, %v246
      %248 = vdwg.mxu0
      %v249 = vmax.f32 %v230, 0.0
      %v250 = vmax.f32 %v232, 0.0
      %v251 = vmax.f32 %v235, 0.0
      %v252 = vmax.f32 %v237, 0.0
      %v253 = vmax.f32 %v240, 0.0
      %v254 = vmax.f32 %v242, 0.0
      %v255 = vmax.f32 %v245, 0.0
      %v256 = vmax.f32 %v247, 0.0
      %257 = vst [vmem:[%s172] sm:$0xff] %v249
      %258 = vst [vmem:[%s172 + $0x8] sm:$0xff] %v250
      %259 = vst [vmem:[%s172 + $0x10] sm:$0xff] %v251
      %260 = vst [vmem:[%s172 + $0x18] sm:$0xff] %v252
      %261 = vst [vmem:[%s172 + $0x20] sm:$0xff] %v253
      %262 = vst [vmem:[%s172 + $0x28] sm:$0xff] %v254
      %263 = vst [vmem:[%s172 + $0x30] sm:$0xff] %v255
      %264 = vst [vmem:[%s172 + $0x38] sm:$0xff] %v256
      %s265 = smul.u32 8, %s14
      %p266 = scmp.lt.s32.totalorder %s265, 15
      %s267 = scalar_select %p266, %s265, 15
      %s268 = smul.addr %s267, 8
      %s269 = scalar_lea.vmem %s3, %s268
      // Predicated region
      $region33: #{detector_forward.17} parent=31 // pred_check
        %p270 = pneg %p100
      $region34: #{detector_forward.17} parent=31 // pred_check_branch
        %272 = sbr.rel (%p270) target = $region36
      $region35: #{detector_forward.17} parent=31 // pred_region
        %s273 = smul.u32 8, %s14
      $region36: #{detector_forward.17} parent=31 // pred_fallthru
        _
    $region32: #{detector_forward.17} parent=5 // pred_fallthru
      _
    %p274 = scmp.le.s32.totalorder 2, %s9
    // Predicated region
    $region37: #{detector_forward.17} parent=5 // pred_check
      %p275 = pneg %p274
    $region38: #{detector_forward.17} parent=5 // pred_check_branch
      %277 = sbr.rel (%p275) target = $region40
    $region39: #{detector_forward.17} parent=5 // pred_region
      %s278 = ssub.s32 %s9, 2
      // Predicated region
      $region41: #{detector_forward.17} parent=39 // pred_check
        %p279 = pneg %p106
      $region42: #{detector_forward.17} parent=39 // pred_check_branch
        %281 = sbr.rel (%p279) target = $region44
      $region43: #{detector_forward.17} parent=39 // pred_region
        %s282 = smul.u32 8, %s15
        %p283 = scmp.lt.s32.totalorder %s282, 15
        %s284 = scalar_select %p283, %s282, 15
        %s285 = smul.addr %s284, 8
        %s286 = scalar_lea.vmem %s3, %s285
      $region44: #{detector_forward.17} parent=39 // pred_fallthru
        _
    $region40: #{detector_forward.17} parent=5 // pred_fallthru
      _
  $region6: #{detector_forward.17} parent=0 // loop_footer
    %s13 = sadd.s32 1, %s9
  $region7: #{detector_forward.17} parent=0 // loop_footer_branch
    %8 = sbr.rel target = $region3
  $region8: #{detector_forward.17} parent=0 // loop_exit
    _

// kernel: detector_forward.20
$region0: #{detector_forward.20}
  #allocation0 [shape = 'u32[]', space=smem, size = 0x4, offset = 0x4, fixed_abs, tag = 'smem constant byte address 0x4 - core index']
  #allocation1 [shape = 'u32[72,128]{1,0:T(1,128)}', space=vmem, size = 0x9000, scoped, tag = 'internal scratch']
  %s0 = inlined_call_operand.vmem [shape: bf16[128,128], index: 0, kind: input, shape index: {}]
  %s1 = inlined_call_operand.vmem [shape: bf16[128,128], index: 1, kind: input, shape index: {}]
  %s2 = inlined_call_operand.vmem [shape: f32[1,128], index: 2, kind: input, shape index: {}]
  %s3 = inlined_call_operand.vmem [shape: f32[128,128], index: 3, kind: input, shape index: {}]
  %s4 = inlined_call_operand.vmem [shape: f32[128,128], index: 4, kind: output, shape index: {}]
  %s5 = sld [smem:[#allocation0]]
  $region49: #{detector_forward.20} parent=0
    _
  %s7 = ssub.s32 1, %s5
  %s8 = scalar_select 0, %s7, %s5
  loop: start=0, step=1, limit=4
  $region2: #{detector_forward.20} parent=0 // loop_pre_header
    _
  $region3: #{detector_forward.20} parent=0 // loop_header
    %s10 = sphi 0, %s14
    %p11 = scmp.ge.s32.totalorder %s10, 4
    %s20 = sphi 0, %s22
    %s23 = sphi 0, %s20
    %s24 = sphi 0, %s23
    %s40 = sphi 0, %s24
    %s44 = sphi 0, %s44
    %s46 = sphi 0, %s44
    %s47 = sphi 0, %s46
    %s61 = sphi 0, %s47
    %s65 = sphi 0, %s65
    %s67 = sphi 0, %s65
    %s68 = sphi 0, %s67
    %s82 = sphi 0, %s68
    %s88 = sphi 0, %s90
    %s91 = sphi 0, %s88
    %s92 = sphi 0, %s91
    %s108 = sphi 0, %s92
    %s114 = sphi 0, %s116
    %s117 = sphi 0, %s114
    %s118 = sphi 0, %s117
    %s134 = sphi 0, %s118
  $region4: #{detector_forward.20} parent=0 // loop_header_branch
    %13 = sbr.rel (%p11) target = $region8
  $region5: #{detector_forward.20} parent=0 // loop_body
    %s15 = ssub.s32 %s10, 1
    %s16 = ssub.s32 %s10, 2
    %s17 = sadd.s32 %s10, 1
    %s18 = ssub.s32 %s10, %s17
    %p19 = scmp.eq.s32.totalorder %s18, 0
    %s21 = sadd.s32 %s20, 1
    %s22 = scalar_select %p19, %s20, %s21
    %p25 = pneg %p19
    %p26 = scmp.eq.s32.totalorder %s10, 1
    %p27 = por %p25, %p26
    %p28 = scmp.ne.s32.totalorder %s20, %s23
    %p29 = scmp.eq.s32.totalorder %s10, 0
    %p30 = por %p28, %p29
    %p31 = scmp.ne.s32.totalorder %s20, %s23
    %p32 = scmp.eq.s32.totalorder %s15, 1
    %p33 = por %p31, %p32
    %p34 = scmp.ne.s32.totalorder %s23, %s24
    %p35 = scmp.eq.s32.totalorder %s15, 0
    %p36 = por %p34, %p35
    %p37 = scmp.ne.s32.totalorder %s23, %s24
    %p38 = scmp.eq.s32.totalorder %s16, 1
    %p39 = por %p37, %p38
    %p41 = scmp.ne.s32.totalorder %s24, %s40
    %p42 = scmp.eq.s32.totalorder %s16, 0
    %p43 = por %p41, %p42
    %s45 = sadd.s32 %s44, 1
    %p48 = scmp.eq.s32.totalorder %s10, 1
    %p49 = scmp.ne.s32.totalorder %s44, %s46
    %p50 = scmp.eq.s32.totalorder %s10, 0
    %p51 = por %p49, %p50
    %p52 = scmp.ne.s32.totalorder %s44, %s46
    %p53 = scmp.eq.s32.totalorder %s15, 1
    %p54 = por %p52, %p53
    %p55 = scmp.ne.s32.totalorder %s46, %s47
    %p56 = scmp.eq.s32.totalorder %s15, 0
    %p57 = por %p55, %p56
    %p58 = scmp.ne.s32.totalorder %s46, %s47
    %p59 = scmp.eq.s32.totalorder %s16, 1
    %p60 = por %p58, %p59
    %p62 = scmp.ne.s32.totalorder %s47, %s61
    %p63 = scmp.eq.s32.totalorder %s16, 0
    %p64 = por %p62, %p63
    %s66 = sadd.s32 %s65, 1
    %p69 = scmp.eq.s32.totalorder %s10, 1
    %p70 = scmp.ne.s32.totalorder %s65, %s67
    %p71 = scmp.eq.s32.totalorder %s10, 0
    %p72 = por %p70, %p71
    %p73 = scmp.ne.s32.totalorder %s65, %s67
    %p74 = scmp.eq.s32.totalorder %s15, 1
    %p75 = por %p73, %p74
    %p76 = scmp.ne.s32.totalorder %s67, %s68
    %p77 = scmp.eq.s32.totalorder %s15, 0
    %p78 = por %p76, %p77
    %p79 = scmp.ne.s32.totalorder %s67, %s68
    %p80 = scmp.eq.s32.totalorder %s16, 1
    %p81 = por %p79, %p80
    %p83 = scmp.ne.s32.totalorder %s68, %s82
    %p84 = scmp.eq.s32.totalorder %s16, 0
    %p85 = por %p83, %p84
    %s86 = ssub.s32 %s10, %s17
    %p87 = scmp.eq.s32.totalorder %s86, 0
    %s89 = sadd.s32 %s88, 1
    %s90 = scalar_select %p87, %s88, %s89
    %p93 = pneg %p87
    %p94 = scmp.eq.s32.totalorder %s10, 1
    %p95 = por %p93, %p94
    %p96 = scmp.ne.s32.totalorder %s88, %s91
    %p97 = scmp.eq.s32.totalorder %s10, 0
    %p98 = por %p96, %p97
    %p99 = scmp.ne.s32.totalorder %s88, %s91
    %p100 = scmp.eq.s32.totalorder %s15, 1
    %p101 = por %p99, %p100
    %p102 = scmp.ne.s32.totalorder %s91, %s92
    %p103 = scmp.eq.s32.totalorder %s15, 0
    %p104 = por %p102, %p103
    %p105 = scmp.ne.s32.totalorder %s91, %s92
    %p106 = scmp.eq.s32.totalorder %s16, 1
    %p107 = por %p105, %p106
    %p109 = scmp.ne.s32.totalorder %s92, %s108
    %p110 = scmp.eq.s32.totalorder %s16, 0
    %p111 = por %p109, %p110
    %s112 = ssub.s32 %s10, %s17
    %p113 = scmp.eq.s32.totalorder %s112, 0
    %s115 = sadd.s32 %s114, 1
    %s116 = scalar_select %p113, %s114, %s115
    %p119 = pneg %p113
    %p120 = scmp.eq.s32.totalorder %s10, 1
    %p121 = por %p119, %p120
    %p122 = scmp.ne.s32.totalorder %s114, %s117
    %p123 = scmp.eq.s32.totalorder %s10, 0
    %p124 = por %p122, %p123
    %p125 = scmp.ne.s32.totalorder %s114, %s117
    %p126 = scmp.eq.s32.totalorder %s15, 1
    %p127 = por %p125, %p126
    %p128 = scmp.ne.s32.totalorder %s117, %s118
    %p129 = scmp.eq.s32.totalorder %s15, 0
    %p130 = por %p128, %p129
    %p131 = scmp.ne.s32.totalorder %s117, %s118
    %p132 = scmp.eq.s32.totalorder %s16, 1
    %p133 = por %p131, %p132
    %p135 = scmp.ne.s32.totalorder %s118, %s134
    %p136 = scmp.eq.s32.totalorder %s16, 0
    %p137 = por %p135, %p136
    %p138 = scmp.le.s32.totalorder 1, %s10
    %p139 = scmp.lt.s32.totalorder %s10, 3
    %p140 = pnand %p138, %p139
    %p141 = pneg %p140
    // Predicated region
    $region9: #{detector_forward.20} parent=5 // pred_check
      _
    $region10: #{detector_forward.20} parent=5 // pred_check_branch
      %143 = sbr.rel (%p140) target = $region12
    $region11: #{detector_forward.20} parent=5 // pred_region
      %s144 = ssub.s32 %s10, 1
      // Predicated region
      $region13: #{detector_forward.20} parent=11 // pred_check
        %p145 = pneg %p57
      $region14: #{detector_forward.20} parent=11 // pred_check_branch
        %147 = sbr.rel (%p145) target = $region16
      $region15: #{detector_forward.20} parent=11 // pred_region
        _
      $region16: #{detector_forward.20} parent=11 // pred_fallthru
        _
      // Predicated region
      $region17: #{detector_forward.20} parent=11 // pred_check
        %p148 = pneg %p78
      $region18: #{detector_forward.20} parent=11 // pred_check_branch
        %150 = sbr.rel (%p148) target = $region20
      $region19: #{detector_forward.20} parent=11 // pred_region
        _
      $region20: #{detector_forward.20} parent=11 // pred_fallthru
        _
    $region12: #{detector_forward.20} parent=5 // pred_fallthru
      _
    %p151 = scmp.lt.s32.totalorder %s10, 2
    // Predicated region
    $region21: #{detector_forward.20} parent=5 // pred_check
      %p152 = pneg %p151
    $region22: #{detector_forward.20} parent=5 // pred_check_branch
      %154 = sbr.rel (%p152) target = $region24
    $region23: #{detector_forward.20} parent=5 // pred_region
      // Predicated region
      $region25: #{detector_forward.20} parent=23 // pred_check
        %p155 = pneg %p30
      $region26: #{detector_forward.20} parent=23 // pred_check_branch
        %157 = sbr.rel (%p155) target = $region28
      $region27: #{detector_forward.20} parent=23 // pred_region
        %s158 = smul.u32 8, %s10
        %p159 = scmp.lt.s32.totalorder %s158, 15
        %s160 = scalar_select %p159, %s158, 15
        %s161 = smul.addr %s160, 4
        %s162 = scalar_lea.vmem %s0, %s161
        %s163 = smul.u32 8, %s10
      $region28: #{detector_forward.20} parent=23 // pred_fallthru
        _
      // Predicated region
      $region29: #{detector_forward.20} parent=23 // pred_check
        %p164 = pneg %p98
      $region30: #{detector_forward.20} parent=23 // pred_check_branch
        %166 = sbr.rel (%p164) target = $region32
      $region31: #{detector_forward.20} parent=23 // pred_region
        %s167 = smul.u32 8, %s10
        %p168 = scmp.lt.s32.totalorder %s167, 15
        %s169 = scalar_select %p168, %s167, 15
        %s170 = smul.addr %s169, 8
        %s171 = scalar_lea.vmem %s3, %s170
        %s172 = smul.u32 8, %s10
      $region32: #{detector_forward.20} parent=23 // pred_fallthru
        _
    $region24: #{detector_forward.20} parent=5 // pred_fallthru
      _
    %p173 = scmp.le.s32.totalorder 1, %s10
    %p174 = scmp.lt.s32.totalorder %s10, 3
    %p175 = pnand %p173, %p174
    %p176 = pneg %p175
    // Predicated region
    $region33: #{detector_forward.20} parent=5 // pred_check
      _
    $region34: #{detector_forward.20} parent=5 // pred_check_branch
      %178 = sbr.rel (%p175) target = $region36
    $region35: #{detector_forward.20} parent=5 // pred_region
      %s179 = ssub.s32 %s10, 1
      %s180 = smul.u32 8, %s15
      %p181 = scmp.lt.s32.totalorder %s180, 15
      %s182 = scalar_select %p181, %s180, 15
      %s183 = smul.addr %s182, 4
      %s184 = scalar_lea.vmem %s0, %s183
      %p185 = pneg %p36
      %p186 = pneg %p33
      %p187 = pneg %p57
      %p188 = pneg %p54
      %p189 = pneg %p78
      %p190 = pneg %p75
      %s191 = smul.u32 8, %s15
      %p192 = scmp.lt.s32.totalorder %s191, 15
      %s193 = scalar_select %p192, %s191, 15
      %s194 = smul.addr %s193, 8
      %s195 = scalar_lea.vmem %s3, %s194
      %p196 = pneg %p104
      %p197 = pneg %p101
      %p198 = pneg %p130
      %p199 = pneg %p127
      %s200 = smul.u32 8, %s15
      %p201 = scmp.lt.s32.totalorder %s200, 15
      %s202 = scalar_select %p201, %s200, 15
      %s203 = smul.addr %s202, 8
      %s204 = scalar_lea.vmem %s4, %s203
      %s205 = smul.u32 8, %s15
      %p206 = scmp.lt.s32.totalorder %s205, 15
      %s207 = scalar_select %p206, %s205, 15
      %s208 = smul.addr %s207, 4
      %s209 = scalar_lea.vmem %s0, %s208
      %s210 = smul.u32 8, %s15
      %s211 = smul.u32 8, %s15
      %p212 = scmp.lt.s32.totalorder %s211, 15
      %s213 = scalar_select %p212, %s211, 15
      %s214 = smul.addr %s213, 8
      %s215 = scalar_lea.vmem %s3, %s214
      %s216 = smul.u32 8, %s15
      %s217 = smul.u32 8, %s15
      %p218 = scmp.lt.s32.totalorder %s217, 15
      %s219 = scalar_select %p218, %s217, 15
      %s220 = smul.addr %s219, 8
      %s221 = scalar_lea.vmem %s4, %s220
      %s222 = smul.u32 8, %s15
      %v223 = vld [vmem:[%s209] sm:$0xf]
      %v224 = vld [vmem:[%s209 + $0x4] sm:$0xf]
      %v225 = vld [vmem:[%s209 + $0x8] sm:$0xf]
      %v226 = vld [vmem:[%s209 + $0xc] sm:$0xf]
      %v227 = vld [vmem:[%s209 + $0x10] sm:$0xf]
      %v228 = vld [vmem:[%s209 + $0x14] sm:$0xf]
      %v229 = vld [vmem:[%s209 + $0x18] sm:$0xf]
      %v230 = vld [vmem:[%s209 + $0x1c] sm:$0xf]
      %v231 = vld [vmem:[%s1] sm:$0xf]
      %v232 = vld [vmem:[%s1 + $0x4] sm:$0xf]
      %v233 = vld [vmem:[%s1 + $0x8] sm:$0xf]
      %v234 = vld [vmem:[%s1 + $0xc] sm:$0xf]
      %v235 = vld [vmem:[%s1 + $0x10] sm:$0xf]
      %v236 = vld [vmem:[%s1 + $0x14] sm:$0xf]
      %v237 = vld [vmem:[%s1 + $0x18] sm:$0xf]
      %v238 = vld [vmem:[%s1 + $0x1c] sm:$0xf]
      %v239 = vld [vmem:[%s1 + $0x20] sm:$0xf]
      %v240 = vld [vmem:[%s1 + $0x24] sm:$0xf]
      %v241 = vld [vmem:[%s1 + $0x28] sm:$0xf]
      %v242 = vld [vmem:[%s1 + $0x2c] sm:$0xf]
      %v243 = vld [vmem:[%s1 + $0x30] sm:$0xf]
      %v244 = vld [vmem:[%s1 + $0x34] sm:$0xf]
      %v245 = vld [vmem:[%s1 + $0x38] sm:$0xf]
      %v246 = vld [vmem:[%s1 + $0x3c] sm:$0xf]
      %v247 = vld [vmem:[%s2] sm:$0x1]
      %v249 = vperm.slane %v247, 0
      %v259 = vunpack.c.l.b16 %v223
      %v260 = vunpack.c.l.b16 %v224
      %v261 = vunpack.c.l.b16 %v225
      %v262 = vunpack.c.l.b16 %v226
      %v263 = vunpack.c.l.b16 %v227
      %v264 = vunpack.c.l.b16 %v228
      %v265 = vunpack.c.l.b16 %v229
      %v266 = vunpack.c.l.b16 %v230
      %v267 = vpack.c.b16 %v260, %v259
      %v268 = vpack.c.b16 %v262, %v261
      %v269 = vpack.c.b16 %v264, %v263
      %v270 = vpack.c.b16 %v266, %v265
      %v291 = vunpack.c.l.b16 %v231
      %v292 = vunpack.c.l.b16 %v232
      %v293 = vunpack.c.l.b16 %v233
      %v294 = vunpack.c.l.b16 %v234
      %v295 = vunpack.c.l.b16 %v235
      %v296 = vunpack.c.l.b16 %v236
      %v297 = vunpack.c.l.b16 %v237
      %v298 = vunpack.c.l.b16 %v238
      %v299 = vunpack.c.l.b16 %v239
      %v300 = vunpack.c.l.b16 %v240
      %v301 = vunpack.c.l.b16 %v241
      %v302 = vunpack.c.l.b16 %v242
      %v303 = vunpack.c.l.b16 %v243
      %v304 = vunpack.c.l.b16 %v244
      %v305 = vunpack.c.l.b16 %v245
      %v306 = vunpack.c.l.b16 %v246
      %v307 = vpack.c.b16 %v292, %v291
      %v308 = vpack.c.b16 %v294, %v293
      %v309 = vpack.c.b16 %v296, %v295
      %v310 = vpack.c.b16 %v298, %v297
      %v311 = vpack.c.b16 %v300, %v299
      %v312 = vpack.c.b16 %v302, %v301
      %v313 = vpack.c.b16 %v304, %v303
      %v314 = vpack.c.b16 %v306, %v305
      %323 = vmatpush.bf16.msra.mxu0 %v314
      %324 = vmatpush.bf16.msra.mxu0 %v313
      %325 = vmatpush.bf16.msra.mxu0 %v312
      %326 = vmatpush.bf16.msra.mxu0 %v311
      %327 = vmatpush.bf16.msra.mxu0 %v310
      %328 = vmatpush.bf16.msra.mxu0 %v309
      %329 = vmatpush.bf16.msra.mxu0 %v308
      %330 = vmatpush.bf16.msra.mxu0 %v307
      %331 = vmatmul.bf16.gmra.mxu0 %v267
      %v332 = vpop.f32.mrf.mxu0
      %v333 = vadd.f32 %v249, %v332
      %v334 = vpop.f32.mrf.mxu0
      %v335 = vadd.f32 %v249, %v334
      %336 = vmatmul.bf16.gmra.mxu0 %v268
      %v337 = vpop.f32.mrf.mxu0
      %v338 = vadd.f32 %v249, %v337
      %v339 = vpop.f32.mrf.mxu0
      %v340 = vadd.f32 %v249, %v339
      %341 = vmatmul.bf16.gmra.mxu0 %v269
      %v342 = vpop.f32.mrf.mxu0
      %v343 = vadd.f32 %v249, %v342
      %v344 = vpop.f32.mrf.mxu0
      %v345 = vadd.f32 %v249, %v344
      %346 = vmatmul.bf16.gmra.mxu0 %v270
      %v347 = vpop.f32.mrf.mxu0
      %v348 = vadd.f32 %v249, %v347
      %v349 = vpop.f32.mrf.mxu0
      %v350 = vadd.f32 %v249, %v349
      %351 = vdwg.mxu0
      %v352 = vld [vmem:[%s215] sm:$0xff]
      %v353 = vld [vmem:[%s215 + $0x8] sm:$0xff]
      %v354 = vld [vmem:[%s215 + $0x10] sm:$0xff]
      %v355 = vld [vmem:[%s215 + $0x18] sm:$0xff]
      %v356 = vld [vmem:[%s215 + $0x20] sm:$0xff]
      %v357 = vld [vmem:[%s215 + $0x28] sm:$0xff]
      %v358 = vld [vmem:[%s215 + $0x30] sm:$0xff]
      %v359 = vld [vmem:[%s215 + $0x38] sm:$0xff]
      %v360 = vadd.f32 %v333, %v352
      %v361 = vadd.f32 %v335, %v353
      %v362 = vadd.f32 %v338, %v354
      %v363 = vadd.f32 %v340, %v355
      %v364 = vadd.f32 %v343, %v356
      %v365 = vadd.f32 %v345, %v357
      %v366 = vadd.f32 %v348, %v358
      %v367 = vadd.f32 %v350, %v359
      %368 = vst [vmem:[%s221] sm:$0xff] %v360
      %369 = vst [vmem:[%s221 + $0x8] sm:$0xff] %v361
      %370 = vst [vmem:[%s221 + $0x10] sm:$0xff] %v362
      %371 = vst [vmem:[%s221 + $0x18] sm:$0xff] %v363
      %372 = vst [vmem:[%s221 + $0x20] sm:$0xff] %v364
      %373 = vst [vmem:[%s221 + $0x28] sm:$0xff] %v365
      %374 = vst [vmem:[%s221 + $0x30] sm:$0xff] %v366
      %375 = vst [vmem:[%s221 + $0x38] sm:$0xff] %v367
      %s376 = smul.u32 8, %s15
      %p377 = scmp.lt.s32.totalorder %s376, 15
      %s378 = scalar_select %p377, %s376, 15
      %s379 = smul.addr %s378, 8
      %s380 = scalar_lea.vmem %s4, %s379
      // Predicated region
      $region37: #{detector_forward.20} parent=35 // pred_check
        %p381 = pneg %p127
      $region38: #{detector_forward.20} parent=35 // pred_check_branch
        %383 = sbr.rel (%p381) target = $region40
      $region39: #{detector_forward.20} parent=35 // pred_region
        %s384 = smul.u32 8, %s15
      $region40: #{detector_forward.20} parent=35 // pred_fallthru
        _
    $region36: #{detector_forward.20} parent=5 // pred_fallthru
      _
    %p385 = scmp.le.s32.totalorder 2, %s10
    // Predicated region
    $region41: #{detector_forward.20} parent=5 // pred_check
      %p386 = pneg %p385
    $region42: #{detector_forward.20} parent=5 // pred_check_branch
      %388 = sbr.rel (%p386) target = $region44
    $region43: #{detector_forward.20} parent=5 // pred_region
      %s389 = ssub.s32 %s10, 2
      // Predicated region
      $region45: #{detector_forward.20} parent=43 // pred_check
        %p390 = pneg %p133
      $region46: #{detector_forward.20} parent=43 // pred_check_branch
        %392 = sbr.rel (%p390) target = $region48
      $region47: #{detector_forward.20} parent=43 // pred_region
        %s393 = smul.u32 8, %s16
        %p394 = scmp.lt.s32.totalorder %s393, 15
        %s395 = scalar_select %p394, %s393, 15
        %s396 = smul.addr %s395, 8
        %s397 = scalar_lea.vmem %s4, %s396
      $region48: #{detector_forward.20} parent=43 // pred_fallthru
        _
    $region44: #{detector_forward.20} parent=5 // pred_fallthru
      _
  $region6: #{detector_forward.20} parent=0 // loop_footer
    %s14 = sadd.s32 1, %s10
  $region7: #{detector_forward.20} parent=0 // loop_footer_branch
    %9 = sbr.rel target = $region3
  $region8: #{detector_forward.20} parent=0 // loop_exit
    _

// kernel: detector_forward.18
$region0: #{detector_forward.18}
  #allocation0 [shape = 'u32[]', space=smem, size = 0x4, offset = 0x4, fixed_abs, tag = 'smem constant byte address 0x4 - core index']
  #allocation1 [shape = 'u32[72,128]{1,0:T(1,128)}', space=vmem, size = 0x9000, scoped, tag = 'internal scratch']
  %s0 = inlined_call_operand.vmem [shape: f32[128,128], index: 0, kind: input, shape index: {}]
  %s1 = inlined_call_operand.vmem [shape: f32[1,128], index: 1, kind: input, shape index: {}]
  %s2 = inlined_call_operand.vmem [shape: f32[1,128], index: 2, kind: input, shape index: {}]
  %s3 = inlined_call_operand.vmem [shape: bf16[128,384], index: 3, kind: input, shape index: {}]
  %s4 = inlined_call_operand.vmem [shape: f32[1,384], index: 4, kind: input, shape index: {}]
  %s5 = inlined_call_operand.vmem [shape: bf16[3,128,128], index: 5, kind: output, shape index: {}]
  %s6 = sld [smem:[#allocation0]]
  $region90: #{detector_forward.18} parent=0
    _
  %s8 = ssub.s32 1, %s6
  %s9 = scalar_select 0, %s8, %s6
  $region1: #{detector_forward.18} parent=0
    #allocation2 [shape = 'u8[98304]{0}', space=vmem, size = 0x18000, scoped, tag = 'output window, operand 0']
    loop: start=0, step=1, limit=4
    $region2: #{detector_forward.18} parent=1 // loop_pre_header
      _
    $region3: #{detector_forward.18} parent=1 // loop_header
      %s11 = sphi 0, %s15
      %p12 = scmp.ge.s32.totalorder %s11, 4
      %s21 = sphi 0, %s23
      %s24 = sphi 0, %s21
      %s25 = sphi 0, %s24
      %s41 = sphi 0, %s25
      %s45 = sphi 0, %s45
      %s47 = sphi 0, %s45
      %s48 = sphi 0, %s47
      %s62 = sphi 0, %s48
      %s66 = sphi 0, %s66
      %s68 = sphi 0, %s66
      %s69 = sphi 0, %s68
      %s83 = sphi 0, %s69
      %s87 = sphi 0, %s87
      %s89 = sphi 0, %s87
      %s90 = sphi 0, %s89
      %s104 = sphi 0, %s90
      %s108 = sphi 0, %s108
      %s110 = sphi 0, %s108
      %s111 = sphi 0, %s110
      %s125 = sphi 0, %s111
      %s131 = sphi 0, %s133
      %s134 = sphi 0, %s131
      %s135 = sphi 0, %s134
      %s151 = sphi 0, %s135
    $region4: #{detector_forward.18} parent=1 // loop_header_branch
      %14 = sbr.rel (%p12) target = $region8
    $region5: #{detector_forward.18} parent=1 // loop_body
      %s16 = ssub.s32 %s11, 1
      %s17 = ssub.s32 %s11, 2
      %s18 = sadd.s32 %s11, 1
      %s19 = ssub.s32 %s11, %s18
      %p20 = scmp.eq.s32.totalorder %s19, 0
      %s22 = sadd.s32 %s21, 1
      %s23 = scalar_select %p20, %s21, %s22
      %p26 = pneg %p20
      %p27 = scmp.eq.s32.totalorder %s11, 1
      %p28 = por %p26, %p27
      %p29 = scmp.ne.s32.totalorder %s21, %s24
      %p30 = scmp.eq.s32.totalorder %s11, 0
      %p31 = por %p29, %p30
      %p32 = scmp.ne.s32.totalorder %s21, %s24
      %p33 = scmp.eq.s32.totalorder %s16, 1
      %p34 = por %p32, %p33
      %p35 = scmp.ne.s32.totalorder %s24, %s25
      %p36 = scmp.eq.s32.totalorder %s16, 0
      %p37 = por %p35, %p36
      %p38 = scmp.ne.s32.totalorder %s24, %s25
      %p39 = scmp.eq.s32.totalorder %s17, 1
      %p40 = por %p38, %p39
      %p42 = scmp.ne.s32.totalorder %s25, %s41
      %p43 = scmp.eq.s32.totalorder %s17, 0
      %p44 = por %p42, %p43
      %s46 = sadd.s32 %s45, 1
      %p49 = scmp.eq.s32.totalorder %s11, 1
      %p50 = scmp.ne.s32.totalorder %s45, %s47
      %p51 = scmp.eq.s32.totalorder %s11, 0
      %p52 = por %p50, %p51
      %p53 = scmp.ne.s32.totalorder %s45, %s47
      %p54 = scmp.eq.s32.totalorder %s16, 1
      %p55 = por %p53, %p54
      %p56 = scmp.ne.s32.totalorder %s47, %s48
      %p57 = scmp.eq.s32.totalorder %s16, 0
      %p58 = por %p56, %p57
      %p59 = scmp.ne.s32.totalorder %s47, %s48
      %p60 = scmp.eq.s32.totalorder %s17, 1
      %p61 = por %p59, %p60
      %p63 = scmp.ne.s32.totalorder %s48, %s62
      %p64 = scmp.eq.s32.totalorder %s17, 0
      %p65 = por %p63, %p64
      %s67 = sadd.s32 %s66, 1
      %p70 = scmp.eq.s32.totalorder %s11, 1
      %p71 = scmp.ne.s32.totalorder %s66, %s68
      %p72 = scmp.eq.s32.totalorder %s11, 0
      %p73 = por %p71, %p72
      %p74 = scmp.ne.s32.totalorder %s66, %s68
      %p75 = scmp.eq.s32.totalorder %s16, 1
      %p76 = por %p74, %p75
      %p77 = scmp.ne.s32.totalorder %s68, %s69
      %p78 = scmp.eq.s32.totalorder %s16, 0
      %p79 = por %p77, %p78
      %p80 = scmp.ne.s32.totalorder %s68, %s69
      %p81 = scmp.eq.s32.totalorder %s17, 1
      %p82 = por %p80, %p81
      %p84 = scmp.ne.s32.totalorder %s69, %s83
      %p85 = scmp.eq.s32.totalorder %s17, 0
      %p86 = por %p84, %p85
      %s88 = sadd.s32 %s87, 1
      %p91 = scmp.eq.s32.totalorder %s11, 1
      %p92 = scmp.ne.s32.totalorder %s87, %s89
      %p93 = scmp.eq.s32.totalorder %s11, 0
      %p94 = por %p92, %p93
      %p95 = scmp.ne.s32.totalorder %s87, %s89
      %p96 = scmp.eq.s32.totalorder %s16, 1
      %p97 = por %p95, %p96
      %p98 = scmp.ne.s32.totalorder %s89, %s90
      %p99 = scmp.eq.s32.totalorder %s16, 0
      %p100 = por %p98, %p99
      %p101 = scmp.ne.s32.totalorder %s89, %s90
      %p102 = scmp.eq.s32.totalorder %s17, 1
      %p103 = por %p101, %p102
      %p105 = scmp.ne.s32.totalorder %s90, %s104
      %p106 = scmp.eq.s32.totalorder %s17, 0
      %p107 = por %p105, %p106
      %s109 = sadd.s32 %s108, 1
      %p112 = scmp.eq.s32.totalorder %s11, 1
      %p113 = scmp.ne.s32.totalorder %s108, %s110
      %p114 = scmp.eq.s32.totalorder %s11, 0
      %p115 = por %p113, %p114
      %p116 = scmp.ne.s32.totalorder %s108, %s110
      %p117 = scmp.eq.s32.totalorder %s16, 1
      %p118 = por %p116, %p117
      %p119 = scmp.ne.s32.totalorder %s110, %s111
      %p120 = scmp.eq.s32.totalorder %s16, 0
      %p121 = por %p119, %p120
      %p122 = scmp.ne.s32.totalorder %s110, %s111
      %p123 = scmp.eq.s32.totalorder %s17, 1
      %p124 = por %p122, %p123
      %p126 = scmp.ne.s32.totalorder %s111, %s125
      %p127 = scmp.eq.s32.totalorder %s17, 0
      %p128 = por %p126, %p127
      %s129 = ssub.s32 %s11, %s18
      %p130 = scmp.eq.s32.totalorder %s129, 0
      %s132 = sadd.s32 %s131, 1
      %s133 = scalar_select %p130, %s131, %s132
      %p136 = pneg %p130
      %p137 = scmp.eq.s32.totalorder %s11, 1
      %p138 = por %p136, %p137
      %p139 = scmp.ne.s32.totalorder %s131, %s134
      %p140 = scmp.eq.s32.totalorder %s11, 0
      %p141 = por %p139, %p140
      %p142 = scmp.ne.s32.totalorder %s131, %s134
      %p143 = scmp.eq.s32.totalorder %s16, 1
      %p144 = por %p142, %p143
      %p145 = scmp.ne.s32.totalorder %s134, %s135
      %p146 = scmp.eq.s32.totalorder %s16, 0
      %p147 = por %p145, %p146
      %p148 = scmp.ne.s32.totalorder %s134, %s135
      %p149 = scmp.eq.s32.totalorder %s17, 1
      %p150 = por %p148, %p149
      %p152 = scmp.ne.s32.totalorder %s135, %s151
      %p153 = scmp.eq.s32.totalorder %s17, 0
      %p154 = por %p152, %p153
      %p155 = scmp.le.s32.totalorder 1, %s11
      %p156 = scmp.lt.s32.totalorder %s11, 3
      %p157 = pnand %p155, %p156
      %p158 = pneg %p157
      // Predicated region
      $region9: #{detector_forward.18} parent=5 // pred_check
        _
      $region10: #{detector_forward.18} parent=5 // pred_check_branch
        %160 = sbr.rel (%p157) target = $region12
      $region11: #{detector_forward.18} parent=5 // pred_region
        %s161 = ssub.s32 %s11, 1
        // Predicated region
        $region13: #{detector_forward.18} parent=11 // pred_check
          %p162 = pneg %p58
        $region14: #{detector_forward.18} parent=11 // pred_check_branch
          %164 = sbr.rel (%p162) target = $region16
        $region15: #{detector_forward.18} parent=11 // pred_region
          _
        $region16: #{detector_forward.18} parent=11 // pred_fallthru
          _
        // Predicated region
        $region17: #{detector_forward.18} parent=11 // pred_check
          %p165 = pneg %p79
        $region18: #{detector_forward.18} parent=11 // pred_check_branch
          %167 = sbr.rel (%p165) target = $region20
        $region19: #{detector_forward.18} parent=11 // pred_region
          _
        $region20: #{detector_forward.18} parent=11 // pred_fallthru
          _
        // Predicated region
        $region21: #{detector_forward.18} parent=11 // pred_check
          %p168 = pneg %p100
        $region22: #{detector_forward.18} parent=11 // pred_check_branch
          %170 = sbr.rel (%p168) target = $region24
        $region23: #{detector_forward.18} parent=11 // pred_region
          _
        $region24: #{detector_forward.18} parent=11 // pred_fallthru
          _
        // Predicated region
        $region25: #{detector_forward.18} parent=11 // pred_check
          %p171 = pneg %p121
        $region26: #{detector_forward.18} parent=11 // pred_check_branch
          %173 = sbr.rel (%p171) target = $region28
        $region27: #{detector_forward.18} parent=11 // pred_region
          _
        $region28: #{detector_forward.18} parent=11 // pred_fallthru
          _
      $region12: #{detector_forward.18} parent=5 // pred_fallthru
        _
      %p174 = scmp.lt.s32.totalorder %s11, 2
      // Predicated region
      $region29: #{detector_forward.18} parent=5 // pred_check
        %p175 = pneg %p174
      $region30: #{detector_forward.18} parent=5 // pred_check_branch
        %177 = sbr.rel (%p175) target = $region32
      $region31: #{detector_forward.18} parent=5 // pred_region
        // Predicated region
        $region33: #{detector_forward.18} parent=31 // pred_check
          %p178 = pneg %p31
        $region34: #{detector_forward.18} parent=31 // pred_check_branch
          %180 = sbr.rel (%p178) target = $region36
        $region35: #{detector_forward.18} parent=31 // pred_region
          %s181 = smul.u32 8, %s11
          %p182 = scmp.lt.s32.totalorder %s181, 15
          %s183 = scalar_select %p182, %s181, 15
          %s184 = smul.addr %s183, 8
          %s185 = scalar_lea.vmem %s0, %s184
          %s186 = smul.u32 8, %s11
        $region36: #{detector_forward.18} parent=31 // pred_fallthru
          _
      $region32: #{detector_forward.18} parent=5 // pred_fallthru
        _
      %p187 = scmp.le.s32.totalorder 1, %s11
      %p188 = scmp.lt.s32.totalorder %s11, 3
      %p189 = pnand %p187, %p188
      %p190 = pneg %p189
      // Predicated region
      $region37: #{detector_forward.18} parent=5 // pred_check
        _
      $region38: #{detector_forward.18} parent=5 // pred_check_branch
        %192 = sbr.rel (%p189) target = $region40
      $region39: #{detector_forward.18} parent=5 // pred_region
        %s193 = ssub.s32 %s11, 1
        %s194 = smul.u32 8, %s16
        %p195 = scmp.lt.s32.totalorder %s194, 15
        %s196 = scalar_select %p195, %s194, 15
        %s197 = smul.addr %s196, 8
        %s198 = scalar_lea.vmem %s0, %s197
        %p199 = pneg %p37
        %p200 = pneg %p34
        %p201 = pneg %p58
        %p202 = pneg %p55
        %p203 = pneg %p79
        %p204 = pneg %p76
        %p205 = pneg %p100
        %p206 = pneg %p97
        %p207 = pneg %p121
        %p208 = pneg %p118
        %p209 = pneg %p147
        %p210 = pneg %p144
        %s211 = sand.u32 %s134, 1
        %s212 = sand.u32 %s134, 1
        %s213 = smul.addr %s212, 96
        %s214 = scalar_lea.vmem [#allocation2], %s213
        %s215 = smul.u32 8, %s16
        %p216 = scmp.lt.s32.totalorder %s215, 15
        %s217 = scalar_select %p216, %s215, 15
        %s218 = smul.addr %s217, 8
        %s219 = scalar_lea.vmem %s0, %s218
        %s220 = smul.u32 8, %s16
        %s221 = smul.u32 8, %s16
        %v222 = vld [vmem:[%s219] sm:$0xff]
        %v223 = vld [vmem:[%s219 + $0x8] sm:$0xff]
        %v224 = vld [vmem:[%s219 + $0x10] sm:$0xff]
        %v225 = vld [vmem:[%s219 + $0x18] sm:$0xff]
        %v226 = vld [vmem:[%s219 + $0x20] sm:$0xff]
        %v227 = vld [vmem:[%s219 + $0x28] sm:$0xff]
        %v228 = vld [vmem:[%s219 + $0x30] sm:$0xff]
        %v229 = vld [vmem:[%s219 + $0x38] sm:$0xff]
        %230 = vadd.xlane.f32.xlu0 %v222
        %v231 = vpop.xlane.xlu0 %230
        %232 = vadd.xlane.f32.xlu0 %v223
        %v233 = vpop.xlane.xlu0 %232
        %234 = vadd.xlane.f32.xlu0 %v224
        %v235 = vpop.xlane.xlu0 %234
        %236 = vadd.xlane.f32.xlu0 %v225
        %v237 = vpop.xlane.xlu0 %236
        %238 = vadd.xlane.f32.xlu0 %v226
        %v239 = vpop.xlane.xlu0 %238
        %240 = vadd.xlane.f32.xlu0 %v227
        %v241 = vpop.xlane.xlu0 %240
        %242 = vadd.xlane.f32.xlu0 %v228
        %v243 = vpop.xlane.xlu0 %242
        %244 = vadd.xlane.f32.xlu0 %v229
        %v245 = vpop.xlane.xlu0 %244
        %v246 = vrcp.pop 128.0
        %v247 = vmul.f32 128.0, %v246
        %v248 = vsub.f32 1.0, %v247
        %v249 = vmul.f32 %v246, %v248
        %v250 = vadd.f32 %v246, %v249
        %vm251 = vweird.f32 %v246
        %v252 = vsel %vm251, %v246, %v250
        %v253 = vmul.f32 %v231, %v252
        %v254 = vmul.f32 %v233, %v252
        %v255 = vmul.f32 %v235, %v252
        %v256 = vmul.f32 %v237, %v252
        %v257 = vmul.f32 %v239, %v252
        %v258 = vmul.f32 %v241, %v252
        %v259 = vmul.f32 %v243, %v252
        %v260 = vmul.f32 %v245, %v252
        %v261 = vsub.f32 %v222, %v253
        %v262 = vsub.f32 %v223, %v254
        %v263 = vsub.f32 %v224, %v255
        %v264 = vsub.f32 %v225, %v256
        %v265 = vsub.f32 %v226, %v257
        %v266 = vsub.f32 %v227, %v258
        %v267 = vsub.f32 %v228, %v259
        %v268 = vsub.f32 %v229, %v260
        %v269 = vmul.f32 %v261, %v261
        %v270 = vmul.f32 %v262, %v262
        %v271 = vmul.f32 %v263, %v263
        %v272 = vmul.f32 %v264, %v264
        %v273 = vmul.f32 %v265, %v265
        %v274 = vmul.f32 %v266, %v266
        %v275 = vmul.f32 %v267, %v267
        %v276 = vmul.f32 %v268, %v268
        %277 = vadd.xlane.f32.xlu0 %v269
        %v278 = vpop.xlane.xlu0 %277
        %279 = vadd.xlane.f32.xlu0 %v270
        %v280 = vpop.xlane.xlu0 %279
        %281 = vadd.xlane.f32.xlu0 %v271
        %v282 = vpop.xlane.xlu0 %281
        %283 = vadd.xlane.f32.xlu0 %v272
        %v284 = vpop.xlane.xlu0 %283
        %285 = vadd.xlane.f32.xlu0 %v273
        %v286 = vpop.xlane.xlu0 %285
        %287 = vadd.xlane.f32.xlu0 %v274
        %v288 = vpop.xlane.xlu0 %287
        %289 = vadd.xlane.f32.xlu0 %v275
        %v290 = vpop.xlane.xlu0 %289
        %291 = vadd.xlane.f32.xlu0 %v276
        %v292 = vpop.xlane.xlu0 %291
        %v293 = vmul.f32 %v278, %v252
        %v294 = vmul.f32 %v280, %v252
        %v295 = vmul.f32 %v282, %v252
        %v296 = vmul.f32 %v284, %v252
        %v297 = vmul.f32 %v286, %v252
        %v298 = vmul.f32 %v288, %v252
        %v299 = vmul.f32 %v290, %v252
        %v300 = vmul.f32 %v292, %v252
        %v301 = vadd.f32 %v293, 1e-05
        %v302 = vadd.f32 %v294, 1e-05
        %v303 = vadd.f32 %v295, 1e-05
        %v304 = vadd.f32 %v296, 1e-05
        %v305 = vadd.f32 %v297, 1e-05
        %v306 = vadd.f32 %v298, 1e-05
        %v307 = vadd.f32 %v299, 1e-05
        %v308 = vadd.f32 %v300, 1e-05
        %v309 = vrsqrt.pop %v301
        %v310 = vmul.f32 %v309, %v301
        %v311 = vmul.f32 %v310, %v309
        %v312 = vmul.f32 0.5, %v311
        %v313 = vsub.f32 1.5, %v312
        %v314 = vmul.f32 %v309, %v313
        %vm315 = vweird.f32 %v301
        %vm316 = vweird.f32 %v309
        %vm317 = vmor %vm315, %vm316
        %v318 = vsel %vm317, %v309, %v314
        %v319 = vrsqrt.pop %v302
        %v320 = vmul.f32 %v319, %v302
        %v321 = vmul.f32 %v320, %v319
        %v322 = vmul.f32 0.5, %v321
        %v323 = vsub.f32 1.5, %v322
        %v324 = vmul.f32 %v319, %v323
        %vm325 = vweird.f32 %v302
        %vm326 = vweird.f32 %v319
        %vm327 = vmor %vm325, %vm326
        %v328 = vsel %vm327, %v319, %v324
        %v329 = vrsqrt.pop %v303
        %v330 = vmul.f32 %v329, %v303
        %v331 = vmul.f32 %v330, %v329
        %v332 = vmul.f32 0.5, %v331
        %v333 = vsub.f32 1.5, %v332
        %v334 = vmul.f32 %v329, %v333
        %vm335 = vweird.f32 %v303
        %vm336 = vweird.f32 %v329
        %vm337 = vmor %vm335, %vm336
        %v338 = vsel %vm337, %v329, %v334
        %v339 = vrsqrt.pop %v304
        %v340 = vmul.f32 %v339, %v304
        %v341 = vmul.f32 %v340, %v339
        %v342 = vmul.f32 0.5, %v341
        %v343 = vsub.f32 1.5, %v342
        %v344 = vmul.f32 %v339, %v343
        %vm345 = vweird.f32 %v304
        %vm346 = vweird.f32 %v339
        %vm347 = vmor %vm345, %vm346
        %v348 = vsel %vm347, %v339, %v344
        %v349 = vrsqrt.pop %v305
        %v350 = vmul.f32 %v349, %v305
        %v351 = vmul.f32 %v350, %v349
        %v352 = vmul.f32 0.5, %v351
        %v353 = vsub.f32 1.5, %v352
        %v354 = vmul.f32 %v349, %v353
        %vm355 = vweird.f32 %v305
        %vm356 = vweird.f32 %v349
        %vm357 = vmor %vm355, %vm356
        %v358 = vsel %vm357, %v349, %v354
        %v359 = vrsqrt.pop %v306
        %v360 = vmul.f32 %v359, %v306
        %v361 = vmul.f32 %v360, %v359
        %v362 = vmul.f32 0.5, %v361
        %v363 = vsub.f32 1.5, %v362
        %v364 = vmul.f32 %v359, %v363
        %vm365 = vweird.f32 %v306
        %vm366 = vweird.f32 %v359
        %vm367 = vmor %vm365, %vm366
        %v368 = vsel %vm367, %v359, %v364
        %v369 = vrsqrt.pop %v307
        %v370 = vmul.f32 %v369, %v307
        %v371 = vmul.f32 %v370, %v369
        %v372 = vmul.f32 0.5, %v371
        %v373 = vsub.f32 1.5, %v372
        %v374 = vmul.f32 %v369, %v373
        %vm375 = vweird.f32 %v307
        %vm376 = vweird.f32 %v369
        %vm377 = vmor %vm375, %vm376
        %v378 = vsel %vm377, %v369, %v374
        %v379 = vrsqrt.pop %v308
        %v380 = vmul.f32 %v379, %v308
        %v381 = vmul.f32 %v380, %v379
        %v382 = vmul.f32 0.5, %v381
        %v383 = vsub.f32 1.5, %v382
        %v384 = vmul.f32 %v379, %v383
        %vm385 = vweird.f32 %v308
        %vm386 = vweird.f32 %v379
        %vm387 = vmor %vm385, %vm386
        %v388 = vsel %vm387, %v379, %v384
        %v389 = vmul.f32 %v261, %v318
        %v390 = vmul.f32 %v262, %v328
        %v391 = vmul.f32 %v263, %v338
        %v392 = vmul.f32 %v264, %v348
        %v393 = vmul.f32 %v265, %v358
        %v394 = vmul.f32 %v266, %v368
        %v395 = vmul.f32 %v267, %v378
        %v396 = vmul.f32 %v268, %v388
        %v397 = vld [vmem:[%s1] sm:$0x1]
        %v399 = vperm.slane %v397, 0
        %v401 = vmul.f32 %v389, %v399
        %v402 = vmul.f32 %v390, %v399
        %v403 = vmul.f32 %v391, %v399
        %v404 = vmul.f32 %v392, %v399
        %v405 = vmul.f32 %v393, %v399
        %v406 = vmul.f32 %v394, %v399
        %v407 = vmul.f32 %v395, %v399
        %v408 = vmul.f32 %v396, %v399
        %v409 = vld [vmem:[%s2] sm:$0x1]
        %v411 = vperm.slane %v409, 0
        %v413 = vadd.f32 %v401, %v411
        %v414 = vadd.f32 %v402, %v411
        %v415 = vadd.f32 %v403, %v411
        %v416 = vadd.f32 %v404, %v411
        %v417 = vadd.f32 %v405, %v411
        %v418 = vadd.f32 %v406, %v411
        %v419 = vadd.f32 %v407, %v411
        %v420 = vadd.f32 %v408, %v411
        %v421 = vpack.c.bf16 %v414, %v413
        %v422 = vpack.c.bf16 %v416, %v415
        %v423 = vpack.c.bf16 %v418, %v417
        %v424 = vpack.c.bf16 %v420, %v419
        %v425 = vld [vmem:[%s3] sm:$0xff]
        %v426 = vld [vmem:[%s3 + $0x8] sm:$0xf]
        %v427 = vld [vmem:[%s3 + $0xc] sm:$0xff]
        %v428 = vld [vmem:[%s3 + $0x14] sm:$0xf]
        %v429 = vld [vmem:[%s3 + $0x18] sm:$0xff]
        %v430 = vld [vmem:[%s3 + $0x20] sm:$0xf]
        %v431 = vld [vmem:[%s3 + $0x24] sm:$0xff]
        %v432 = vld [vmem:[%s3 + $0x2c] sm:$0xf]
        %v433 = vld [vmem:[%s3 + $0x30] sm:$0xff]
        %v434 = vld [vmem:[%s3 + $0x38] sm:$0xf]
        %v435 = vld [vmem:[%s3 + $0x3c] sm:$0xff]
        %v436 = vld [vmem:[%s3 + $0x44] sm:$0xf]
        %v437 = vld [vmem:[%s3 + $0x48] sm:$0xff]
        %v438 = vld [vmem:[%s3 + $0x50] sm:$0xf]
        %v439 = vld [vmem:[%s3 + $0x54] sm:$0xff]
        %v440 = vld [vmem:[%s3 + $0x5c] sm:$0xf]
        %v441 = vld [vmem:[%s3 + $0x60] sm:$0xff]
        %v442 = vld [vmem:[%s3 + $0x68] sm:$0xf]
        %v443 = vld [vmem:[%s3 + $0x6c] sm:$0xff]
        %v444 = vld [vmem:[%s3 + $0x74] sm:$0xf]
        %v445 = vld [vmem:[%s3 + $0x78] sm:$0xff]
        %v446 = vld [vmem:[%s3 + $0x80] sm:$0xf]
        %v447 = vld [vmem:[%s3 + $0x84] sm:$0xff]
        %v448 = vld [vmem:[%s3 + $0x8c] sm:$0xf]
        %v449 = vld [vmem:[%s3 + $0x90] sm:$0xff]
        %v450 = vld [vmem:[%s3 + $0x98] sm:$0xf]
        %v451 = vld [vmem:[%s3 + $0x9c] sm:$0xff]
        %v452 = vld [vmem:[%s3 + $0xa4] sm:$0xf]
        %v453 = vld [vmem:[%s3 + $0xa8] sm:$0xff]
        %v454 = vld [vmem:[%s3 + $0xb0] sm:$0xf]
        %v455 = vld [vmem:[%s3 + $0xb4] sm:$0xff]
        %v456 = vld [vmem:[%s3 + $0xbc] sm:$0xf]
        %v457 = vld [vmem:[%s4] sm:$0x7]
        %v459 = vperm.slane %v457, 0
        %v460 = vperm.slane %v457, 1
        %v461 = vperm.slane %v457, 2
        %v497 = vunpack.c.l.b16 %v425
        %v498 = vunpack.c.h.b16 %v425
        %v499 = vunpack.c.l.b16 %v426
        %v500 = vunpack.c.l.b16 %v427
        %v501 = vunpack.c.h.b16 %v427
        %v502 = vunpack.c.l.b16 %v428
        %v503 = vunpack.c.l.b16 %v429
        %v504 = vunpack.c.h.b16 %v429
        %v505 = vunpack.c.l.b16 %v430
        %v506 = vunpack.c.l.b16 %v431
        %v507 = vunpack.c.h.b16 %v431
        %v508 = vunpack.c.l.b16 %v432
        %v509 = vunpack.c.l.b16 %v433
        %v510 = vunpack.c.h.b16 %v433
        %v511 = vunpack.c.l.b16 %v434
        %v512 = vunpack.c.l.b16 %v435
        %v513 = vunpack.c.h.b16 %v435
        %v514 = vunpack.c.l.b16 %v436
        %v515 = vunpack.c.l.b16 %v437
        %v516 = vunpack.c.h.b16 %v437
        %v517 = vunpack.c.l.b16 %v438
        %v518 = vunpack.c.l.b16 %v439
        %v519 = vunpack.c.h.b16 %v439
        %v520 = vunpack.c.l.b16 %v440
        %v521 = vunpack.c.l.b16 %v441
        %v522 = vunpack.c.h.b16 %v441
        %v523 = vunpack.c.l.b16 %v442
        %v524 = vunpack.c.l.b16 %v443
        %v525 = vunpack.c.h.b16 %v443
        %v526 = vunpack.c.l.b16 %v444
        %v527 = vunpack.c.l.b16 %v445
        %v528 = vunpack.c.h.b16 %v445
        %v529 = vunpack.c.l.b16 %v446
        %v530 = vunpack.c.l.b16 %v447
        %v531 = vunpack.c.h.b16 %v447
        %v532 = vunpack.c.l.b16 %v448
        %v533 = vunpack.c.l.b16 %v449
        %v534 = vunpack.c.h.b16 %v449
        %v535 = vunpack.c.l.b16 %v450
        %v536 = vunpack.c.l.b16 %v451
        %v537 = vunpack.c.h.b16 %v451
        %v538 = vunpack.c.l.b16 %v452
        %v539 = vunpack.c.l.b16 %v453
        %v540 = vunpack.c.h.b16 %v453
        %v541 = vunpack.c.l.b16 %v454
        %v542 = vunpack.c.l.b16 %v455
        %v543 = vunpack.c.h.b16 %v455
        %v544 = vunpack.c.l.b16 %v456
        %v545 = vpack.c.b16 %v500, %v497
        %v546 = vpack.c.b16 %v501, %v498
        %v547 = vpack.c.b16 %v502, %v499
        %v548 = vpack.c.b16 %v506, %v503
        %v549 = vpack.c.b16 %v507, %v504
        %v550 = vpack.c.b16 %v508, %v505
        %v551 = vpack.c.b16 %v512, %v509
        %v552 = vpack.c.b16 %v513, %v510
        %v553 = vpack.c.b16 %v514, %v511
        %v554 = vpack.c.b16 %v518, %v515
        %v555 = vpack.c.b16 %v519, %v516
        %v556 = vpack.c.b16 %v520, %v517
        %v557 = vpack.c.b16 %v524, %v521
        %v558 = vpack.c.b16 %v525, %v522
        %v559 = vpack.c.b16 %v526, %v523
        %v560 = vpack.c.b16 %v530, %v527
        %v561 = vpack.c.b16 %v531, %v528
        %v562 = vpack.c.b16 %v532, %v529
        %v563 = vpack.c.b16 %v536, %v533
        %v564 = vpack.c.b16 %v537, %v534
        %v565 = vpack.c.b16 %v538, %v535
        %v566 = vpack.c.b16 %v542, %v539
        %v567 = vpack.c.b16 %v543, %v540
        %v568 = vpack.c.b16 %v544, %v541
        %593 = vmatpush.bf16.msra.mxu0 %v566
        %594 = vmatpush.bf16.msra.mxu0 %v563
        %595 = vmatpush.bf16.msra.mxu0 %v560
        %596 = vmatpush.bf16.msra.mxu0 %v557
        %597 = vmatpush.bf16.msra.mxu0 %v554
        %598 = vmatpush.bf16.msra.mxu0 %v551
        %599 = vmatpush.bf16.msra.mxu0 %v548
        %600 = vmatpush.bf16.msra.mxu0 %v545
        %601 = vmatmul.bf16.gmra.mxu0 %v421
        %v602 = vpop.f32.mrf.mxu0
        %v603 = vadd.f32 %v459, %v602
        %v604 = vpop.f32.mrf.mxu0
        %v605 = vadd.f32 %v459, %v604
        %606 = vmatmul.bf16.gmra.mxu0 %v422
        %v607 = vpop.f32.mrf.mxu0
        %v608 = vadd.f32 %v459, %v607
        %v609 = vpop.f32.mrf.mxu0
        %v610 = vadd.f32 %v459, %v609
        %611 = vmatmul.bf16.gmra.mxu0 %v423
        %v612 = vpop.f32.mrf.mxu0
        %v613 = vadd.f32 %v459, %v612
        %v614 = vpop.f32.mrf.mxu0
        %v615 = vadd.f32 %v459, %v614
        %616 = vmatmul.bf16.gmra.mxu0 %v424
        %v617 = vpop.f32.mrf.mxu0
        %v618 = vadd.f32 %v459, %v617
        %v619 = vpop.f32.mrf.mxu0
        %v620 = vadd.f32 %v459, %v619
        %621 = vdwg.mxu0
        %622 = vmatpush.bf16.msra.mxu0 %v567
        %623 = vmatpush.bf16.msra.mxu0 %v564
        %624 = vmatpush.bf16.msra.mxu0 %v561
        %625 = vmatpush.bf16.msra.mxu0 %v558
        %626 = vmatpush.bf16.msra.mxu0 %v555
        %627 = vmatpush.bf16.msra.mxu0 %v552
        %628 = vmatpush.bf16.msra.mxu0 %v549
        %629 = vmatpush.bf16.msra.mxu0 %v546
        %630 = vmatmul.bf16.gmra.mxu0 %v421
        %v631 = vpop.f32.mrf.mxu0
        %v632 = vadd.f32 %v460, %v631
        %v633 = vpop.f32.mrf.mxu0
        %v634 = vadd.f32 %v460, %v633
        %635 = vmatmul.bf16.gmra.mxu0 %v422
        %v636 = vpop.f32.mrf.mxu0
        %v637 = vadd.f32 %v460, %v636
        %v638 = vpop.f32.mrf.mxu0
        %v639 = vadd.f32 %v460, %v638
        %640 = vmatmul.bf16.gmra.mxu0 %v423
        %v641 = vpop.f32.mrf.mxu0
        %v642 = vadd.f32 %v460, %v641
        %v643 = vpop.f32.mrf.mxu0
        %v644 = vadd.f32 %v460, %v643
        %645 = vmatmul.bf16.gmra.mxu0 %v424
        %v646 = vpop.f32.mrf.mxu0
        %v647 = vadd.f32 %v460, %v646
        %v648 = vpop.f32.mrf.mxu0
        %v649 = vadd.f32 %v460, %v648
        %650 = vdwg.mxu0
        %651 = vmatpush.bf16.msra.mxu0 %v568
        %652 = vmatpush.bf16.msra.mxu0 %v565
        %653 = vmatpush.bf16.msra.mxu0 %v562
        %654 = vmatpush.bf16.msra.mxu0 %v559
        %655 = vmatpush.bf16.msra.mxu0 %v556
        %656 = vmatpush.bf16.msra.mxu0 %v553
        %657 = vmatpush.bf16.msra.mxu0 %v550
        %658 = vmatpush.bf16.msra.mxu0 %v547
        %659 = vmatmul.bf16.gmra.mxu0 %v421
        %v660 = vpop.f32.mrf.mxu0
        %v661 = vadd.f32 %v461, %v660
        %v662 = vpop.f32.mrf.mxu0
        %v663 = vadd.f32 %v461, %v662
        %664 = vmatmul.bf16.gmra.mxu0 %v422
        %v665 = vpop.f32.mrf.mxu0
        %v666 = vadd.f32 %v461, %v665
        %v667 = vpop.f32.mrf.mxu0
        %v668 = vadd.f32 %v461, %v667
        %669 = vmatmul.bf16.gmra.mxu0 %v423
        %v670 = vpop.f32.mrf.mxu0
        %v671 = vadd.f32 %v461, %v670
        %v672 = vpop.f32.mrf.mxu0
        %v673 = vadd.f32 %v461, %v672
        %674 = vmatmul.bf16.gmra.mxu0 %v424
        %v675 = vpop.f32.mrf.mxu0
        %v676 = vadd.f32 %v461, %v675
        %v677 = vpop.f32.mrf.mxu0
        %v678 = vadd.f32 %v461, %v677
        %679 = vdwg.mxu0
        %v680 = vpack.c.bf16 %v603, %v603
        %v681 = vpack.c.bf16 %v605, %v605
        %v682 = vpack.c.bf16 %v608, %v608
        %v683 = vpack.c.bf16 %v610, %v610
        %v684 = vpack.c.bf16 %v613, %v613
        %v685 = vpack.c.bf16 %v615, %v615
        %v686 = vpack.c.bf16 %v618, %v618
        %v687 = vpack.c.bf16 %v620, %v620
        %688 = vst [vmem:[%s214] sm:$0xf] %v680
        %689 = vst [vmem:[%s214 + $0x4] sm:$0xf] %v681
        %690 = vst [vmem:[%s214 + $0x8] sm:$0xf] %v682
        %691 = vst [vmem:[%s214 + $0xc] sm:$0xf] %v683
        %692 = vst [vmem:[%s214 + $0x10] sm:$0xf] %v684
        %693 = vst [vmem:[%s214 + $0x14] sm:$0xf] %v685
        %694 = vst [vmem:[%s214 + $0x18] sm:$0xf] %v686
        %695 = vst [vmem:[%s214 + $0x1c] sm:$0xf] %v687
        %v696 = vpack.c.bf16 %v632, %v632
        %v697 = vpack.c.bf16 %v634, %v634
        %v698 = vpack.c.bf16 %v637, %v637
        %v699 = vpack.c.bf16 %v639, %v639
        %v700 = vpack.c.bf16 %v642, %v642
        %v701 = vpack.c.bf16 %v644, %v644
        %v702 = vpack.c.bf16 %v647, %v647
        %v703 = vpack.c.bf16 %v649, %v649
        %s704 = scalar_lea.vmem %s214, 32 [#allocation2]
        %705 = vst [vmem:[%s704] sm:$0xf] %v696
        %706 = vst [vmem:[%s704 + $0x4] sm:$0xf] %v697
        %707 = vst [vmem:[%s704 + $0x8] sm:$0xf] %v698
        %708 = vst [vmem:[%s704 + $0xc] sm:$0xf] %v699
        %709 = vst [vmem:[%s704 + $0x10] sm:$0xf] %v700
        %710 = vst [vmem:[%s704 + $0x14] sm:$0xf] %v701
        %711 = vst [vmem:[%s704 + $0x18] sm:$0xf] %v702
        %712 = vst [vmem:[%s704 + $0x1c] sm:$0xf] %v703
        %v713 = vpack.c.bf16 %v661, %v661
        %v714 = vpack.c.bf16 %v663, %v663
        %v715 = vpack.c.bf16 %v666, %v666
        %v716 = vpack.c.bf16 %v668, %v668
        %v717 = vpack.c.bf16 %v671, %v671
        %v718 = vpack.c.bf16 %v673, %v673
        %v719 = vpack.c.bf16 %v676, %v676
        %v720 = vpack.c.bf16 %v678, %v678
        %s721 = scalar_lea.vmem %s214, 64 [#allocation2]
        %722 = vst [vmem:[%s721] sm:$0xf] %v713
        %723 = vst [vmem:[%s721 + $0x4] sm:$0xf] %v714
        %724 = vst [vmem:[%s721 + $0x8] sm:$0xf] %v715
        %725 = vst [vmem:[%s721 + $0xc] sm:$0xf] %v716
        %726 = vst [vmem:[%s721 + $0x10] sm:$0xf] %v717
        %727 = vst [vmem:[%s721 + $0x14] sm:$0xf] %v718
        %728 = vst [vmem:[%s721 + $0x18] sm:$0xf] %v719
        %729 = vst [vmem:[%s721 + $0x1c] sm:$0xf] %v720
        %s730 = sand.u32 %s134, 1
        %s731 = sand.u32 %s134, 1
        %s732 = smul.addr %s731, 96
        %s733 = scalar_lea.vmem [#allocation2], %s732
        // Predicated region
        $region41: #{detector_forward.18} parent=39 // pred_check
          %p734 = pneg %p144
        $region42: #{detector_forward.18} parent=39 // pred_check_branch
          %736 = sbr.rel (%p734) target = $region44
        $region43: #{detector_forward.18} parent=39 // pred_region
          %s737 = smul.u32 8, %s16
          %s738 = smul.addr %s737, 4
          %s739 = scalar_lea.vmem %s5, %s738
          // Predicated region
          $region45: #{detector_forward.18} parent=43 // pred_check
            _
          $region46: #{detector_forward.18} parent=43 // pred_check_branch
            %741 = sbr.rel (0) target = $region48
          $region47: #{detector_forward.18} parent=43 // pred_region
            // Predicated region
            $region49: #{detector_forward.18} parent=47 // pred_check
              _
            $region50: #{detector_forward.18} parent=47 // pred_check_branch
              %743 = sbr.rel target = $region52
            $region51: #{detector_forward.18} parent=47 // pred_region
              // Predicated region
              $region64: #{detector_forward.18} parent=51 // pred_check
                _
              $region65: #{detector_forward.18} parent=51 // pred_check_branch
                %805 = sbr.rel (0) target = $region67
              $region66: #{detector_forward.18} parent=51 // pred_region
                loop: start=0, step=1, limit=1
                $region68: #{detector_forward.18} parent=66 // loop_pre_header
                  _
                $region69: #{detector_forward.18} parent=66 // loop_header
                  %s807 = sphi 0, %s811
                  %p808 = scmp.ge.s32.totalorder %s807, 1
                  %s812 = sphi %s733, %s733
                  %s813 = sphi %s739, %s739
                $region70: #{detector_forward.18} parent=66 // loop_header_branch
                  %810 = sbr.rel (%p808) target = $region74
                $region71: #{detector_forward.18} parent=66 // loop_body
                  _
                $region72: #{detector_forward.18} parent=66 // loop_footer
                  %s811 = sadd.s32 1, %s807
                $region73: #{detector_forward.18} parent=66 // loop_footer_branch
                  %806 = sbr.rel target = $region69
                $region74: #{detector_forward.18} parent=66 // loop_exit
                  _
                %s815 = ssub.s32 16, 1
                loop: start=0, step=1, limit=1
                $region75: #{detector_forward.18} parent=66 // loop_pre_header
                  _
                $region76: #{detector_forward.18} parent=66 // loop_header
                  %s817 = sphi 0, %s821
                  %p818 = scmp.ge.s32.totalorder %s817, 1
                  %s822 = sphi %s733, %s733
                  %s823 = sphi %s739, %s739
                $region77: #{detector_forward.18} parent=66 // loop_header_branch
                  %820 = sbr.rel (%p818) target = $region81
                $region78: #{detector_forward.18} parent=66 // loop_body
                  %v824 = vld [vmem:[%s822] sm:%s815]
                  %825 = vst [vmem:[%s823] sm:%s815] %v824
                  %v826 = vld [vmem:[%s822 + $0x4] sm:%s815]
                  %827 = vst [vmem:[%s823 + $0x4] sm:%s815] %v826
                  %v828 = vld [vmem:[%s822 + $0x8] sm:%s815]
                  %829 = vst [vmem:[%s823 + $0x8] sm:%s815] %v828
                  %v830 = vld [vmem:[%s822 + $0xc] sm:%s815]
                  %831 = vst [vmem:[%s823 + $0xc] sm:%s815] %v830
                  %v832 = vld [vmem:[%s822 + $0x10] sm:%s815]
                  %833 = vst [vmem:[%s823 + $0x10] sm:%s815] %v832
                  %v834 = vld [vmem:[%s822 + $0x14] sm:%s815]
                  %835 = vst [vmem:[%s823 + $0x14] sm:%s815] %v834
                  %v836 = vld [vmem:[%s822 + $0x18] sm:%s815]
                  %837 = vst [vmem:[%s823 + $0x18] sm:%s815] %v836
                  %v838 = vld [vmem:[%s822 + $0x1c] sm:%s815]
                  %839 = vst [vmem:[%s823 + $0x1c] sm:%s815] %v838
                  %v840 = vld [vmem:[%s822 + $0x20] sm:%s815]
                  %841 = vst [vmem:[%s823 + $0x40] sm:%s815] %v840
                  %v842 = vld [vmem:[%s822 + $0x24] sm:%s815]
                  %843 = vst [vmem:[%s823 + $0x44] sm:%s815] %v842
                  %v844 = vld [vmem:[%s822 + $0x28] sm:%s815]
                  %845 = vst [vmem:[%s823 + $0x48] sm:%s815] %v844
                  %v846 = vld [vmem:[%s822 + $0x2c] sm:%s815]
                  %847 = vst [vmem:[%s823 + $0x4c] sm:%s815] %v846
                  %v848 = vld [vmem:[%s822 + $0x30] sm:%s815]
                  %849 = vst [vmem:[%s823 + $0x50] sm:%s815] %v848
                  %v850 = vld [vmem:[%s822 + $0x34] sm:%s815]
                  %851 = vst [vmem:[%s823 + $0x54] sm:%s815] %v850
                  %v852 = vld [vmem:[%s822 + $0x38] sm:%s815]
                  %853 = vst [vmem:[%s823 + $0x58] sm:%s815] %v852
                  %v854 = vld [vmem:[%s822 + $0x3c] sm:%s815]
                  %855 = vst [vmem:[%s823 + $0x5c] sm:%s815] %v854
                  %v856 = vld [vmem:[%s822 + $0x40] sm:%s815]
                  %857 = vst [vmem:[%s823 + $0x80] sm:%s815] %v856
                  %v858 = vld [vmem:[%s822 + $0x44] sm:%s815]
                  %859 = vst [vmem:[%s823 + $0x84] sm:%s815] %v858
                  %v860 = vld [vmem:[%s822 + $0x48] sm:%s815]
                  %861 = vst [vmem:[%s823 + $0x88] sm:%s815] %v860
                  %v862 = vld [vmem:[%s822 + $0x4c] sm:%s815]
                  %863 = vst [vmem:[%s823 + $0x8c] sm:%s815] %v862
                  %v864 = vld [vmem:[%s822 + $0x50] sm:%s815]
                  %865 = vst [vmem:[%s823 + $0x90] sm:%s815] %v864
                  %v866 = vld [vmem:[%s822 + $0x54] sm:%s815]
                  %867 = vst [vmem:[%s823 + $0x94] sm:%s815] %v866
                  %v868 = vld [vmem:[%s822 + $0x58] sm:%s815]
                  %869 = vst [vmem:[%s823 + $0x98] sm:%s815] %v868
                  %v870 = vld [vmem:[%s822 + $0x5c] sm:%s815]
                  %871 = vst [vmem:[%s823 + $0x9c] sm:%s815] %v870
                $region79: #{detector_forward.18} parent=66 // loop_footer
                  %s821 = sadd.s32 1, %s817
                $region80: #{detector_forward.18} parent=66 // loop_footer_branch
                  %816 = sbr.rel target = $region76
                $region81: #{detector_forward.18} parent=66 // loop_exit
                  _
              $region67: #{detector_forward.18} parent=51 // pred_fallthru
                _
            $region52: #{detector_forward.18} parent=47 // pred_fallthru
              _
            // Predicated region
            $region53: #{detector_forward.18} parent=47 // pred_check
              _
            $region54: #{detector_forward.18} parent=47 // pred_check_branch
              %745 = sbr.rel (0) target = $region56
            $region55: #{detector_forward.18} parent=47 // pred_region
              %s747 = ssub.s32 16, 1
              loop: start=0, step=1, limit=1
              $region57: #{detector_forward.18} parent=55 // loop_pre_header
                _
              $region58: #{detector_forward.18} parent=55 // loop_header
                %s749 = sphi 0, %s753
                %p750 = scmp.ge.s32.totalorder %s749, 1
                %s754 = sphi %s733, %s733
                %s755 = sphi %s739, %s739
              $region59: #{detector_forward.18} parent=55 // loop_header_branch
                %752 = sbr.rel (%p750) target = $region63
              $region60: #{detector_forward.18} parent=55 // loop_body
                %v756 = vld [vmem:[%s754] sm:%s747]
                %757 = vst [vmem:[%s755] sm:%s747] %v756
                %v758 = vld [vmem:[%s754 + $0x4] sm:%s747]
                %759 = vst [vmem:[%s755 + $0x4] sm:%s747] %v758
                %v760 = vld [vmem:[%s754 + $0x8] sm:%s747]
                %761 = vst [vmem:[%s755 + $0x8] sm:%s747] %v760
                %v762 = vld [vmem:[%s754 + $0xc] sm:%s747]
                %763 = vst [vmem:[%s755 + $0xc] sm:%s747] %v762
                %v764 = vld [vmem:[%s754 + $0x10] sm:%s747]
                %765 = vst [vmem:[%s755 + $0x10] sm:%s747] %v764
                %v766 = vld [vmem:[%s754 + $0x14] sm:%s747]
                %767 = vst [vmem:[%s755 + $0x14] sm:%s747] %v766
                %v768 = vld [vmem:[%s754 + $0x18] sm:%s747]
                %769 = vst [vmem:[%s755 + $0x18] sm:%s747] %v768
                %v770 = vld [vmem:[%s754 + $0x1c] sm:%s747]
                %771 = vst [vmem:[%s755 + $0x1c] sm:%s747] %v770
                %v772 = vld [vmem:[%s754 + $0x20] sm:%s747]
                %773 = vst [vmem:[%s755 + $0x40] sm:%s747] %v772
                %v774 = vld [vmem:[%s754 + $0x24] sm:%s747]
                %775 = vst [vmem:[%s755 + $0x44] sm:%s747] %v774
                %v776 = vld [vmem:[%s754 + $0x28] sm:%s747]
                %777 = vst [vmem:[%s755 + $0x48] sm:%s747] %v776
                %v778 = vld [vmem:[%s754 + $0x2c] sm:%s747]
                %779 = vst [vmem:[%s755 + $0x4c] sm:%s747] %v778
                %v780 = vld [vmem:[%s754 + $0x30] sm:%s747]
                %781 = vst [vmem:[%s755 + $0x50] sm:%s747] %v780
                %v782 = vld [vmem:[%s754 + $0x34] sm:%s747]
                %783 = vst [vmem:[%s755 + $0x54] sm:%s747] %v782
                %v784 = vld [vmem:[%s754 + $0x38] sm:%s747]
                %785 = vst [vmem:[%s755 + $0x58] sm:%s747] %v784
                %v786 = vld [vmem:[%s754 + $0x3c] sm:%s747]
                %787 = vst [vmem:[%s755 + $0x5c] sm:%s747] %v786
                %v788 = vld [vmem:[%s754 + $0x40] sm:%s747]
                %789 = vst [vmem:[%s755 + $0x80] sm:%s747] %v788
                %v790 = vld [vmem:[%s754 + $0x44] sm:%s747]
                %791 = vst [vmem:[%s755 + $0x84] sm:%s747] %v790
                %v792 = vld [vmem:[%s754 + $0x48] sm:%s747]
                %793 = vst [vmem:[%s755 + $0x88] sm:%s747] %v792
                %v794 = vld [vmem:[%s754 + $0x4c] sm:%s747]
                %795 = vst [vmem:[%s755 + $0x8c] sm:%s747] %v794
                %v796 = vld [vmem:[%s754 + $0x50] sm:%s747]
                %797 = vst [vmem:[%s755 + $0x90] sm:%s747] %v796
                %v798 = vld [vmem:[%s754 + $0x54] sm:%s747]
                %799 = vst [vmem:[%s755 + $0x94] sm:%s747] %v798
                %v800 = vld [vmem:[%s754 + $0x58] sm:%s747]
                %801 = vst [vmem:[%s755 + $0x98] sm:%s747] %v800
                %v802 = vld [vmem:[%s754 + $0x5c] sm:%s747]
                %803 = vst [vmem:[%s755 + $0x9c] sm:%s747] %v802
              $region61: #{detector_forward.18} parent=55 // loop_footer
                %s753 = sadd.s32 1, %s749
              $region62: #{detector_forward.18} parent=55 // loop_footer_branch
                %748 = sbr.rel target = $region58
              $region63: #{detector_forward.18} parent=55 // loop_exit
                _
            $region56: #{detector_forward.18} parent=47 // pred_fallthru
              _
          $region48: #{detector_forward.18} parent=43 // pred_fallthru
            _
          %872 = vnop
        $region44: #{detector_forward.18} parent=39 // pred_fallthru
          _
      $region40: #{detector_forward.18} parent=5 // pred_fallthru
        _
      %p873 = scmp.le.s32.totalorder 2, %s11
      // Predicated region
      $region82: #{detector_forward.18} parent=5 // pred_check
        %p874 = pneg %p873
      $region83: #{detector_forward.18} parent=5 // pred_check_branch
        %876 = sbr.rel (%p874) target = $region85
      $region84: #{detector_forward.18} parent=5 // pred_region
        %s877 = ssub.s32 %s11, 2
        // Predicated region
        $region86: #{detector_forward.18} parent=84 // pred_check
          %p878 = pneg %p150
        $region87: #{detector_forward.18} parent=84 // pred_check_branch
          %880 = sbr.rel (%p878) target = $region89
        $region88: #{detector_forward.18} parent=84 // pred_region
          %s881 = sand.u32 %s135, 1
          %s882 = sand.u32 %s135, 1
          %s883 = smul.addr %s882, 96
          %s884 = scalar_lea.vmem [#allocation2], %s883
        $region89: #{detector_forward.18} parent=84 // pred_fallthru
          _
      $region85: #{detector_forward.18} parent=5 // pred_fallthru
        _
    $region6: #{detector_forward.18} parent=1 // loop_footer
      %s15 = sadd.s32 1, %s11
    $region7: #{detector_forward.18} parent=1 // loop_footer_branch
      %10 = sbr.rel target = $region3
    $region8: #{detector_forward.18} parent=1 // loop_exit
      _

// kernel: detector_forward.21
$region0: #{detector_forward.21}
  #allocation0 [shape = 'u32[]', space=smem, size = 0x4, offset = 0x4, fixed_abs, tag = 'smem constant byte address 0x4 - core index']
  #allocation1 [shape = 'u32[72,128]{1,0:T(1,128)}', space=vmem, size = 0x9000, scoped, tag = 'internal scratch']
  %s0 = inlined_call_operand.vmem [shape: f32[128,128], index: 0, kind: input, shape index: {}]
  %s1 = inlined_call_operand.vmem [shape: f32[1,128], index: 1, kind: input, shape index: {}]
  %s2 = inlined_call_operand.vmem [shape: f32[1,128], index: 2, kind: input, shape index: {}]
  %s3 = inlined_call_operand.vmem [shape: bf16[128,256], index: 3, kind: input, shape index: {}]
  %s4 = inlined_call_operand.vmem [shape: f32[1,256], index: 4, kind: input, shape index: {}]
  %s5 = inlined_call_operand.vmem [shape: bf16[128,256], index: 5, kind: output, shape index: {}]
  %s6 = sld [smem:[#allocation0]]
  $region53: #{detector_forward.21} parent=0
    _
  %s8 = ssub.s32 1, %s6
  %s9 = scalar_select 0, %s8, %s6
  loop: start=0, step=1, limit=4
  $region2: #{detector_forward.21} parent=0 // loop_pre_header
    _
  $region3: #{detector_forward.21} parent=0 // loop_header
    %s11 = sphi 0, %s15
    %p12 = scmp.ge.s32.totalorder %s11, 4
    %s21 = sphi 0, %s23
    %s24 = sphi 0, %s21
    %s25 = sphi 0, %s24
    %s41 = sphi 0, %s25
    %s45 = sphi 0, %s45
    %s47 = sphi 0, %s45
    %s48 = sphi 0, %s47
    %s62 = sphi 0, %s48
    %s66 = sphi 0, %s66
    %s68 = sphi 0, %s66
    %s69 = sphi 0, %s68
    %s83 = sphi 0, %s69
    %s87 = sphi 0, %s87
    %s89 = sphi 0, %s87
    %s90 = sphi 0, %s89
    %s104 = sphi 0, %s90
    %s108 = sphi 0, %s108
    %s110 = sphi 0, %s108
    %s111 = sphi 0, %s110
    %s125 = sphi 0, %s111
    %s131 = sphi 0, %s133
    %s134 = sphi 0, %s131
    %s135 = sphi 0, %s134
    %s151 = sphi 0, %s135
  $region4: #{detector_forward.21} parent=0 // loop_header_branch
    %14 = sbr.rel (%p12) target = $region8
  $region5: #{detector_forward.21} parent=0 // loop_body
    %s16 = ssub.s32 %s11, 1
    %s17 = ssub.s32 %s11, 2
    %s18 = sadd.s32 %s11, 1
    %s19 = ssub.s32 %s11, %s18
    %p20 = scmp.eq.s32.totalorder %s19, 0
    %s22 = sadd.s32 %s21, 1
    %s23 = scalar_select %p20, %s21, %s22
    %p26 = pneg %p20
    %p27 = scmp.eq.s32.totalorder %s11, 1
    %p28 = por %p26, %p27
    %p29 = scmp.ne.s32.totalorder %s21, %s24
    %p30 = scmp.eq.s32.totalorder %s11, 0
    %p31 = por %p29, %p30
    %p32 = scmp.ne.s32.totalorder %s21, %s24
    %p33 = scmp.eq.s32.totalorder %s16, 1
    %p34 = por %p32, %p33
    %p35 = scmp.ne.s32.totalorder %s24, %s25
    %p36 = scmp.eq.s32.totalorder %s16, 0
    %p37 = por %p35, %p36
    %p38 = scmp.ne.s32.totalorder %s24, %s25
    %p39 = scmp.eq.s32.totalorder %s17, 1
    %p40 = por %p38, %p39
    %p42 = scmp.ne.s32.totalorder %s25, %s41
    %p43 = scmp.eq.s32.totalorder %s17, 0
    %p44 = por %p42, %p43
    %s46 = sadd.s32 %s45, 1
    %p49 = scmp.eq.s32.totalorder %s11, 1
    %p50 = scmp.ne.s32.totalorder %s45, %s47
    %p51 = scmp.eq.s32.totalorder %s11, 0
    %p52 = por %p50, %p51
    %p53 = scmp.ne.s32.totalorder %s45, %s47
    %p54 = scmp.eq.s32.totalorder %s16, 1
    %p55 = por %p53, %p54
    %p56 = scmp.ne.s32.totalorder %s47, %s48
    %p57 = scmp.eq.s32.totalorder %s16, 0
    %p58 = por %p56, %p57
    %p59 = scmp.ne.s32.totalorder %s47, %s48
    %p60 = scmp.eq.s32.totalorder %s17, 1
    %p61 = por %p59, %p60
    %p63 = scmp.ne.s32.totalorder %s48, %s62
    %p64 = scmp.eq.s32.totalorder %s17, 0
    %p65 = por %p63, %p64
    %s67 = sadd.s32 %s66, 1
    %p70 = scmp.eq.s32.totalorder %s11, 1
    %p71 = scmp.ne.s32.totalorder %s66, %s68
    %p72 = scmp.eq.s32.totalorder %s11, 0
    %p73 = por %p71, %p72
    %p74 = scmp.ne.s32.totalorder %s66, %s68
    %p75 = scmp.eq.s32.totalorder %s16, 1
    %p76 = por %p74, %p75
    %p77 = scmp.ne.s32.totalorder %s68, %s69
    %p78 = scmp.eq.s32.totalorder %s16, 0
    %p79 = por %p77, %p78
    %p80 = scmp.ne.s32.totalorder %s68, %s69
    %p81 = scmp.eq.s32.totalorder %s17, 1
    %p82 = por %p80, %p81
    %p84 = scmp.ne.s32.totalorder %s69, %s83
    %p85 = scmp.eq.s32.totalorder %s17, 0
    %p86 = por %p84, %p85
    %s88 = sadd.s32 %s87, 1
    %p91 = scmp.eq.s32.totalorder %s11, 1
    %p92 = scmp.ne.s32.totalorder %s87, %s89
    %p93 = scmp.eq.s32.totalorder %s11, 0
    %p94 = por %p92, %p93
    %p95 = scmp.ne.s32.totalorder %s87, %s89
    %p96 = scmp.eq.s32.totalorder %s16, 1
    %p97 = por %p95, %p96
    %p98 = scmp.ne.s32.totalorder %s89, %s90
    %p99 = scmp.eq.s32.totalorder %s16, 0
    %p100 = por %p98, %p99
    %p101 = scmp.ne.s32.totalorder %s89, %s90
    %p102 = scmp.eq.s32.totalorder %s17, 1
    %p103 = por %p101, %p102
    %p105 = scmp.ne.s32.totalorder %s90, %s104
    %p106 = scmp.eq.s32.totalorder %s17, 0
    %p107 = por %p105, %p106
    %s109 = sadd.s32 %s108, 1
    %p112 = scmp.eq.s32.totalorder %s11, 1
    %p113 = scmp.ne.s32.totalorder %s108, %s110
    %p114 = scmp.eq.s32.totalorder %s11, 0
    %p115 = por %p113, %p114
    %p116 = scmp.ne.s32.totalorder %s108, %s110
    %p117 = scmp.eq.s32.totalorder %s16, 1
    %p118 = por %p116, %p117
    %p119 = scmp.ne.s32.totalorder %s110, %s111
    %p120 = scmp.eq.s32.totalorder %s16, 0
    %p121 = por %p119, %p120
    %p122 = scmp.ne.s32.totalorder %s110, %s111
    %p123 = scmp.eq.s32.totalorder %s17, 1
    %p124 = por %p122, %p123
    %p126 = scmp.ne.s32.totalorder %s111, %s125
    %p127 = scmp.eq.s32.totalorder %s17, 0
    %p128 = por %p126, %p127
    %s129 = ssub.s32 %s11, %s18
    %p130 = scmp.eq.s32.totalorder %s129, 0
    %s132 = sadd.s32 %s131, 1
    %s133 = scalar_select %p130, %s131, %s132
    %p136 = pneg %p130
    %p137 = scmp.eq.s32.totalorder %s11, 1
    %p138 = por %p136, %p137
    %p139 = scmp.ne.s32.totalorder %s131, %s134
    %p140 = scmp.eq.s32.totalorder %s11, 0
    %p141 = por %p139, %p140
    %p142 = scmp.ne.s32.totalorder %s131, %s134
    %p143 = scmp.eq.s32.totalorder %s16, 1
    %p144 = por %p142, %p143
    %p145 = scmp.ne.s32.totalorder %s134, %s135
    %p146 = scmp.eq.s32.totalorder %s16, 0
    %p147 = por %p145, %p146
    %p148 = scmp.ne.s32.totalorder %s134, %s135
    %p149 = scmp.eq.s32.totalorder %s17, 1
    %p150 = por %p148, %p149
    %p152 = scmp.ne.s32.totalorder %s135, %s151
    %p153 = scmp.eq.s32.totalorder %s17, 0
    %p154 = por %p152, %p153
    %p155 = scmp.le.s32.totalorder 1, %s11
    %p156 = scmp.lt.s32.totalorder %s11, 3
    %p157 = pnand %p155, %p156
    %p158 = pneg %p157
    // Predicated region
    $region9: #{detector_forward.21} parent=5 // pred_check
      _
    $region10: #{detector_forward.21} parent=5 // pred_check_branch
      %160 = sbr.rel (%p157) target = $region12
    $region11: #{detector_forward.21} parent=5 // pred_region
      %s161 = ssub.s32 %s11, 1
      // Predicated region
      $region13: #{detector_forward.21} parent=11 // pred_check
        %p162 = pneg %p58
      $region14: #{detector_forward.21} parent=11 // pred_check_branch
        %164 = sbr.rel (%p162) target = $region16
      $region15: #{detector_forward.21} parent=11 // pred_region
        _
      $region16: #{detector_forward.21} parent=11 // pred_fallthru
        _
      // Predicated region
      $region17: #{detector_forward.21} parent=11 // pred_check
        %p165 = pneg %p79
      $region18: #{detector_forward.21} parent=11 // pred_check_branch
        %167 = sbr.rel (%p165) target = $region20
      $region19: #{detector_forward.21} parent=11 // pred_region
        _
      $region20: #{detector_forward.21} parent=11 // pred_fallthru
        _
      // Predicated region
      $region21: #{detector_forward.21} parent=11 // pred_check
        %p168 = pneg %p100
      $region22: #{detector_forward.21} parent=11 // pred_check_branch
        %170 = sbr.rel (%p168) target = $region24
      $region23: #{detector_forward.21} parent=11 // pred_region
        _
      $region24: #{detector_forward.21} parent=11 // pred_fallthru
        _
      // Predicated region
      $region25: #{detector_forward.21} parent=11 // pred_check
        %p171 = pneg %p121
      $region26: #{detector_forward.21} parent=11 // pred_check_branch
        %173 = sbr.rel (%p171) target = $region28
      $region27: #{detector_forward.21} parent=11 // pred_region
        _
      $region28: #{detector_forward.21} parent=11 // pred_fallthru
        _
    $region12: #{detector_forward.21} parent=5 // pred_fallthru
      _
    %p174 = scmp.lt.s32.totalorder %s11, 2
    // Predicated region
    $region29: #{detector_forward.21} parent=5 // pred_check
      %p175 = pneg %p174
    $region30: #{detector_forward.21} parent=5 // pred_check_branch
      %177 = sbr.rel (%p175) target = $region32
    $region31: #{detector_forward.21} parent=5 // pred_region
      // Predicated region
      $region33: #{detector_forward.21} parent=31 // pred_check
        %p178 = pneg %p31
      $region34: #{detector_forward.21} parent=31 // pred_check_branch
        %180 = sbr.rel (%p178) target = $region36
      $region35: #{detector_forward.21} parent=31 // pred_region
        %s181 = smul.u32 8, %s11
        %p182 = scmp.lt.s32.totalorder %s181, 15
        %s183 = scalar_select %p182, %s181, 15
        %s184 = smul.addr %s183, 8
        %s185 = scalar_lea.vmem %s0, %s184
        %s186 = smul.u32 8, %s11
      $region36: #{detector_forward.21} parent=31 // pred_fallthru
        _
    $region32: #{detector_forward.21} parent=5 // pred_fallthru
      _
    %p187 = scmp.le.s32.totalorder 1, %s11
    %p188 = scmp.lt.s32.totalorder %s11, 3
    %p189 = pnand %p187, %p188
    %p190 = pneg %p189
    // Predicated region
    $region37: #{detector_forward.21} parent=5 // pred_check
      _
    $region38: #{detector_forward.21} parent=5 // pred_check_branch
      %192 = sbr.rel (%p189) target = $region40
    $region39: #{detector_forward.21} parent=5 // pred_region
      %s193 = ssub.s32 %s11, 1
      %s194 = smul.u32 8, %s16
      %p195 = scmp.lt.s32.totalorder %s194, 15
      %s196 = scalar_select %p195, %s194, 15
      %s197 = smul.addr %s196, 8
      %s198 = scalar_lea.vmem %s0, %s197
      %p199 = pneg %p37
      %p200 = pneg %p34
      %p201 = pneg %p58
      %p202 = pneg %p55
      %p203 = pneg %p79
      %p204 = pneg %p76
      %p205 = pneg %p100
      %p206 = pneg %p97
      %p207 = pneg %p121
      %p208 = pneg %p118
      %p209 = pneg %p147
      %p210 = pneg %p144
      %s211 = smul.u32 8, %s16
      %p212 = scmp.lt.s32.totalorder %s211, 15
      %s213 = scalar_select %p212, %s211, 15
      %s214 = smul.addr %s213, 2
      %s215 = smul.addr %s214, 4
      %s216 = scalar_lea.vmem %s5, %s215
      %s217 = smul.u32 8, %s16
      %p218 = scmp.lt.s32.totalorder %s217, 15
      %s219 = scalar_select %p218, %s217, 15
      %s220 = smul.addr %s219, 8
      %s221 = scalar_lea.vmem %s0, %s220
      %s222 = smul.u32 8, %s16
      %s223 = smul.u32 8, %s16
      %p224 = scmp.lt.s32.totalorder %s223, 15
      %s225 = scalar_select %p224, %s223, 15
      %s226 = smul.addr %s225, 2
      %s227 = smul.addr %s226, 4
      %s228 = scalar_lea.vmem %s5, %s227
      %s229 = smul.u32 8, %s16
      %v230 = vld [vmem:[%s221] sm:$0xff]
      %v231 = vld [vmem:[%s221 + $0x8] sm:$0xff]
      %v232 = vld [vmem:[%s221 + $0x10] sm:$0xff]
      %v233 = vld [vmem:[%s221 + $0x18] sm:$0xff]
      %v234 = vld [vmem:[%s221 + $0x20] sm:$0xff]
      %v235 = vld [vmem:[%s221 + $0x28] sm:$0xff]
      %v236 = vld [vmem:[%s221 + $0x30] sm:$0xff]
      %v237 = vld [vmem:[%s221 + $0x38] sm:$0xff]
      %238 = vadd.xlane.f32.xlu0 %v230
      %v239 = vpop.xlane.xlu0 %238
      %240 = vadd.xlane.f32.xlu0 %v231
      %v241 = vpop.xlane.xlu0 %240
      %242 = vadd.xlane.f32.xlu0 %v232
      %v243 = vpop.xlane.xlu0 %242
      %244 = vadd.xlane.f32.xlu0 %v233
      %v245 = vpop.xlane.xlu0 %244
      %246 = vadd.xlane.f32.xlu0 %v234
      %v247 = vpop.xlane.xlu0 %246
      %248 = vadd.xlane.f32.xlu0 %v235
      %v249 = vpop.xlane.xlu0 %248
      %250 = vadd.xlane.f32.xlu0 %v236
      %v251 = vpop.xlane.xlu0 %250
      %252 = vadd.xlane.f32.xlu0 %v237
      %v253 = vpop.xlane.xlu0 %252
      %v254 = vrcp.pop 128.0
      %v255 = vmul.f32 128.0, %v254
      %v256 = vsub.f32 1.0, %v255
      %v257 = vmul.f32 %v254, %v256
      %v258 = vadd.f32 %v254, %v257
      %vm259 = vweird.f32 %v254
      %v260 = vsel %vm259, %v254, %v258
      %v261 = vmul.f32 %v239, %v260
      %v262 = vmul.f32 %v241, %v260
      %v263 = vmul.f32 %v243, %v260
      %v264 = vmul.f32 %v245, %v260
      %v265 = vmul.f32 %v247, %v260
      %v266 = vmul.f32 %v249, %v260
      %v267 = vmul.f32 %v251, %v260
      %v268 = vmul.f32 %v253, %v260
      %v269 = vsub.f32 %v230, %v261
      %v270 = vsub.f32 %v231, %v262
      %v271 = vsub.f32 %v232, %v263
      %v272 = vsub.f32 %v233, %v264
      %v273 = vsub.f32 %v234, %v265
      %v274 = vsub.f32 %v235, %v266
      %v275 = vsub.f32 %v236, %v267
      %v276 = vsub.f32 %v237, %v268
      %v277 = vmul.f32 %v269, %v269
      %v278 = vmul.f32 %v270, %v270
      %v279 = vmul.f32 %v271, %v271
      %v280 = vmul.f32 %v272, %v272
      %v281 = vmul.f32 %v273, %v273
      %v282 = vmul.f32 %v274, %v274
      %v283 = vmul.f32 %v275, %v275
      %v284 = vmul.f32 %v276, %v276
      %285 = vadd.xlane.f32.xlu0 %v277
      %v286 = vpop.xlane.xlu0 %285
      %287 = vadd.xlane.f32.xlu0 %v278
      %v288 = vpop.xlane.xlu0 %287
      %289 = vadd.xlane.f32.xlu0 %v279
      %v290 = vpop.xlane.xlu0 %289
      %291 = vadd.xlane.f32.xlu0 %v280
      %v292 = vpop.xlane.xlu0 %291
      %293 = vadd.xlane.f32.xlu0 %v281
      %v294 = vpop.xlane.xlu0 %293
      %295 = vadd.xlane.f32.xlu0 %v282
      %v296 = vpop.xlane.xlu0 %295
      %297 = vadd.xlane.f32.xlu0 %v283
      %v298 = vpop.xlane.xlu0 %297
      %299 = vadd.xlane.f32.xlu0 %v284
      %v300 = vpop.xlane.xlu0 %299
      %v301 = vmul.f32 %v286, %v260
      %v302 = vmul.f32 %v288, %v260
      %v303 = vmul.f32 %v290, %v260
      %v304 = vmul.f32 %v292, %v260
      %v305 = vmul.f32 %v294, %v260
      %v306 = vmul.f32 %v296, %v260
      %v307 = vmul.f32 %v298, %v260
      %v308 = vmul.f32 %v300, %v260
      %v309 = vadd.f32 %v301, 1e-05
      %v310 = vadd.f32 %v302, 1e-05
      %v311 = vadd.f32 %v303, 1e-05
      %v312 = vadd.f32 %v304, 1e-05
      %v313 = vadd.f32 %v305, 1e-05
      %v314 = vadd.f32 %v306, 1e-05
      %v315 = vadd.f32 %v307, 1e-05
      %v316 = vadd.f32 %v308, 1e-05
      %v317 = vrsqrt.pop %v309
      %v318 = vmul.f32 %v317, %v309
      %v319 = vmul.f32 %v318, %v317
      %v320 = vmul.f32 0.5, %v319
      %v321 = vsub.f32 1.5, %v320
      %v322 = vmul.f32 %v317, %v321
      %vm323 = vweird.f32 %v309
      %vm324 = vweird.f32 %v317
      %vm325 = vmor %vm323, %vm324
      %v326 = vsel %vm325, %v317, %v322
      %v327 = vrsqrt.pop %v310
      %v328 = vmul.f32 %v327, %v310
      %v329 = vmul.f32 %v328, %v327
      %v330 = vmul.f32 0.5, %v329
      %v331 = vsub.f32 1.5, %v330
      %v332 = vmul.f32 %v327, %v331
      %vm333 = vweird.f32 %v310
      %vm334 = vweird.f32 %v327
      %vm335 = vmor %vm333, %vm334
      %v336 = vsel %vm335, %v327, %v332
      %v337 = vrsqrt.pop %v311
      %v338 = vmul.f32 %v337, %v311
      %v339 = vmul.f32 %v338, %v337
      %v340 = vmul.f32 0.5, %v339
      %v341 = vsub.f32 1.5, %v340
      %v342 = vmul.f32 %v337, %v341
      %vm343 = vweird.f32 %v311
      %vm344 = vweird.f32 %v337
      %vm345 = vmor %vm343, %vm344
      %v346 = vsel %vm345, %v337, %v342
      %v347 = vrsqrt.pop %v312
      %v348 = vmul.f32 %v347, %v312
      %v349 = vmul.f32 %v348, %v347
      %v350 = vmul.f32 0.5, %v349
      %v351 = vsub.f32 1.5, %v350
      %v352 = vmul.f32 %v347, %v351
      %vm353 = vweird.f32 %v312
      %vm354 = vweird.f32 %v347
      %vm355 = vmor %vm353, %vm354
      %v356 = vsel %vm355, %v347, %v352
      %v357 = vrsqrt.pop %v313
      %v358 = vmul.f32 %v357, %v313
      %v359 = vmul.f32 %v358, %v357
      %v360 = vmul.f32 0.5, %v359
      %v361 = vsub.f32 1.5, %v360
      %v362 = vmul.f32 %v357, %v361
      %vm363 = vweird.f32 %v313
      %vm364 = vweird.f32 %v357
      %vm365 = vmor %vm363, %vm364
      %v366 = vsel %vm365, %v357, %v362
      %v367 = vrsqrt.pop %v314
      %v368 = vmul.f32 %v367, %v314
      %v369 = vmul.f32 %v368, %v367
      %v370 = vmul.f32 0.5, %v369
      %v371 = vsub.f32 1.5, %v370
      %v372 = vmul.f32 %v367, %v371
      %vm373 = vweird.f32 %v314
      %vm374 = vweird.f32 %v367
      %vm375 = vmor %vm373, %vm374
      %v376 = vsel %vm375, %v367, %v372
      %v377 = vrsqrt.pop %v315
      %v378 = vmul.f32 %v377, %v315
      %v379 = vmul.f32 %v378, %v377
      %v380 = vmul.f32 0.5, %v379
      %v381 = vsub.f32 1.5, %v380
      %v382 = vmul.f32 %v377, %v381
      %vm383 = vweird.f32 %v315
      %vm384 = vweird.f32 %v377
      %vm385 = vmor %vm383, %vm384
      %v386 = vsel %vm385, %v377, %v382
      %v387 = vrsqrt.pop %v316
      %v388 = vmul.f32 %v387, %v316
      %v389 = vmul.f32 %v388, %v387
      %v390 = vmul.f32 0.5, %v389
      %v391 = vsub.f32 1.5, %v390
      %v392 = vmul.f32 %v387, %v391
      %vm393 = vweird.f32 %v316
      %vm394 = vweird.f32 %v387
      %vm395 = vmor %vm393, %vm394
      %v396 = vsel %vm395, %v387, %v392
      %v397 = vmul.f32 %v269, %v326
      %v398 = vmul.f32 %v270, %v336
      %v399 = vmul.f32 %v271, %v346
      %v400 = vmul.f32 %v272, %v356
      %v401 = vmul.f32 %v273, %v366
      %v402 = vmul.f32 %v274, %v376
      %v403 = vmul.f32 %v275, %v386
      %v404 = vmul.f32 %v276, %v396
      %v405 = vld [vmem:[%s1] sm:$0x1]
      %v407 = vperm.slane %v405, 0
      %v409 = vmul.f32 %v397, %v407
      %v410 = vmul.f32 %v398, %v407
      %v411 = vmul.f32 %v399, %v407
      %v412 = vmul.f32 %v400, %v407
      %v413 = vmul.f32 %v401, %v407
      %v414 = vmul.f32 %v402, %v407
      %v415 = vmul.f32 %v403, %v407
      %v416 = vmul.f32 %v404, %v407
      %v417 = vld [vmem:[%s2] sm:$0x1]
      %v419 = vperm.slane %v417, 0
      %v421 = vadd.f32 %v409, %v419
      %v422 = vadd.f32 %v410, %v419
      %v423 = vadd.f32 %v411, %v419
      %v424 = vadd.f32 %v412, %v419
      %v425 = vadd.f32 %v413, %v419
      %v426 = vadd.f32 %v414, %v419
      %v427 = vadd.f32 %v415, %v419
      %v428 = vadd.f32 %v416, %v419
      %v429 = vpack.c.bf16 %v422, %v421
      %v430 = vpack.c.bf16 %v424, %v423
      %v431 = vpack.c.bf16 %v426, %v425
      %v432 = vpack.c.bf16 %v428, %v427
      %v433 = vld [vmem:[%s3] sm:$0xff]
      %v434 = vld [vmem:[%s3 + $0x8] sm:$0xff]
      %v435 = vld [vmem:[%s3 + $0x10] sm:$0xff]
      %v436 = vld [vmem:[%s3 + $0x18] sm:$0xff]
      %v437 = vld [vmem:[%s3 + $0x20] sm:$0xff]
      %v438 = vld [vmem:[%s3 + $0x28] sm:$0xff]
      %v439 = vld [vmem:[%s3 + $0x30] sm:$0xff]
      %v440 = vld [vmem:[%s3 + $0x38] sm:$0xff]
      %v441 = vld [vmem:[%s3 + $0x40] sm:$0xff]
      %v442 = vld [vmem:[%s3 + $0x48] sm:$0xff]
      %v443 = vld [vmem:[%s3 + $0x50] sm:$0xff]
      %v444 = vld [vmem:[%s3 + $0x58] sm:$0xff]
      %v445 = vld [vmem:[%s3 + $0x60] sm:$0xff]
      %v446 = vld [vmem:[%s3 + $0x68] sm:$0xff]
      %v447 = vld [vmem:[%s3 + $0x70] sm:$0xff]
      %v448 = vld [vmem:[%s3 + $0x78] sm:$0xff]
      %v449 = vld [vmem:[%s4] sm:$0x3]
      %v451 = vperm.slane %v449, 0
      %v452 = vperm.slane %v449, 1
      %v471 = vunpack.c.l.b16 %v433
      %v472 = vunpack.c.h.b16 %v433
      %v473 = vunpack.c.l.b16 %v434
      %v474 = vunpack.c.h.b16 %v434
      %v475 = vunpack.c.l.b16 %v435
      %v476 = vunpack.c.h.b16 %v435
      %v477 = vunpack.c.l.b16 %v436
      %v478 = vunpack.c.h.b16 %v436
      %v479 = vunpack.c.l.b16 %v437
      %v480 = vunpack.c.h.b16 %v437
      %v481 = vunpack.c.l.b16 %v438
      %v482 = vunpack.c.h.b16 %v438
      %v483 = vunpack.c.l.b16 %v439
      %v484 = vunpack.c.h.b16 %v439
      %v485 = vunpack.c.l.b16 %v440
      %v486 = vunpack.c.h.b16 %v440
      %v487 = vunpack.c.l.b16 %v441
      %v488 = vunpack.c.h.b16 %v441
      %v489 = vunpack.c.l.b16 %v442
      %v490 = vunpack.c.h.b16 %v442
      %v491 = vunpack.c.l.b16 %v443
      %v492 = vunpack.c.h.b16 %v443
      %v493 = vunpack.c.l.b16 %v444
      %v494 = vunpack.c.h.b16 %v444
      %v495 = vunpack.c.l.b16 %v445
      %v496 = vunpack.c.h.b16 %v445
      %v497 = vunpack.c.l.b16 %v446
      %v498 = vunpack.c.h.b16 %v446
      %v499 = vunpack.c.l.b16 %v447
      %v500 = vunpack.c.h.b16 %v447
      %v501 = vunpack.c.l.b16 %v448
      %v502 = vunpack.c.h.b16 %v448
      %v503 = vpack.c.b16 %v473, %v471
      %v504 = vpack.c.b16 %v474, %v472
      %v505 = vpack.c.b16 %v477, %v475
      %v506 = vpack.c.b16 %v478, %v476
      %v507 = vpack.c.b16 %v481, %v479
      %v508 = vpack.c.b16 %v482, %v480
      %v509 = vpack.c.b16 %v485, %v483
      %v510 = vpack.c.b16 %v486, %v484
      %v511 = vpack.c.b16 %v489, %v487
      %v512 = vpack.c.b16 %v490, %v488
      %v513 = vpack.c.b16 %v493, %v491
      %v514 = vpack.c.b16 %v494, %v492
      %v515 = vpack.c.b16 %v497, %v495
      %v516 = vpack.c.b16 %v498, %v496
      %v517 = vpack.c.b16 %v501, %v499
      %v518 = vpack.c.b16 %v502, %v500
      %535 = vmatpush.bf16.msra.mxu0 %v517
      %536 = vmatpush.bf16.msra.mxu0 %v515
      %537 = vmatpush.bf16.msra.mxu0 %v513
      %538 = vmatpush.bf16.msra.mxu0 %v511
      %539 = vmatpush.bf16.msra.mxu0 %v509
      %540 = vmatpush.bf16.msra.mxu0 %v507
      %541 = vmatpush.bf16.msra.mxu0 %v505
      %542 = vmatpush.bf16.msra.mxu0 %v503
      %543 = vmatmul.bf16.gmra.mxu0 %v429
      %v544 = vpop.f32.mrf.mxu0
      %v545 = vadd.f32 %v451, %v544
      %v546 = vpop.f32.mrf.mxu0
      %v547 = vadd.f32 %v451, %v546
      %548 = vmatmul.bf16.gmra.mxu0 %v430
      %v549 = vpop.f32.mrf.mxu0
      %v550 = vadd.f32 %v451, %v549
      %v551 = vpop.f32.mrf.mxu0
      %v552 = vadd.f32 %v451, %v551
      %553 = vmatmul.bf16.gmra.mxu0 %v431
      %v554 = vpop.f32.mrf.mxu0
      %v555 = vadd.f32 %v451, %v554
      %v556 = vpop.f32.mrf.mxu0
      %v557 = vadd.f32 %v451, %v556
      %558 = vmatmul.bf16.gmra.mxu0 %v432
      %v559 = vpop.f32.mrf.mxu0
      %v560 = vadd.f32 %v451, %v559
      %v561 = vpop.f32.mrf.mxu0
      %v562 = vadd.f32 %v451, %v561
      %563 = vdwg.mxu0
      %564 = vmatpush.bf16.msra.mxu0 %v518
      %565 = vmatpush.bf16.msra.mxu0 %v516
      %566 = vmatpush.bf16.msra.mxu0 %v514
      %567 = vmatpush.bf16.msra.mxu0 %v512
      %568 = vmatpush.bf16.msra.mxu0 %v510
      %569 = vmatpush.bf16.msra.mxu0 %v508
      %570 = vmatpush.bf16.msra.mxu0 %v506
      %571 = vmatpush.bf16.msra.mxu0 %v504
      %572 = vmatmul.bf16.gmra.mxu0 %v429
      %v573 = vpop.f32.mrf.mxu0
      %v574 = vadd.f32 %v452, %v573
      %v575 = vpop.f32.mrf.mxu0
      %v576 = vadd.f32 %v452, %v575
      %577 = vmatmul.bf16.gmra.mxu0 %v430
      %v578 = vpop.f32.mrf.mxu0
      %v579 = vadd.f32 %v452, %v578
      %v580 = vpop.f32.mrf.mxu0
      %v581 = vadd.f32 %v452, %v580
      %582 = vmatmul.bf16.gmra.mxu0 %v431
      %v583 = vpop.f32.mrf.mxu0
      %v584 = vadd.f32 %v452, %v583
      %v585 = vpop.f32.mrf.mxu0
      %v586 = vadd.f32 %v452, %v585
      %587 = vmatmul.bf16.gmra.mxu0 %v432
      %v588 = vpop.f32.mrf.mxu0
      %v589 = vadd.f32 %v452, %v588
      %v590 = vpop.f32.mrf.mxu0
      %v591 = vadd.f32 %v452, %v590
      %592 = vdwg.mxu0
      %v593 = vmul.f32 %v545, %v545
      %v594 = vmul.f32 %v574, %v574
      %v595 = vmul.f32 %v547, %v547
      %v596 = vmul.f32 %v576, %v576
      %v597 = vmul.f32 %v550, %v550
      %v598 = vmul.f32 %v579, %v579
      %v599 = vmul.f32 %v552, %v552
      %v600 = vmul.f32 %v581, %v581
      %v601 = vmul.f32 %v555, %v555
      %v602 = vmul.f32 %v584, %v584
      %v603 = vmul.f32 %v557, %v557
      %v604 = vmul.f32 %v586, %v586
      %v605 = vmul.f32 %v560, %v560
      %v606 = vmul.f32 %v589, %v589
      %v607 = vmul.f32 %v562, %v562
      %v608 = vmul.f32 %v591, %v591
      %v609 = vmul.f32 %v545, %v593
      %v610 = vmul.f32 %v574, %v594
      %v611 = vmul.f32 %v547, %v595
      %v612 = vmul.f32 %v576, %v596
      %v613 = vmul.f32 %v550, %v597
      %v614 = vmul.f32 %v579, %v598
      %v615 = vmul.f32 %v552, %v599
      %v616 = vmul.f32 %v581, %v600
      %v617 = vmul.f32 %v555, %v601
      %v618 = vmul.f32 %v584, %v602
      %v619 = vmul.f32 %v557, %v603
      %v620 = vmul.f32 %v586, %v604
      %v621 = vmul.f32 %v560, %v605
      %v622 = vmul.f32 %v589, %v606
      %v623 = vmul.f32 %v562, %v607
      %v624 = vmul.f32 %v591, %v608
      %v625 = vmul.f32 %v609, 0.044715
      %v626 = vmul.f32 %v610, 0.044715
      %v627 = vmul.f32 %v611, 0.044715
      %v628 = vmul.f32 %v612, 0.044715
      %v629 = vmul.f32 %v613, 0.044715
      %v630 = vmul.f32 %v614, 0.044715
      %v631 = vmul.f32 %v615, 0.044715
      %v632 = vmul.f32 %v616, 0.044715
      %v633 = vmul.f32 %v617, 0.044715
      %v634 = vmul.f32 %v618, 0.044715
      %v635 = vmul.f32 %v619, 0.044715
      %v636 = vmul.f32 %v620, 0.044715
      %v637 = vmul.f32 %v621, 0.044715
      %v638 = vmul.f32 %v622, 0.044715
      %v639 = vmul.f32 %v623, 0.044715
      %v640 = vmul.f32 %v624, 0.044715
      %v641 = vadd.f32 %v545, %v625
      %v642 = vadd.f32 %v574, %v626
      %v643 = vadd.f32 %v547, %v627
      %v644 = vadd.f32 %v576, %v628
      %v645 = vadd.f32 %v550, %v629
      %v646 = vadd.f32 %v579, %v630
      %v647 = vadd.f32 %v552, %v631
      %v648 = vadd.f32 %v581, %v632
      %v649 = vadd.f32 %v555, %v633
      %v650 = vadd.f32 %v584, %v634
      %v651 = vadd.f32 %v557, %v635
      %v652 = vadd.f32 %v586, %v636
      %v653 = vadd.f32 %v560, %v637
      %v654 = vadd.f32 %v589, %v638
      %v655 = vadd.f32 %v562, %v639
      %v656 = vadd.f32 %v591, %v640
      %v657 = vmul.f32 %v641, 0.7978846
      %v658 = vmul.f32 %v642, 0.7978846
      %v659 = vmul.f32 %v643, 0.7978846
      %v660 = vmul.f32 %v644, 0.7978846
      %v661 = vmul.f32 %v645, 0.7978846
      %v662 = vmul.f32 %v646, 0.7978846
      %v663 = vmul.f32 %v647, 0.7978846
      %v664 = vmul.f32 %v648, 0.7978846
      %v665 = vmul.f32 %v649, 0.7978846
      %v666 = vmul.f32 %v650, 0.7978846
      %v667 = vmul.f32 %v651, 0.7978846
      %v668 = vmul.f32 %v652, 0.7978846
      %v669 = vmul.f32 %v653, 0.7978846
      %v670 = vmul.f32 %v654, 0.7978846
      %v671 = vmul.f32 %v655, 0.7978846
      %v672 = vmul.f32 %v656, 0.7978846
      %v673 = vtanh.pop %v657
      %v674 = vtanh.pop %v658
      %v675 = vtanh.pop %v659
      %v676 = vtanh.pop %v660
      %v677 = vtanh.pop %v661
      %v678 = vtanh.pop %v662
      %v679 = vtanh.pop %v663
      %v680 = vtanh.pop %v664
      %v681 = vtanh.pop %v665
      %v682 = vtanh.pop %v666
      %v683 = vtanh.pop %v667
      %v684 = vtanh.pop %v668
      %v685 = vtanh.pop %v669
      %v686 = vtanh.pop %v670
      %v687 = vtanh.pop %v671
      %v688 = vtanh.pop %v672
      %v689 = vadd.f32 %v673, 1.0
      %v690 = vadd.f32 %v674, 1.0
      %v691 = vadd.f32 %v675, 1.0
      %v692 = vadd.f32 %v676, 1.0
      %v693 = vadd.f32 %v677, 1.0
      %v694 = vadd.f32 %v678, 1.0
      %v695 = vadd.f32 %v679, 1.0
      %v696 = vadd.f32 %v680, 1.0
      %v697 = vadd.f32 %v681, 1.0
      %v698 = vadd.f32 %v682, 1.0
      %v699 = vadd.f32 %v683, 1.0
      %v700 = vadd.f32 %v684, 1.0
      %v701 = vadd.f32 %v685, 1.0
      %v702 = vadd.f32 %v686, 1.0
      %v703 = vadd.f32 %v687, 1.0
      %v704 = vadd.f32 %v688, 1.0
      %v705 = vmul.f32 %v689, 0.5
      %v706 = vmul.f32 %v690, 0.5
      %v707 = vmul.f32 %v691, 0.5
      %v708 = vmul.f32 %v692, 0.5
      %v709 = vmul.f32 %v693, 0.5
      %v710 = vmul.f32 %v694, 0.5
      %v711 = vmul.f32 %v695, 0.5
      %v712 = vmul.f32 %v696, 0.5
      %v713 = vmul.f32 %v697, 0.5
      %v714 = vmul.f32 %v698, 0.5
      %v715 = vmul.f32 %v699, 0.5
      %v716 = vmul.f32 %v700, 0.5
      %v717 = vmul.f32 %v701, 0.5
      %v718 = vmul.f32 %v702, 0.5
      %v719 = vmul.f32 %v703, 0.5
      %v720 = vmul.f32 %v704, 0.5
      %v721 = vmul.f32 %v545, %v705
      %v722 = vmul.f32 %v574, %v706
      %v723 = vmul.f32 %v547, %v707
      %v724 = vmul.f32 %v576, %v708
      %v725 = vmul.f32 %v550, %v709
      %v726 = vmul.f32 %v579, %v710
      %v727 = vmul.f32 %v552, %v711
      %v728 = vmul.f32 %v581, %v712
      %v729 = vmul.f32 %v555, %v713
      %v730 = vmul.f32 %v584, %v714
      %v731 = vmul.f32 %v557, %v715
      %v732 = vmul.f32 %v586, %v716
      %v733 = vmul.f32 %v560, %v717
      %v734 = vmul.f32 %v589, %v718
      %v735 = vmul.f32 %v562, %v719
      %v736 = vmul.f32 %v591, %v720
      %v737 = vpack.c.bf16 %v722, %v721
      %v738 = vpack.c.bf16 %v724, %v723
      %v739 = vpack.c.bf16 %v726, %v725
      %v740 = vpack.c.bf16 %v728, %v727
      %v741 = vpack.c.bf16 %v730, %v729
      %v742 = vpack.c.bf16 %v732, %v731
      %v743 = vpack.c.bf16 %v734, %v733
      %v744 = vpack.c.bf16 %v736, %v735
      %745 = vst [vmem:[%s228] sm:$0xff] %v737
      %746 = vst [vmem:[%s228 + $0x8] sm:$0xff] %v738
      %747 = vst [vmem:[%s228 + $0x10] sm:$0xff] %v739
      %748 = vst [vmem:[%s228 + $0x18] sm:$0xff] %v740
      %749 = vst [vmem:[%s228 + $0x20] sm:$0xff] %v741
      %750 = vst [vmem:[%s228 + $0x28] sm:$0xff] %v742
      %751 = vst [vmem:[%s228 + $0x30] sm:$0xff] %v743
      %752 = vst [vmem:[%s228 + $0x38] sm:$0xff] %v744
      %s753 = smul.u32 8, %s16
      %p754 = scmp.lt.s32.totalorder %s753, 15
      %s755 = scalar_select %p754, %s753, 15
      %s756 = smul.addr %s755, 2
      %s757 = smul.addr %s756, 4
      %s758 = scalar_lea.vmem %s5, %s757
      // Predicated region
      $region41: #{detector_forward.21} parent=39 // pred_check
        %p759 = pneg %p144
      $region42: #{detector_forward.21} parent=39 // pred_check_branch
        %761 = sbr.rel (%p759) target = $region44
      $region43: #{detector_forward.21} parent=39 // pred_region
        %s762 = smul.u32 8, %s16
      $region44: #{detector_forward.21} parent=39 // pred_fallthru
        _
    $region40: #{detector_forward.21} parent=5 // pred_fallthru
      _
    %p763 = scmp.le.s32.totalorder 2, %s11
    // Predicated region
    $region45: #{detector_forward.21} parent=5 // pred_check
      %p764 = pneg %p763
    $region46: #{detector_forward.21} parent=5 // pred_check_branch
      %766 = sbr.rel (%p764) target = $region48
    $region47: #{detector_forward.21} parent=5 // pred_region
      %s767 = ssub.s32 %s11, 2
      // Predicated region
      $region49: #{detector_forward.21} parent=47 // pred_check
        %p768 = pneg %p150
      $region50: #{detector_forward.21} parent=47 // pred_check_branch
        %770 = sbr.rel (%p768) target = $region52
      $region51: #{detector_forward.21} parent=47 // pred_region
        %s771 = smul.u32 8, %s17
        %p772 = scmp.lt.s32.totalorder %s771, 15
        %s773 = scalar_select %p772, %s771, 15
        %s774 = smul.addr %s773, 2
        %s775 = smul.addr %s774, 4
        %s776 = scalar_lea.vmem %s5, %s775
      $region52: #{detector_forward.21} parent=47 // pred_fallthru
        _
    $region48: #{detector_forward.21} parent=5 // pred_fallthru
      _
  $region6: #{detector_forward.21} parent=0 // loop_footer
    %s15 = sadd.s32 1, %s11
  $region7: #{detector_forward.21} parent=0 // loop_footer_branch
    %10 = sbr.rel target = $region3
  $region8: #{detector_forward.21} parent=0 // loop_exit
    _

// kernel: detector_forward.22
$region0: #{detector_forward.22}
  #allocation0 [shape = 'u32[]', space=smem, size = 0x4, offset = 0x4, fixed_abs, tag = 'smem constant byte address 0x4 - core index']
  #allocation1 [shape = 'u32[72,128]{1,0:T(1,128)}', space=vmem, size = 0x9000, scoped, tag = 'internal scratch']
  %s0 = inlined_call_operand.vmem [shape: bf16[128,256], index: 0, kind: input, shape index: {}]
  %s1 = inlined_call_operand.vmem [shape: bf16[256,128], index: 1, kind: input, shape index: {}]
  %s2 = inlined_call_operand.vmem [shape: f32[1,128], index: 2, kind: input, shape index: {}]
  %s3 = inlined_call_operand.vmem [shape: f32[128,128], index: 3, kind: input, shape index: {}]
  %s4 = inlined_call_operand.vmem [shape: f32[128,128], index: 4, kind: output, shape index: {}]
  %s5 = sld [smem:[#allocation0]]
  $region49: #{detector_forward.22} parent=0
    _
  %s7 = ssub.s32 1, %s5
  %s8 = scalar_select 0, %s7, %s5
  loop: start=0, step=1, limit=4
  $region2: #{detector_forward.22} parent=0 // loop_pre_header
    _
  $region3: #{detector_forward.22} parent=0 // loop_header
    %s10 = sphi 0, %s14
    %p11 = scmp.ge.s32.totalorder %s10, 4
    %s20 = sphi 0, %s22
    %s23 = sphi 0, %s20
    %s24 = sphi 0, %s23
    %s40 = sphi 0, %s24
    %s44 = sphi 0, %s44
    %s46 = sphi 0, %s44
    %s47 = sphi 0, %s46
    %s61 = sphi 0, %s47
    %s65 = sphi 0, %s65
    %s67 = sphi 0, %s65
    %s68 = sphi 0, %s67
    %s82 = sphi 0, %s68
    %s88 = sphi 0, %s90
    %s91 = sphi 0, %s88
    %s92 = sphi 0, %s91
    %s108 = sphi 0, %s92
    %s114 = sphi 0, %s116
    %s117 = sphi 0, %s114
    %s118 = sphi 0, %s117
    %s134 = sphi 0, %s118
  $region4: #{detector_forward.22} parent=0 // loop_header_branch
    %13 = sbr.rel (%p11) target = $region8
  $region5: #{detector_forward.22} parent=0 // loop_body
    %s15 = ssub.s32 %s10, 1
    %s16 = ssub.s32 %s10, 2
    %s17 = sadd.s32 %s10, 1
    %s18 = ssub.s32 %s10, %s17
    %p19 = scmp.eq.s32.totalorder %s18, 0
    %s21 = sadd.s32 %s20, 1
    %s22 = scalar_select %p19, %s20, %s21
    %p25 = pneg %p19
    %p26 = scmp.eq.s32.totalorder %s10, 1
    %p27 = por %p25, %p26
    %p28 = scmp.ne.s32.totalorder %s20, %s23
    %p29 = scmp.eq.s32.totalorder %s10, 0
    %p30 = por %p28, %p29
    %p31 = scmp.ne.s32.totalorder %s20, %s23
    %p32 = scmp.eq.s32.totalorder %s15, 1
    %p33 = por %p31, %p32
    %p34 = scmp.ne.s32.totalorder %s23, %s24
    %p35 = scmp.eq.s32.totalorder %s15, 0
    %p36 = por %p34, %p35
    %p37 = scmp.ne.s32.totalorder %s23, %s24
    %p38 = scmp.eq.s32.totalorder %s16, 1
    %p39 = por %p37, %p38
    %p41 = scmp.ne.s32.totalorder %s24, %s40
    %p42 = scmp.eq.s32.totalorder %s16, 0
    %p43 = por %p41, %p42
    %s45 = sadd.s32 %s44, 1
    %p48 = scmp.eq.s32.totalorder %s10, 1
    %p49 = scmp.ne.s32.totalorder %s44, %s46
    %p50 = scmp.eq.s32.totalorder %s10, 0
    %p51 = por %p49, %p50
    %p52 = scmp.ne.s32.totalorder %s44, %s46
    %p53 = scmp.eq.s32.totalorder %s15, 1
    %p54 = por %p52, %p53
    %p55 = scmp.ne.s32.totalorder %s46, %s47
    %p56 = scmp.eq.s32.totalorder %s15, 0
    %p57 = por %p55, %p56
    %p58 = scmp.ne.s32.totalorder %s46, %s47
    %p59 = scmp.eq.s32.totalorder %s16, 1
    %p60 = por %p58, %p59
    %p62 = scmp.ne.s32.totalorder %s47, %s61
    %p63 = scmp.eq.s32.totalorder %s16, 0
    %p64 = por %p62, %p63
    %s66 = sadd.s32 %s65, 1
    %p69 = scmp.eq.s32.totalorder %s10, 1
    %p70 = scmp.ne.s32.totalorder %s65, %s67
    %p71 = scmp.eq.s32.totalorder %s10, 0
    %p72 = por %p70, %p71
    %p73 = scmp.ne.s32.totalorder %s65, %s67
    %p74 = scmp.eq.s32.totalorder %s15, 1
    %p75 = por %p73, %p74
    %p76 = scmp.ne.s32.totalorder %s67, %s68
    %p77 = scmp.eq.s32.totalorder %s15, 0
    %p78 = por %p76, %p77
    %p79 = scmp.ne.s32.totalorder %s67, %s68
    %p80 = scmp.eq.s32.totalorder %s16, 1
    %p81 = por %p79, %p80
    %p83 = scmp.ne.s32.totalorder %s68, %s82
    %p84 = scmp.eq.s32.totalorder %s16, 0
    %p85 = por %p83, %p84
    %s86 = ssub.s32 %s10, %s17
    %p87 = scmp.eq.s32.totalorder %s86, 0
    %s89 = sadd.s32 %s88, 1
    %s90 = scalar_select %p87, %s88, %s89
    %p93 = pneg %p87
    %p94 = scmp.eq.s32.totalorder %s10, 1
    %p95 = por %p93, %p94
    %p96 = scmp.ne.s32.totalorder %s88, %s91
    %p97 = scmp.eq.s32.totalorder %s10, 0
    %p98 = por %p96, %p97
    %p99 = scmp.ne.s32.totalorder %s88, %s91
    %p100 = scmp.eq.s32.totalorder %s15, 1
    %p101 = por %p99, %p100
    %p102 = scmp.ne.s32.totalorder %s91, %s92
    %p103 = scmp.eq.s32.totalorder %s15, 0
    %p104 = por %p102, %p103
    %p105 = scmp.ne.s32.totalorder %s91, %s92
    %p106 = scmp.eq.s32.totalorder %s16, 1
    %p107 = por %p105, %p106
    %p109 = scmp.ne.s32.totalorder %s92, %s108
    %p110 = scmp.eq.s32.totalorder %s16, 0
    %p111 = por %p109, %p110
    %s112 = ssub.s32 %s10, %s17
    %p113 = scmp.eq.s32.totalorder %s112, 0
    %s115 = sadd.s32 %s114, 1
    %s116 = scalar_select %p113, %s114, %s115
    %p119 = pneg %p113
    %p120 = scmp.eq.s32.totalorder %s10, 1
    %p121 = por %p119, %p120
    %p122 = scmp.ne.s32.totalorder %s114, %s117
    %p123 = scmp.eq.s32.totalorder %s10, 0
    %p124 = por %p122, %p123
    %p125 = scmp.ne.s32.totalorder %s114, %s117
    %p126 = scmp.eq.s32.totalorder %s15, 1
    %p127 = por %p125, %p126
    %p128 = scmp.ne.s32.totalorder %s117, %s118
    %p129 = scmp.eq.s32.totalorder %s15, 0
    %p130 = por %p128, %p129
    %p131 = scmp.ne.s32.totalorder %s117, %s118
    %p132 = scmp.eq.s32.totalorder %s16, 1
    %p133 = por %p131, %p132
    %p135 = scmp.ne.s32.totalorder %s118, %s134
    %p136 = scmp.eq.s32.totalorder %s16, 0
    %p137 = por %p135, %p136
    %p138 = scmp.le.s32.totalorder 1, %s10
    %p139 = scmp.lt.s32.totalorder %s10, 3
    %p140 = pnand %p138, %p139
    %p141 = pneg %p140
    // Predicated region
    $region9: #{detector_forward.22} parent=5 // pred_check
      _
    $region10: #{detector_forward.22} parent=5 // pred_check_branch
      %143 = sbr.rel (%p140) target = $region12
    $region11: #{detector_forward.22} parent=5 // pred_region
      %s144 = ssub.s32 %s10, 1
      // Predicated region
      $region13: #{detector_forward.22} parent=11 // pred_check
        %p145 = pneg %p57
      $region14: #{detector_forward.22} parent=11 // pred_check_branch
        %147 = sbr.rel (%p145) target = $region16
      $region15: #{detector_forward.22} parent=11 // pred_region
        _
      $region16: #{detector_forward.22} parent=11 // pred_fallthru
        _
      // Predicated region
      $region17: #{detector_forward.22} parent=11 // pred_check
        %p148 = pneg %p78
      $region18: #{detector_forward.22} parent=11 // pred_check_branch
        %150 = sbr.rel (%p148) target = $region20
      $region19: #{detector_forward.22} parent=11 // pred_region
        _
      $region20: #{detector_forward.22} parent=11 // pred_fallthru
        _
    $region12: #{detector_forward.22} parent=5 // pred_fallthru
      _
    %p151 = scmp.lt.s32.totalorder %s10, 2
    // Predicated region
    $region21: #{detector_forward.22} parent=5 // pred_check
      %p152 = pneg %p151
    $region22: #{detector_forward.22} parent=5 // pred_check_branch
      %154 = sbr.rel (%p152) target = $region24
    $region23: #{detector_forward.22} parent=5 // pred_region
      // Predicated region
      $region25: #{detector_forward.22} parent=23 // pred_check
        %p155 = pneg %p30
      $region26: #{detector_forward.22} parent=23 // pred_check_branch
        %157 = sbr.rel (%p155) target = $region28
      $region27: #{detector_forward.22} parent=23 // pred_region
        %s158 = smul.u32 8, %s10
        %p159 = scmp.lt.s32.totalorder %s158, 15
        %s160 = scalar_select %p159, %s158, 15
        %s161 = smul.addr %s160, 2
        %s162 = smul.addr %s161, 4
        %s163 = scalar_lea.vmem %s0, %s162
        %s164 = smul.u32 8, %s10
      $region28: #{detector_forward.22} parent=23 // pred_fallthru
        _
      // Predicated region
      $region29: #{detector_forward.22} parent=23 // pred_check
        %p165 = pneg %p98
      $region30: #{detector_forward.22} parent=23 // pred_check_branch
        %167 = sbr.rel (%p165) target = $region32
      $region31: #{detector_forward.22} parent=23 // pred_region
        %s168 = smul.u32 8, %s10
        %p169 = scmp.lt.s32.totalorder %s168, 15
        %s170 = scalar_select %p169, %s168, 15
        %s171 = smul.addr %s170, 8
        %s172 = scalar_lea.vmem %s3, %s171
        %s173 = smul.u32 8, %s10
      $region32: #{detector_forward.22} parent=23 // pred_fallthru
        _
    $region24: #{detector_forward.22} parent=5 // pred_fallthru
      _
    %p174 = scmp.le.s32.totalorder 1, %s10
    %p175 = scmp.lt.s32.totalorder %s10, 3
    %p176 = pnand %p174, %p175
    %p177 = pneg %p176
    // Predicated region
    $region33: #{detector_forward.22} parent=5 // pred_check
      _
    $region34: #{detector_forward.22} parent=5 // pred_check_branch
      %179 = sbr.rel (%p176) target = $region36
    $region35: #{detector_forward.22} parent=5 // pred_region
      %s180 = ssub.s32 %s10, 1
      %s181 = smul.u32 8, %s15
      %p182 = scmp.lt.s32.totalorder %s181, 15
      %s183 = scalar_select %p182, %s181, 15
      %s184 = smul.addr %s183, 2
      %s185 = smul.addr %s184, 4
      %s186 = scalar_lea.vmem %s0, %s185
      %p187 = pneg %p36
      %p188 = pneg %p33
      %p189 = pneg %p57
      %p190 = pneg %p54
      %p191 = pneg %p78
      %p192 = pneg %p75
      %s193 = smul.u32 8, %s15
      %p194 = scmp.lt.s32.totalorder %s193, 15
      %s195 = scalar_select %p194, %s193, 15
      %s196 = smul.addr %s195, 8
      %s197 = scalar_lea.vmem %s3, %s196
      %p198 = pneg %p104
      %p199 = pneg %p101
      %p200 = pneg %p130
      %p201 = pneg %p127
      %s202 = smul.u32 8, %s15
      %p203 = scmp.lt.s32.totalorder %s202, 15
      %s204 = scalar_select %p203, %s202, 15
      %s205 = smul.addr %s204, 8
      %s206 = scalar_lea.vmem %s4, %s205
      %s207 = smul.u32 8, %s15
      %p208 = scmp.lt.s32.totalorder %s207, 15
      %s209 = scalar_select %p208, %s207, 15
      %s210 = smul.addr %s209, 2
      %s211 = smul.addr %s210, 4
      %s212 = scalar_lea.vmem %s0, %s211
      %s213 = smul.u32 8, %s15
      %s214 = smul.u32 8, %s15
      %p215 = scmp.lt.s32.totalorder %s214, 15
      %s216 = scalar_select %p215, %s214, 15
      %s217 = smul.addr %s216, 8
      %s218 = scalar_lea.vmem %s3, %s217
      %s219 = smul.u32 8, %s15
      %s220 = smul.u32 8, %s15
      %p221 = scmp.lt.s32.totalorder %s220, 15
      %s222 = scalar_select %p221, %s220, 15
      %s223 = smul.addr %s222, 8
      %s224 = scalar_lea.vmem %s4, %s223
      %s225 = smul.u32 8, %s15
      %v226 = vld [vmem:[%s212] sm:$0xff]
      %v227 = vld [vmem:[%s212 + $0x8] sm:$0xff]
      %v228 = vld [vmem:[%s212 + $0x10] sm:$0xff]
      %v229 = vld [vmem:[%s212 + $0x18] sm:$0xff]
      %v230 = vld [vmem:[%s212 + $0x20] sm:$0xff]
      %v231 = vld [vmem:[%s212 + $0x28] sm:$0xff]
      %v232 = vld [vmem:[%s212 + $0x30] sm:$0xff]
      %v233 = vld [vmem:[%s212 + $0x38] sm:$0xff]
      %v234 = vld [vmem:[%s1] sm:$0xf]
      %v235 = vld [vmem:[%s1 + $0x4] sm:$0xf]
      %v236 = vld [vmem:[%s1 + $0x8] sm:$0xf]
      %v237 = vld [vmem:[%s1 + $0xc] sm:$0xf]
      %v238 = vld [vmem:[%s1 + $0x10] sm:$0xf]
      %v239 = vld [vmem:[%s1 + $0x14] sm:$0xf]
      %v240 = vld [vmem:[%s1 + $0x18] sm:$0xf]
      %v241 = vld [vmem:[%s1 + $0x1c] sm:$0xf]
      %v242 = vld [vmem:[%s1 + $0x20] sm:$0xf]
      %v243 = vld [vmem:[%s1 + $0x24] sm:$0xf]
      %v244 = vld [vmem:[%s1 + $0x28] sm:$0xf]
      %v245 = vld [vmem:[%s1 + $0x2c] sm:$0xf]
      %v246 = vld [vmem:[%s1 + $0x30] sm:$0xf]
      %v247 = vld [vmem:[%s1 + $0x34] sm:$0xf]
      %v248 = vld [vmem:[%s1 + $0x38] sm:$0xf]
      %v249 = vld [vmem:[%s1 + $0x3c] sm:$0xf]
      %v250 = vld [vmem:[%s1 + $0x40] sm:$0xf]
      %v251 = vld [vmem:[%s1 + $0x44] sm:$0xf]
      %v252 = vld [vmem:[%s1 + $0x48] sm:$0xf]
      %v253 = vld [vmem:[%s1 + $0x4c] sm:$0xf]
      %v254 = vld [vmem:[%s1 + $0x50] sm:$0xf]
      %v255 = vld [vmem:[%s1 + $0x54] sm:$0xf]
      %v256 = vld [vmem:[%s1 + $0x58] sm:$0xf]
      %v257 = vld [vmem:[%s1 + $0x5c] sm:$0xf]
      %v258 = vld [vmem:[%s1 + $0x60] sm:$0xf]
      %v259 = vld [vmem:[%s1 + $0x64] sm:$0xf]
      %v260 = vld [vmem:[%s1 + $0x68] sm:$0xf]
      %v261 = vld [vmem:[%s1 + $0x6c] sm:$0xf]
      %v262 = vld [vmem:[%s1 + $0x70] sm:$0xf]
      %v263 = vld [vmem:[%s1 + $0x74] sm:$0xf]
      %v264 = vld [vmem:[%s1 + $0x78] sm:$0xf]
      %v265 = vld [vmem:[%s1 + $0x7c] sm:$0xf]
      %v266 = vld [vmem:[%s2] sm:$0x1]
      %v268 = vperm.slane %v266, 0
      %v278 = vunpack.c.l.b16 %v226
      %v279 = vunpack.c.h.b16 %v226
      %v280 = vunpack.c.l.b16 %v227
      %v281 = vunpack.c.h.b16 %v227
      %v282 = vunpack.c.l.b16 %v228
      %v283 = vunpack.c.h.b16 %v228
      %v284 = vunpack.c.l.b16 %v229
      %v285 = vunpack.c.h.b16 %v229
      %v286 = vunpack.c.l.b16 %v230
      %v287 = vunpack.c.h.b16 %v230
      %v288 = vunpack.c.l.b16 %v231
      %v289 = vunpack.c.h.b16 %v231
      %v290 = vunpack.c.l.b16 %v232
      %v291 = vunpack.c.h.b16 %v232
      %v292 = vunpack.c.l.b16 %v233
      %v293 = vunpack.c.h.b16 %v233
      %v294 = vpack.c.b16 %v280, %v278
      %v295 = vpack.c.b16 %v281, %v279
      %v296 = vpack.c.b16 %v284, %v282
      %v297 = vpack.c.b16 %v285, %v283
      %v298 = vpack.c.b16 %v288, %v286
      %v299 = vpack.c.b16 %v289, %v287
      %v300 = vpack.c.b16 %v292, %v290
      %v301 = vpack.c.b16 %v293, %v291
      %v342 = vunpack.c.l.b16 %v234
      %v343 = vunpack.c.l.b16 %v235
      %v344 = vunpack.c.l.b16 %v236
      %v345 = vunpack.c.l.b16 %v237
      %v346 = vunpack.c.l.b16 %v238
      %v347 = vunpack.c.l.b16 %v239
      %v348 = vunpack.c.l.b16 %v240
      %v349 = vunpack.c.l.b16 %v241
      %v350 = vunpack.c.l.b16 %v242
      %v351 = vunpack.c.l.b16 %v243
      %v352 = vunpack.c.l.b16 %v244
      %v353 = vunpack.c.l.b16 %v245
      %v354 = vunpack.c.l.b16 %v246
      %v355 = vunpack.c.l.b16 %v247
      %v356 = vunpack.c.l.b16 %v248
      %v357 = vunpack.c.l.b16 %v249
      %v358 = vunpack.c.l.b16 %v250
      %v359 = vunpack.c.l.b16 %v251
      %v360 = vunpack.c.l.b16 %v252
      %v361 = vunpack.c.l.b16 %v253
      %v362 = vunpack.c.l.b16 %v254
      %v363 = vunpack.c.l.b16 %v255
      %v364 = vunpack.c.l.b16 %v256
      %v365 = vunpack.c.l.b16 %v257
      %v366 = vunpack.c.l.b16 %v258
      %v367 = vunpack.c.l.b16 %v259
      %v368 = vunpack.c.l.b16 %v260
      %v369 = vunpack.c.l.b16 %v261
      %v370 = vunpack.c.l.b16 %v262
      %v371 = vunpack.c.l.b16 %v263
      %v372 = vunpack.c.l.b16 %v264
      %v373 = vunpack.c.l.b16 %v265
      %v374 = vpack.c.b16 %v343, %v342
      %v375 = vpack.c.b16 %v345, %v344
      %v376 = vpack.c.b16 %v347, %v346
      %v377 = vpack.c.b16 %v349, %v348
      %v378 = vpack.c.b16 %v351, %v350
      %v379 = vpack.c.b16 %v353, %v352
      %v380 = vpack.c.b16 %v355, %v354
      %v381 = vpack.c.b16 %v357, %v356
      %v382 = vpack.c.b16 %v359, %v358
      %v383 = vpack.c.b16 %v361, %v360
      %v384 = vpack.c.b16 %v363, %v362
      %v385 = vpack.c.b16 %v365, %v364
      %v386 = vpack.c.b16 %v367, %v366
      %v387 = vpack.c.b16 %v369, %v368
      %v388 = vpack.c.b16 %v371, %v370
      %v389 = vpack.c.b16 %v373, %v372
      %406 = vmatpush.bf16.msra.mxu0 %v381
      %407 = vmatpush.bf16.msra.mxu0 %v380
      %408 = vmatpush.bf16.msra.mxu0 %v379
      %409 = vmatpush.bf16.msra.mxu0 %v378
      %410 = vmatpush.bf16.msra.mxu0 %v377
      %411 = vmatpush.bf16.msra.mxu0 %v376
      %412 = vmatpush.bf16.msra.mxu0 %v375
      %413 = vmatpush.bf16.msra.mxu0 %v374
      %414 = vmatmul.bf16.gmra.mxu0 %v294
      %v415 = vpop.f32.mrf.mxu0
      %v416 = vadd.f32 %v268, %v415
      %v417 = vpop.f32.mrf.mxu0
      %v418 = vadd.f32 %v268, %v417
      %419 = vmatmul.bf16.gmra.mxu0 %v296
      %v420 = vpop.f32.mrf.mxu0
      %v421 = vadd.f32 %v268, %v420
      %v422 = vpop.f32.mrf.mxu0
      %v423 = vadd.f32 %v268, %v422
      %424 = vmatmul.bf16.gmra.mxu0 %v298
      %v425 = vpop.f32.mrf.mxu0
      %v426 = vadd.f32 %v268, %v425
      %v427 = vpop.f32.mrf.mxu0
      %v428 = vadd.f32 %v268, %v427
      %429 = vmatmul.bf16.gmra.mxu0 %v300
      %v430 = vpop.f32.mrf.mxu0
      %v431 = vadd.f32 %v268, %v430
      %v432 = vpop.f32.mrf.mxu0
      %v433 = vadd.f32 %v268, %v432
      %434 = vdwg.mxu0
      %435 = vmatpush.bf16.msra.mxu0 %v389
      %436 = vmatpush.bf16.msra.mxu0 %v388
      %437 = vmatpush.bf16.msra.mxu0 %v387
      %438 = vmatpush.bf16.msra.mxu0 %v386
      %439 = vmatpush.bf16.msra.mxu0 %v385
      %440 = vmatpush.bf16.msra.mxu0 %v384
      %441 = vmatpush.bf16.msra.mxu0 %v383
      %442 = vmatpush.bf16.msra.mxu0 %v382
      %443 = vmatmul.bf16.gmra.mxu0 %v295
      %v444 = vpop.f32.mrf.mxu0
      %v445 = vadd.f32 %v416, %v444
      %v446 = vpop.f32.mrf.mxu0
      %v447 = vadd.f32 %v418, %v446
      %448 = vmatmul.bf16.gmra.mxu0 %v297
      %v449 = vpop.f32.mrf.mxu0
      %v450 = vadd.f32 %v421, %v449
      %v451 = vpop.f32.mrf.mxu0
      %v452 = vadd.f32 %v423, %v451
      %453 = vmatmul.bf16.gmra.mxu0 %v299
      %v454 = vpop.f32.mrf.mxu0
      %v455 = vadd.f32 %v426, %v454
      %v456 = vpop.f32.mrf.mxu0
      %v457 = vadd.f32 %v428, %v456
      %458 = vmatmul.bf16.gmra.mxu0 %v301
      %v459 = vpop.f32.mrf.mxu0
      %v460 = vadd.f32 %v431, %v459
      %v461 = vpop.f32.mrf.mxu0
      %v462 = vadd.f32 %v433, %v461
      %463 = vdwg.mxu0
      %v464 = vld [vmem:[%s218] sm:$0xff]
      %v465 = vld [vmem:[%s218 + $0x8] sm:$0xff]
      %v466 = vld [vmem:[%s218 + $0x10] sm:$0xff]
      %v467 = vld [vmem:[%s218 + $0x18] sm:$0xff]
      %v468 = vld [vmem:[%s218 + $0x20] sm:$0xff]
      %v469 = vld [vmem:[%s218 + $0x28] sm:$0xff]
      %v470 = vld [vmem:[%s218 + $0x30] sm:$0xff]
      %v471 = vld [vmem:[%s218 + $0x38] sm:$0xff]
      %v472 = vadd.f32 %v445, %v464
      %v473 = vadd.f32 %v447, %v465
      %v474 = vadd.f32 %v450, %v466
      %v475 = vadd.f32 %v452, %v467
      %v476 = vadd.f32 %v455, %v468
      %v477 = vadd.f32 %v457, %v469
      %v478 = vadd.f32 %v460, %v470
      %v479 = vadd.f32 %v462, %v471
      %480 = vst [vmem:[%s224] sm:$0xff] %v472
      %481 = vst [vmem:[%s224 + $0x8] sm:$0xff] %v473
      %482 = vst [vmem:[%s224 + $0x10] sm:$0xff] %v474
      %483 = vst [vmem:[%s224 + $0x18] sm:$0xff] %v475
      %484 = vst [vmem:[%s224 + $0x20] sm:$0xff] %v476
      %485 = vst [vmem:[%s224 + $0x28] sm:$0xff] %v477
      %486 = vst [vmem:[%s224 + $0x30] sm:$0xff] %v478
      %487 = vst [vmem:[%s224 + $0x38] sm:$0xff] %v479
      %s488 = smul.u32 8, %s15
      %p489 = scmp.lt.s32.totalorder %s488, 15
      %s490 = scalar_select %p489, %s488, 15
      %s491 = smul.addr %s490, 8
      %s492 = scalar_lea.vmem %s4, %s491
      // Predicated region
      $region37: #{detector_forward.22} parent=35 // pred_check
        %p493 = pneg %p127
      $region38: #{detector_forward.22} parent=35 // pred_check_branch
        %495 = sbr.rel (%p493) target = $region40
      $region39: #{detector_forward.22} parent=35 // pred_region
        %s496 = smul.u32 8, %s15
      $region40: #{detector_forward.22} parent=35 // pred_fallthru
        _
    $region36: #{detector_forward.22} parent=5 // pred_fallthru
      _
    %p497 = scmp.le.s32.totalorder 2, %s10
    // Predicated region
    $region41: #{detector_forward.22} parent=5 // pred_check
      %p498 = pneg %p497
    $region42: #{detector_forward.22} parent=5 // pred_check_branch
      %500 = sbr.rel (%p498) target = $region44
    $region43: #{detector_forward.22} parent=5 // pred_region
      %s501 = ssub.s32 %s10, 2
      // Predicated region
      $region45: #{detector_forward.22} parent=43 // pred_check
        %p502 = pneg %p133
      $region46: #{detector_forward.22} parent=43 // pred_check_branch
        %504 = sbr.rel (%p502) target = $region48
      $region47: #{detector_forward.22} parent=43 // pred_region
        %s505 = smul.u32 8, %s16
        %p506 = scmp.lt.s32.totalorder %s505, 15
        %s507 = scalar_select %p506, %s505, 15
        %s508 = smul.addr %s507, 8
        %s509 = scalar_lea.vmem %s4, %s508
      $region48: #{detector_forward.22} parent=43 // pred_fallthru
        _
    $region44: #{detector_forward.22} parent=5 // pred_fallthru
      _
  $region6: #{detector_forward.22} parent=0 // loop_footer
    %s14 = sadd.s32 1, %s10
  $region7: #{detector_forward.22} parent=0 // loop_footer_branch
    %9 = sbr.rel target = $region3
  $region8: #{detector_forward.22} parent=0 // loop_exit
    _

// kernel: detector_forward.19
$region0: #{detector_forward.19}
  #allocation0 [shape = 'u32[]', space=smem, size = 0x4, offset = 0x4, fixed_abs, tag = 'smem constant byte address 0x4 - core index']
  #allocation1 [shape = 'u32[72,128]{1,0:T(1,128)}', space=vmem, size = 0x9000, scoped, tag = 'internal scratch']
  #allocation2 [shape = 'f32[64,128]{1,0:T(8,128)}', space=vmem, size = 0x8000, scoped, tag = 'scratch operand']
  #allocation3 [shape = 'f32[4,64,1]{2,1,0:T(8,128)}', space=vmem, size = 0x20000, scoped, tag = 'scratch operand']
  #allocation4 [shape = 'f32[4,64,1]{2,1,0:T(8,128)}', space=vmem, size = 0x20000, scoped, tag = 'scratch operand']
  %s0 = inlined_call_operand.vmem [shape: bf16[3,2,64,128], index: 0, kind: input, shape index: {}, may-alias: {0,1,2}]
  %s1 = inlined_call_operand.vmem [shape: bf16[3,2,64,128], index: 1, kind: input, shape index: {}, may-alias: {0,1,2}]
  %s2 = inlined_call_operand.vmem [shape: bf16[3,2,64,128], index: 2, kind: input, shape index: {}, may-alias: {0,1,2}]
  %s3 = inlined_call_operand.vmem [shape: bf16[2,64,128], index: 3, kind: output, shape index: {}]
  %s4 = sld [smem:[#allocation0]]
  $region53: #{detector_forward.19} parent=0
    _
  %s6 = ssub.s32 1, %s4
  %s7 = scalar_select 0, %s6, %s4
  loop: start=0, step=1, limit=4
  $region2: #{detector_forward.19} parent=0 // loop_pre_header
    _
  $region3: #{detector_forward.19} parent=0 // loop_header
    %s9 = sphi 0, %s13
    %p10 = scmp.ge.s32.totalorder %s9, 4
    %s16 = sphi 0, %s35
    %s17 = sphi 0, %s31
    %s18 = sphi 0, %s27
    %s19 = sphi 0, %s16
    %s20 = sphi 0, %s17
    %s21 = sphi 0, %s18
    %s22 = sphi 0, %s19
    %s23 = sphi 0, %s20
    %s24 = sphi 0, %s21
    %s40 = sphi 0, %s42
    %s43 = sphi 0, %s40
    %s44 = sphi 0, %s43
    %s60 = sphi 0, %s44
    %s68 = sphi 0, %s70
    %s71 = sphi 0, %s68
    %s72 = sphi 0, %s71
    %s88 = sphi 0, %s72
    %s96 = sphi 0, %s98
    %s99 = sphi 0, %s96
    %s100 = sphi 0, %s99
    %s116 = sphi 0, %s100
    %s124 = sphi 0, %s126
    %s127 = sphi 0, %s124
    %s128 = sphi 0, %s127
    %s144 = sphi 0, %s128
  $region4: #{detector_forward.19} parent=0 // loop_header_branch
    %12 = sbr.rel (%p10) target = $region8
  $region5: #{detector_forward.19} parent=0 // loop_body
    %s14 = ssub.s32 %s9, 1
    %s15 = ssub.s32 %s9, 2
    %s25 = sadd.s32 1, %s18
    %p26 = scmp.ge.s32.totalorder %s25, 1
    %s27 = scalar_select %p26, 0, %s25
    %s28 = sadd.s32 1, %s17
    %s29 = scalar_select %p26, %s28, %s17
    %p30 = scmp.ge.s32.totalorder %s29, 1
    %s31 = scalar_select %p30, 0, %s29
    %s32 = sadd.s32 1, %s16
    %s33 = scalar_select %p30, %s32, %s16
    %p34 = scmp.ge.s32.totalorder %s33, 2
    %s35 = scalar_select %p34, 0, %s33
    %s36 = ssub.s32 %s16, %s35
    %s37 = ssub.s32 %s17, %s31
    %s38 = sor.u32 %s36, %s37
    %p39 = scmp.eq.s32.totalorder %s38, 0
    %s41 = sadd.s32 %s40, 1
    %s42 = scalar_select %p39, %s40, %s41
    %p45 = pneg %p39
    %p46 = scmp.eq.s32.totalorder %s9, 1
    %p47 = por %p45, %p46
    %p48 = scmp.ne.s32.totalorder %s40, %s43
    %p49 = scmp.eq.s32.totalorder %s9, 0
    %p50 = por %p48, %p49
    %p51 = scmp.ne.s32.totalorder %s40, %s43
    %p52 = scmp.eq.s32.totalorder %s14, 1
    %p53 = por %p51, %p52
    %p54 = scmp.ne.s32.totalorder %s43, %s44
    %p55 = scmp.eq.s32.totalorder %s14, 0
    %p56 = por %p54, %p55
    %p57 = scmp.ne.s32.totalorder %s43, %s44
    %p58 = scmp.eq.s32.totalorder %s15, 1
    %p59 = por %p57, %p58
    %p61 = scmp.ne.s32.totalorder %s44, %s60
    %p62 = scmp.eq.s32.totalorder %s15, 0
    %p63 = por %p61, %p62
    %s64 = ssub.s32 %s16, %s35
    %s65 = ssub.s32 %s18, %s27
    %s66 = sor.u32 %s64, %s65
    %p67 = scmp.eq.s32.totalorder %s66, 0
    %s69 = sadd.s32 %s68, 1
    %s70 = scalar_select %p67, %s68, %s69
    %p73 = pneg %p67
    %p74 = scmp.eq.s32.totalorder %s9, 1
    %p75 = por %p73, %p74
    %p76 = scmp.ne.s32.totalorder %s68, %s71
    %p77 = scmp.eq.s32.totalorder %s9, 0
    %p78 = por %p76, %p77
    %p79 = scmp.ne.s32.totalorder %s68, %s71
    %p80 = scmp.eq.s32.totalorder %s14, 1
    %p81 = por %p79, %p80
    %p82 = scmp.ne.s32.totalorder %s71, %s72
    %p83 = scmp.eq.s32.totalorder %s14, 0
    %p84 = por %p82, %p83
    %p85 = scmp.ne.s32.totalorder %s71, %s72
    %p86 = scmp.eq.s32.totalorder %s15, 1
    %p87 = por %p85, %p86
    %p89 = scmp.ne.s32.totalorder %s72, %s88
    %p90 = scmp.eq.s32.totalorder %s15, 0
    %p91 = por %p89, %p90
    %s92 = ssub.s32 %s16, %s35
    %s93 = ssub.s32 %s18, %s27
    %s94 = sor.u32 %s92, %s93
    %p95 = scmp.eq.s32.totalorder %s94, 0
    %s97 = sadd.s32 %s96, 1
    %s98 = scalar_select %p95, %s96, %s97
    %p101 = pneg %p95
    %p102 = scmp.eq.s32.totalorder %s9, 1
    %p103 = por %p101, %p102
    %p104 = scmp.ne.s32.totalorder %s96, %s99
    %p105 = scmp.eq.s32.totalorder %s9, 0
    %p106 = por %p104, %p105
    %p107 = scmp.ne.s32.totalorder %s96, %s99
    %p108 = scmp.eq.s32.totalorder %s14, 1
    %p109 = por %p107, %p108
    %p110 = scmp.ne.s32.totalorder %s99, %s100
    %p111 = scmp.eq.s32.totalorder %s14, 0
    %p112 = por %p110, %p111
    %p113 = scmp.ne.s32.totalorder %s99, %s100
    %p114 = scmp.eq.s32.totalorder %s15, 1
    %p115 = por %p113, %p114
    %p117 = scmp.ne.s32.totalorder %s100, %s116
    %p118 = scmp.eq.s32.totalorder %s15, 0
    %p119 = por %p117, %p118
    %s120 = ssub.s32 %s16, %s35
    %s121 = ssub.s32 %s17, %s31
    %s122 = sor.u32 %s120, %s121
    %p123 = scmp.eq.s32.totalorder %s122, 0
    %s125 = sadd.s32 %s124, 1
    %s126 = scalar_select %p123, %s124, %s125
    %p129 = pneg %p123
    %p130 = scmp.eq.s32.totalorder %s9, 1
    %p131 = por %p129, %p130
    %p132 = scmp.ne.s32.totalorder %s124, %s127
    %p133 = scmp.eq.s32.totalorder %s9, 0
    %p134 = por %p132, %p133
    %p135 = scmp.ne.s32.totalorder %s124, %s127
    %p136 = scmp.eq.s32.totalorder %s14, 1
    %p137 = por %p135, %p136
    %p138 = scmp.ne.s32.totalorder %s127, %s128
    %p139 = scmp.eq.s32.totalorder %s14, 0
    %p140 = por %p138, %p139
    %p141 = scmp.ne.s32.totalorder %s127, %s128
    %p142 = scmp.eq.s32.totalorder %s15, 1
    %p143 = por %p141, %p142
    %p145 = scmp.ne.s32.totalorder %s128, %s144
    %p146 = scmp.eq.s32.totalorder %s15, 0
    %p147 = por %p145, %p146
    %p148 = scmp.le.s32.totalorder 1, %s9
    %p149 = scmp.lt.s32.totalorder %s9, 3
    %p150 = pnand %p148, %p149
    %p151 = pneg %p150
    // Predicated region
    $region9: #{detector_forward.19} parent=5 // pred_check
      _
    $region10: #{detector_forward.19} parent=5 // pred_check_branch
      %153 = sbr.rel (%p150) target = $region12
    $region11: #{detector_forward.19} parent=5 // pred_region
      %s154 = ssub.s32 %s9, 1
    $region12: #{detector_forward.19} parent=5 // pred_fallthru
      _
    %p155 = scmp.lt.s32.totalorder %s9, 2
    // Predicated region
    $region13: #{detector_forward.19} parent=5 // pred_check
      %p156 = pneg %p155
    $region14: #{detector_forward.19} parent=5 // pred_check_branch
      %158 = sbr.rel (%p156) target = $region16
    $region15: #{detector_forward.19} parent=5 // pred_region
      // Predicated region
      $region17: #{detector_forward.19} parent=15 // pred_check
        %p159 = pneg %p50
      $region18: #{detector_forward.19} parent=15 // pred_check_branch
        %161 = sbr.rel (%p159) target = $region20
      $region19: #{detector_forward.19} parent=15 // pred_region
        %s162 = smul.u32 8, %s17
        %p163 = scmp.lt.s32.totalorder %s16, 1
        %s164 = scalar_select %p163, %s16, 1
        %p165 = scmp.lt.s32.totalorder %s162, 7
        %s166 = scalar_select %p165, %s162, 7
        %s167 = smul.addr %s164, 8
        %s168 = sadd.s32 %s166, %s167
        %s169 = smul.addr %s168, 4
        %s170 = scalar_lea.vmem %s0, %s169
        %s171 = smul.u32 8, %s17
      $region20: #{detector_forward.19} parent=15 // pred_fallthru
        _
      // Predicated region
      $region21: #{detector_forward.19} parent=15 // pred_check
        %p172 = pneg %p78
      $region22: #{detector_forward.19} parent=15 // pred_check_branch
        %174 = sbr.rel (%p172) target = $region24
      $region23: #{detector_forward.19} parent=15 // pred_region
        %s175 = smul.u32 8, %s18
        %p176 = scmp.lt.s32.totalorder %s16, 1
        %s177 = scalar_select %p176, %s16, 1
        %p178 = scmp.lt.s32.totalorder %s175, 7
        %s179 = scalar_select %p178, %s175, 7
        %s180 = smul.addr %s177, 8
        %s181 = sadd.s32 %s179, %s180
        %s182 = sadd.s32 %s181, 16
        %s183 = smul.addr %s182, 4
        %s184 = scalar_lea.vmem %s1, %s183
        %s185 = smul.u32 8, %s18
      $region24: #{detector_forward.19} parent=15 // pred_fallthru
        _
      // Predicated region
      $region25: #{detector_forward.19} parent=15 // pred_check
        %p186 = pneg %p106
      $region26: #{detector_forward.19} parent=15 // pred_check_branch
        %188 = sbr.rel (%p186) target = $region28
      $region27: #{detector_forward.19} parent=15 // pred_region
        %s189 = smul.u32 8, %s18
        %p190 = scmp.lt.s32.totalorder %s16, 1
        %s191 = scalar_select %p190, %s16, 1
        %p192 = scmp.lt.s32.totalorder %s189, 7
        %s193 = scalar_select %p192, %s189, 7
        %s194 = smul.addr %s191, 8
        %s195 = sadd.s32 %s193, %s194
        %s196 = sadd.s32 %s195, 32
        %s197 = smul.addr %s196, 4
        %s198 = scalar_lea.vmem %s2, %s197
        %s199 = smul.u32 8, %s18
      $region28: #{detector_forward.19} parent=15 // pred_fallthru
        _
    $region16: #{detector_forward.19} parent=5 // pred_fallthru
      _
    %p200 = scmp.le.s32.totalorder 1, %s9
    %p201 = scmp.lt.s32.totalorder %s9, 3
    %p202 = pnand %p200, %p201
    %p203 = pneg %p202
    // Predicated region
    $region29: #{detector_forward.19} parent=5 // pred_check
      _
    $region30: #{detector_forward.19} parent=5 // pred_check_branch
      %205 = sbr.rel (%p202) target = $region32
    $region31: #{detector_forward.19} parent=5 // pred_region
      %s206 = ssub.s32 %s9, 1
      %s207 = smul.u32 8, %s20
      %p208 = scmp.lt.s32.totalorder %s19, 1
      %s209 = scalar_select %p208, %s19, 1
      %p210 = scmp.lt.s32.totalorder %s207, 7
      %s211 = scalar_select %p210, %s207, 7
      %s212 = smul.addr %s209, 8
      %s213 = sadd.s32 %s211, %s212
      %s214 = smul.addr %s213, 4
      %s215 = scalar_lea.vmem %s0, %s214
      %p216 = pneg %p56
      %p217 = pneg %p53
      %s218 = smul.u32 8, %s21
      %p219 = scmp.lt.s32.totalorder %s19, 1
      %s220 = scalar_select %p219, %s19, 1
      %p221 = scmp.lt.s32.totalorder %s218, 7
      %s222 = scalar_select %p221, %s218, 7
      %s223 = smul.addr %s220, 8
      %s224 = sadd.s32 %s222, %s223
      %s225 = sadd.s32 %s224, 16
      %s226 = smul.addr %s225, 4
      %s227 = scalar_lea.vmem %s1, %s226
      %p228 = pneg %p84
      %p229 = pneg %p81
      %s230 = smul.u32 8, %s21
      %p231 = scmp.lt.s32.totalorder %s19, 1
      %s232 = scalar_select %p231, %s19, 1
      %p233 = scmp.lt.s32.totalorder %s230, 7
      %s234 = scalar_select %p233, %s230, 7
      %s235 = smul.addr %s232, 8
      %s236 = sadd.s32 %s234, %s235
      %s237 = sadd.s32 %s236, 32
      %s238 = smul.addr %s237, 4
      %s239 = scalar_lea.vmem %s2, %s238
      %p240 = pneg %p112
      %p241 = pneg %p109
      %p242 = pneg %p140
      %p243 = pneg %p137
      %s244 = smul.u32 8, %s20
      %p245 = scmp.lt.s32.totalorder %s19, 1
      %s246 = scalar_select %p245, %s19, 1
      %p247 = scmp.lt.s32.totalorder %s244, 7
      %s248 = scalar_select %p247, %s244, 7
      %s249 = smul.addr %s246, 8
      %s250 = sadd.s32 %s248, %s249
      %s251 = smul.addr %s250, 4
      %s252 = scalar_lea.vmem %s3, %s251
      %s253 = smul.u32 8, %s20
      %p254 = scmp.lt.s32.totalorder %s19, 1
      %s255 = scalar_select %p254, %s19, 1
      %p256 = scmp.lt.s32.totalorder %s253, 7
      %s257 = scalar_select %p256, %s253, 7
      %s258 = smul.addr %s255, 8
      %s259 = sadd.s32 %s257, %s258
      %s260 = smul.addr %s259, 4
      %s261 = scalar_lea.vmem %s0, %s260
      %s262 = smul.u32 8, %s20
      %s263 = smul.u32 8, %s21
      %p264 = scmp.lt.s32.totalorder %s19, 1
      %s265 = scalar_select %p264, %s19, 1
      %p266 = scmp.lt.s32.totalorder %s263, 7
      %s267 = scalar_select %p266, %s263, 7
      %s268 = smul.addr %s265, 8
      %s269 = sadd.s32 %s267, %s268
      %s270 = sadd.s32 %s269, 16
      %s271 = smul.addr %s270, 4
      %s272 = scalar_lea.vmem %s1, %s271
      %s273 = smul.u32 8, %s21
      %s274 = smul.u32 8, %s21
      %p275 = scmp.lt.s32.totalorder %s19, 1
      %s276 = scalar_select %p275, %s19, 1
      %p277 = scmp.lt.s32.totalorder %s274, 7
      %s278 = scalar_select %p277, %s274, 7
      %s279 = smul.addr %s276, 8
      %s280 = sadd.s32 %s278, %s279
      %s281 = sadd.s32 %s280, 32
      %s282 = smul.addr %s281, 4
      %s283 = scalar_lea.vmem %s2, %s282
      %s284 = smul.u32 8, %s21
      %s285 = smul.u32 8, %s20
      %p286 = scmp.lt.s32.totalorder %s19, 1
      %s287 = scalar_select %p286, %s19, 1
      %p288 = scmp.lt.s32.totalorder %s285, 7
      %s289 = scalar_select %p288, %s285, 7
      %s290 = smul.addr %s287, 8
      %s291 = sadd.s32 %s289, %s290
      %s292 = smul.addr %s291, 4
      %s293 = scalar_lea.vmem %s3, %s292
      %s294 = smul.u32 8, %s20
      %p296 = scmp.eq.s32.totalorder %s21, 0
      // Predicated region
      $region33: #{detector_forward.19} parent=31 // pred_check
        %p297 = pneg %p296
      $region34: #{detector_forward.19} parent=31 // pred_check_branch
        %299 = sbr.rel (%p297) target = $region36
      $region35: #{detector_forward.19} parent=31 // pred_region
        %300 = vst [vmem:[#allocation2] sm:$0xff] 0.0
        %301 = vst [vmem:[#allocation2 + $0x8] sm:$0xff] 0.0
        %302 = vst [vmem:[#allocation2 + $0x10] sm:$0xff] 0.0
        %303 = vst [vmem:[#allocation2 + $0x18] sm:$0xff] 0.0
        %304 = vst [vmem:[#allocation2 + $0x20] sm:$0xff] 0.0
        %305 = vst [vmem:[#allocation2 + $0x28] sm:$0xff] 0.0
        %306 = vst [vmem:[#allocation2 + $0x30] sm:$0xff] 0.0
        %307 = vst [vmem:[#allocation2 + $0x38] sm:$0xff] 0.0
        %vm308 = vcmask 7168
        %309 = vst.msk [vmem:[#allocation3] sm:$0xff] %vm308, -inf
        %310 = vst.msk [vmem:[#allocation3 + $0x8] sm:$0xff] %vm308, -inf
        %311 = vst.msk [vmem:[#allocation3 + $0x10] sm:$0xff] %vm308, -inf
        %312 = vst.msk [vmem:[#allocation3 + $0x18] sm:$0xff] %vm308, -inf
        %313 = vst.msk [vmem:[#allocation3 + $0x20] sm:$0xff] %vm308, -inf
        %314 = vst.msk [vmem:[#allocation3 + $0x28] sm:$0xff] %vm308, -inf
        %315 = vst.msk [vmem:[#allocation3 + $0x30] sm:$0xff] %vm308, -inf
        %316 = vst.msk [vmem:[#allocation3 + $0x38] sm:$0xff] %vm308, -inf
        %317 = vst.msk [vmem:[#allocation3 + $0x40] sm:$0xff] %vm308, -inf
        %318 = vst.msk [vmem:[#allocation3 + $0x48] sm:$0xff] %vm308, -inf
        %319 = vst.msk [vmem:[#allocation3 + $0x50] sm:$0xff] %vm308, -inf
        %320 = vst.msk [vmem:[#allocation3 + $0x58] sm:$0xff] %vm308, -inf
        %321 = vst.msk [vmem:[#allocation3 + $0x60] sm:$0xff] %vm308, -inf
        %322 = vst.msk [vmem:[#allocation3 + $0x68] sm:$0xff] %vm308, -inf
        %323 = vst.msk [vmem:[#allocation3 + $0x70] sm:$0xff] %vm308, -inf
        %324 = vst.msk [vmem:[#allocation3 + $0x78] sm:$0xff] %vm308, -inf
        %325 = vst.msk [vmem:[#allocation3 + $0x80] sm:$0xff] %vm308, -inf
        %326 = vst.msk [vmem:[#allocation3 + $0x88] sm:$0xff] %vm308, -inf
        %327 = vst.msk [vmem:[#allocation3 + $0x90] sm:$0xff] %vm308, -inf
        %328 = vst.msk [vmem:[#allocation3 + $0x98] sm:$0xff] %vm308, -inf
        %329 = vst.msk [vmem:[#allocation3 + $0xa0] sm:$0xff] %vm308, -inf
        %330 = vst.msk [vmem:[#allocation3 + $0xa8] sm:$0xff] %vm308, -inf
        %331 = vst.msk [vmem:[#allocation3 + $0xb0] sm:$0xff] %vm308, -inf
        %332 = vst.msk [vmem:[#allocation3 + $0xb8] sm:$0xff] %vm308, -inf
        %333 = vst.msk [vmem:[#allocation3 + $0xc0] sm:$0xff] %vm308, -inf
        %334 = vst.msk [vmem:[#allocation3 + $0xc8] sm:$0xff] %vm308, -inf
        %335 = vst.msk [vmem:[#allocation3 + $0xd0] sm:$0xff] %vm308, -inf
        %336 = vst.msk [vmem:[#allocation3 + $0xd8] sm:$0xff] %vm308, -inf
        %337 = vst.msk [vmem:[#allocation3 + $0xe0] sm:$0xff] %vm308, -inf
        %338 = vst.msk [vmem:[#allocation3 + $0xe8] sm:$0xff] %vm308, -inf
        %339 = vst.msk [vmem:[#allocation3 + $0xf0] sm:$0xff] %vm308, -inf
        %340 = vst.msk [vmem:[#allocation3 + $0xf8] sm:$0xff] %vm308, -inf
        %341 = vst.msk [vmem:[#allocation4] sm:$0xff] %vm308, 0.0
        %342 = vst.msk [vmem:[#allocation4 + $0x8] sm:$0xff] %vm308, 0.0
        %343 = vst.msk [vmem:[#allocation4 + $0x10] sm:$0xff] %vm308, 0.0
        %344 = vst.msk [vmem:[#allocation4 + $0x18] sm:$0xff] %vm308, 0.0
        %345 = vst.msk [vmem:[#allocation4 + $0x20] sm:$0xff] %vm308, 0.0
        %346 = vst.msk [vmem:[#allocation4 + $0x28] sm:$0xff] %vm308, 0.0
        %347 = vst.msk [vmem:[#allocation4 + $0x30] sm:$0xff] %vm308, 0.0
        %348 = vst.msk [vmem:[#allocation4 + $0x38] sm:$0xff] %vm308, 0.0
        %349 = vst.msk [vmem:[#allocation4 + $0x40] sm:$0xff] %vm308, 0.0
        %350 = vst.msk [vmem:[#allocation4 + $0x48] sm:$0xff] %vm308, 0.0
        %351 = vst.msk [vmem:[#allocation4 + $0x50] sm:$0xff] %vm308, 0.0
        %352 = vst.msk [vmem:[#allocation4 + $0x58] sm:$0xff] %vm308, 0.0
        %353 = vst.msk [vmem:[#allocation4 + $0x60] sm:$0xff] %vm308, 0.0
        %354 = vst.msk [vmem:[#allocation4 + $0x68] sm:$0xff] %vm308, 0.0
        %355 = vst.msk [vmem:[#allocation4 + $0x70] sm:$0xff] %vm308, 0.0
        %356 = vst.msk [vmem:[#allocation4 + $0x78] sm:$0xff] %vm308, 0.0
        %357 = vst.msk [vmem:[#allocation4 + $0x80] sm:$0xff] %vm308, 0.0
        %358 = vst.msk [vmem:[#allocation4 + $0x88] sm:$0xff] %vm308, 0.0
        %359 = vst.msk [vmem:[#allocation4 + $0x90] sm:$0xff] %vm308, 0.0
        %360 = vst.msk [vmem:[#allocation4 + $0x98] sm:$0xff] %vm308, 0.0
        %361 = vst.msk [vmem:[#allocation4 + $0xa0] sm:$0xff] %vm308, 0.0
        %362 = vst.msk [vmem:[#allocation4 + $0xa8] sm:$0xff] %vm308, 0.0
        %363 = vst.msk [vmem:[#allocation4 + $0xb0] sm:$0xff] %vm308, 0.0
        %364 = vst.msk [vmem:[#allocation4 + $0xb8] sm:$0xff] %vm308, 0.0
        %365 = vst.msk [vmem:[#allocation4 + $0xc0] sm:$0xff] %vm308, 0.0
        %366 = vst.msk [vmem:[#allocation4 + $0xc8] sm:$0xff] %vm308, 0.0
        %367 = vst.msk [vmem:[#allocation4 + $0xd0] sm:$0xff] %vm308, 0.0
        %368 = vst.msk [vmem:[#allocation4 + $0xd8] sm:$0xff] %vm308, 0.0
        %369 = vst.msk [vmem:[#allocation4 + $0xe0] sm:$0xff] %vm308, 0.0
        %370 = vst.msk [vmem:[#allocation4 + $0xe8] sm:$0xff] %vm308, 0.0
        %371 = vst.msk [vmem:[#allocation4 + $0xf0] sm:$0xff] %vm308, 0.0
        %372 = vst.msk [vmem:[#allocation4 + $0xf8] sm:$0xff] %vm308, 0.0
      $region36: #{detector_forward.19} parent=31 // pred_fallthru
        _
      %v373 = vld [vmem:[%s261] sm:$0xf]
      %v374 = vld [vmem:[%s261 + $0x4] sm:$0xf]
      %v375 = vld [vmem:[%s261 + $0x8] sm:$0xf]
      %v376 = vld [vmem:[%s261 + $0xc] sm:$0xf]
      %v377 = vld [vmem:[%s261 + $0x10] sm:$0xf]
      %v378 = vld [vmem:[%s261 + $0x14] sm:$0xf]
      %v379 = vld [vmem:[%s261 + $0x18] sm:$0xf]
      %v380 = vld [vmem:[%s261 + $0x1c] sm:$0xf]
      %v381 = vld [vmem:[%s272] sm:$0xf]
      %v382 = vld [vmem:[%s272 + $0x4] sm:$0xf]
      %v383 = vld [vmem:[%s272 + $0x8] sm:$0xf]
      %v384 = vld [vmem:[%s272 + $0xc] sm:$0xf]
      %v385 = vld [vmem:[%s272 + $0x10] sm:$0xf]
      %v386 = vld [vmem:[%s272 + $0x14] sm:$0xf]
      %v387 = vld [vmem:[%s272 + $0x18] sm:$0xf]
      %v388 = vld [vmem:[%s272 + $0x1c] sm:$0xf]
      %v389 = vld [vmem:[%s283] sm:$0xf]
      %v390 = vld [vmem:[%s283 + $0x4] sm:$0xf]
      %v391 = vld [vmem:[%s283 + $0x8] sm:$0xf]
      %v392 = vld [vmem:[%s283 + $0xc] sm:$0xf]
      %v393 = vld [vmem:[%s283 + $0x10] sm:$0xf]
      %v394 = vld [vmem:[%s283 + $0x14] sm:$0xf]
      %v395 = vld [vmem:[%s283 + $0x18] sm:$0xf]
      %v396 = vld [vmem:[%s283 + $0x1c] sm:$0xf]
      %v405 = vunpack.c.l.b16 %v373
      %v406 = vunpack.c.l.b16 %v374
      %v407 = vunpack.c.l.b16 %v375
      %v408 = vunpack.c.l.b16 %v376
      %v409 = vunpack.c.l.b16 %v377
      %v410 = vunpack.c.l.b16 %v378
      %v411 = vunpack.c.l.b16 %v379
      %v412 = vunpack.c.l.b16 %v380
      %v413 = vpack.c.b16 %v406, %v405
      %v414 = vpack.c.b16 %v408, %v407
      %v415 = vpack.c.b16 %v410, %v409
      %v416 = vpack.c.b16 %v412, %v411
      %v425 = vunpack.c.l.b16 %v381
      %v426 = vunpack.c.l.b16 %v382
      %v427 = vunpack.c.l.b16 %v383
      %v428 = vunpack.c.l.b16 %v384
      %v429 = vunpack.c.l.b16 %v385
      %v430 = vunpack.c.l.b16 %v386
      %v431 = vunpack.c.l.b16 %v387
      %v432 = vunpack.c.l.b16 %v388
      %v433 = vpack.c.b16 %v426, %v425
      %v434 = vpack.c.b16 %v428, %v427
      %v435 = vpack.c.b16 %v430, %v429
      %v436 = vpack.c.b16 %v432, %v431
      %vm437 = vcmask 261120
      %v439 = vsel %vm437, %v413, 0
      %v442 = vsel %vm437, %v414, 0
      %v445 = vsel %vm437, %v415, 0
      %v448 = vsel %vm437, %v416, 0
      %v451 = vsel %vm437, %v433, 0
      %v454 = vsel %vm437, %v434, 0
      %v457 = vsel %vm437, %v435, 0
      %v460 = vsel %vm437, %v436, 0
      %462 = vmatpush.bf16.xpose.msra.mxu0 0
      %463 = vmatpush.bf16.xpose.msra.mxu0 0
      %464 = vmatpush.bf16.xpose.msra.mxu0 0
      %465 = vmatpush.bf16.xpose.msra.mxu0 0
      %466 = vmatpush.bf16.xpose.msra.mxu0 %v460
      %467 = vmatpush.bf16.xpose.msra.mxu0 %v457
      %468 = vmatpush.bf16.xpose.msra.mxu0 %v454
      %469 = vmatpush.bf16.xpose.msra.mxu0 %v451
      %470 = vmatmul.bf16.gmra.mxu0 %v439
      %v471 = vpop.f32.mrf.mxu0
      %v472 = vadd.f32 0.0, %v471
      %v473 = vpop.f32.mrf.mxu0
      %v474 = vadd.f32 0.0, %v473
      %475 = vmatmul.bf16.gmra.mxu0 %v442
      %v476 = vpop.f32.mrf.mxu0
      %v477 = vadd.f32 0.0, %v476
      %v478 = vpop.f32.mrf.mxu0
      %v479 = vadd.f32 0.0, %v478
      %480 = vmatmul.bf16.gmra.mxu0 %v445
      %v481 = vpop.f32.mrf.mxu0
      %v482 = vadd.f32 0.0, %v481
      %v483 = vpop.f32.mrf.mxu0
      %v484 = vadd.f32 0.0, %v483
      %485 = vmatmul.bf16.gmra.mxu0 %v448
      %v486 = vpop.f32.mrf.mxu0
      %v487 = vadd.f32 0.0, %v486
      %v488 = vpop.f32.mrf.mxu0
      %v489 = vadd.f32 0.0, %v488
      %490 = vdwg.mxu0
      %v491 = vmul.f32 %v472, 0.17677669
      %v492 = vmul.f32 %v474, 0.17677669
      %v493 = vmul.f32 %v477, 0.17677669
      %v494 = vmul.f32 %v479, 0.17677669
      %v495 = vmul.f32 %v482, 0.17677669
      %v496 = vmul.f32 %v484, 0.17677669
      %v497 = vmul.f32 %v487, 0.17677669
      %v498 = vmul.f32 %v489, 0.17677669
      %v499 = vld [vmem:[#allocation3] sm:$0xff]
      %v500 = vld [vmem:[#allocation3 + $0x8] sm:$0xff]
      %v501 = vld [vmem:[#allocation3 + $0x10] sm:$0xff]
      %v502 = vld [vmem:[#allocation3 + $0x18] sm:$0xff]
      %v503 = vld [vmem:[#allocation3 + $0x20] sm:$0xff]
      %v504 = vld [vmem:[#allocation3 + $0x28] sm:$0xff]
      %v505 = vld [vmem:[#allocation3 + $0x30] sm:$0xff]
      %v506 = vld [vmem:[#allocation3 + $0x38] sm:$0xff]
      %vm507 = vcmask 523264
      %v508 = vsel %vm507, %v491, -inf
      %509 = vmax.xlane.f32.xlu0 %v508
      %v510 = vpop.xlane.xlu0 %509
      %v511 = vsel %vm507, %v492, -inf
      %512 = vmax.xlane.f32.xlu0 %v511
      %v513 = vpop.xlane.xlu0 %512
      %v514 = vsel %vm507, %v493, -inf
      %515 = vmax.xlane.f32.xlu0 %v514
      %v516 = vpop.xlane.xlu0 %515
      %v517 = vsel %vm507, %v494, -inf
      %518 = vmax.xlane.f32.xlu0 %v517
      %v519 = vpop.xlane.xlu0 %518
      %v520 = vsel %vm507, %v495, -inf
      %521 = vmax.xlane.f32.xlu0 %v520
      %v522 = vpop.xlane.xlu0 %521
      %v523 = vsel %vm507, %v496, -inf
      %524 = vmax.xlane.f32.xlu0 %v523
      %v525 = vpop.xlane.xlu0 %524
      %v526 = vsel %vm507, %v497, -inf
      %527 = vmax.xlane.f32.xlu0 %v526
      %v528 = vpop.xlane.xlu0 %527
      %v529 = vsel %vm507, %v498, -inf
      %530 = vmax.xlane.f32.xlu0 %v529
      %v531 = vpop.xlane.xlu0 %530
      %v532 = vmax.f32 %v499, %v510
      %v533 = vmax.f32 %v500, %v513
      %v534 = vmax.f32 %v501, %v516
      %v535 = vmax.f32 %v502, %v519
      %v536 = vmax.f32 %v503, %v522
      %v537 = vmax.f32 %v504, %v525
      %v538 = vmax.f32 %v505, %v528
      %v539 = vmax.f32 %v506, %v531
      %v540 = vsub.f32 %v499, %v532
      %v541 = vsub.f32 %v500, %v533
      %v542 = vsub.f32 %v501, %v534
      %v543 = vsub.f32 %v502, %v535
      %v544 = vsub.f32 %v503, %v536
      %v545 = vsub.f32 %v504, %v537
      %v546 = vsub.f32 %v505, %v538
      %v547 = vsub.f32 %v506, %v539
      %v548 = vmul.f32 %v540, 1.442695
      %v549 = vpow.pop %v548
      %v550 = vmul.f32 %v541, 1.442695
      %v551 = vpow.pop %v550
      %v552 = vmul.f32 %v542, 1.442695
      %v553 = vpow.pop %v552
      %v554 = vmul.f32 %v543, 1.442695
      %v555 = vpow.pop %v554
      %v556 = vmul.f32 %v544, 1.442695
      %v557 = vpow.pop %v556
      %v558 = vmul.f32 %v545, 1.442695
      %v559 = vpow.pop %v558
      %v560 = vmul.f32 %v546, 1.442695
      %v561 = vpow.pop %v560
      %v562 = vmul.f32 %v547, 1.442695
      %v563 = vpow.pop %v562
      %565 = vset.pattern.permute.xlu0 0
      %566 = vperm.xlu0 %565, %v532
      %v567 = vpop.permute.xlu0 %566
      %570 = vset.pattern.permute.xlu0 0
      %571 = vperm.xlu0 %570, %v533
      %v572 = vpop.permute.xlu0 %571
      %575 = vset.pattern.permute.xlu0 0
      %576 = vperm.xlu0 %575, %v534
      %v577 = vpop.permute.xlu0 %576
      %580 = vset.pattern.permute.xlu0 0
      %581 = vperm.xlu0 %580, %v535
      %v582 = vpop.permute.xlu0 %581
      %585 = vset.pattern.permute.xlu0 0
      %586 = vperm.xlu0 %585, %v536
      %v587 = vpop.permute.xlu0 %586
      %590 = vset.pattern.permute.xlu0 0
      %591 = vperm.xlu0 %590, %v537
      %v592 = vpop.permute.xlu0 %591
      %595 = vset.pattern.permute.xlu0 0
      %596 = vperm.xlu0 %595, %v538
      %v597 = vpop.permute.xlu0 %596
      %600 = vset.pattern.permute.xlu0 0
      %601 = vperm.xlu0 %600, %v539
      %v602 = vpop.permute.xlu0 %601
      %v604 = vsub.f32 %v491, %v567
      %v605 = vsub.f32 %v492, %v572
      %v606 = vsub.f32 %v493, %v577
      %v607 = vsub.f32 %v494, %v582
      %v608 = vsub.f32 %v495, %v587
      %v609 = vsub.f32 %v496, %v592
      %v610 = vsub.f32 %v497, %v597
      %v611 = vsub.f32 %v498, %v602
      %v612 = vmul.f32 %v604, 1.442695
      %v613 = vpow.pop %v612
      %v614 = vmul.f32 %v605, 1.442695
      %v615 = vpow.pop %v614
      %v616 = vmul.f32 %v606, 1.442695
      %v617 = vpow.pop %v616
      %v618 = vmul.f32 %v607, 1.442695
      %v619 = vpow.pop %v618
      %v620 = vmul.f32 %v608, 1.442695
      %v621 = vpow.pop %v620
      %v622 = vmul.f32 %v609, 1.442695
      %v623 = vpow.pop %v622
      %v624 = vmul.f32 %v610, 1.442695
      %v625 = vpow.pop %v624
      %v626 = vmul.f32 %v611, 1.442695
      %v627 = vpow.pop %v626
      %v628 = vld [vmem:[#allocation4] sm:$0xff]
      %v629 = vld [vmem:[#allocation4 + $0x8] sm:$0xff]
      %v630 = vld [vmem:[#allocation4 + $0x10] sm:$0xff]
      %v631 = vld [vmem:[#allocation4 + $0x18] sm:$0xff]
      %v632 = vld [vmem:[#allocation4 + $0x20] sm:$0xff]
      %v633 = vld [vmem:[#allocation4 + $0x28] sm:$0xff]
      %v634 = vld [vmem:[#allocation4 + $0x30] sm:$0xff]
      %v635 = vld [vmem:[#allocation4 + $0x38] sm:$0xff]
      %v636 = vmul.f32 %v549, %v628
      %v637 = vmul.f32 %v551, %v629
      %v638 = vmul.f32 %v553, %v630
      %v639 = vmul.f32 %v555, %v631
      %v640 = vmul.f32 %v557, %v632
      %v641 = vmul.f32 %v559, %v633
      %v642 = vmul.f32 %v561, %v634
      %v643 = vmul.f32 %v563, %v635
      %v644 = vsel %vm507, %v613, 0.0
      %645 = vadd.xlane.f32.xlu0 %v644
      %v646 = vpop.xlane.xlu0 %645
      %v647 = vsel %vm507, %v615, 0.0
      %648 = vadd.xlane.f32.xlu0 %v647
      %v649 = vpop.xlane.xlu0 %648
      %v650 = vsel %vm507, %v617, 0.0
      %651 = vadd.xlane.f32.xlu0 %v650
      %v652 = vpop.xlane.xlu0 %651
      %v653 = vsel %vm507, %v619, 0.0
      %654 = vadd.xlane.f32.xlu0 %v653
      %v655 = vpop.xlane.xlu0 %654
      %v656 = vsel %vm507, %v621, 0.0
      %657 = vadd.xlane.f32.xlu0 %v656
      %v658 = vpop.xlane.xlu0 %657
      %v659 = vsel %vm507, %v623, 0.0
      %660 = vadd.xlane.f32.xlu0 %v659
      %v661 = vpop.xlane.xlu0 %660
      %v662 = vsel %vm507, %v625, 0.0
      %663 = vadd.xlane.f32.xlu0 %v662
      %v664 = vpop.xlane.xlu0 %663
      %v665 = vsel %vm507, %v627, 0.0
      %666 = vadd.xlane.f32.xlu0 %v665
      %v667 = vpop.xlane.xlu0 %666
      %v668 = vadd.f32 %v636, %v646
      %v669 = vadd.f32 %v637, %v649
      %v670 = vadd.f32 %v638, %v652
      %v671 = vadd.f32 %v639, %v655
      %v672 = vadd.f32 %v640, %v658
      %v673 = vadd.f32 %v641, %v661
      %v674 = vadd.f32 %v642, %v664
      %v675 = vadd.f32 %v643, %v667
      %vm676 = vcmask 7168
      %677 = vst.msk [vmem:[#allocation4] sm:$0xff] %vm676, %v668
      %678 = vst.msk [vmem:[#allocation4 + $0x8] sm:$0xff] %vm676, %v669
      %679 = vst.msk [vmem:[#allocation4 + $0x10] sm:$0xff] %vm676, %v670
      %680 = vst.msk [vmem:[#allocation4 + $0x18] sm:$0xff] %vm676, %v671
      %681 = vst.msk [vmem:[#allocation4 + $0x20] sm:$0xff] %vm676, %v672
      %682 = vst.msk [vmem:[#allocation4 + $0x28] sm:$0xff] %vm676, %v673
      %683 = vst.msk [vmem:[#allocation4 + $0x30] sm:$0xff] %vm676, %v674
      %684 = vst.msk [vmem:[#allocation4 + $0x38] sm:$0xff] %vm676, %v675
      %v685 = vpack.c.bf16 %v615, %v613
      %v686 = vpack.c.bf16 %v619, %v617
      %v687 = vpack.c.bf16 %v623, %v621
      %v688 = vpack.c.bf16 %v627, %v625
      %v697 = vunpack.c.l.b16 %v389
      %v698 = vunpack.c.l.b16 %v390
      %v699 = vunpack.c.l.b16 %v391
      %v700 = vunpack.c.l.b16 %v392
      %v701 = vunpack.c.l.b16 %v393
      %v702 = vunpack.c.l.b16 %v394
      %v703 = vunpack.c.l.b16 %v395
      %v704 = vunpack.c.l.b16 %v396
      %v705 = vpack.c.b16 %v698, %v697
      %v706 = vpack.c.b16 %v700, %v699
      %v707 = vpack.c.b16 %v702, %v701
      %v708 = vpack.c.b16 %v704, %v703
      %v714 = vsel %vm507, %v685, 0
      %v717 = vsel %vm507, %v686, 0
      %v720 = vsel %vm507, %v687, 0
      %v723 = vsel %vm507, %v688, 0
      %725 = vmatpush.bf16.msra.mxu0 0
      %726 = vmatpush.bf16.msra.mxu0 0
      %727 = vmatpush.bf16.msra.mxu0 0
      %728 = vmatpush.bf16.msra.mxu0 0
      %729 = vmatpush.bf16.msra.mxu0 %v708
      %730 = vmatpush.bf16.msra.mxu0 %v707
      %731 = vmatpush.bf16.msra.mxu0 %v706
      %732 = vmatpush.bf16.msra.mxu0 %v705
      %733 = vmatmul.bf16.gmra.mxu0 %v714
      %v734 = vpop.f32.mrf.mxu0
      %v735 = vadd.f32 0.0, %v734
      %v736 = vpop.f32.mrf.mxu0
      %v737 = vadd.f32 0.0, %v736
      %738 = vmatmul.bf16.gmra.mxu0 %v717
      %v739 = vpop.f32.mrf.mxu0
      %v740 = vadd.f32 0.0, %v739
      %v741 = vpop.f32.mrf.mxu0
      %v742 = vadd.f32 0.0, %v741
      %743 = vmatmul.bf16.gmra.mxu0 %v720
      %v744 = vpop.f32.mrf.mxu0
      %v745 = vadd.f32 0.0, %v744
      %v746 = vpop.f32.mrf.mxu0
      %v747 = vadd.f32 0.0, %v746
      %748 = vmatmul.bf16.gmra.mxu0 %v723
      %v749 = vpop.f32.mrf.mxu0
      %v750 = vadd.f32 0.0, %v749
      %v751 = vpop.f32.mrf.mxu0
      %v752 = vadd.f32 0.0, %v751
      %753 = vdwg.mxu0
      %v754 = vld [vmem:[#allocation2] sm:$0xff]
      %v755 = vld [vmem:[#allocation2 + $0x8] sm:$0xff]
      %v756 = vld [vmem:[#allocation2 + $0x10] sm:$0xff]
      %v757 = vld [vmem:[#allocation2 + $0x18] sm:$0xff]
      %v758 = vld [vmem:[#allocation2 + $0x20] sm:$0xff]
      %v759 = vld [vmem:[#allocation2 + $0x28] sm:$0xff]
      %v760 = vld [vmem:[#allocation2 + $0x30] sm:$0xff]
      %v761 = vld [vmem:[#allocation2 + $0x38] sm:$0xff]
      %763 = vset.pattern.permute.xlu0 0
      %764 = vperm.xlu0 %763, %v549
      %v765 = vpop.permute.xlu0 %764
      %768 = vset.pattern.permute.xlu0 0
      %769 = vperm.xlu0 %768, %v551
      %v770 = vpop.permute.xlu0 %769
      %773 = vset.pattern.permute.xlu0 0
      %774 = vperm.xlu0 %773, %v553
      %v775 = vpop.permute.xlu0 %774
      %778 = vset.pattern.permute.xlu0 0
      %779 = vperm.xlu0 %778, %v555
      %v780 = vpop.permute.xlu0 %779
      %783 = vset.pattern.permute.xlu0 0
      %784 = vperm.xlu0 %783, %v557
      %v785 = vpop.permute.xlu0 %784
      %788 = vset.pattern.permute.xlu0 0
      %789 = vperm.xlu0 %788, %v559
      %v790 = vpop.permute.xlu0 %789
      %793 = vset.pattern.permute.xlu0 0
      %794 = vperm.xlu0 %793, %v561
      %v795 = vpop.permute.xlu0 %794
      %798 = vset.pattern.permute.xlu0 0
      %799 = vperm.xlu0 %798, %v563
      %v800 = vpop.permute.xlu0 %799
      %v802 = vmul.f32 %v765, %v754
      %v803 = vmul.f32 %v770, %v755
      %v804 = vmul.f32 %v775, %v756
      %v805 = vmul.f32 %v780, %v757
      %v806 = vmul.f32 %v785, %v758
      %v807 = vmul.f32 %v790, %v759
      %v808 = vmul.f32 %v795, %v760
      %v809 = vmul.f32 %v800, %v761
      %v810 = vadd.f32 %v802, %v735
      %v811 = vadd.f32 %v803, %v737
      %v812 = vadd.f32 %v804, %v740
      %v813 = vadd.f32 %v805, %v742
      %v814 = vadd.f32 %v806, %v745
      %v815 = vadd.f32 %v807, %v747
      %v816 = vadd.f32 %v808, %v750
      %v817 = vadd.f32 %v809, %v752
      %818 = vst.msk [vmem:[#allocation2] sm:$0xff] %vm437, %v810
      %819 = vst.msk [vmem:[#allocation2 + $0x8] sm:$0xff] %vm437, %v811
      %820 = vst.msk [vmem:[#allocation2 + $0x10] sm:$0xff] %vm437, %v812
      %821 = vst.msk [vmem:[#allocation2 + $0x18] sm:$0xff] %vm437, %v813
      %822 = vst.msk [vmem:[#allocation2 + $0x20] sm:$0xff] %vm437, %v814
      %823 = vst.msk [vmem:[#allocation2 + $0x28] sm:$0xff] %vm437, %v815
      %824 = vst.msk [vmem:[#allocation2 + $0x30] sm:$0xff] %vm437, %v816
      %825 = vst.msk [vmem:[#allocation2 + $0x38] sm:$0xff] %vm437, %v817
      %826 = vst.msk [vmem:[#allocation3] sm:$0xff] %vm676, %v532
      %827 = vst.msk [vmem:[#allocation3 + $0x8] sm:$0xff] %vm676, %v533
      %828 = vst.msk [vmem:[#allocation3 + $0x10] sm:$0xff] %vm676, %v534
      %829 = vst.msk [vmem:[#allocation3 + $0x18] sm:$0xff] %vm676, %v535
      %830 = vst.msk [vmem:[#allocation3 + $0x20] sm:$0xff] %vm676, %v536
      %831 = vst.msk [vmem:[#allocation3 + $0x28] sm:$0xff] %vm676, %v537
      %832 = vst.msk [vmem:[#allocation3 + $0x30] sm:$0xff] %vm676, %v538
      %833 = vst.msk [vmem:[#allocation3 + $0x38] sm:$0xff] %vm676, %v539
      %834 = vrot.lane.b32.xlu0 %v413, 96
      %v835 = vpop.permute.xlu0 %834
      %836 = vrot.lane.b32.xlu0 %v414, 96
      %v837 = vpop.permute.xlu0 %836
      %838 = vrot.lane.b32.xlu0 %v415, 96
      %v839 = vpop.permute.xlu0 %838
      %840 = vrot.lane.b32.xlu0 %v416, 96
      %v841 = vpop.permute.xlu0 %840
      %842 = vrot.lane.b32.xlu0 %v433, 96
      %v843 = vpop.permute.xlu0 %842
      %844 = vrot.lane.b32.xlu0 %v434, 96
      %v845 = vpop.permute.xlu0 %844
      %846 = vrot.lane.b32.xlu0 %v435, 96
      %v847 = vpop.permute.xlu0 %846
      %848 = vrot.lane.b32.xlu0 %v436, 96
      %v849 = vpop.permute.xlu0 %848
      %v851 = vsel %vm437, %v835, 0
      %v854 = vsel %vm437, %v837, 0
      %v857 = vsel %vm437, %v839, 0
      %v860 = vsel %vm437, %v841, 0
      %v863 = vsel %vm437, %v843, 0
      %v866 = vsel %vm437, %v845, 0
      %v869 = vsel %vm437, %v847, 0
      %v872 = vsel %vm437, %v849, 0
      %874 = vmatpush.bf16.xpose.msra.mxu0 0
      %875 = vmatpush.bf16.xpose.msra.mxu0 0
      %876 = vmatpush.bf16.xpose.msra.mxu0 0
      %877 = vmatpush.bf16.xpose.msra.mxu0 0
      %878 = vmatpush.bf16.xpose.msra.mxu0 %v872
      %879 = vmatpush.bf16.xpose.msra.mxu0 %v869
      %880 = vmatpush.bf16.xpose.msra.mxu0 %v866
      %881 = vmatpush.bf16.xpose.msra.mxu0 %v863
      %882 = vmatmul.bf16.gmra.mxu0 %v851
      %v883 = vpop.f32.mrf.mxu0
      %v884 = vadd.f32 0.0, %v883
      %v885 = vpop.f32.mrf.mxu0
      %v886 = vadd.f32 0.0, %v885
      %887 = vmatmul.bf16.gmra.mxu0 %v854
      %v888 = vpop.f32.mrf.mxu0
      %v889 = vadd.f32 0.0, %v888
      %v890 = vpop.f32.mrf.mxu0
      %v891 = vadd.f32 0.0, %v890
      %892 = vmatmul.bf16.gmra.mxu0 %v857
      %v893 = vpop.f32.mrf.mxu0
      %v894 = vadd.f32 0.0, %v893
      %v895 = vpop.f32.mrf.mxu0
      %v896 = vadd.f32 0.0, %v895
      %897 = vmatmul.bf16.gmra.mxu0 %v860
      %v898 = vpop.f32.mrf.mxu0
      %v899 = vadd.f32 0.0, %v898
      %v900 = vpop.f32.mrf.mxu0
      %v901 = vadd.f32 0.0, %v900
      %902 = vdwg.mxu0
      %v903 = vmul.f32 %v884, 0.17677669
      %v904 = vmul.f32 %v886, 0.17677669
      %v905 = vmul.f32 %v889, 0.17677669
      %v906 = vmul.f32 %v891, 0.17677669
      %v907 = vmul.f32 %v894, 0.17677669
      %v908 = vmul.f32 %v896, 0.17677669
      %v909 = vmul.f32 %v899, 0.17677669
      %v910 = vmul.f32 %v901, 0.17677669
      %s911 = scalar_lea.vmem [#allocation3], 64
      %v912 = vld [vmem:[%s911] sm:$0xff]
      %v913 = vld [vmem:[%s911 + $0x8] sm:$0xff]
      %v914 = vld [vmem:[%s911 + $0x10] sm:$0xff]
      %v915 = vld [vmem:[%s911 + $0x18] sm:$0xff]
      %v916 = vld [vmem:[%s911 + $0x20] sm:$0xff]
      %v917 = vld [vmem:[%s911 + $0x28] sm:$0xff]
      %v918 = vld [vmem:[%s911 + $0x30] sm:$0xff]
      %v919 = vld [vmem:[%s911 + $0x38] sm:$0xff]
      %v920 = vsel %vm507, %v903, -inf
      %921 = vmax.xlane.f32.xlu0 %v920
      %v922 = vpop.xlane.xlu0 %921
      %v923 = vsel %vm507, %v904, -inf
      %924 = vmax.xlane.f32.xlu0 %v923
      %v925 = vpop.xlane.xlu0 %924
      %v926 = vsel %vm507, %v905, -inf
      %927 = vmax.xlane.f32.xlu0 %v926
      %v928 = vpop.xlane.xlu0 %927
      %v929 = vsel %vm507, %v906, -inf
      %930 = vmax.xlane.f32.xlu0 %v929
      %v931 = vpop.xlane.xlu0 %930
      %v932 = vsel %vm507, %v907, -inf
      %933 = vmax.xlane.f32.xlu0 %v932
      %v934 = vpop.xlane.xlu0 %933
      %v935 = vsel %vm507, %v908, -inf
      %936 = vmax.xlane.f32.xlu0 %v935
      %v937 = vpop.xlane.xlu0 %936
      %v938 = vsel %vm507, %v909, -inf
      %939 = vmax.xlane.f32.xlu0 %v938
      %v940 = vpop.xlane.xlu0 %939
      %v941 = vsel %vm507, %v910, -inf
      %942 = vmax.xlane.f32.xlu0 %v941
      %v943 = vpop.xlane.xlu0 %942
      %v944 = vmax.f32 %v912, %v922
      %v945 = vmax.f32 %v913, %v925
      %v946 = vmax.f32 %v914, %v928
      %v947 = vmax.f32 %v915, %v931
      %v948 = vmax.f32 %v916, %v934
      %v949 = vmax.f32 %v917, %v937
      %v950 = vmax.f32 %v918, %v940
      %v951 = vmax.f32 %v919, %v943
      %v952 = vsub.f32 %v912, %v944
      %v953 = vsub.f32 %v913, %v945
      %v954 = vsub.f32 %v914, %v946
      %v955 = vsub.f32 %v915, %v947
      %v956 = vsub.f32 %v916, %v948
      %v957 = vsub.f32 %v917, %v949
      %v958 = vsub.f32 %v918, %v950
      %v959 = vsub.f32 %v919, %v951
      %v960 = vmul.f32 %v952, 1.442695
      %v961 = vpow.pop %v960
      %v962 = vmul.f32 %v953, 1.442695
      %v963 = vpow.pop %v962
      %v964 = vmul.f32 %v954, 1.442695
      %v965 = vpow.pop %v964
      %v966 = vmul.f32 %v955, 1.442695
      %v967 = vpow.pop %v966
      %v968 = vmul.f32 %v956, 1.442695
      %v969 = vpow.pop %v968
      %v970 = vmul.f32 %v957, 1.442695
      %v971 = vpow.pop %v970
      %v972 = vmul.f32 %v958, 1.442695
      %v973 = vpow.pop %v972
      %v974 = vmul.f32 %v959, 1.442695
      %v975 = vpow.pop %v974
      %977 = vset.pattern.permute.xlu0 0
      %978 = vperm.xlu0 %977, %v944
      %v979 = vpop.permute.xlu0 %978
      %982 = vset.pattern.permute.xlu0 0
      %983 = vperm.xlu0 %982, %v945
      %v984 = vpop.permute.xlu0 %983
      %987 = vset.pattern.permute.xlu0 0
      %988 = vperm.xlu0 %987, %v946
      %v989 = vpop.permute.xlu0 %988
      %992 = vset.pattern.permute.xlu0 0
      %993 = vperm.xlu0 %992, %v947
      %v994 = vpop.permute.xlu0 %993
      %997 = vset.pattern.permute.xlu0 0
      %998 = vperm.xlu0 %997, %v948
      %v999 = vpop.permute.xlu0 %998
      %1002 = vset.pattern.permute.xlu0 0
      %1003 = vperm.xlu0 %1002, %v949
      %v1004 = vpop.permute.xlu0 %1003
      %1007 = vset.pattern.permute.xlu0 0
      %1008 = vperm.xlu0 %1007, %v950
      %v1009 = vpop.permute.xlu0 %1008
      %1012 = vset.pattern.permute.xlu0 0
      %1013 = vperm.xlu0 %1012, %v951
      %v1014 = vpop.permute.xlu0 %1013
      %v1016 = vsub.f32 %v903, %v979
      %v1017 = vsub.f32 %v904, %v984
      %v1018 = vsub.f32 %v905, %v989
      %v1019 = vsub.f32 %v906, %v994
      %v1020 = vsub.f32 %v907, %v999
      %v1021 = vsub.f32 %v908, %v1004
      %v1022 = vsub.f32 %v909, %v1009
      %v1023 = vsub.f32 %v910, %v1014
      %v1024 = vmul.f32 %v1016, 1.442695
      %v1025 = vpow.pop %v1024
      %v1026 = vmul.f32 %v1017, 1.442695
      %v1027 = vpow.pop %v1026
      %v1028 = vmul.f32 %v1018, 1.442695
      %v1029 = vpow.pop %v1028
      %v1030 = vmul.f32 %v1019, 1.442695
      %v1031 = vpow.pop %v1030
      %v1032 = vmul.f32 %v1020, 1.442695
      %v1033 = vpow.pop %v1032
      %v1034 = vmul.f32 %v1021, 1.442695
      %v1035 = vpow.pop %v1034
      %v1036 = vmul.f32 %v1022, 1.442695
      %v1037 = vpow.pop %v1036
      %v1038 = vmul.f32 %v1023, 1.442695
      %v1039 = vpow.pop %v1038
      %s1040 = scalar_lea.vmem [#allocation4], 64
      %v1041 = vld [vmem:[%s1040] sm:$0xff]
      %v1042 = vld [vmem:[%s1040 + $0x8] sm:$0xff]
      %v1043 = vld [vmem:[%s1040 + $0x10] sm:$0xff]
      %v1044 = vld [vmem:[%s1040 + $0x18] sm:$0xff]
      %v1045 = vld [vmem:[%s1040 + $0x20] sm:$0xff]
      %v1046 = vld [vmem:[%s1040 + $0x28] sm:$0xff]
      %v1047 = vld [vmem:[%s1040 + $0x30] sm:$0xff]
      %v1048 = vld [vmem:[%s1040 + $0x38] sm:$0xff]
      %v1049 = vmul.f32 %v961, %v1041
      %v1050 = vmul.f32 %v963, %v1042
      %v1051 = vmul.f32 %v965, %v1043
      %v1052 = vmul.f32 %v967, %v1044
      %v1053 = vmul.f32 %v969, %v1045
      %v1054 = vmul.f32 %v971, %v1046
      %v1055 = vmul.f32 %v973, %v1047
      %v1056 = vmul.f32 %v975, %v1048
      %v1057 = vsel %vm507, %v1025, 0.0
      %1058 = vadd.xlane.f32.xlu0 %v1057
      %v1059 = vpop.xlane.xlu0 %1058
      %v1060 = vsel %vm507, %v1027, 0.0
      %1061 = vadd.xlane.f32.xlu0 %v1060
      %v1062 = vpop.xlane.xlu0 %1061
      %v1063 = vsel %vm507, %v1029, 0.0
      %1064 = vadd.xlane.f32.xlu0 %v1063
      %v1065 = vpop.xlane.xlu0 %1064
      %v1066 = vsel %vm507, %v1031, 0.0
      %1067 = vadd.xlane.f32.xlu0 %v1066
      %v1068 = vpop.xlane.xlu0 %1067
      %v1069 = vsel %vm507, %v1033, 0.0
      %1070 = vadd.xlane.f32.xlu0 %v1069
      %v1071 = vpop.xlane.xlu0 %1070
      %v1072 = vsel %vm507, %v1035, 0.0
      %1073 = vadd.xlane.f32.xlu0 %v1072
      %v1074 = vpop.xlane.xlu0 %1073
      %v1075 = vsel %vm507, %v1037, 0.0
      %1076 = vadd.xlane.f32.xlu0 %v1075
      %v1077 = vpop.xlane.xlu0 %1076
      %v1078 = vsel %vm507, %v1039, 0.0
      %1079 = vadd.xlane.f32.xlu0 %v1078
      %v1080 = vpop.xlane.xlu0 %1079
      %v1081 = vadd.f32 %v1049, %v1059
      %v1082 = vadd.f32 %v1050, %v1062
      %v1083 = vadd.f32 %v1051, %v1065
      %v1084 = vadd.f32 %v1052, %v1068
      %v1085 = vadd.f32 %v1053, %v1071
      %v1086 = vadd.f32 %v1054, %v1074
      %v1087 = vadd.f32 %v1055, %v1077
      %v1088 = vadd.f32 %v1056, %v1080
      %1089 = vst.msk [vmem:[%s1040] sm:$0xff] %vm676, %v1081
      %1090 = vst.msk [vmem:[%s1040 + $0x8] sm:$0xff] %vm676, %v1082
      %1091 = vst.msk [vmem:[%s1040 + $0x10] sm:$0xff] %vm676, %v1083
      %1092 = vst.msk [vmem:[%s1040 + $0x18] sm:$0xff] %vm676, %v1084
      %1093 = vst.msk [vmem:[%s1040 + $0x20] sm:$0xff] %vm676, %v1085
      %1094 = vst.msk [vmem:[%s1040 + $0x28] sm:$0xff] %vm676, %v1086
      %1095 = vst.msk [vmem:[%s1040 + $0x30] sm:$0xff] %vm676, %v1087
      %1096 = vst.msk [vmem:[%s1040 + $0x38] sm:$0xff] %vm676, %v1088
      %v1097 = vpack.c.bf16 %v1027, %v1025
      %v1098 = vpack.c.bf16 %v1031, %v1029
      %v1099 = vpack.c.bf16 %v1035, %v1033
      %v1100 = vpack.c.bf16 %v1039, %v1037
      %1101 = vrot.lane.b32.xlu0 %v705, 96
      %v1102 = vpop.permute.xlu0 %1101
      %1103 = vrot.lane.b32.xlu0 %v706, 96
      %v1104 = vpop.permute.xlu0 %1103
      %1105 = vrot.lane.b32.xlu0 %v707, 96
      %v1106 = vpop.permute.xlu0 %1105
      %1107 = vrot.lane.b32.xlu0 %v708, 96
      %v1108 = vpop.permute.xlu0 %1107
      %v1114 = vsel %vm507, %v1097, 0
      %v1117 = vsel %vm507, %v1098, 0
      %v1120 = vsel %vm507, %v1099, 0
      %v1123 = vsel %vm507, %v1100, 0
      %1125 = vmatpush.bf16.msra.mxu0 0
      %1126 = vmatpush.bf16.msra.mxu0 0
      %1127 = vmatpush.bf16.msra.mxu0 0
      %1128 = vmatpush.bf16.msra.mxu0 0
      %1129 = vmatpush.bf16.msra.mxu0 %v1108
      %1130 = vmatpush.bf16.msra.mxu0 %v1106
      %1131 = vmatpush.bf16.msra.mxu0 %v1104
      %1132 = vmatpush.bf16.msra.mxu0 %v1102
      %1133 = vmatmul.bf16.gmra.mxu0 %v1114
      %v1134 = vpop.f32.mrf.mxu0
      %v1135 = vadd.f32 0.0, %v1134
      %v1136 = vpop.f32.mrf.mxu0
      %v1137 = vadd.f32 0.0, %v1136
      %1138 = vmatmul.bf16.gmra.mxu0 %v1117
      %v1139 = vpop.f32.mrf.mxu0
      %v1140 = vadd.f32 0.0, %v1139
      %v1141 = vpop.f32.mrf.mxu0
      %v1142 = vadd.f32 0.0, %v1141
      %1143 = vmatmul.bf16.gmra.mxu0 %v1120
      %v1144 = vpop.f32.mrf.mxu0
      %v1145 = vadd.f32 0.0, %v1144
      %v1146 = vpop.f32.mrf.mxu0
      %v1147 = vadd.f32 0.0, %v1146
      %1148 = vmatmul.bf16.gmra.mxu0 %v1123
      %v1149 = vpop.f32.mrf.mxu0
      %v1150 = vadd.f32 0.0, %v1149
      %v1151 = vpop.f32.mrf.mxu0
      %v1152 = vadd.f32 0.0, %v1151
      %1153 = vdwg.mxu0
      %v1154 = vld [vmem:[#allocation2] sm:$0xff]
      %v1155 = vld [vmem:[#allocation2 + $0x8] sm:$0xff]
      %v1156 = vld [vmem:[#allocation2 + $0x10] sm:$0xff]
      %v1157 = vld [vmem:[#allocation2 + $0x18] sm:$0xff]
      %v1158 = vld [vmem:[#allocation2 + $0x20] sm:$0xff]
      %v1159 = vld [vmem:[#allocation2 + $0x28] sm:$0xff]
      %v1160 = vld [vmem:[#allocation2 + $0x30] sm:$0xff]
      %v1161 = vld [vmem:[#allocation2 + $0x38] sm:$0xff]
      %1163 = vset.pattern.permute.xlu0 0
      %1164 = vperm.xlu0 %1163, %v961
      %v1165 = vpop.permute.xlu0 %1164
      %1168 = vset.pattern.permute.xlu0 0
      %1169 = vperm.xlu0 %1168, %v963
      %v1170 = vpop.permute.xlu0 %1169
      %1173 = vset.pattern.permute.xlu0 0
      %1174 = vperm.xlu0 %1173, %v965
      %v1175 = vpop.permute.xlu0 %1174
      %1178 = vset.pattern.permute.xlu0 0
      %1179 = vperm.xlu0 %1178, %v967
      %v1180 = vpop.permute.xlu0 %1179
      %1183 = vset.pattern.permute.xlu0 0
      %1184 = vperm.xlu0 %1183, %v969
      %v1185 = vpop.permute.xlu0 %1184
      %1188 = vset.pattern.permute.xlu0 0
      %1189 = vperm.xlu0 %1188, %v971
      %v1190 = vpop.permute.xlu0 %1189
      %1193 = vset.pattern.permute.xlu0 0
      %1194 = vperm.xlu0 %1193, %v973
      %v1195 = vpop.permute.xlu0 %1194
      %1198 = vset.pattern.permute.xlu0 0
      %1199 = vperm.xlu0 %1198, %v975
      %v1200 = vpop.permute.xlu0 %1199
      %v1202 = vmul.f32 %v1165, %v1154
      %v1203 = vmul.f32 %v1170, %v1155
      %v1204 = vmul.f32 %v1175, %v1156
      %v1205 = vmul.f32 %v1180, %v1157
      %v1206 = vmul.f32 %v1185, %v1158
      %v1207 = vmul.f32 %v1190, %v1159
      %v1208 = vmul.f32 %v1195, %v1160
      %v1209 = vmul.f32 %v1200, %v1161
      %1218 = vrot.lane.b32.xlu0 %v1135, 32
      %v1219 = vpop.permute.xlu0 %1218
      %1220 = vrot.lane.b32.xlu0 %v1137, 32
      %v1221 = vpop.permute.xlu0 %1220
      %1222 = vrot.lane.b32.xlu0 %v1140, 32
      %v1223 = vpop.permute.xlu0 %1222
      %1224 = vrot.lane.b32.xlu0 %v1142, 32
      %v1225 = vpop.permute.xlu0 %1224
      %1226 = vrot.lane.b32.xlu0 %v1145, 32
      %v1227 = vpop.permute.xlu0 %1226
      %1228 = vrot.lane.b32.xlu0 %v1147, 32
      %v1229 = vpop.permute.xlu0 %1228
      %1230 = vrot.lane.b32.xlu0 %v1150, 32
      %v1231 = vpop.permute.xlu0 %1230
      %1232 = vrot.lane.b32.xlu0 %v1152, 32
      %v1233 = vpop.permute.xlu0 %1232
      %v1242 = vadd.f32 %v1202, %v1219
      %v1243 = vadd.f32 %v1203, %v1221
      %v1244 = vadd.f32 %v1204, %v1223
      %v1245 = vadd.f32 %v1205, %v1225
      %v1246 = vadd.f32 %v1206, %v1227
      %v1247 = vadd.f32 %v1207, %v1229
      %v1248 = vadd.f32 %v1208, %v1231
      %v1249 = vadd.f32 %v1209, %v1233
      %vm1250 = vcmask 523520
      %1251 = vst.msk [vmem:[#allocation2] sm:$0xff] %vm1250, %v1242
      %1252 = vst.msk [vmem:[#allocation2 + $0x8] sm:$0xff] %vm1250, %v1243
      %1253 = vst.msk [vmem:[#allocation2 + $0x10] sm:$0xff] %vm1250, %v1244
      %1254 = vst.msk [vmem:[#allocation2 + $0x18] sm:$0xff] %vm1250, %v1245
      %1255 = vst.msk [vmem:[#allocation2 + $0x20] sm:$0xff] %vm1250, %v1246
      %1256 = vst.msk [vmem:[#allocation2 + $0x28] sm:$0xff] %vm1250, %v1247
      %1257 = vst.msk [vmem:[#allocation2 + $0x30] sm:$0xff] %vm1250, %v1248
      %1258 = vst.msk [vmem:[#allocation2 + $0x38] sm:$0xff] %vm1250, %v1249
      %1259 = vst.msk [vmem:[%s911] sm:$0xff] %vm676, %v944
      %1260 = vst.msk [vmem:[%s911 + $0x8] sm:$0xff] %vm676, %v945
      %1261 = vst.msk [vmem:[%s911 + $0x10] sm:$0xff] %vm676, %v946
      %1262 = vst.msk [vmem:[%s911 + $0x18] sm:$0xff] %vm676, %v947
      %1263 = vst.msk [vmem:[%s911 + $0x20] sm:$0xff] %vm676, %v948
      %1264 = vst.msk [vmem:[%s911 + $0x28] sm:$0xff] %vm676, %v949
      %1265 = vst.msk [vmem:[%s911 + $0x30] sm:$0xff] %vm676, %v950
      %1266 = vst.msk [vmem:[%s911 + $0x38] sm:$0xff] %vm676, %v951
      %1267 = vrot.lane.b32.xlu0 %v413, 64
      %v1268 = vpop.permute.xlu0 %1267
      %1269 = vrot.lane.b32.xlu0 %v414, 64
      %v1270 = vpop.permute.xlu0 %1269
      %1271 = vrot.lane.b32.xlu0 %v415, 64
      %v1272 = vpop.permute.xlu0 %1271
      %1273 = vrot.lane.b32.xlu0 %v416, 64
      %v1274 = vpop.permute.xlu0 %1273
      %1275 = vrot.lane.b32.xlu0 %v433, 64
      %v1276 = vpop.permute.xlu0 %1275
      %1277 = vrot.lane.b32.xlu0 %v434, 64
      %v1278 = vpop.permute.xlu0 %1277
      %1279 = vrot.lane.b32.xlu0 %v435, 64
      %v1280 = vpop.permute.xlu0 %1279
      %1281 = vrot.lane.b32.xlu0 %v436, 64
      %v1282 = vpop.permute.xlu0 %1281
      %v1284 = vsel %vm437, %v1268, 0
      %v1287 = vsel %vm437, %v1270, 0
      %v1290 = vsel %vm437, %v1272, 0
      %v1293 = vsel %vm437, %v1274, 0
      %v1296 = vsel %vm437, %v1276, 0
      %v1299 = vsel %vm437, %v1278, 0
      %v1302 = vsel %vm437, %v1280, 0
      %v1305 = vsel %vm437, %v1282, 0
      %1307 = vmatpush.bf16.xpose.msra.mxu0 0
      %1308 = vmatpush.bf16.xpose.msra.mxu0 0
      %1309 = vmatpush.bf16.xpose.msra.mxu0 0
      %1310 = vmatpush.bf16.xpose.msra.mxu0 0
      %1311 = vmatpush.bf16.xpose.msra.mxu0 %v1305
      %1312 = vmatpush.bf16.xpose.msra.mxu0 %v1302
      %1313 = vmatpush.bf16.xpose.msra.mxu0 %v1299
      %1314 = vmatpush.bf16.xpose.msra.mxu0 %v1296
      %1315 = vmatmul.bf16.gmra.mxu0 %v1284
      %v1316 = vpop.f32.mrf.mxu0
      %v1317 = vadd.f32 0.0, %v1316
      %v1318 = vpop.f32.mrf.mxu0
      %v1319 = vadd.f32 0.0, %v1318
      %1320 = vmatmul.bf16.gmra.mxu0 %v1287
      %v1321 = vpop.f32.mrf.mxu0
      %v1322 = vadd.f32 0.0, %v1321
      %v1323 = vpop.f32.mrf.mxu0
      %v1324 = vadd.f32 0.0, %v1323
      %1325 = vmatmul.bf16.gmra.mxu0 %v1290
      %v1326 = vpop.f32.mrf.mxu0
      %v1327 = vadd.f32 0.0, %v1326
      %v1328 = vpop.f32.mrf.mxu0
      %v1329 = vadd.f32 0.0, %v1328
      %1330 = vmatmul.bf16.gmra.mxu0 %v1293
      %v1331 = vpop.f32.mrf.mxu0
      %v1332 = vadd.f32 0.0, %v1331
      %v1333 = vpop.f32.mrf.mxu0
      %v1334 = vadd.f32 0.0, %v1333
      %1335 = vdwg.mxu0
      %v1336 = vmul.f32 %v1317, 0.17677669
      %v1337 = vmul.f32 %v1319, 0.17677669
      %v1338 = vmul.f32 %v1322, 0.17677669
      %v1339 = vmul.f32 %v1324, 0.17677669
      %v1340 = vmul.f32 %v1327, 0.17677669
      %v1341 = vmul.f32 %v1329, 0.17677669
      %v1342 = vmul.f32 %v1332, 0.17677669
      %v1343 = vmul.f32 %v1334, 0.17677669
      %s1344 = scalar_lea.vmem [#allocation3], 128
      %v1345 = vld [vmem:[%s1344] sm:$0xff]
      %v1346 = vld [vmem:[%s1344 + $0x8] sm:$0xff]
      %v1347 = vld [vmem:[%s1344 + $0x10] sm:$0xff]
      %v1348 = vld [vmem:[%s1344 + $0x18] sm:$0xff]
      %v1349 = vld [vmem:[%s1344 + $0x20] sm:$0xff]
      %v1350 = vld [vmem:[%s1344 + $0x28] sm:$0xff]
      %v1351 = vld [vmem:[%s1344 + $0x30] sm:$0xff]
      %v1352 = vld [vmem:[%s1344 + $0x38] sm:$0xff]
      %v1353 = vsel %vm507, %v1336, -inf
      %1354 = vmax.xlane.f32.xlu0 %v1353
      %v1355 = vpop.xlane.xlu0 %1354
      %v1356 = vsel %vm507, %v1337, -inf
      %1357 = vmax.xlane.f32.xlu0 %v1356
      %v1358 = vpop.xlane.xlu0 %1357
      %v1359 = vsel %vm507, %v1338, -inf
      %1360 = vmax.xlane.f32.xlu0 %v1359
      %v1361 = vpop.xlane.xlu0 %1360
      %v1362 = vsel %vm507, %v1339, -inf
      %1363 = vmax.xlane.f32.xlu0 %v1362
      %v1364 = vpop.xlane.xlu0 %1363
      %v1365 = vsel %vm507, %v1340, -inf
      %1366 = vmax.xlane.f32.xlu0 %v1365
      %v1367 = vpop.xlane.xlu0 %1366
      %v1368 = vsel %vm507, %v1341, -inf
      %1369 = vmax.xlane.f32.xlu0 %v1368
      %v1370 = vpop.xlane.xlu0 %1369
      %v1371 = vsel %vm507, %v1342, -inf
      %1372 = vmax.xlane.f32.xlu0 %v1371
      %v1373 = vpop.xlane.xlu0 %1372
      %v1374 = vsel %vm507, %v1343, -inf
      %1375 = vmax.xlane.f32.xlu0 %v1374
      %v1376 = vpop.xlane.xlu0 %1375
      %v1377 = vmax.f32 %v1345, %v1355
      %v1378 = vmax.f32 %v1346, %v1358
      %v1379 = vmax.f32 %v1347, %v1361
      %v1380 = vmax.f32 %v1348, %v1364
      %v1381 = vmax.f32 %v1349, %v1367
      %v1382 = vmax.f32 %v1350, %v1370
      %v1383 = vmax.f32 %v1351, %v1373
      %v1384 = vmax.f32 %v1352, %v1376
      %v1385 = vsub.f32 %v1345, %v1377
      %v1386 = vsub.f32 %v1346, %v1378
      %v1387 = vsub.f32 %v1347, %v1379
      %v1388 = vsub.f32 %v1348, %v1380
      %v1389 = vsub.f32 %v1349, %v1381
      %v1390 = vsub.f32 %v1350, %v1382
      %v1391 = vsub.f32 %v1351, %v1383
      %v1392 = vsub.f32 %v1352, %v1384
      %v1393 = vmul.f32 %v1385, 1.442695
      %v1394 = vpow.pop %v1393
      %v1395 = vmul.f32 %v1386, 1.442695
      %v1396 = vpow.pop %v1395
      %v1397 = vmul.f32 %v1387, 1.442695
      %v1398 = vpow.pop %v1397
      %v1399 = vmul.f32 %v1388, 1.442695
      %v1400 = vpow.pop %v1399
      %v1401 = vmul.f32 %v1389, 1.442695
      %v1402 = vpow.pop %v1401
      %v1403 = vmul.f32 %v1390, 1.442695
      %v1404 = vpow.pop %v1403
      %v1405 = vmul.f32 %v1391, 1.442695
      %v1406 = vpow.pop %v1405
      %v1407 = vmul.f32 %v1392, 1.442695
      %v1408 = vpow.pop %v1407
      %1410 = vset.pattern.permute.xlu0 0
      %1411 = vperm.xlu0 %1410, %v1377
      %v1412 = vpop.permute.xlu0 %1411
      %1415 = vset.pattern.permute.xlu0 0
      %1416 = vperm.xlu0 %1415, %v1378
      %v1417 = vpop.permute.xlu0 %1416
      %1420 = vset.pattern.permute.xlu0 0
      %1421 = vperm.xlu0 %1420, %v1379
      %v1422 = vpop.permute.xlu0 %1421
      %1425 = vset.pattern.permute.xlu0 0
      %1426 = vperm.xlu0 %1425, %v1380
      %v1427 = vpop.permute.xlu0 %1426
      %1430 = vset.pattern.permute.xlu0 0
      %1431 = vperm.xlu0 %1430, %v1381
      %v1432 = vpop.permute.xlu0 %1431
      %1435 = vset.pattern.permute.xlu0 0
      %1436 = vperm.xlu0 %1435, %v1382
      %v1437 = vpop.permute.xlu0 %1436
      %1440 = vset.pattern.permute.xlu0 0
      %1441 = vperm.xlu0 %1440, %v1383
      %v1442 = vpop.permute.xlu0 %1441
      %1445 = vset.pattern.permute.xlu0 0
      %1446 = vperm.xlu0 %1445, %v1384
      %v1447 = vpop.permute.xlu0 %1446
      %v1449 = vsub.f32 %v1336, %v1412
      %v1450 = vsub.f32 %v1337, %v1417
      %v1451 = vsub.f32 %v1338, %v1422
      %v1452 = vsub.f32 %v1339, %v1427
      %v1453 = vsub.f32 %v1340, %v1432
      %v1454 = vsub.f32 %v1341, %v1437
      %v1455 = vsub.f32 %v1342, %v1442
      %v1456 = vsub.f32 %v1343, %v1447
      %v1457 = vmul.f32 %v1449, 1.442695
      %v1458 = vpow.pop %v1457
      %v1459 = vmul.f32 %v1450, 1.442695
      %v1460 = vpow.pop %v1459
      %v1461 = vmul.f32 %v1451, 1.442695
      %v1462 = vpow.pop %v1461
      %v1463 = vmul.f32 %v1452, 1.442695
      %v1464 = vpow.pop %v1463
      %v1465 = vmul.f32 %v1453, 1.442695
      %v1466 = vpow.pop %v1465
      %v1467 = vmul.f32 %v1454, 1.442695
      %v1468 = vpow.pop %v1467
      %v1469 = vmul.f32 %v1455, 1.442695
      %v1470 = vpow.pop %v1469
      %v1471 = vmul.f32 %v1456, 1.442695
      %v1472 = vpow.pop %v1471
      %s1473 = scalar_lea.vmem [#allocation4], 128
      %v1474 = vld [vmem:[%s1473] sm:$0xff]
      %v1475 = vld [vmem:[%s1473 + $0x8] sm:$0xff]
      %v1476 = vld [vmem:[%s1473 + $0x10] sm:$0xff]
      %v1477 = vld [vmem:[%s1473 + $0x18] sm:$0xff]
      %v1478 = vld [vmem:[%s1473 + $0x20] sm:$0xff]
      %v1479 = vld [vmem:[%s1473 + $0x28] sm:$0xff]
      %v1480 = vld [vmem:[%s1473 + $0x30] sm:$0xff]
      %v1481 = vld [vmem:[%s1473 + $0x38] sm:$0xff]
      %v1482 = vmul.f32 %v1394, %v1474
      %v1483 = vmul.f32 %v1396, %v1475
      %v1484 = vmul.f32 %v1398, %v1476
      %v1485 = vmul.f32 %v1400, %v1477
      %v1486 = vmul.f32 %v1402, %v1478
      %v1487 = vmul.f32 %v1404, %v1479
      %v1488 = vmul.f32 %v1406, %v1480
      %v1489 = vmul.f32 %v1408, %v1481
      %v1490 = vsel %vm507, %v1458, 0.0
      %1491 = vadd.xlane.f32.xlu0 %v1490
      %v1492 = vpop.xlane.xlu0 %1491
      %v1493 = vsel %vm507, %v1460, 0.0
      %1494 = vadd.xlane.f32.xlu0 %v1493
      %v1495 = vpop.xlane.xlu0 %1494
      %v1496 = vsel %vm507, %v1462, 0.0
      %1497 = vadd.xlane.f32.xlu0 %v1496
      %v1498 = vpop.xlane.xlu0 %1497
      %v1499 = vsel %vm507, %v1464, 0.0
      %1500 = vadd.xlane.f32.xlu0 %v1499
      %v1501 = vpop.xlane.xlu0 %1500
      %v1502 = vsel %vm507, %v1466, 0.0
      %1503 = vadd.xlane.f32.xlu0 %v1502
      %v1504 = vpop.xlane.xlu0 %1503
      %v1505 = vsel %vm507, %v1468, 0.0
      %1506 = vadd.xlane.f32.xlu0 %v1505
      %v1507 = vpop.xlane.xlu0 %1506
      %v1508 = vsel %vm507, %v1470, 0.0
      %1509 = vadd.xlane.f32.xlu0 %v1508
      %v1510 = vpop.xlane.xlu0 %1509
      %v1511 = vsel %vm507, %v1472, 0.0
      %1512 = vadd.xlane.f32.xlu0 %v1511
      %v1513 = vpop.xlane.xlu0 %1512
      %v1514 = vadd.f32 %v1482, %v1492
      %v1515 = vadd.f32 %v1483, %v1495
      %v1516 = vadd.f32 %v1484, %v1498
      %v1517 = vadd.f32 %v1485, %v1501
      %v1518 = vadd.f32 %v1486, %v1504
      %v1519 = vadd.f32 %v1487, %v1507
      %v1520 = vadd.f32 %v1488, %v1510
      %v1521 = vadd.f32 %v1489, %v1513
      %1522 = vst.msk [vmem:[%s1473] sm:$0xff] %vm676, %v1514
      %1523 = vst.msk [vmem:[%s1473 + $0x8] sm:$0xff] %vm676, %v1515
      %1524 = vst.msk [vmem:[%s1473 + $0x10] sm:$0xff] %vm676, %v1516
      %1525 = vst.msk [vmem:[%s1473 + $0x18] sm:$0xff] %vm676, %v1517
      %1526 = vst.msk [vmem:[%s1473 + $0x20] sm:$0xff] %vm676, %v1518
      %1527 = vst.msk [vmem:[%s1473 + $0x28] sm:$0xff] %vm676, %v1519
      %1528 = vst.msk [vmem:[%s1473 + $0x30] sm:$0xff] %vm676, %v1520
      %1529 = vst.msk [vmem:[%s1473 + $0x38] sm:$0xff] %vm676, %v1521
      %v1530 = vpack.c.bf16 %v1460, %v1458
      %v1531 = vpack.c.bf16 %v1464, %v1462
      %v1532 = vpack.c.bf16 %v1468, %v1466
      %v1533 = vpack.c.bf16 %v1472, %v1470
      %1534 = vrot.lane.b32.xlu0 %v705, 64
      %v1535 = vpop.permute.xlu0 %1534
      %1536 = vrot.lane.b32.xlu0 %v706, 64
      %v1537 = vpop.permute.xlu0 %1536
      %1538 = vrot.lane.b32.xlu0 %v707, 64
      %v1539 = vpop.permute.xlu0 %1538
      %1540 = vrot.lane.b32.xlu0 %v708, 64
      %v1541 = vpop.permute.xlu0 %1540
      %v1547 = vsel %vm507, %v1530, 0
      %v1550 = vsel %vm507, %v1531, 0
      %v1553 = vsel %vm507, %v1532, 0
      %v1556 = vsel %vm507, %v1533, 0
      %1558 = vmatpush.bf16.msra.mxu0 0
      %1559 = vmatpush.bf16.msra.mxu0 0
      %1560 = vmatpush.bf16.msra.mxu0 0
      %1561 = vmatpush.bf16.msra.mxu0 0
      %1562 = vmatpush.bf16.msra.mxu0 %v1541
      %1563 = vmatpush.bf16.msra.mxu0 %v1539
      %1564 = vmatpush.bf16.msra.mxu0 %v1537
      %1565 = vmatpush.bf16.msra.mxu0 %v1535
      %1566 = vmatmul.bf16.gmra.mxu0 %v1547
      %v1567 = vpop.f32.mrf.mxu0
      %v1568 = vadd.f32 0.0, %v1567
      %v1569 = vpop.f32.mrf.mxu0
      %v1570 = vadd.f32 0.0, %v1569
      %1571 = vmatmul.bf16.gmra.mxu0 %v1550
      %v1572 = vpop.f32.mrf.mxu0
      %v1573 = vadd.f32 0.0, %v1572
      %v1574 = vpop.f32.mrf.mxu0
      %v1575 = vadd.f32 0.0, %v1574
      %1576 = vmatmul.bf16.gmra.mxu0 %v1553
      %v1577 = vpop.f32.mrf.mxu0
      %v1578 = vadd.f32 0.0, %v1577
      %v1579 = vpop.f32.mrf.mxu0
      %v1580 = vadd.f32 0.0, %v1579
      %1581 = vmatmul.bf16.gmra.mxu0 %v1556
      %v1582 = vpop.f32.mrf.mxu0
      %v1583 = vadd.f32 0.0, %v1582
      %v1584 = vpop.f32.mrf.mxu0
      %v1585 = vadd.f32 0.0, %v1584
      %1586 = vdwg.mxu0
      %v1587 = vld [vmem:[#allocation2] sm:$0xff]
      %v1588 = vld [vmem:[#allocation2 + $0x8] sm:$0xff]
      %v1589 = vld [vmem:[#allocation2 + $0x10] sm:$0xff]
      %v1590 = vld [vmem:[#allocation2 + $0x18] sm:$0xff]
      %v1591 = vld [vmem:[#allocation2 + $0x20] sm:$0xff]
      %v1592 = vld [vmem:[#allocation2 + $0x28] sm:$0xff]
      %v1593 = vld [vmem:[#allocation2 + $0x30] sm:$0xff]
      %v1594 = vld [vmem:[#allocation2 + $0x38] sm:$0xff]
      %1596 = vset.pattern.permute.xlu0 0
      %1597 = vperm.xlu0 %1596, %v1394
      %v1598 = vpop.permute.xlu0 %1597
      %1601 = vset.pattern.permute.xlu0 0
      %1602 = vperm.xlu0 %1601, %v1396
      %v1603 = vpop.permute.xlu0 %1602
      %1606 = vset.pattern.permute.xlu0 0
      %1607 = vperm.xlu0 %1606, %v1398
      %v1608 = vpop.permute.xlu0 %1607
      %1611 = vset.pattern.permute.xlu0 0
      %1612 = vperm.xlu0 %1611, %v1400
      %v1613 = vpop.permute.xlu0 %1612
      %1616 = vset.pattern.permute.xlu0 0
      %1617 = vperm.xlu0 %1616, %v1402
      %v1618 = vpop.permute.xlu0 %1617
      %1621 = vset.pattern.permute.xlu0 0
      %1622 = vperm.xlu0 %1621, %v1404
      %v1623 = vpop.permute.xlu0 %1622
      %1626 = vset.pattern.permute.xlu0 0
      %1627 = vperm.xlu0 %1626, %v1406
      %v1628 = vpop.permute.xlu0 %1627
      %1631 = vset.pattern.permute.xlu0 0
      %1632 = vperm.xlu0 %1631, %v1408
      %v1633 = vpop.permute.xlu0 %1632
      %v1635 = vmul.f32 %v1598, %v1587
      %v1636 = vmul.f32 %v1603, %v1588
      %v1637 = vmul.f32 %v1608, %v1589
      %v1638 = vmul.f32 %v1613, %v1590
      %v1639 = vmul.f32 %v1618, %v1591
      %v1640 = vmul.f32 %v1623, %v1592
      %v1641 = vmul.f32 %v1628, %v1593
      %v1642 = vmul.f32 %v1633, %v1594
      %1651 = vrot.lane.b32.xlu0 %v1568, 64
      %v1652 = vpop.permute.xlu0 %1651
      %1653 = vrot.lane.b32.xlu0 %v1570, 64
      %v1654 = vpop.permute.xlu0 %1653
      %1655 = vrot.lane.b32.xlu0 %v1573, 64
      %v1656 = vpop.permute.xlu0 %1655
      %1657 = vrot.lane.b32.xlu0 %v1575, 64
      %v1658 = vpop.permute.xlu0 %1657
      %1659 = vrot.lane.b32.xlu0 %v1578, 64
      %v1660 = vpop.permute.xlu0 %1659
      %1661 = vrot.lane.b32.xlu0 %v1580, 64
      %v1662 = vpop.permute.xlu0 %1661
      %1663 = vrot.lane.b32.xlu0 %v1583, 64
      %v1664 = vpop.permute.xlu0 %1663
      %1665 = vrot.lane.b32.xlu0 %v1585, 64
      %v1666 = vpop.permute.xlu0 %1665
      %v1675 = vadd.f32 %v1635, %v1652
      %v1676 = vadd.f32 %v1636, %v1654
      %v1677 = vadd.f32 %v1637, %v1656
      %v1678 = vadd.f32 %v1638, %v1658
      %v1679 = vadd.f32 %v1639, %v1660
      %v1680 = vadd.f32 %v1640, %v1662
      %v1681 = vadd.f32 %v1641, %v1664
      %v1682 = vadd.f32 %v1642, %v1666
      %vm1683 = vcmask 785920
      %1684 = vst.msk [vmem:[#allocation2] sm:$0xff] %vm1683, %v1675
      %1685 = vst.msk [vmem:[#allocation2 + $0x8] sm:$0xff] %vm1683, %v1676
      %1686 = vst.msk [vmem:[#allocation2 + $0x10] sm:$0xff] %vm1683, %v1677
      %1687 = vst.msk [vmem:[#allocation2 + $0x18] sm:$0xff] %vm1683, %v1678
      %1688 = vst.msk [vmem:[#allocation2 + $0x20] sm:$0xff] %vm1683, %v1679
      %1689 = vst.msk [vmem:[#allocation2 + $0x28] sm:$0xff] %vm1683, %v1680
      %1690 = vst.msk [vmem:[#allocation2 + $0x30] sm:$0xff] %vm1683, %v1681
      %1691 = vst.msk [vmem:[#allocation2 + $0x38] sm:$0xff] %vm1683, %v1682
      %1692 = vst.msk [vmem:[%s1344] sm:$0xff] %vm676, %v1377
      %1693 = vst.msk [vmem:[%s1344 + $0x8] sm:$0xff] %vm676, %v1378
      %1694 = vst.msk [vmem:[%s1344 + $0x10] sm:$0xff] %vm676, %v1379
      %1695 = vst.msk [vmem:[%s1344 + $0x18] sm:$0xff] %vm676, %v1380
      %1696 = vst.msk [vmem:[%s1344 + $0x20] sm:$0xff] %vm676, %v1381
      %1697 = vst.msk [vmem:[%s1344 + $0x28] sm:$0xff] %vm676, %v1382
      %1698 = vst.msk [vmem:[%s1344 + $0x30] sm:$0xff] %vm676, %v1383
      %1699 = vst.msk [vmem:[%s1344 + $0x38] sm:$0xff] %vm676, %v1384
      %1700 = vrot.lane.b32.xlu0 %v413, 32
      %v1701 = vpop.permute.xlu0 %1700
      %1702 = vrot.lane.b32.xlu0 %v414, 32
      %v1703 = vpop.permute.xlu0 %1702
      %1704 = vrot.lane.b32.xlu0 %v415, 32
      %v1705 = vpop.permute.xlu0 %1704
      %1706 = vrot.lane.b32.xlu0 %v416, 32
      %v1707 = vpop.permute.xlu0 %1706
      %1708 = vrot.lane.b32.xlu0 %v433, 32
      %v1709 = vpop.permute.xlu0 %1708
      %1710 = vrot.lane.b32.xlu0 %v434, 32
      %v1711 = vpop.permute.xlu0 %1710
      %1712 = vrot.lane.b32.xlu0 %v435, 32
      %v1713 = vpop.permute.xlu0 %1712
      %1714 = vrot.lane.b32.xlu0 %v436, 32
      %v1715 = vpop.permute.xlu0 %1714
      %v1717 = vsel %vm437, %v1701, 0
      %v1720 = vsel %vm437, %v1703, 0
      %v1723 = vsel %vm437, %v1705, 0
      %v1726 = vsel %vm437, %v1707, 0
      %v1729 = vsel %vm437, %v1709, 0
      %v1732 = vsel %vm437, %v1711, 0
      %v1735 = vsel %vm437, %v1713, 0
      %v1738 = vsel %vm437, %v1715, 0
      %1740 = vmatpush.bf16.xpose.msra.mxu0 0
      %1741 = vmatpush.bf16.xpose.msra.mxu0 0
      %1742 = vmatpush.bf16.xpose.msra.mxu0 0
      %1743 = vmatpush.bf16.xpose.msra.mxu0 0
      %1744 = vmatpush.bf16.xpose.msra.mxu0 %v1738
      %1745 = vmatpush.bf16.xpose.msra.mxu0 %v1735
      %1746 = vmatpush.bf16.xpose.msra.mxu0 %v1732
      %1747 = vmatpush.bf16.xpose.msra.mxu0 %v1729
      %1748 = vmatmul.bf16.gmra.mxu0 %v1717
      %v1749 = vpop.f32.mrf.mxu0
      %v1750 = vadd.f32 0.0, %v1749
      %v1751 = vpop.f32.mrf.mxu0
      %v1752 = vadd.f32 0.0, %v1751
      %1753 = vmatmul.bf16.gmra.mxu0 %v1720
      %v1754 = vpop.f32.mrf.mxu0
      %v1755 = vadd.f32 0.0, %v1754
      %v1756 = vpop.f32.mrf.mxu0
      %v1757 = vadd.f32 0.0, %v1756
      %1758 = vmatmul.bf16.gmra.mxu0 %v1723
      %v1759 = vpop.f32.mrf.mxu0
      %v1760 = vadd.f32 0.0, %v1759
      %v1761 = vpop.f32.mrf.mxu0
      %v1762 = vadd.f32 0.0, %v1761
      %1763 = vmatmul.bf16.gmra.mxu0 %v1726
      %v1764 = vpop.f32.mrf.mxu0
      %v1765 = vadd.f32 0.0, %v1764
      %v1766 = vpop.f32.mrf.mxu0
      %v1767 = vadd.f32 0.0, %v1766
      %1768 = vdwg.mxu0
      %v1769 = vmul.f32 %v1750, 0.17677669
      %v1770 = vmul.f32 %v1752, 0.17677669
      %v1771 = vmul.f32 %v1755, 0.17677669
      %v1772 = vmul.f32 %v1757, 0.17677669
      %v1773 = vmul.f32 %v1760, 0.17677669
      %v1774 = vmul.f32 %v1762, 0.17677669
      %v1775 = vmul.f32 %v1765, 0.17677669
      %v1776 = vmul.f32 %v1767, 0.17677669
      %s1777 = scalar_lea.vmem [#allocation3], 192
      %v1778 = vld [vmem:[%s1777] sm:$0xff]
      %v1779 = vld [vmem:[%s1777 + $0x8] sm:$0xff]
      %v1780 = vld [vmem:[%s1777 + $0x10] sm:$0xff]
      %v1781 = vld [vmem:[%s1777 + $0x18] sm:$0xff]
      %v1782 = vld [vmem:[%s1777 + $0x20] sm:$0xff]
      %v1783 = vld [vmem:[%s1777 + $0x28] sm:$0xff]
      %v1784 = vld [vmem:[%s1777 + $0x30] sm:$0xff]
      %v1785 = vld [vmem:[%s1777 + $0x38] sm:$0xff]
      %v1786 = vsel %vm507, %v1769, -inf
      %1787 = vmax.xlane.f32.xlu0 %v1786
      %v1788 = vpop.xlane.xlu0 %1787
      %v1789 = vsel %vm507, %v1770, -inf
      %1790 = vmax.xlane.f32.xlu0 %v1789
      %v1791 = vpop.xlane.xlu0 %1790
      %v1792 = vsel %vm507, %v1771, -inf
      %1793 = vmax.xlane.f32.xlu0 %v1792
      %v1794 = vpop.xlane.xlu0 %1793
      %v1795 = vsel %vm507, %v1772, -inf
      %1796 = vmax.xlane.f32.xlu0 %v1795
      %v1797 = vpop.xlane.xlu0 %1796
      %v1798 = vsel %vm507, %v1773, -inf
      %1799 = vmax.xlane.f32.xlu0 %v1798
      %v1800 = vpop.xlane.xlu0 %1799
      %v1801 = vsel %vm507, %v1774, -inf
      %1802 = vmax.xlane.f32.xlu0 %v1801
      %v1803 = vpop.xlane.xlu0 %1802
      %v1804 = vsel %vm507, %v1775, -inf
      %1805 = vmax.xlane.f32.xlu0 %v1804
      %v1806 = vpop.xlane.xlu0 %1805
      %v1807 = vsel %vm507, %v1776, -inf
      %1808 = vmax.xlane.f32.xlu0 %v1807
      %v1809 = vpop.xlane.xlu0 %1808
      %v1810 = vmax.f32 %v1778, %v1788
      %v1811 = vmax.f32 %v1779, %v1791
      %v1812 = vmax.f32 %v1780, %v1794
      %v1813 = vmax.f32 %v1781, %v1797
      %v1814 = vmax.f32 %v1782, %v1800
      %v1815 = vmax.f32 %v1783, %v1803
      %v1816 = vmax.f32 %v1784, %v1806
      %v1817 = vmax.f32 %v1785, %v1809
      %v1818 = vsub.f32 %v1778, %v1810
      %v1819 = vsub.f32 %v1779, %v1811
      %v1820 = vsub.f32 %v1780, %v1812
      %v1821 = vsub.f32 %v1781, %v1813
      %v1822 = vsub.f32 %v1782, %v1814
      %v1823 = vsub.f32 %v1783, %v1815
      %v1824 = vsub.f32 %v1784, %v1816
      %v1825 = vsub.f32 %v1785, %v1817
      %v1826 = vmul.f32 %v1818, 1.442695
      %v1827 = vpow.pop %v1826
      %v1828 = vmul.f32 %v1819, 1.442695
      %v1829 = vpow.pop %v1828
      %v1830 = vmul.f32 %v1820, 1.442695
      %v1831 = vpow.pop %v1830
      %v1832 = vmul.f32 %v1821, 1.442695
      %v1833 = vpow.pop %v1832
      %v1834 = vmul.f32 %v1822, 1.442695
      %v1835 = vpow.pop %v1834
      %v1836 = vmul.f32 %v1823, 1.442695
      %v1837 = vpow.pop %v1836
      %v1838 = vmul.f32 %v1824, 1.442695
      %v1839 = vpow.pop %v1838
      %v1840 = vmul.f32 %v1825, 1.442695
      %v1841 = vpow.pop %v1840
      %1843 = vset.pattern.permute.xlu0 0
      %1844 = vperm.xlu0 %1843, %v1810
      %v1845 = vpop.permute.xlu0 %1844
      %1848 = vset.pattern.permute.xlu0 0
      %1849 = vperm.xlu0 %1848, %v1811
      %v1850 = vpop.permute.xlu0 %1849
      %1853 = vset.pattern.permute.xlu0 0
      %1854 = vperm.xlu0 %1853, %v1812
      %v1855 = vpop.permute.xlu0 %1854
      %1858 = vset.pattern.permute.xlu0 0
      %1859 = vperm.xlu0 %1858, %v1813
      %v1860 = vpop.permute.xlu0 %1859
      %1863 = vset.pattern.permute.xlu0 0
      %1864 = vperm.xlu0 %1863, %v1814
      %v1865 = vpop.permute.xlu0 %1864
      %1868 = vset.pattern.permute.xlu0 0
      %1869 = vperm.xlu0 %1868, %v1815
      %v1870 = vpop.permute.xlu0 %1869
      %1873 = vset.pattern.permute.xlu0 0
      %1874 = vperm.xlu0 %1873, %v1816
      %v1875 = vpop.permute.xlu0 %1874
      %1878 = vset.pattern.permute.xlu0 0
      %1879 = vperm.xlu0 %1878, %v1817
      %v1880 = vpop.permute.xlu0 %1879
      %v1882 = vsub.f32 %v1769, %v1845
      %v1883 = vsub.f32 %v1770, %v1850
      %v1884 = vsub.f32 %v1771, %v1855
      %v1885 = vsub.f32 %v1772, %v1860
      %v1886 = vsub.f32 %v1773, %v1865
      %v1887 = vsub.f32 %v1774, %v1870
      %v1888 = vsub.f32 %v1775, %v1875
      %v1889 = vsub.f32 %v1776, %v1880
      %v1890 = vmul.f32 %v1882, 1.442695
      %v1891 = vpow.pop %v1890
      %v1892 = vmul.f32 %v1883, 1.442695
      %v1893 = vpow.pop %v1892
      %v1894 = vmul.f32 %v1884, 1.442695
      %v1895 = vpow.pop %v1894
      %v1896 = vmul.f32 %v1885, 1.442695
      %v1897 = vpow.pop %v1896
      %v1898 = vmul.f32 %v1886, 1.442695
      %v1899 = vpow.pop %v1898
      %v1900 = vmul.f32 %v1887, 1.442695
      %v1901 = vpow.pop %v1900
      %v1902 = vmul.f32 %v1888, 1.442695
      %v1903 = vpow.pop %v1902
      %v1904 = vmul.f32 %v1889, 1.442695
      %v1905 = vpow.pop %v1904
      %s1906 = scalar_lea.vmem [#allocation4], 192
      %v1907 = vld [vmem:[%s1906] sm:$0xff]
      %v1908 = vld [vmem:[%s1906 + $0x8] sm:$0xff]
      %v1909 = vld [vmem:[%s1906 + $0x10] sm:$0xff]
      %v1910 = vld [vmem:[%s1906 + $0x18] sm:$0xff]
      %v1911 = vld [vmem:[%s1906 + $0x20] sm:$0xff]
      %v1912 = vld [vmem:[%s1906 + $0x28] sm:$0xff]
      %v1913 = vld [vmem:[%s1906 + $0x30] sm:$0xff]
      %v1914 = vld [vmem:[%s1906 + $0x38] sm:$0xff]
      %v1915 = vmul.f32 %v1827, %v1907
      %v1916 = vmul.f32 %v1829, %v1908
      %v1917 = vmul.f32 %v1831, %v1909
      %v1918 = vmul.f32 %v1833, %v1910
      %v1919 = vmul.f32 %v1835, %v1911
      %v1920 = vmul.f32 %v1837, %v1912
      %v1921 = vmul.f32 %v1839, %v1913
      %v1922 = vmul.f32 %v1841, %v1914
      %v1923 = vsel %vm507, %v1891, 0.0
      %1924 = vadd.xlane.f32.xlu0 %v1923
      %v1925 = vpop.xlane.xlu0 %1924
      %v1926 = vsel %vm507, %v1893, 0.0
      %1927 = vadd.xlane.f32.xlu0 %v1926
      %v1928 = vpop.xlane.xlu0 %1927
      %v1929 = vsel %vm507, %v1895, 0.0
      %1930 = vadd.xlane.f32.xlu0 %v1929
      %v1931 = vpop.xlane.xlu0 %1930
      %v1932 = vsel %vm507, %v1897, 0.0
      %1933 = vadd.xlane.f32.xlu0 %v1932
      %v1934 = vpop.xlane.xlu0 %1933
      %v1935 = vsel %vm507, %v1899, 0.0
      %1936 = vadd.xlane.f32.xlu0 %v1935
      %v1937 = vpop.xlane.xlu0 %1936
      %v1938 = vsel %vm507, %v1901, 0.0
      %1939 = vadd.xlane.f32.xlu0 %v1938
      %v1940 = vpop.xlane.xlu0 %1939
      %v1941 = vsel %vm507, %v1903, 0.0
      %1942 = vadd.xlane.f32.xlu0 %v1941
      %v1943 = vpop.xlane.xlu0 %1942
      %v1944 = vsel %vm507, %v1905, 0.0
      %1945 = vadd.xlane.f32.xlu0 %v1944
      %v1946 = vpop.xlane.xlu0 %1945
      %v1947 = vadd.f32 %v1915, %v1925
      %v1948 = vadd.f32 %v1916, %v1928
      %v1949 = vadd.f32 %v1917, %v1931
      %v1950 = vadd.f32 %v1918, %v1934
      %v1951 = vadd.f32 %v1919, %v1937
      %v1952 = vadd.f32 %v1920, %v1940
      %v1953 = vadd.f32 %v1921, %v1943
      %v1954 = vadd.f32 %v1922, %v1946
      %1955 = vst.msk [vmem:[%s1906] sm:$0xff] %vm676, %v1947
      %1956 = vst.msk [vmem:[%s1906 + $0x8] sm:$0xff] %vm676, %v1948
      %1957 = vst.msk [vmem:[%s1906 + $0x10] sm:$0xff] %vm676, %v1949
      %1958 = vst.msk [vmem:[%s1906 + $0x18] sm:$0xff] %vm676, %v1950
      %1959 = vst.msk [vmem:[%s1906 + $0x20] sm:$0xff] %vm676, %v1951
      %1960 = vst.msk [vmem:[%s1906 + $0x28] sm:$0xff] %vm676, %v1952
      %1961 = vst.msk [vmem:[%s1906 + $0x30] sm:$0xff] %vm676, %v1953
      %1962 = vst.msk [vmem:[%s1906 + $0x38] sm:$0xff] %vm676, %v1954
      %v1963 = vpack.c.bf16 %v1893, %v1891
      %v1964 = vpack.c.bf16 %v1897, %v1895
      %v1965 = vpack.c.bf16 %v1901, %v1899
      %v1966 = vpack.c.bf16 %v1905, %v1903
      %1967 = vrot.lane.b32.xlu0 %v705, 32
      %v1968 = vpop.permute.xlu0 %1967
      %1969 = vrot.lane.b32.xlu0 %v706, 32
      %v1970 = vpop.permute.xlu0 %1969
      %1971 = vrot.lane.b32.xlu0 %v707, 32
      %v1972 = vpop.permute.xlu0 %1971
      %1973 = vrot.lane.b32.xlu0 %v708, 32
      %v1974 = vpop.permute.xlu0 %1973
      %v1980 = vsel %vm507, %v1963, 0
      %v1983 = vsel %vm507, %v1964, 0
      %v1986 = vsel %vm507, %v1965, 0
      %v1989 = vsel %vm507, %v1966, 0
      %1991 = vmatpush.bf16.msra.mxu0 0
      %1992 = vmatpush.bf16.msra.mxu0 0
      %1993 = vmatpush.bf16.msra.mxu0 0
      %1994 = vmatpush.bf16.msra.mxu0 0
      %1995 = vmatpush.bf16.msra.mxu0 %v1974
      %1996 = vmatpush.bf16.msra.mxu0 %v1972
      %1997 = vmatpush.bf16.msra.mxu0 %v1970
      %1998 = vmatpush.bf16.msra.mxu0 %v1968
      %1999 = vmatmul.bf16.gmra.mxu0 %v1980
      %v2000 = vpop.f32.mrf.mxu0
      %v2001 = vadd.f32 0.0, %v2000
      %v2002 = vpop.f32.mrf.mxu0
      %v2003 = vadd.f32 0.0, %v2002
      %2004 = vmatmul.bf16.gmra.mxu0 %v1983
      %v2005 = vpop.f32.mrf.mxu0
      %v2006 = vadd.f32 0.0, %v2005
      %v2007 = vpop.f32.mrf.mxu0
      %v2008 = vadd.f32 0.0, %v2007
      %2009 = vmatmul.bf16.gmra.mxu0 %v1986
      %v2010 = vpop.f32.mrf.mxu0
      %v2011 = vadd.f32 0.0, %v2010
      %v2012 = vpop.f32.mrf.mxu0
      %v2013 = vadd.f32 0.0, %v2012
      %2014 = vmatmul.bf16.gmra.mxu0 %v1989
      %v2015 = vpop.f32.mrf.mxu0
      %v2016 = vadd.f32 0.0, %v2015
      %v2017 = vpop.f32.mrf.mxu0
      %v2018 = vadd.f32 0.0, %v2017
      %2019 = vdwg.mxu0
      %v2020 = vld [vmem:[#allocation2] sm:$0xff]
      %v2021 = vld [vmem:[#allocation2 + $0x8] sm:$0xff]
      %v2022 = vld [vmem:[#allocation2 + $0x10] sm:$0xff]
      %v2023 = vld [vmem:[#allocation2 + $0x18] sm:$0xff]
      %v2024 = vld [vmem:[#allocation2 + $0x20] sm:$0xff]
      %v2025 = vld [vmem:[#allocation2 + $0x28] sm:$0xff]
      %v2026 = vld [vmem:[#allocation2 + $0x30] sm:$0xff]
      %v2027 = vld [vmem:[#allocation2 + $0x38] sm:$0xff]
      %2029 = vset.pattern.permute.xlu0 0
      %2030 = vperm.xlu0 %2029, %v1827
      %v2031 = vpop.permute.xlu0 %2030
      %2034 = vset.pattern.permute.xlu0 0
      %2035 = vperm.xlu0 %2034, %v1829
      %v2036 = vpop.permute.xlu0 %2035
      %2039 = vset.pattern.permute.xlu0 0
      %2040 = vperm.xlu0 %2039, %v1831
      %v2041 = vpop.permute.xlu0 %2040
      %2044 = vset.pattern.permute.xlu0 0
      %2045 = vperm.xlu0 %2044, %v1833
      %v2046 = vpop.permute.xlu0 %2045
      %2049 = vset.pattern.permute.xlu0 0
      %2050 = vperm.xlu0 %2049, %v1835
      %v2051 = vpop.permute.xlu0 %2050
      %2054 = vset.pattern.permute.xlu0 0
      %2055 = vperm.xlu0 %2054, %v1837
      %v2056 = vpop.permute.xlu0 %2055
      %2059 = vset.pattern.permute.xlu0 0
      %2060 = vperm.xlu0 %2059, %v1839
      %v2061 = vpop.permute.xlu0 %2060
      %2064 = vset.pattern.permute.xlu0 0
      %2065 = vperm.xlu0 %2064, %v1841
      %v2066 = vpop.permute.xlu0 %2065
      %v2068 = vmul.f32 %v2031, %v2020
      %v2069 = vmul.f32 %v2036, %v2021
      %v2070 = vmul.f32 %v2041, %v2022
      %v2071 = vmul.f32 %v2046, %v2023
      %v2072 = vmul.f32 %v2051, %v2024
      %v2073 = vmul.f32 %v2056, %v2025
      %v2074 = vmul.f32 %v2061, %v2026
      %v2075 = vmul.f32 %v2066, %v2027
      %2084 = vrot.lane.b32.xlu0 %v2001, 96
      %v2085 = vpop.permute.xlu0 %2084
      %2086 = vrot.lane.b32.xlu0 %v2003, 96
      %v2087 = vpop.permute.xlu0 %2086
      %2088 = vrot.lane.b32.xlu0 %v2006, 96
      %v2089 = vpop.permute.xlu0 %2088
      %2090 = vrot.lane.b32.xlu0 %v2008, 96
      %v2091 = vpop.permute.xlu0 %2090
      %2092 = vrot.lane.b32.xlu0 %v2011, 96
      %v2093 = vpop.permute.xlu0 %2092
      %2094 = vrot.lane.b32.xlu0 %v2013, 96
      %v2095 = vpop.permute.xlu0 %2094
      %2096 = vrot.lane.b32.xlu0 %v2016, 96
      %v2097 = vpop.permute.xlu0 %2096
      %2098 = vrot.lane.b32.xlu0 %v2018, 96
      %v2099 = vpop.permute.xlu0 %2098
      %v2108 = vadd.f32 %v2068, %v2085
      %v2109 = vadd.f32 %v2069, %v2087
      %v2110 = vadd.f32 %v2070, %v2089
      %v2111 = vadd.f32 %v2071, %v2091
      %v2112 = vadd.f32 %v2072, %v2093
      %v2113 = vadd.f32 %v2073, %v2095
      %v2114 = vadd.f32 %v2074, %v2097
      %v2115 = vadd.f32 %v2075, %v2099
      %vm2116 = vcmask 1048320
      %2117 = vst.msk [vmem:[#allocation2] sm:$0xff] %vm2116, %v2108
      %2118 = vst.msk [vmem:[#allocation2 + $0x8] sm:$0xff] %vm2116, %v2109
      %2119 = vst.msk [vmem:[#allocation2 + $0x10] sm:$0xff] %vm2116, %v2110
      %2120 = vst.msk [vmem:[#allocation2 + $0x18] sm:$0xff] %vm2116, %v2111
      %2121 = vst.msk [vmem:[#allocation2 + $0x20] sm:$0xff] %vm2116, %v2112
      %2122 = vst.msk [vmem:[#allocation2 + $0x28] sm:$0xff] %vm2116, %v2113
      %2123 = vst.msk [vmem:[#allocation2 + $0x30] sm:$0xff] %vm2116, %v2114
      %2124 = vst.msk [vmem:[#allocation2 + $0x38] sm:$0xff] %vm2116, %v2115
      %2125 = vst.msk [vmem:[%s1777] sm:$0xff] %vm676, %v1810
      %2126 = vst.msk [vmem:[%s1777 + $0x8] sm:$0xff] %vm676, %v1811
      %2127 = vst.msk [vmem:[%s1777 + $0x10] sm:$0xff] %vm676, %v1812
      %2128 = vst.msk [vmem:[%s1777 + $0x18] sm:$0xff] %vm676, %v1813
      %2129 = vst.msk [vmem:[%s1777 + $0x20] sm:$0xff] %vm676, %v1814
      %2130 = vst.msk [vmem:[%s1777 + $0x28] sm:$0xff] %vm676, %v1815
      %2131 = vst.msk [vmem:[%s1777 + $0x30] sm:$0xff] %vm676, %v1816
      %2132 = vst.msk [vmem:[%s1777 + $0x38] sm:$0xff] %vm676, %v1817
      // Predicated region
      $region37: #{detector_forward.19} parent=31 // pred_check
        %p2133 = pneg %p296
      $region38: #{detector_forward.19} parent=31 // pred_check_branch
        %2135 = sbr.rel (%p2133) target = $region40
      $region39: #{detector_forward.19} parent=31 // pred_region
        %v2136 = vld [vmem:[#allocation4] sm:$0xff]
        %v2137 = vld [vmem:[#allocation4 + $0x8] sm:$0xff]
        %v2138 = vld [vmem:[#allocation4 + $0x10] sm:$0xff]
        %v2139 = vld [vmem:[#allocation4 + $0x18] sm:$0xff]
        %v2140 = vld [vmem:[#allocation4 + $0x20] sm:$0xff]
        %v2141 = vld [vmem:[#allocation4 + $0x28] sm:$0xff]
        %v2142 = vld [vmem:[#allocation4 + $0x30] sm:$0xff]
        %v2143 = vld [vmem:[#allocation4 + $0x38] sm:$0xff]
        %v2144 = vrcp.pop %v2136
        %v2145 = vrcp.pop %v2137
        %v2146 = vrcp.pop %v2138
        %v2147 = vrcp.pop %v2139
        %v2148 = vrcp.pop %v2140
        %v2149 = vrcp.pop %v2141
        %v2150 = vrcp.pop %v2142
        %v2151 = vrcp.pop %v2143
        %2153 = vset.pattern.permute.xlu0 0
        %2154 = vperm.xlu0 %2153, %v2144
        %v2155 = vpop.permute.xlu0 %2154
        %2158 = vset.pattern.permute.xlu0 0
        %2159 = vperm.xlu0 %2158, %v2145
        %v2160 = vpop.permute.xlu0 %2159
        %2163 = vset.pattern.permute.xlu0 0
        %2164 = vperm.xlu0 %2163, %v2146
        %v2165 = vpop.permute.xlu0 %2164
        %2168 = vset.pattern.permute.xlu0 0
        %2169 = vperm.xlu0 %2168, %v2147
        %v2170 = vpop.permute.xlu0 %2169
        %2173 = vset.pattern.permute.xlu0 0
        %2174 = vperm.xlu0 %2173, %v2148
        %v2175 = vpop.permute.xlu0 %2174
        %2178 = vset.pattern.permute.xlu0 0
        %2179 = vperm.xlu0 %2178, %v2149
        %v2180 = vpop.permute.xlu0 %2179
        %2183 = vset.pattern.permute.xlu0 0
        %2184 = vperm.xlu0 %2183, %v2150
        %v2185 = vpop.permute.xlu0 %2184
        %2188 = vset.pattern.permute.xlu0 0
        %2189 = vperm.xlu0 %2188, %v2151
        %v2190 = vpop.permute.xlu0 %2189
        %v2192 = vld [vmem:[%s1040] sm:$0xff]
        %v2193 = vld [vmem:[%s1040 + $0x8] sm:$0xff]
        %v2194 = vld [vmem:[%s1040 + $0x10] sm:$0xff]
        %v2195 = vld [vmem:[%s1040 + $0x18] sm:$0xff]
        %v2196 = vld [vmem:[%s1040 + $0x20] sm:$0xff]
        %v2197 = vld [vmem:[%s1040 + $0x28] sm:$0xff]
        %v2198 = vld [vmem:[%s1040 + $0x30] sm:$0xff]
        %v2199 = vld [vmem:[%s1040 + $0x38] sm:$0xff]
        %v2200 = vrcp.pop %v2192
        %v2201 = vrcp.pop %v2193
        %v2202 = vrcp.pop %v2194
        %v2203 = vrcp.pop %v2195
        %v2204 = vrcp.pop %v2196
        %v2205 = vrcp.pop %v2197
        %v2206 = vrcp.pop %v2198
        %v2207 = vrcp.pop %v2199
        %2209 = vset.pattern.permute.xlu0 0
        %2210 = vperm.xlu0 %2209, %v2200
        %v2211 = vpop.permute.xlu0 %2210
        %2214 = vset.pattern.permute.xlu0 0
        %2215 = vperm.xlu0 %2214, %v2201
        %v2216 = vpop.permute.xlu0 %2215
        %2219 = vset.pattern.permute.xlu0 0
        %2220 = vperm.xlu0 %2219, %v2202
        %v2221 = vpop.permute.xlu0 %2220
        %2224 = vset.pattern.permute.xlu0 0
        %2225 = vperm.xlu0 %2224, %v2203
        %v2226 = vpop.permute.xlu0 %2225
        %2229 = vset.pattern.permute.xlu0 0
        %2230 = vperm.xlu0 %2229, %v2204
        %v2231 = vpop.permute.xlu0 %2230
        %2234 = vset.pattern.permute.xlu0 0
        %2235 = vperm.xlu0 %2234, %v2205
        %v2236 = vpop.permute.xlu0 %2235
        %2239 = vset.pattern.permute.xlu0 0
        %2240 = vperm.xlu0 %2239, %v2206
        %v2241 = vpop.permute.xlu0 %2240
        %2244 = vset.pattern.permute.xlu0 0
        %2245 = vperm.xlu0 %2244, %v2207
        %v2246 = vpop.permute.xlu0 %2245
        %v2248 = vld [vmem:[%s1473] sm:$0xff]
        %v2249 = vld [vmem:[%s1473 + $0x8] sm:$0xff]
        %v2250 = vld [vmem:[%s1473 + $0x10] sm:$0xff]
        %v2251 = vld [vmem:[%s1473 + $0x18] sm:$0xff]
        %v2252 = vld [vmem:[%s1473 + $0x20] sm:$0xff]
        %v2253 = vld [vmem:[%s1473 + $0x28] sm:$0xff]
        %v2254 = vld [vmem:[%s1473 + $0x30] sm:$0xff]
        %v2255 = vld [vmem:[%s1473 + $0x38] sm:$0xff]
        %v2256 = vrcp.pop %v2248
        %v2257 = vrcp.pop %v2249
        %v2258 = vrcp.pop %v2250
        %v2259 = vrcp.pop %v2251
        %v2260 = vrcp.pop %v2252
        %v2261 = vrcp.pop %v2253
        %v2262 = vrcp.pop %v2254
        %v2263 = vrcp.pop %v2255
        %2265 = vset.pattern.permute.xlu0 0
        %2266 = vperm.xlu0 %2265, %v2256
        %v2267 = vpop.permute.xlu0 %2266
        %2270 = vset.pattern.permute.xlu0 0
        %2271 = vperm.xlu0 %2270, %v2257
        %v2272 = vpop.permute.xlu0 %2271
        %2275 = vset.pattern.permute.xlu0 0
        %2276 = vperm.xlu0 %2275, %v2258
        %v2277 = vpop.permute.xlu0 %2276
        %2280 = vset.pattern.permute.xlu0 0
        %2281 = vperm.xlu0 %2280, %v2259
        %v2282 = vpop.permute.xlu0 %2281
        %2285 = vset.pattern.permute.xlu0 0
        %2286 = vperm.xlu0 %2285, %v2260
        %v2287 = vpop.permute.xlu0 %2286
        %2290 = vset.pattern.permute.xlu0 0
        %2291 = vperm.xlu0 %2290, %v2261
        %v2292 = vpop.permute.xlu0 %2291
        %2295 = vset.pattern.permute.xlu0 0
        %2296 = vperm.xlu0 %2295, %v2262
        %v2297 = vpop.permute.xlu0 %2296
        %2300 = vset.pattern.permute.xlu0 0
        %2301 = vperm.xlu0 %2300, %v2263
        %v2302 = vpop.permute.xlu0 %2301
        %v2304 = vld [vmem:[%s1906] sm:$0xff]
        %v2305 = vld [vmem:[%s1906 + $0x8] sm:$0xff]
        %v2306 = vld [vmem:[%s1906 + $0x10] sm:$0xff]
        %v2307 = vld [vmem:[%s1906 + $0x18] sm:$0xff]
        %v2308 = vld [vmem:[%s1906 + $0x20] sm:$0xff]
        %v2309 = vld [vmem:[%s1906 + $0x28] sm:$0xff]
        %v2310 = vld [vmem:[%s1906 + $0x30] sm:$0xff]
        %v2311 = vld [vmem:[%s1906 + $0x38] sm:$0xff]
        %v2312 = vrcp.pop %v2304
        %v2313 = vrcp.pop %v2305
        %v2314 = vrcp.pop %v2306
        %v2315 = vrcp.pop %v2307
        %v2316 = vrcp.pop %v2308
        %v2317 = vrcp.pop %v2309
        %v2318 = vrcp.pop %v2310
        %v2319 = vrcp.pop %v2311
        %2321 = vset.pattern.permute.xlu0 0
        %2322 = vperm.xlu0 %2321, %v2312
        %v2323 = vpop.permute.xlu0 %2322
        %2326 = vset.pattern.permute.xlu0 0
        %2327 = vperm.xlu0 %2326, %v2313
        %v2328 = vpop.permute.xlu0 %2327
        %2331 = vset.pattern.permute.xlu0 0
        %2332 = vperm.xlu0 %2331, %v2314
        %v2333 = vpop.permute.xlu0 %2332
        %2336 = vset.pattern.permute.xlu0 0
        %2337 = vperm.xlu0 %2336, %v2315
        %v2338 = vpop.permute.xlu0 %2337
        %2341 = vset.pattern.permute.xlu0 0
        %2342 = vperm.xlu0 %2341, %v2316
        %v2343 = vpop.permute.xlu0 %2342
        %2346 = vset.pattern.permute.xlu0 0
        %2347 = vperm.xlu0 %2346, %v2317
        %v2348 = vpop.permute.xlu0 %2347
        %2351 = vset.pattern.permute.xlu0 0
        %2352 = vperm.xlu0 %2351, %v2318
        %v2353 = vpop.permute.xlu0 %2352
        %2356 = vset.pattern.permute.xlu0 0
        %2357 = vperm.xlu0 %2356, %v2319
        %v2358 = vpop.permute.xlu0 %2357
        %v2360 = vsel %vm437, %v2155, %v2211
        %v2361 = vsel %vm437, %v2160, %v2216
        %v2362 = vsel %vm437, %v2165, %v2221
        %v2363 = vsel %vm437, %v2170, %v2226
        %v2364 = vsel %vm437, %v2175, %v2231
        %v2365 = vsel %vm437, %v2180, %v2236
        %v2366 = vsel %vm437, %v2185, %v2241
        %v2367 = vsel %vm437, %v2190, %v2246
        %v2368 = vsel %vm507, %v2360, %v2267
        %v2369 = vsel %vm507, %v2361, %v2272
        %v2370 = vsel %vm507, %v2362, %v2277
        %v2371 = vsel %vm507, %v2363, %v2282
        %v2372 = vsel %vm507, %v2364, %v2287
        %v2373 = vsel %vm507, %v2365, %v2292
        %v2374 = vsel %vm507, %v2366, %v2297
        %v2375 = vsel %vm507, %v2367, %v2302
        %vm2376 = vcmask 785408
        %v2377 = vsel %vm2376, %v2368, %v2323
        %v2378 = vsel %vm2376, %v2369, %v2328
        %v2379 = vsel %vm2376, %v2370, %v2333
        %v2380 = vsel %vm2376, %v2371, %v2338
        %v2381 = vsel %vm2376, %v2372, %v2343
        %v2382 = vsel %vm2376, %v2373, %v2348
        %v2383 = vsel %vm2376, %v2374, %v2353
        %v2384 = vsel %vm2376, %v2375, %v2358
        %v2385 = vld [vmem:[#allocation2] sm:$0xff]
        %v2386 = vld [vmem:[#allocation2 + $0x8] sm:$0xff]
        %v2387 = vld [vmem:[#allocation2 + $0x10] sm:$0xff]
        %v2388 = vld [vmem:[#allocation2 + $0x18] sm:$0xff]
        %v2389 = vld [vmem:[#allocation2 + $0x20] sm:$0xff]
        %v2390 = vld [vmem:[#allocation2 + $0x28] sm:$0xff]
        %v2391 = vld [vmem:[#allocation2 + $0x30] sm:$0xff]
        %v2392 = vld [vmem:[#allocation2 + $0x38] sm:$0xff]
        %v2393 = vmul.f32 %v2385, %v2377
        %v2394 = vmul.f32 %v2386, %v2378
        %v2395 = vmul.f32 %v2387, %v2379
        %v2396 = vmul.f32 %v2388, %v2380
        %v2397 = vmul.f32 %v2389, %v2381
        %v2398 = vmul.f32 %v2390, %v2382
        %v2399 = vmul.f32 %v2391, %v2383
        %v2400 = vmul.f32 %v2392, %v2384
        %v2401 = vpack.c.bf16 %v2393, %v2393
        %v2402 = vpack.c.bf16 %v2394, %v2394
        %v2403 = vpack.c.bf16 %v2395, %v2395
        %v2404 = vpack.c.bf16 %v2396, %v2396
        %v2405 = vpack.c.bf16 %v2397, %v2397
        %v2406 = vpack.c.bf16 %v2398, %v2398
        %v2407 = vpack.c.bf16 %v2399, %v2399
        %v2408 = vpack.c.bf16 %v2400, %v2400
        %2409 = vst [vmem:[%s293] sm:$0xf] %v2401
        %2410 = vst [vmem:[%s293 + $0x4] sm:$0xf] %v2402
        %2411 = vst [vmem:[%s293 + $0x8] sm:$0xf] %v2403
        %2412 = vst [vmem:[%s293 + $0xc] sm:$0xf] %v2404
        %2413 = vst [vmem:[%s293 + $0x10] sm:$0xf] %v2405
        %2414 = vst [vmem:[%s293 + $0x14] sm:$0xf] %v2406
        %2415 = vst [vmem:[%s293 + $0x18] sm:$0xf] %v2407
        %2416 = vst [vmem:[%s293 + $0x1c] sm:$0xf] %v2408
      $region40: #{detector_forward.19} parent=31 // pred_fallthru
        _
      %s2417 = smul.u32 8, %s20
      %p2418 = scmp.lt.s32.totalorder %s19, 1
      %s2419 = scalar_select %p2418, %s19, 1
      %p2420 = scmp.lt.s32.totalorder %s2417, 7
      %s2421 = scalar_select %p2420, %s2417, 7
      %s2422 = smul.addr %s2419, 8
      %s2423 = sadd.s32 %s2421, %s2422
      %s2424 = smul.addr %s2423, 4
      %s2425 = scalar_lea.vmem %s3, %s2424
      // Predicated region
      $region41: #{detector_forward.19} parent=31 // pred_check
        %p2426 = pneg %p137
      $region42: #{detector_forward.19} parent=31 // pred_check_branch
        %2428 = sbr.rel (%p2426) target = $region44
      $region43: #{detector_forward.19} parent=31 // pred_region
        %s2429 = smul.u32 8, %s20
      $region44: #{detector_forward.19} parent=31 // pred_fallthru
        _
    $region32: #{detector_forward.19} parent=5 // pred_fallthru
      _
    %p2430 = scmp.le.s32.totalorder 2, %s9
    // Predicated region
    $region45: #{detector_forward.19} parent=5 // pred_check
      %p2431 = pneg %p2430
    $region46: #{detector_forward.19} parent=5 // pred_check_branch
      %2433 = sbr.rel (%p2431) target = $region48
    $region47: #{detector_forward.19} parent=5 // pred_region
      %s2434 = ssub.s32 %s9, 2
      // Predicated region
      $region49: #{detector_forward.19} parent=47 // pred_check
        %p2435 = pneg %p143
      $region50: #{detector_forward.19} parent=47 // pred_check_branch
        %2437 = sbr.rel (%p2435) target = $region52
      $region51: #{detector_forward.19} parent=47 // pred_region
        %s2438 = smul.u32 8, %s23
        %p2439 = scmp.lt.s32.totalorder %s22, 1
        %s2440 = scalar_select %p2439, %s22, 1
        %p2441 = scmp.lt.s32.totalorder %s2438, 7
        %s2442 = scalar_select %p2441, %s2438, 7
        %s2443 = smul.addr %s2440, 8
        %s2444 = sadd.s32 %s2442, %s2443
        %s2445 = smul.addr %s2444, 4
        %s2446 = scalar_lea.vmem %s3, %s2445
      $region52: #{detector_forward.19} parent=47 // pred_fallthru
        _
    $region48: #{detector_forward.19} parent=5 // pred_fallthru
      _
  $region6: #{detector_forward.19} parent=0 // loop_footer
    %s13 = sadd.s32 1, %s9
  $region7: #{detector_forward.19} parent=0 // loop_footer_branch
    %8 = sbr.rel target = $region3
  $region8: #{detector_forward.19} parent=0 // loop_exit
    _

// kernel: detector_forward.33
$region0: #{detector_forward.33}
  #allocation0 [shape = 'u32[]', space=smem, size = 0x4, offset = 0x4, fixed_abs, tag = 'smem constant byte address 0x4 - core index']
  #allocation1 [shape = 'u32[72,128]{1,0:T(1,128)}', space=vmem, size = 0x9000, scoped, tag = 'internal scratch']
  %s0 = inlined_call_operand.vmem [shape: f32[128,128], index: 0, kind: input, shape index: {}]
  %s1 = inlined_call_operand.vmem [shape: f32[1,128], index: 1, kind: input, shape index: {}]
  %s2 = inlined_call_operand.vmem [shape: f32[1,128], index: 2, kind: input, shape index: {}]
  %s3 = inlined_call_operand.vmem [shape: bf16[128,128], index: 3, kind: input, shape index: {}]
  %s4 = inlined_call_operand.vmem [shape: f32[1,128], index: 4, kind: input, shape index: {}]
  %s5 = inlined_call_operand.hbm [shape: f32[128,128], index: 5, kind: output, shape index: {}]
  %s6 = sld [smem:[#allocation0]]
  $region53: #{detector_forward.33} parent=0
    _
  %s8 = ssub.s32 1, %s6
  %s9 = scalar_select 0, %s8, %s6
  $region1: #{detector_forward.33} parent=0
    #allocation2 [shape = 'u8[65536]{0}', space=vmem, size = 0x10000, scoped, tag = 'output window, operand 0']
    #allocation3 [shape = 's32[2]{0}', space=sflag, size = 0x8, scoped, tag = 'scoped memory for detector_forward.33']
    %10 = vsyncpa [#allocation3], 0
    %s11 = scalar_lea.sflag [#allocation3], 1
    %12 = vsyncpa %s11, 0
    loop: start=0, step=1, limit=4
    $region2: #{detector_forward.33} parent=1 // loop_pre_header
      _
    $region3: #{detector_forward.33} parent=1 // loop_header
      %s14 = sphi 0, %s18
      %p15 = scmp.ge.s32.totalorder %s14, 4
      %s24 = sphi 0, %s26
      %s27 = sphi 0, %s24
      %s28 = sphi 0, %s27
      %s44 = sphi 0, %s28
      %s48 = sphi 0, %s48
      %s50 = sphi 0, %s48
      %s51 = sphi 0, %s50
      %s65 = sphi 0, %s51
      %s69 = sphi 0, %s69
      %s71 = sphi 0, %s69
      %s72 = sphi 0, %s71
      %s86 = sphi 0, %s72
      %s90 = sphi 0, %s90
      %s92 = sphi 0, %s90
      %s93 = sphi 0, %s92
      %s107 = sphi 0, %s93
      %s111 = sphi 0, %s111
      %s113 = sphi 0, %s111
      %s114 = sphi 0, %s113
      %s128 = sphi 0, %s114
      %s134 = sphi 0, %s136
      %s137 = sphi 0, %s134
      %s138 = sphi 0, %s137
      %s154 = sphi 0, %s138
    $region4: #{detector_forward.33} parent=1 // loop_header_branch
      %17 = sbr.rel (%p15) target = $region8
    $region5: #{detector_forward.33} parent=1 // loop_body
      %s19 = ssub.s32 %s14, 1
      %s20 = ssub.s32 %s14, 2
      %s21 = sadd.s32 %s14, 1
      %s22 = ssub.s32 %s14, %s21
      %p23 = scmp.eq.s32.totalorder %s22, 0
      %s25 = sadd.s32 %s24, 1
      %s26 = scalar_select %p23, %s24, %s25
      %p29 = pneg %p23
      %p30 = scmp.eq.s32.totalorder %s14, 1
      %p31 = por %p29, %p30
      %p32 = scmp.ne.s32.totalorder %s24, %s27
      %p33 = scmp.eq.s32.totalorder %s14, 0
      %p34 = por %p32, %p33
      %p35 = scmp.ne.s32.totalorder %s24, %s27
      %p36 = scmp.eq.s32.totalorder %s19, 1
      %p37 = por %p35, %p36
      %p38 = scmp.ne.s32.totalorder %s27, %s28
      %p39 = scmp.eq.s32.totalorder %s19, 0
      %p40 = por %p38, %p39
      %p41 = scmp.ne.s32.totalorder %s27, %s28
      %p42 = scmp.eq.s32.totalorder %s20, 1
      %p43 = por %p41, %p42
      %p45 = scmp.ne.s32.totalorder %s28, %s44
      %p46 = scmp.eq.s32.totalorder %s20, 0
      %p47 = por %p45, %p46
      %s49 = sadd.s32 %s48, 1
      %p52 = scmp.eq.s32.totalorder %s14, 1
      %p53 = scmp.ne.s32.totalorder %s48, %s50
      %p54 = scmp.eq.s32.totalorder %s14, 0
      %p55 = por %p53, %p54
      %p56 = scmp.ne.s32.totalorder %s48, %s50
      %p57 = scmp.eq.s32.totalorder %s19, 1
      %p58 = por %p56, %p57
      %p59 = scmp.ne.s32.totalorder %s50, %s51
      %p60 = scmp.eq.s32.totalorder %s19, 0
      %p61 = por %p59, %p60
      %p62 = scmp.ne.s32.totalorder %s50, %s51
      %p63 = scmp.eq.s32.totalorder %s20, 1
      %p64 = por %p62, %p63
      %p66 = scmp.ne.s32.totalorder %s51, %s65
      %p67 = scmp.eq.s32.totalorder %s20, 0
      %p68 = por %p66, %p67
      %s70 = sadd.s32 %s69, 1
      %p73 = scmp.eq.s32.totalorder %s14, 1
      %p74 = scmp.ne.s32.totalorder %s69, %s71
      %p75 = scmp.eq.s32.totalorder %s14, 0
      %p76 = por %p74, %p75
      %p77 = scmp.ne.s32.totalorder %s69, %s71
      %p78 = scmp.eq.s32.totalorder %s19, 1
      %p79 = por %p77, %p78
      %p80 = scmp.ne.s32.totalorder %s71, %s72
      %p81 = scmp.eq.s32.totalorder %s19, 0
      %p82 = por %p80, %p81
      %p83 = scmp.ne.s32.totalorder %s71, %s72
      %p84 = scmp.eq.s32.totalorder %s20, 1
      %p85 = por %p83, %p84
      %p87 = scmp.ne.s32.totalorder %s72, %s86
      %p88 = scmp.eq.s32.totalorder %s20, 0
      %p89 = por %p87, %p88
      %s91 = sadd.s32 %s90, 1
      %p94 = scmp.eq.s32.totalorder %s14, 1
      %p95 = scmp.ne.s32.totalorder %s90, %s92
      %p96 = scmp.eq.s32.totalorder %s14, 0
      %p97 = por %p95, %p96
      %p98 = scmp.ne.s32.totalorder %s90, %s92
      %p99 = scmp.eq.s32.totalorder %s19, 1
      %p100 = por %p98, %p99
      %p101 = scmp.ne.s32.totalorder %s92, %s93
      %p102 = scmp.eq.s32.totalorder %s19, 0
      %p103 = por %p101, %p102
      %p104 = scmp.ne.s32.totalorder %s92, %s93
      %p105 = scmp.eq.s32.totalorder %s20, 1
      %p106 = por %p104, %p105
      %p108 = scmp.ne.s32.totalorder %s93, %s107
      %p109 = scmp.eq.s32.totalorder %s20, 0
      %p110 = por %p108, %p109
      %s112 = sadd.s32 %s111, 1
      %p115 = scmp.eq.s32.totalorder %s14, 1
      %p116 = scmp.ne.s32.totalorder %s111, %s113
      %p117 = scmp.eq.s32.totalorder %s14, 0
      %p118 = por %p116, %p117
      %p119 = scmp.ne.s32.totalorder %s111, %s113
      %p120 = scmp.eq.s32.totalorder %s19, 1
      %p121 = por %p119, %p120
      %p122 = scmp.ne.s32.totalorder %s113, %s114
      %p123 = scmp.eq.s32.totalorder %s19, 0
      %p124 = por %p122, %p123
      %p125 = scmp.ne.s32.totalorder %s113, %s114
      %p126 = scmp.eq.s32.totalorder %s20, 1
      %p127 = por %p125, %p126
      %p129 = scmp.ne.s32.totalorder %s114, %s128
      %p130 = scmp.eq.s32.totalorder %s20, 0
      %p131 = por %p129, %p130
      %s132 = ssub.s32 %s14, %s21
      %p133 = scmp.eq.s32.totalorder %s132, 0
      %s135 = sadd.s32 %s134, 1
      %s136 = scalar_select %p133, %s134, %s135
      %p139 = pneg %p133
      %p140 = scmp.eq.s32.totalorder %s14, 1
      %p141 = por %p139, %p140
      %p142 = scmp.ne.s32.totalorder %s134, %s137
      %p143 = scmp.eq.s32.totalorder %s14, 0
      %p144 = por %p142, %p143
      %p145 = scmp.ne.s32.totalorder %s134, %s137
      %p146 = scmp.eq.s32.totalorder %s19, 1
      %p147 = por %p145, %p146
      %p148 = scmp.ne.s32.totalorder %s137, %s138
      %p149 = scmp.eq.s32.totalorder %s19, 0
      %p150 = por %p148, %p149
      %p151 = scmp.ne.s32.totalorder %s137, %s138
      %p152 = scmp.eq.s32.totalorder %s20, 1
      %p153 = por %p151, %p152
      %p155 = scmp.ne.s32.totalorder %s138, %s154
      %p156 = scmp.eq.s32.totalorder %s20, 0
      %p157 = por %p155, %p156
      %p158 = scmp.le.s32.totalorder 1, %s14
      %p159 = scmp.lt.s32.totalorder %s14, 3
      %p160 = pnand %p158, %p159
      %p161 = pneg %p160
      // Predicated region
      $region9: #{detector_forward.33} parent=5 // pred_check
        _
      $region10: #{detector_forward.33} parent=5 // pred_check_branch
        %163 = sbr.rel (%p160) target = $region12
      $region11: #{detector_forward.33} parent=5 // pred_region
        %s164 = ssub.s32 %s14, 1
        // Predicated region
        $region13: #{detector_forward.33} parent=11 // pred_check
          %p165 = pneg %p61
        $region14: #{detector_forward.33} parent=11 // pred_check_branch
          %167 = sbr.rel (%p165) target = $region16
        $region15: #{detector_forward.33} parent=11 // pred_region
          _
        $region16: #{detector_forward.33} parent=11 // pred_fallthru
          _
        // Predicated region
        $region17: #{detector_forward.33} parent=11 // pred_check
          %p168 = pneg %p82
        $region18: #{detector_forward.33} parent=11 // pred_check_branch
          %170 = sbr.rel (%p168) target = $region20
        $region19: #{detector_forward.33} parent=11 // pred_region
          _
        $region20: #{detector_forward.33} parent=11 // pred_fallthru
          _
        // Predicated region
        $region21: #{detector_forward.33} parent=11 // pred_check
          %p171 = pneg %p103
        $region22: #{detector_forward.33} parent=11 // pred_check_branch
          %173 = sbr.rel (%p171) target = $region24
        $region23: #{detector_forward.33} parent=11 // pred_region
          _
        $region24: #{detector_forward.33} parent=11 // pred_fallthru
          _
        // Predicated region
        $region25: #{detector_forward.33} parent=11 // pred_check
          %p174 = pneg %p124
        $region26: #{detector_forward.33} parent=11 // pred_check_branch
          %176 = sbr.rel (%p174) target = $region28
        $region27: #{detector_forward.33} parent=11 // pred_region
          _
        $region28: #{detector_forward.33} parent=11 // pred_fallthru
          _
      $region12: #{detector_forward.33} parent=5 // pred_fallthru
        _
      %p177 = scmp.lt.s32.totalorder %s14, 2
      // Predicated region
      $region29: #{detector_forward.33} parent=5 // pred_check
        %p178 = pneg %p177
      $region30: #{detector_forward.33} parent=5 // pred_check_branch
        %180 = sbr.rel (%p178) target = $region32
      $region31: #{detector_forward.33} parent=5 // pred_region
        // Predicated region
        $region33: #{detector_forward.33} parent=31 // pred_check
          %p181 = pneg %p34
        $region34: #{detector_forward.33} parent=31 // pred_check_branch
          %183 = sbr.rel (%p181) target = $region36
        $region35: #{detector_forward.33} parent=31 // pred_region
          %s184 = smul.u32 8, %s14
          %p185 = scmp.lt.s32.totalorder %s184, 15
          %s186 = scalar_select %p185, %s184, 15
          %s187 = smul.addr %s186, 8
          %s188 = scalar_lea.vmem %s0, %s187
          %s189 = smul.u32 8, %s14
        $region36: #{detector_forward.33} parent=31 // pred_fallthru
          _
      $region32: #{detector_forward.33} parent=5 // pred_fallthru
        _
      %p190 = scmp.le.s32.totalorder 1, %s14
      %p191 = scmp.lt.s32.totalorder %s14, 3
      %p192 = pnand %p190, %p191
      %p193 = pneg %p192
      // Predicated region
      $region37: #{detector_forward.33} parent=5 // pred_check
        _
      $region38: #{detector_forward.33} parent=5 // pred_check_branch
        %195 = sbr.rel (%p192) target = $region40
      $region39: #{detector_forward.33} parent=5 // pred_region
        %s196 = ssub.s32 %s14, 1
        %s197 = smul.u32 8, %s19
        %p198 = scmp.lt.s32.totalorder %s197, 15
        %s199 = scalar_select %p198, %s197, 15
        %s200 = smul.addr %s199, 8
        %s201 = scalar_lea.vmem %s0, %s200
        %p202 = pneg %p40
        %p203 = pneg %p37
        %p204 = pneg %p61
        %p205 = pneg %p58
        %p206 = pneg %p82
        %p207 = pneg %p79
        %p208 = pneg %p103
        %p209 = pneg %p100
        %p210 = pneg %p124
        %p211 = pneg %p121
        %p212 = pneg %p150
        %p213 = pneg %p147
        %s214 = sand.u32 %s137, 1
        %s215 = scalar_lea.sflag [#allocation3], %s214
        %s216 = sand.u32 %s137, 1
        %s217 = smul.addr %s216, 64
        %s218 = scalar_lea.vmem [#allocation2], %s217
        %s219 = smul.u32 8, %s19
        %p220 = scmp.lt.s32.totalorder %s219, 15
        %s221 = scalar_select %p220, %s219, 15
        %s222 = smul.addr %s221, 8
        %s223 = scalar_lea.vmem %s0, %s222
        %s224 = smul.u32 8, %s19
        %s225 = smul.u32 8, %s19
        %v226 = vld [vmem:[%s223] sm:$0xff]
        %v227 = vld [vmem:[%s223 + $0x8] sm:$0xff]
        %v228 = vld [vmem:[%s223 + $0x10] sm:$0xff]
        %v229 = vld [vmem:[%s223 + $0x18] sm:$0xff]
        %v230 = vld [vmem:[%s223 + $0x20] sm:$0xff]
        %v231 = vld [vmem:[%s223 + $0x28] sm:$0xff]
        %v232 = vld [vmem:[%s223 + $0x30] sm:$0xff]
        %v233 = vld [vmem:[%s223 + $0x38] sm:$0xff]
        %234 = vadd.xlane.f32.xlu0 %v226
        %v235 = vpop.xlane.xlu0 %234
        %236 = vadd.xlane.f32.xlu0 %v227
        %v237 = vpop.xlane.xlu0 %236
        %238 = vadd.xlane.f32.xlu0 %v228
        %v239 = vpop.xlane.xlu0 %238
        %240 = vadd.xlane.f32.xlu0 %v229
        %v241 = vpop.xlane.xlu0 %240
        %242 = vadd.xlane.f32.xlu0 %v230
        %v243 = vpop.xlane.xlu0 %242
        %244 = vadd.xlane.f32.xlu0 %v231
        %v245 = vpop.xlane.xlu0 %244
        %246 = vadd.xlane.f32.xlu0 %v232
        %v247 = vpop.xlane.xlu0 %246
        %248 = vadd.xlane.f32.xlu0 %v233
        %v249 = vpop.xlane.xlu0 %248
        %v250 = vrcp.pop 128.0
        %v251 = vmul.f32 128.0, %v250
        %v252 = vsub.f32 1.0, %v251
        %v253 = vmul.f32 %v250, %v252
        %v254 = vadd.f32 %v250, %v253
        %vm255 = vweird.f32 %v250
        %v256 = vsel %vm255, %v250, %v254
        %v257 = vmul.f32 %v235, %v256
        %v258 = vmul.f32 %v237, %v256
        %v259 = vmul.f32 %v239, %v256
        %v260 = vmul.f32 %v241, %v256
        %v261 = vmul.f32 %v243, %v256
        %v262 = vmul.f32 %v245, %v256
        %v263 = vmul.f32 %v247, %v256
        %v264 = vmul.f32 %v249, %v256
        %v265 = vsub.f32 %v226, %v257
        %v266 = vsub.f32 %v227, %v258
        %v267 = vsub.f32 %v228, %v259
        %v268 = vsub.f32 %v229, %v260
        %v269 = vsub.f32 %v230, %v261
        %v270 = vsub.f32 %v231, %v262
        %v271 = vsub.f32 %v232, %v263
        %v272 = vsub.f32 %v233, %v264
        %v273 = vmul.f32 %v265, %v265
        %v274 = vmul.f32 %v266, %v266
        %v275 = vmul.f32 %v267, %v267
        %v276 = vmul.f32 %v268, %v268
        %v277 = vmul.f32 %v269, %v269
        %v278 = vmul.f32 %v270, %v270
        %v279 = vmul.f32 %v271, %v271
        %v280 = vmul.f32 %v272, %v272
        %281 = vadd.xlane.f32.xlu0 %v273
        %v282 = vpop.xlane.xlu0 %281
        %283 = vadd.xlane.f32.xlu0 %v274
        %v284 = vpop.xlane.xlu0 %283
        %285 = vadd.xlane.f32.xlu0 %v275
        %v286 = vpop.xlane.xlu0 %285
        %287 = vadd.xlane.f32.xlu0 %v276
        %v288 = vpop.xlane.xlu0 %287
        %289 = vadd.xlane.f32.xlu0 %v277
        %v290 = vpop.xlane.xlu0 %289
        %291 = vadd.xlane.f32.xlu0 %v278
        %v292 = vpop.xlane.xlu0 %291
        %293 = vadd.xlane.f32.xlu0 %v279
        %v294 = vpop.xlane.xlu0 %293
        %295 = vadd.xlane.f32.xlu0 %v280
        %v296 = vpop.xlane.xlu0 %295
        %v297 = vmul.f32 %v282, %v256
        %v298 = vmul.f32 %v284, %v256
        %v299 = vmul.f32 %v286, %v256
        %v300 = vmul.f32 %v288, %v256
        %v301 = vmul.f32 %v290, %v256
        %v302 = vmul.f32 %v292, %v256
        %v303 = vmul.f32 %v294, %v256
        %v304 = vmul.f32 %v296, %v256
        %v305 = vadd.f32 %v297, 1e-05
        %v306 = vadd.f32 %v298, 1e-05
        %v307 = vadd.f32 %v299, 1e-05
        %v308 = vadd.f32 %v300, 1e-05
        %v309 = vadd.f32 %v301, 1e-05
        %v310 = vadd.f32 %v302, 1e-05
        %v311 = vadd.f32 %v303, 1e-05
        %v312 = vadd.f32 %v304, 1e-05
        %v313 = vrsqrt.pop %v305
        %v314 = vmul.f32 %v313, %v305
        %v315 = vmul.f32 %v314, %v313
        %v316 = vmul.f32 0.5, %v315
        %v317 = vsub.f32 1.5, %v316
        %v318 = vmul.f32 %v313, %v317
        %vm319 = vweird.f32 %v305
        %vm320 = vweird.f32 %v313
        %vm321 = vmor %vm319, %vm320
        %v322 = vsel %vm321, %v313, %v318
        %v323 = vrsqrt.pop %v306
        %v324 = vmul.f32 %v323, %v306
        %v325 = vmul.f32 %v324, %v323
        %v326 = vmul.f32 0.5, %v325
        %v327 = vsub.f32 1.5, %v326
        %v328 = vmul.f32 %v323, %v327
        %vm329 = vweird.f32 %v306
        %vm330 = vweird.f32 %v323
        %vm331 = vmor %vm329, %vm330
        %v332 = vsel %vm331, %v323, %v328
        %v333 = vrsqrt.pop %v307
        %v334 = vmul.f32 %v333, %v307
        %v335 = vmul.f32 %v334, %v333
        %v336 = vmul.f32 0.5, %v335
        %v337 = vsub.f32 1.5, %v336
        %v338 = vmul.f32 %v333, %v337
        %vm339 = vweird.f32 %v307
        %vm340 = vweird.f32 %v333
        %vm341 = vmor %vm339, %vm340
        %v342 = vsel %vm341, %v333, %v338
        %v343 = vrsqrt.pop %v308
        %v344 = vmul.f32 %v343, %v308
        %v345 = vmul.f32 %v344, %v343
        %v346 = vmul.f32 0.5, %v345
        %v347 = vsub.f32 1.5, %v346
        %v348 = vmul.f32 %v343, %v347
        %vm349 = vweird.f32 %v308
        %vm350 = vweird.f32 %v343
        %vm351 = vmor %vm349, %vm350
        %v352 = vsel %vm351, %v343, %v348
        %v353 = vrsqrt.pop %v309
        %v354 = vmul.f32 %v353, %v309
        %v355 = vmul.f32 %v354, %v353
        %v356 = vmul.f32 0.5, %v355
        %v357 = vsub.f32 1.5, %v356
        %v358 = vmul.f32 %v353, %v357
        %vm359 = vweird.f32 %v309
        %vm360 = vweird.f32 %v353
        %vm361 = vmor %vm359, %vm360
        %v362 = vsel %vm361, %v353, %v358
        %v363 = vrsqrt.pop %v310
        %v364 = vmul.f32 %v363, %v310
        %v365 = vmul.f32 %v364, %v363
        %v366 = vmul.f32 0.5, %v365
        %v367 = vsub.f32 1.5, %v366
        %v368 = vmul.f32 %v363, %v367
        %vm369 = vweird.f32 %v310
        %vm370 = vweird.f32 %v363
        %vm371 = vmor %vm369, %vm370
        %v372 = vsel %vm371, %v363, %v368
        %v373 = vrsqrt.pop %v311
        %v374 = vmul.f32 %v373, %v311
        %v375 = vmul.f32 %v374, %v373
        %v376 = vmul.f32 0.5, %v375
        %v377 = vsub.f32 1.5, %v376
        %v378 = vmul.f32 %v373, %v377
        %vm379 = vweird.f32 %v311
        %vm380 = vweird.f32 %v373
        %vm381 = vmor %vm379, %vm380
        %v382 = vsel %vm381, %v373, %v378
        %v383 = vrsqrt.pop %v312
        %v384 = vmul.f32 %v383, %v312
        %v385 = vmul.f32 %v384, %v383
        %v386 = vmul.f32 0.5, %v385
        %v387 = vsub.f32 1.5, %v386
        %v388 = vmul.f32 %v383, %v387
        %vm389 = vweird.f32 %v312
        %vm390 = vweird.f32 %v383
        %vm391 = vmor %vm389, %vm390
        %v392 = vsel %vm391, %v383, %v388
        %v393 = vmul.f32 %v265, %v322
        %v394 = vmul.f32 %v266, %v332
        %v395 = vmul.f32 %v267, %v342
        %v396 = vmul.f32 %v268, %v352
        %v397 = vmul.f32 %v269, %v362
        %v398 = vmul.f32 %v270, %v372
        %v399 = vmul.f32 %v271, %v382
        %v400 = vmul.f32 %v272, %v392
        %v401 = vld [vmem:[%s1] sm:$0x1]
        %v403 = vperm.slane %v401, 0
        %v405 = vmul.f32 %v393, %v403
        %v406 = vmul.f32 %v394, %v403
        %v407 = vmul.f32 %v395, %v403
        %v408 = vmul.f32 %v396, %v403
        %v409 = vmul.f32 %v397, %v403
        %v410 = vmul.f32 %v398, %v403
        %v411 = vmul.f32 %v399, %v403
        %v412 = vmul.f32 %v400, %v403
        %v413 = vld [vmem:[%s2] sm:$0x1]
        %v415 = vperm.slane %v413, 0
        %v417 = vadd.f32 %v405, %v415
        %v418 = vadd.f32 %v406, %v415
        %v419 = vadd.f32 %v407, %v415
        %v420 = vadd.f32 %v408, %v415
        %v421 = vadd.f32 %v409, %v415
        %v422 = vadd.f32 %v410, %v415
        %v423 = vadd.f32 %v411, %v415
        %v424 = vadd.f32 %v412, %v415
        %v425 = vpack.c.bf16 %v418, %v417
        %v426 = vpack.c.bf16 %v420, %v419
        %v427 = vpack.c.bf16 %v422, %v421
        %v428 = vpack.c.bf16 %v424, %v423
        %v429 = vld [vmem:[%s3] sm:$0xf]
        %v430 = vld [vmem:[%s3 + $0x4] sm:$0xf]
        %v431 = vld [vmem:[%s3 + $0x8] sm:$0xf]
        %v432 = vld [vmem:[%s3 + $0xc] sm:$0xf]
        %v433 = vld [vmem:[%s3 + $0x10] sm:$0xf]
        %v434 = vld [vmem:[%s3 + $0x14] sm:$0xf]
        %v435 = vld [vmem:[%s3 + $0x18] sm:$0xf]
        %v436 = vld [vmem:[%s3 + $0x1c] sm:$0xf]
        %v437 = vld [vmem:[%s3 + $0x20] sm:$0xf]
        %v438 = vld [vmem:[%s3 + $0x24] sm:$0xf]
        %v439 = vld [vmem:[%s3 + $0x28] sm:$0xf]
        %v440 = vld [vmem:[%s3 + $0x2c] sm:$0xf]
        %v441 = vld [vmem:[%s3 + $0x30] sm:$0xf]
        %v442 = vld [vmem:[%s3 + $0x34] sm:$0xf]
        %v443 = vld [vmem:[%s3 + $0x38] sm:$0xf]
        %v444 = vld [vmem:[%s3 + $0x3c] sm:$0xf]
        %v445 = vld [vmem:[%s4] sm:$0x1]
        %v447 = vperm.slane %v445, 0
        %v465 = vunpack.c.l.b16 %v429
        %v466 = vunpack.c.l.b16 %v430
        %v467 = vunpack.c.l.b16 %v431
        %v468 = vunpack.c.l.b16 %v432
        %v469 = vunpack.c.l.b16 %v433
        %v470 = vunpack.c.l.b16 %v434
        %v471 = vunpack.c.l.b16 %v435
        %v472 = vunpack.c.l.b16 %v436
        %v473 = vunpack.c.l.b16 %v437
        %v474 = vunpack.c.l.b16 %v438
        %v475 = vunpack.c.l.b16 %v439
        %v476 = vunpack.c.l.b16 %v440
        %v477 = vunpack.c.l.b16 %v441
        %v478 = vunpack.c.l.b16 %v442
        %v479 = vunpack.c.l.b16 %v443
        %v480 = vunpack.c.l.b16 %v444
        %v481 = vpack.c.b16 %v466, %v465
        %v482 = vpack.c.b16 %v468, %v467
        %v483 = vpack.c.b16 %v470, %v469
        %v484 = vpack.c.b16 %v472, %v471
        %v485 = vpack.c.b16 %v474, %v473
        %v486 = vpack.c.b16 %v476, %v475
        %v487 = vpack.c.b16 %v478, %v477
        %v488 = vpack.c.b16 %v480, %v479
        %497 = vmatpush.bf16.msra.mxu0 %v488
        %498 = vmatpush.bf16.msra.mxu0 %v487
        %499 = vmatpush.bf16.msra.mxu0 %v486
        %500 = vmatpush.bf16.msra.mxu0 %v485
        %501 = vmatpush.bf16.msra.mxu0 %v484
        %502 = vmatpush.bf16.msra.mxu0 %v483
        %503 = vmatpush.bf16.msra.mxu0 %v482
        %504 = vmatpush.bf16.msra.mxu0 %v481
        %505 = vmatmul.bf16.gmra.mxu0 %v425
        %v506 = vpop.f32.mrf.mxu0
        %v507 = vadd.f32 %v447, %v506
        %v508 = vpop.f32.mrf.mxu0
        %v509 = vadd.f32 %v447, %v508
        %510 = vmatmul.bf16.gmra.mxu0 %v426
        %v511 = vpop.f32.mrf.mxu0
        %v512 = vadd.f32 %v447, %v511
        %v513 = vpop.f32.mrf.mxu0
        %v514 = vadd.f32 %v447, %v513
        %515 = vmatmul.bf16.gmra.mxu0 %v427
        %v516 = vpop.f32.mrf.mxu0
        %v517 = vadd.f32 %v447, %v516
        %v518 = vpop.f32.mrf.mxu0
        %v519 = vadd.f32 %v447, %v518
        %520 = vmatmul.bf16.gmra.mxu0 %v428
        %v521 = vpop.f32.mrf.mxu0
        %v522 = vadd.f32 %v447, %v521
        %v523 = vpop.f32.mrf.mxu0
        %v524 = vadd.f32 %v447, %v523
        %525 = vdwg.mxu0
        %526 = vst [vmem:[%s218] sm:$0xff] %v507
        %527 = vst [vmem:[%s218 + $0x8] sm:$0xff] %v509
        %528 = vst [vmem:[%s218 + $0x10] sm:$0xff] %v512
        %529 = vst [vmem:[%s218 + $0x18] sm:$0xff] %v514
        %530 = vst [vmem:[%s218 + $0x20] sm:$0xff] %v517
        %531 = vst [vmem:[%s218 + $0x28] sm:$0xff] %v519
        %532 = vst [vmem:[%s218 + $0x30] sm:$0xff] %v522
        %533 = vst [vmem:[%s218 + $0x38] sm:$0xff] %v524
        %s534 = sand.u32 %s137, 1
        %s535 = scalar_lea.sflag [#allocation3], %s534
        %s536 = sand.u32 %s137, 1
        %s537 = smul.addr %s536, 64
        %s538 = scalar_lea.vmem [#allocation2], %s537
        // Predicated region
        $region41: #{detector_forward.33} parent=39 // pred_check
          %p539 = pneg %p147
        $region42: #{detector_forward.33} parent=39 // pred_check_branch
          %541 = sbr.rel (%p539) target = $region44
        $region43: #{detector_forward.33} parent=39 // pred_region
          %s542 = smul.u32 8, %s19
          %544 = vsyncadd %s535, 0
          %s545 = smul.addr %s542, 8
          %s546 = scalar_lea.hbm %s5, %s545
          %s547 = sshll.u32 %s538, 4
          %s548 = int_to_ptr.vmem [resolvable:$true] %s547
          %s549 = sshll.u32 %s546, 4
          %s550 = int_to_ptr.hbm [resolvable:$true] %s549
          %555 = dma.vmem_to_hbm [thread:$0]  %s548, 1024, %s550, %s535, 128, 128, 8
        $region44: #{detector_forward.33} parent=39 // pred_fallthru
          _
      $region40: #{detector_forward.33} parent=5 // pred_fallthru
        _
      %p556 = scmp.le.s32.totalorder 2, %s14
      // Predicated region
      $region45: #{detector_forward.33} parent=5 // pred_check
        %p557 = pneg %p556
      $region46: #{detector_forward.33} parent=5 // pred_check_branch
        %559 = sbr.rel (%p557) target = $region48
      $region47: #{detector_forward.33} parent=5 // pred_region
        %s560 = ssub.s32 %s14, 2
        // Predicated region
        $region49: #{detector_forward.33} parent=47 // pred_check
          %p561 = pneg %p153
        $region50: #{detector_forward.33} parent=47 // pred_check_branch
          %563 = sbr.rel (%p561) target = $region52
        $region51: #{detector_forward.33} parent=47 // pred_region
          %s564 = sand.u32 %s138, 1
          %s565 = scalar_lea.sflag [#allocation3], %s564
          %s566 = sand.u32 %s138, 1
          %s567 = smul.addr %s566, 64
          %s568 = scalar_lea.vmem [#allocation2], %s567
          %570 = dma.done %s565, 1024
        $region52: #{detector_forward.33} parent=47 // pred_fallthru
          _
      $region48: #{detector_forward.33} parent=5 // pred_fallthru
        _
    $region6: #{detector_forward.33} parent=1 // loop_footer
      %s18 = sadd.s32 1, %s14
    $region7: #{detector_forward.33} parent=1 // loop_footer_branch
      %13 = sbr.rel target = $region3
    $region8: #{detector_forward.33} parent=1 // loop_exit
      _
    %571 = vsyncpa [#allocation3], 1
    %s572 = scalar_lea.sflag [#allocation3], 1
    %573 = vsyncpa %s572, 1

</llo_original>
